<compile_context>
chip_gen: v7x
topology: tpu7x:2x2x1
jax: 0.10.0
libtpu: 0.0.40
codegen_flags: <defaults>
</compile_context>

<pallas_src>
import functools

import jax
import jax.numpy as jnp
from jax import lax
from jax.experimental import pallas as pl
from jax.experimental.pallas import tpu as pltpu

VMEM_LIMIT = 32 * 1024 * 1024  # explicit scoped-VMEM budget (safe on v5e/v6e/v7x)


# ------------------------------ small helpers -------------------------------

def _round_up(x, m):
    return ((x + m - 1) // m) * m


def _pick_tile_m(m, cap=512):
    """Largest multiple-of-8 divisor of m that is <= cap; else pad to 256s."""
    for d in range(min(m, cap), 7, -1):
        if d % 8 == 0 and m % d == 0:
            return d, m
    tm = 256
    return tm, _round_up(m, tm)


def _largest_divisor(n, cap):
    for d in range(min(n, cap), 0, -1):
        if n % d == 0:
            return d
    return 1


# ----------------------------- Pallas kernels ------------------------------

def _matmul_bias_kernel(a_ref, w_ref, b_ref, o_ref, acc_ref, *, relu):
    """Tiled (TM,TK)@(TK,TN) with f32 VMEM accumulator, fused bias (+ReLU)."""
    k = pl.program_id(2)

    @pl.when(k == 0)
    def _init():
        acc_ref[...] = jnp.zeros_like(acc_ref)

    acc_ref[...] += jnp.dot(a_ref[...], w_ref[...],
                            preferred_element_type=jnp.float32)

    @pl.when(k == pl.num_programs(2) - 1)
    def _finalize():
        y = acc_ref[...] + b_ref[...]
        if relu:
            y = jnp.maximum(y, 0.0)
        o_ref[...] = y.astype(o_ref.dtype)


def _maxpool_kernel(x_ref, o_ref):
    """2x2 max pool; the four taps are major-dim sub-blocks of the input view.

    x_ref: (TB, 2, 2, Wo, C)  [dims: (b*ho, h_parity, w_parity, wo, c)]
    o_ref: (TB, Wo, C)
    """
    o_ref[...] = jnp.maximum(
        jnp.maximum(x_ref[:, 0, 0, :, :], x_ref[:, 0, 1, :, :]),
        jnp.maximum(x_ref[:, 1, 0, :, :], x_ref[:, 1, 1, :, :]))


def _fc_fused_kernel(x_ref, w1_ref, b1_ref, w2_ref, b2_ref, o_ref, h_ref):
    """fc1 (streamed over K, f32 acc in VMEM) + ReLU + fc2, in one kernel."""
    k = pl.program_id(0)

    @pl.when(k == 0)
    def _init():
        h_ref[...] = jnp.zeros_like(h_ref)

    h_ref[...] += jnp.dot(x_ref[...], w1_ref[...],
                          preferred_element_type=jnp.float32)

    @pl.when(k == pl.num_programs(0) - 1)
    def _finalize():
        h = jnp.maximum(h_ref[...] + b1_ref[...], 0.0).astype(w2_ref.dtype)
        o_ref[...] = (jnp.dot(h, w2_ref[...], preferred_element_type=jnp.float32)
                      + b2_ref[...])


# ------------------------------ Pallas wrappers ------------------------------

def matmul_bias_act(a, w, b, *, relu, out_dtype=jnp.bfloat16, tm_cap=512):
    """(M,K)@(K,N)+b with optional ReLU. N must already be a 128-multiple."""
    M, K = a.shape
    K2, N = w.shape
    assert K == K2 and N % 128 == 0
    a = a.astype(jnp.bfloat16)

    tn = 128                              # 128-wide N tiles (v5e MXU / dense vst)
    tk = K                                # K is small for both convs: one block
    tm, Mp = _pick_tile_m(M, tm_cap)
    if Mp != M:
        a = jnp.pad(a, ((0, Mp - M), (0, 0)))

    grid = (Mp // tm, N // tn, 1)
    out_isz = jnp.dtype(out_dtype).itemsize
    cost = pl.CostEstimate(
        flops=2 * Mp * N * K,
        transcendentals=0,
        bytes_accessed=(Mp * K + K * N) * 2 + Mp * N * out_isz + N * 4)

    out = pl.pallas_call(
        functools.partial(_matmul_bias_kernel, relu=relu),
        out_shape=jax.ShapeDtypeStruct((Mp, N), out_dtype),
        grid=grid,
        in_specs=[
            pl.BlockSpec((tm, tk), lambda i, j, k: (i, k)),
            pl.BlockSpec((tk, tn), lambda i, j, k: (k, j)),
            pl.BlockSpec((1, tn), lambda i, j, k: (0, j)),
        ],
        out_specs=pl.BlockSpec((tm, tn), lambda i, j, k: (i, j)),
        scratch_shapes=[pltpu.VMEM((tm, tn), jnp.float32)],
        compiler_params=pltpu.CompilerParams(
            dimension_semantics=("parallel", "parallel", "arbitrary"),
            vmem_limit_bytes=VMEM_LIMIT),
        cost_estimate=cost,
    )(a, w, b)
    return out[:M] if Mp != M else out


def maxpool2x2(y_rows, B, Ho, Wo, C):
    """2x2/stride-2 max pool.

    y_rows: (B*2Ho*2*Wo, C) conv output whose rows are ordered
            (b, h, w_parity, w_out) - so a free reshape exposes the pool taps.
    Returns (B, Ho, Wo, C).
    """
    R = B * Ho
    x5 = y_rows.reshape(R, 2, 2, Wo, C)      # (b*ho, hp, wp, wo, c) - free view
    tb = _largest_divisor(R, 64)
    out = pl.pallas_call(
        _maxpool_kernel,
        out_shape=jax.ShapeDtypeStruct((R, Wo, C), y_rows.dtype),
        grid=(R // tb,),
        in_specs=[pl.BlockSpec((tb, 2, 2, Wo, C),
                               lambda i: (i, 0, 0, 0, 0))],
        out_specs=pl.BlockSpec((tb, Wo, C), lambda i: (i, 0, 0)),
        compiler_params=pltpu.CompilerParams(
            dimension_semantics=("parallel",),
            vmem_limit_bytes=VMEM_LIMIT),
    )(x5)
    return out.reshape(B, Ho, Wo, C)


def fc_fused(feat, w1, b1, w2, b2, n_out):
    """ReLU(feat @ w1 + b1) @ w2 + b2 in a single pallas_call (hidden in VMEM)."""
    B, K = feat.shape
    Kp, H = w1.shape
    H2, N2p = w2.shape
    assert H == H2 and Kp >= K and Kp % 512 == 0 and N2p % 128 == 0
    Bp = max(8, _round_up(B, 8))

    x = jnp.pad(feat.astype(jnp.bfloat16), ((0, Bp - B), (0, Kp - K)))
    tk = 512
    cost = pl.CostEstimate(
        flops=2 * Bp * Kp * H + 2 * Bp * H * N2p,
        transcendentals=0,
        bytes_accessed=(Bp * Kp + Kp * H + H * N2p) * 2 + Bp * N2p * 4)

    out = pl.pallas_call(
        _fc_fused_kernel,
        out_shape=jax.ShapeDtypeStruct((Bp, N2p), jnp.float32),
        grid=(Kp // tk,),
        in_specs=[
            pl.BlockSpec((Bp, tk), lambda k: (0, k)),
            pl.BlockSpec((tk, H), lambda k: (k, 0)),
            pl.BlockSpec((1, H), lambda k: (0, 0)),
            pl.BlockSpec((H, N2p), lambda k: (0, 0)),
            pl.BlockSpec((1, N2p), lambda k: (0, 0)),
        ],
        out_specs=pl.BlockSpec((Bp, N2p), lambda k: (0, 0)),
        scratch_shapes=[pltpu.VMEM((Bp, H), jnp.float32)],
        compiler_params=pltpu.CompilerParams(
            dimension_semantics=("arbitrary",),
            vmem_limit_bytes=VMEM_LIMIT),
        cost_estimate=cost,
    )(x, w1, b1, w2, b2)
    return out[:B, :n_out]


# ------------------------------- JAX glue -----------------------------------

def im2col_5x5_wsplit(x_nhwc):
    """5x5 'same' (pad=2) patches.

    Rows are ordered (b, h, w_parity, w_out) so the conv-output rows can be
    pooled with a free reshape; features are ordered (kh, kw, c_in) to match
    the packed weights.
    # TODO(synk): fuse this into the conv kernel (tap-loop) to avoid the
    # 25x HBM materialization.
    """
    B, H, W, C = x_nhwc.shape
    Wo = W // 2
    xp = jnp.pad(x_nhwc, ((0, 0), (2, 2), (2, 2), (0, 0)))
    feats = []
    for kh in range(5):
        for kw in range(5):
            taps = [xp[:, kh:kh + H, kw + wp:kw + wp + 2 * Wo:2, :]
                    for wp in (0, 1)]
            feats.append(jnp.stack(taps, axis=2))          # (B, H, 2, Wo, C)
    a = jnp.concatenate(feats, axis=-1)                    # (B, H, 2, Wo, 25C)
    return a.reshape(B * H * 2 * Wo, 25 * C)


def init_params(key, only_digits=True):
    """Deterministic synthetic params with PyTorch-convention shapes."""
    n_out = 10 if only_digits else 62
    ks = jax.random.split(key, 8)

    def u(k, shape, fan_in):
        bound = 1.0 / jnp.sqrt(jnp.float32(fan_in))
        return jax.random.uniform(k, shape, jnp.float32, -bound, bound)

    return {
        "conv1_w": u(ks[0], (32, 1, 5, 5), 25),        # OIHW
        "conv1_b": u(ks[1], (32,), 25),
        "conv2_w": u(ks[2], (64, 32, 5, 5), 32 * 25),  # OIHW
        "conv2_b": u(ks[3], (64,), 32 * 25),
        "fc1_w": u(ks[4], (512, 3136), 3136),          # (out, in) like torch
        "fc1_b": u(ks[5], (512,), 3136),
        "fc2_w": u(ks[6], (n_out, 512), 512),
        "fc2_b": u(ks[7], (n_out,), 512),
    }


def prepare_params(p):
    """One-time weight packing: transpose/reshape, pad lanes to 128, cast bf16."""
    bf, f32 = jnp.bfloat16, jnp.float32
    n_out = p["fc2_w"].shape[0]
    n2p = _round_up(n_out, 128)

    w1 = p["conv1_w"].reshape(32, 25).T                     # (25, 32), (kh,kw)
    w2 = jnp.transpose(p["conv2_w"], (2, 3, 1, 0)).reshape(800, 64)
    fc1 = p["fc1_w"].T                                      # (3136, 512)
    fc2 = p["fc2_w"].T                                      # (512, n_out)

    return {
        "conv1_w": jnp.pad(w1, ((0, 0), (0, 96))).astype(bf),          # (25,128)
        "conv1_b": jnp.pad(p["conv1_b"], (0, 96)).reshape(1, 128).astype(f32),
        "conv2_w": jnp.pad(w2, ((0, 0), (0, 64))).astype(bf),          # (800,128)
        "conv2_b": jnp.pad(p["conv2_b"], (0, 64)).reshape(1, 128).astype(f32),
        "fc1_w": jnp.pad(fc1, ((0, 3584 - 3136), (0, 0))).astype(bf),  # (3584,512)
        "fc1_b": p["fc1_b"].reshape(1, 512).astype(f32),
        "fc2_w": jnp.pad(fc2, ((0, 0), (0, n2p - n_out))).astype(bf),  # (512,128)
        "fc2_b": jnp.pad(p["fc2_b"], (0, n2p - n_out)).reshape(1, n2p).astype(f32),
    }


def cnn_fedavg_forward(x, pp, *, n_out=10):
    """x: (B, 28, 28) float32 -> logits (B, n_out)."""
    B = x.shape[0]
    xb = x.astype(jnp.bfloat16)[:, :, :, None]               # (B,28,28,1)

    # conv2d_1 (1->32, 5x5, pad 2) + ReLU + 2x2 max-pool
    a1 = im2col_5x5_wsplit(xb)                               # (B*784, 25)
    y1 = matmul_bias_act(a1, pp["conv1_w"], pp["conv1_b"], relu=True)  # (B*784,128)
    p1 = maxpool2x2(y1, B, 14, 14, 128)[..., :32]            # (B,14,14,32)

    # conv2d_2 (32->64, 5x5, pad 2) + ReLU + 2x2 max-pool
    a2 = im2col_5x5_wsplit(p1)                               # (B*196, 800)
    y2 = matmul_bias_act(a2, pp["conv2_w"], pp["conv2_b"], relu=True)  # (B*196,128)
    p2 = maxpool2x2(y2, B, 7, 7, 128)[..., :64]              # (B,7,7,64)

    # flatten in torch NCHW order: index = c*49 + h*7 + w
    feat = jnp.transpose(p2, (0, 3, 1, 2)).reshape(B, 3136)

    # fused fc1(+ReLU)+fc2
    return fc_fused(feat, pp["fc1_w"], pp["fc1_b"], pp["fc2_w"], pp["fc2_b"],
                    n_out)


def reference_forward(x, p):
    """Pure-JAX f32 reference mirroring the torch module (sanity check)."""
    xi = x[:, None, :, :]
    y = lax.conv_general_dilated(xi, p["conv1_w"], (1, 1), [(2, 2), (2, 2)],
                                 dimension_numbers=("NCHW", "OIHW", "NCHW"))
    y = jnp.maximum(y + p["conv1_b"][None, :, None, None], 0.0)
    y = lax.reduce_window(y, -jnp.inf, lax.max, (1, 1, 2, 2), (1, 1, 2, 2), "VALID")
    y = lax.conv_general_dilated(y, p["conv2_w"], (1, 1), [(2, 2), (2, 2)],
                                 dimension_numbers=("NCHW", "OIHW", "NCHW"))
    y = jnp.maximum(y + p["conv2_b"][None, :, None, None], 0.0)
    y = lax.reduce_window(y, -jnp.inf, lax.max, (1, 1, 2, 2), (1, 1, 2, 2), "VALID")
    f = y.reshape(y.shape[0], -1)
    h = jnp.maximum(f @ p["fc1_w"].T + p["fc1_b"], 0.0)
    return h @ p["fc2_w"].T + p["fc2_b"]


if __name__ == "__main__":
    key = jax.random.PRNGKey(0)
    pkey, xkey = jax.random.split(key)
    params = init_params(pkey, only_digits=True)
    packed = prepare_params(params)          # one-time weight packing (bf16)

    B = 2
    x = jax.random.normal(xkey, (B, 28, 28), dtype=jnp.float32)

    fwd = jax.jit(cnn_fedavg_forward)
    out = jax.block_until_ready(fwd(x, packed))
    assert out.shape == (B, 10), out.shape

    ref = reference_forward(x, params)
    max_err = float(jnp.max(jnp.abs(out - ref)))
    assert max_err < 5e-2, f"mismatch vs reference: {max_err}"

    print("KERNEL_OK")
</pallas_src>

<mosaic_0001>
module attributes {stable_mosaic.version = 11 : i64} {
  func.func @_matmul_bias_kernel(%arg0: i32, %arg1: i32, %arg2: i32, %arg3: memref<392x25xbf16, #tpu.memory_space<vmem>>, %arg4: memref<25x128xbf16, #tpu.memory_space<vmem>>, %arg5: memref<1x128xf32, #tpu.memory_space<vmem>>, %arg6: memref<392x128xbf16, #tpu.memory_space<vmem>>, %arg7: memref<392x128xf32, #tpu.memory_space<vmem>>) attributes {dimension_semantics = [#tpu.dimension_semantics<parallel>, #tpu.dimension_semantics<parallel>, #tpu.dimension_semantics<arbitrary>], iteration_bounds = array<i64: 4, 1, 1>, scalar_prefetch = 0 : i64, scratch_operands = 1 : i64, tpu.core_type = #tpu.core_type<tc>, window_params = [{transform_indices = @transform_0, window_bounds = array<i64: 392, 25>}, {transform_indices = @transform_1, window_bounds = array<i64: 25, 128>}, {transform_indices = @transform_2, window_bounds = array<i64: 1, 128>}, {transform_indices = @transform_3, window_bounds = array<i64: 392, 128>}]} {
    %c0_i32 = arith.constant 0 : i32
    %0 = arith.cmpi eq, %arg2, %c0_i32 : i32
    %1 = arith.extui %0 : i1 to i32
    %c0_i32_0 = arith.constant 0 : i32
    %2 = arith.cmpi ne, %1, %c0_i32_0 : i32
    scf.if %2 {
      %cst_10 = arith.constant 0.000000e+00 : f32
      %12 = vector.broadcast %cst_10 : f32 to vector<392x128xf32>
      %c0_11 = arith.constant 0 : index
      %c0_12 = arith.constant 0 : index
      %13 = vector.load %arg7[%c0_11, %c0_12] : memref<392x128xf32, #tpu.memory_space<vmem>>, vector<392x128xf32>
      tpu.vector_store %arg7[%c0_11, %c0_12], %12 {strides = array<i32>} : memref<392x128xf32, #tpu.memory_space<vmem>>, vector<392x128xf32>,
    } else {
    }
    %c0 = arith.constant 0 : index
    %c0_1 = arith.constant 0 : index
    %3 = vector.load %arg7[%c0, %c0_1] : memref<392x128xf32, #tpu.memory_space<vmem>>, vector<392x128xf32>
    %c0_2 = arith.constant 0 : index
    %c0_3 = arith.constant 0 : index
    %4 = vector.load %arg3[%c0_2, %c0_3] : memref<392x25xbf16, #tpu.memory_space<vmem>>, vector<392x25xbf16>
    %c0_4 = arith.constant 0 : index
    %c0_5 = arith.constant 0 : index
    %5 = vector.load %arg4[%c0_4, %c0_5] : memref<25x128xbf16, #tpu.memory_space<vmem>>, vector<25x128xbf16>
    %cst = arith.constant dense<0.000000e+00> : vector<392x128xf32>
    %6 = tpu.matmul %4, %5, %cst {dimension_numbers = #tpu.dot_dimension_numbers<[1], [0], [0], [1], [0, 0, 1, 1], [], []>} : vector<392x25xbf16>, vector<25x128xbf16>, vector<392x128xf32> -> vector<392x128xf32>
    %7 = arith.addf %3, %6 : vector<392x128xf32>
    %c0_6 = arith.constant 0 : index
    %c0_7 = arith.constant 0 : index
    %8 = vector.load %arg7[%c0_6, %c0_7] : memref<392x128xf32, #tpu.memory_space<vmem>>, vector<392x128xf32>
    tpu.vector_store %arg7[%c0_6, %c0_7], %7 {strides = array<i32>} : memref<392x128xf32, #tpu.memory_space<vmem>>, vector<392x128xf32>,
    %c0_i32_8 = arith.constant 0 : i32
    %9 = arith.cmpi eq, %arg2, %c0_i32_8 : i32
    %10 = arith.extui %9 : i1 to i32
    %c0_i32_9 = arith.constant 0 : i32
    %11 = arith.cmpi ne, %10, %c0_i32_9 : i32
    scf.if %11 {
      %c0_10 = arith.constant 0 : index
      %c0_11 = arith.constant 0 : index
      %12 = vector.load %arg7[%c0_10, %c0_11] : memref<392x128xf32, #tpu.memory_space<vmem>>, vector<392x128xf32>
      %c0_12 = arith.constant 0 : index
      %c0_13 = arith.constant 0 : index
      %13 = vector.load %arg5[%c0_12, %c0_13] : memref<1x128xf32, #tpu.memory_space<vmem>>, vector<1x128xf32>
      %14 = vector.broadcast %13 : vector<1x128xf32> to vector<392x128xf32>
      %15 = arith.addf %12, %14 : vector<392x128xf32>
      %cst_14 = arith.constant 0.000000e+00 : f32
      %16 = vector.broadcast %cst_14 : f32 to vector<392x128xf32>
      %17 = arith.maximumf %15, %16 : vector<392x128xf32>
      %18 = arith.truncf %17 : vector<392x128xf32> to vector<392x128xbf16>
      %c0_15 = arith.constant 0 : index
      %c0_16 = arith.constant 0 : index
      %19 = vector.load %arg6[%c0_15, %c0_16] : memref<392x128xbf16, #tpu.memory_space<vmem>>, vector<392x128xbf16>
      tpu.vector_store %arg6[%c0_15, %c0_16], %18 {strides = array<i32>} : memref<392x128xbf16, #tpu.memory_space<vmem>>, vector<392x128xbf16>,
    } else {
    }
    return
  }
  func.func @transform_0(%arg0: i32, %arg1: i32, %arg2: i32) -> (i32, i32) {
    %c0_i32 = arith.constant 0 : i32
    return %arg0, %arg2 : i32, i32
  }
  func.func @transform_1(%arg0: i32, %arg1: i32, %arg2: i32) -> (i32, i32) {
    %c0_i32 = arith.constant 0 : i32
    return %arg2, %arg1 : i32, i32
  }
  func.func @transform_2(%arg0: i32, %arg1: i32, %arg2: i32) -> (i32, i32) {
    %c0_i32 = arith.constant 0 : i32
    %c0_i32_0 = arith.constant 0 : i32
    return %c0_i32, %arg1 : i32, i32
  }
  func.func @transform_3(%arg0: i32, %arg1: i32, %arg2: i32) -> (i32, i32) {
    %c0_i32 = arith.constant 0 : i32
    return %arg0, %arg1 : i32, i32
  }
}

module attributes {stable_mosaic.version = 11 : i64} {
  func.func @_maxpool_kernel(%arg0: i32, %arg1: memref<28x2x2x14x128xbf16, #tpu.memory_space<vmem>>, %arg2: memref<28x14x128xbf16, #tpu.memory_space<vmem>>) attributes {dimension_semantics = [#tpu.dimension_semantics<parallel>], iteration_bounds = array<i64: 1>, scalar_prefetch = 0 : i64, scratch_operands = 0 : i64, tpu.core_type = #tpu.core_type<tc>, window_params = [{transform_indices = @transform_0, window_bounds = array<i64: 28, 2, 2, 14, 128>}, {transform_indices = @transform_1, window_bounds = array<i64: 28, 14, 128>}]} {
    %c0 = arith.constant 0 : index
    %c0_0 = arith.constant 0 : index
    %c0_1 = arith.constant 0 : index
    %c0_2 = arith.constant 0 : index
    %c0_3 = arith.constant 0 : index
    %0 = vector.load %arg1[%c0, %c0_0, %c0_1, %c0_2, %c0_3] : memref<28x2x2x14x128xbf16, #tpu.memory_space<vmem>>, vector<28x1x1x14x128xbf16>
    %1 = vector.shape_cast %0 : vector<28x1x1x14x128xbf16> to vector<28x14x128xbf16>
    %c0_4 = arith.constant 0 : index
    %c0_5 = arith.constant 0 : index
    %c1 = arith.constant 1 : index
    %c0_6 = arith.constant 0 : index
    %c0_7 = arith.constant 0 : index
    %2 = vector.load %arg1[%c0_4, %c0_5, %c1, %c0_6, %c0_7] : memref<28x2x2x14x128xbf16, #tpu.memory_space<vmem>>, vector<28x1x1x14x128xbf16>
    %3 = vector.shape_cast %2 : vector<28x1x1x14x128xbf16> to vector<28x14x128xbf16>
    %4 = arith.maximumf %1, %3 : vector<28x14x128xbf16>
    %c0_8 = arith.constant 0 : index
    %c1_9 = arith.constant 1 : index
    %c0_10 = arith.constant 0 : index
    %c0_11 = arith.constant 0 : index
    %c0_12 = arith.constant 0 : index
    %5 = vector.load %arg1[%c0_8, %c1_9, %c0_10, %c0_11, %c0_12] : memref<28x2x2x14x128xbf16, #tpu.memory_space<vmem>>, vector<28x1x1x14x128xbf16>
    %6 = vector.shape_cast %5 : vector<28x1x1x14x128xbf16> to vector<28x14x128xbf16>
    %c0_13 = arith.constant 0 : index
    %c1_14 = arith.constant 1 : index
    %c1_15 = arith.constant 1 : index
    %c0_16 = arith.constant 0 : index
    %c0_17 = arith.constant 0 : index
    %7 = vector.load %arg1[%c0_13, %c1_14, %c1_15, %c0_16, %c0_17] : memref<28x2x2x14x128xbf16, #tpu.memory_space<vmem>>, vector<28x1x1x14x128xbf16>
    %8 = vector.shape_cast %7 : vector<28x1x1x14x128xbf16> to vector<28x14x128xbf16>
    %9 = arith.maximumf %6, %8 : vector<28x14x128xbf16>
    %10 = arith.maximumf %4, %9 : vector<28x14x128xbf16>
    %c0_18 = arith.constant 0 : index
    %c0_19 = arith.constant 0 : index
    %c0_20 = arith.constant 0 : index
    %11 = vector.load %arg2[%c0_18, %c0_19, %c0_20] : memref<28x14x128xbf16, #tpu.memory_space<vmem>>, vector<28x14x128xbf16>
    tpu.vector_store %arg2[%c0_18, %c0_19, %c0_20], %10 {strides = array<i32>} : memref<28x14x128xbf16, #tpu.memory_space<vmem>>, vector<28x14x128xbf16>,
    return
  }
  func.func @transform_0(%arg0: i32) -> (i32, i32, i32, i32, i32) {
    %c0_i32 = arith.constant 0 : i32
    %c0_i32_0 = arith.constant 0 : i32
    %c0_i32_1 = arith.constant 0 : i32
    %c0_i32_2 = arith.constant 0 : i32
    %c0_i32_3 = arith.constant 0 : i32
    return %arg0, %c0_i32, %c0_i32_0, %c0_i32_1, %c0_i32_2 : i32, i32, i32, i32, i32
  }
  func.func @transform_1(%arg0: i32) -> (i32, i32, i32) {
    %c0_i32 = arith.constant 0 : i32
    %c0_i32_0 = arith.constant 0 : i32
    %c0_i32_1 = arith.constant 0 : i32
    return %arg0, %c0_i32, %c0_i32_0 : i32, i32, i32
  }
}

module attributes {stable_mosaic.version = 11 : i64} {
  func.func @_matmul_bias_kernel(%arg0: i32, %arg1: i32, %arg2: i32, %arg3: memref<392x800xbf16, #tpu.memory_space<vmem>>, %arg4: memref<800x128xbf16, #tpu.memory_space<vmem>>, %arg5: memref<1x128xf32, #tpu.memory_space<vmem>>, %arg6: memref<392x128xbf16, #tpu.memory_space<vmem>>, %arg7: memref<392x128xf32, #tpu.memory_space<vmem>>) attributes {dimension_semantics = [#tpu.dimension_semantics<parallel>, #tpu.dimension_semantics<parallel>, #tpu.dimension_semantics<arbitrary>], iteration_bounds = array<i64: 1, 1, 1>, scalar_prefetch = 0 : i64, scratch_operands = 1 : i64, tpu.core_type = #tpu.core_type<tc>, window_params = [{transform_indices = @transform_0, window_bounds = array<i64: 392, 800>}, {transform_indices = @transform_1, window_bounds = array<i64: 800, 128>}, {transform_indices = @transform_2, window_bounds = array<i64: 1, 128>}, {transform_indices = @transform_3, window_bounds = array<i64: 392, 128>}]} {
    %c0_i32 = arith.constant 0 : i32
    %0 = arith.cmpi eq, %arg2, %c0_i32 : i32
    %1 = arith.extui %0 : i1 to i32
    %c0_i32_0 = arith.constant 0 : i32
    %2 = arith.cmpi ne, %1, %c0_i32_0 : i32
    scf.if %2 {
      %cst_10 = arith.constant 0.000000e+00 : f32
      %12 = vector.broadcast %cst_10 : f32 to vector<392x128xf32>
      %c0_11 = arith.constant 0 : index
      %c0_12 = arith.constant 0 : index
      %13 = vector.load %arg7[%c0_11, %c0_12] : memref<392x128xf32, #tpu.memory_space<vmem>>, vector<392x128xf32>
      tpu.vector_store %arg7[%c0_11, %c0_12], %12 {strides = array<i32>} : memref<392x128xf32, #tpu.memory_space<vmem>>, vector<392x128xf32>,
    } else {
    }
    %c0 = arith.constant 0 : index
    %c0_1 = arith.constant 0 : index
    %3 = vector.load %arg7[%c0, %c0_1] : memref<392x128xf32, #tpu.memory_space<vmem>>, vector<392x128xf32>
    %c0_2 = arith.constant 0 : index
    %c0_3 = arith.constant 0 : index
    %4 = vector.load %arg3[%c0_2, %c0_3] : memref<392x800xbf16, #tpu.memory_space<vmem>>, vector<392x800xbf16>
    %c0_4 = arith.constant 0 : index
    %c0_5 = arith.constant 0 : index
    %5 = vector.load %arg4[%c0_4, %c0_5] : memref<800x128xbf16, #tpu.memory_space<vmem>>, vector<800x128xbf16>
    %cst = arith.constant dense<0.000000e+00> : vector<392x128xf32>
    %6 = tpu.matmul %4, %5, %cst {dimension_numbers = #tpu.dot_dimension_numbers<[1], [0], [0], [1], [0, 0, 1, 1], [], []>} : vector<392x800xbf16>, vector<800x128xbf16>, vector<392x128xf32> -> vector<392x128xf32>
    %7 = arith.addf %3, %6 : vector<392x128xf32>
    %c0_6 = arith.constant 0 : index
    %c0_7 = arith.constant 0 : index
    %8 = vector.load %arg7[%c0_6, %c0_7] : memref<392x128xf32, #tpu.memory_space<vmem>>, vector<392x128xf32>
    tpu.vector_store %arg7[%c0_6, %c0_7], %7 {strides = array<i32>} : memref<392x128xf32, #tpu.memory_space<vmem>>, vector<392x128xf32>,
    %c0_i32_8 = arith.constant 0 : i32
    %9 = arith.cmpi eq, %arg2, %c0_i32_8 : i32
    %10 = arith.extui %9 : i1 to i32
    %c0_i32_9 = arith.constant 0 : i32
    %11 = arith.cmpi ne, %10, %c0_i32_9 : i32
    scf.if %11 {
      %c0_10 = arith.constant 0 : index
      %c0_11 = arith.constant 0 : index
      %12 = vector.load %arg7[%c0_10, %c0_11] : memref<392x128xf32, #tpu.memory_space<vmem>>, vector<392x128xf32>
      %c0_12 = arith.constant 0 : index
      %c0_13 = arith.constant 0 : index
      %13 = vector.load %arg5[%c0_12, %c0_13] : memref<1x128xf32, #tpu.memory_space<vmem>>, vector<1x128xf32>
      %14 = vector.broadcast %13 : vector<1x128xf32> to vector<392x128xf32>
      %15 = arith.addf %12, %14 : vector<392x128xf32>
      %cst_14 = arith.constant 0.000000e+00 : f32
      %16 = vector.broadcast %cst_14 : f32 to vector<392x128xf32>
      %17 = arith.maximumf %15, %16 : vector<392x128xf32>
      %18 = arith.truncf %17 : vector<392x128xf32> to vector<392x128xbf16>
      %c0_15 = arith.constant 0 : index
      %c0_16 = arith.constant 0 : index
      %19 = vector.load %arg6[%c0_15, %c0_16] : memref<392x128xbf16, #tpu.memory_space<vmem>>, vector<392x128xbf16>
      tpu.vector_store %arg6[%c0_15, %c0_16], %18 {strides = array<i32>} : memref<392x128xbf16, #tpu.memory_space<vmem>>, vector<392x128xbf16>,
    } else {
    }
    return
  }
  func.func @transform_0(%arg0: i32, %arg1: i32, %arg2: i32) -> (i32, i32) {
    %c0_i32 = arith.constant 0 : i32
    return %arg0, %arg2 : i32, i32
  }
  func.func @transform_1(%arg0: i32, %arg1: i32, %arg2: i32) -> (i32, i32) {
    %c0_i32 = arith.constant 0 : i32
    return %arg2, %arg1 : i32, i32
  }
  func.func @transform_2(%arg0: i32, %arg1: i32, %arg2: i32) -> (i32, i32) {
    %c0_i32 = arith.constant 0 : i32
    %c0_i32_0 = arith.constant 0 : i32
    return %c0_i32, %arg1 : i32, i32
  }
  func.func @transform_3(%arg0: i32, %arg1: i32, %arg2: i32) -> (i32, i32) {
    %c0_i32 = arith.constant 0 : i32
    return %arg0, %arg1 : i32, i32
  }
}

module attributes {stable_mosaic.version = 11 : i64} {
  func.func @_maxpool_kernel(%arg0: i32, %arg1: memref<14x2x2x7x128xbf16, #tpu.memory_space<vmem>>, %arg2: memref<14x7x128xbf16, #tpu.memory_space<vmem>>) attributes {dimension_semantics = [#tpu.dimension_semantics<parallel>], iteration_bounds = array<i64: 1>, scalar_prefetch = 0 : i64, scratch_operands = 0 : i64, tpu.core_type = #tpu.core_type<tc>, window_params = [{transform_indices = @transform_0, window_bounds = array<i64: 14, 2, 2, 7, 128>}, {transform_indices = @transform_1, window_bounds = array<i64: 14, 7, 128>}]} {
    %c0 = arith.constant 0 : index
    %c0_0 = arith.constant 0 : index
    %c0_1 = arith.constant 0 : index
    %c0_2 = arith.constant 0 : index
    %c0_3 = arith.constant 0 : index
    %0 = vector.load %arg1[%c0, %c0_0, %c0_1, %c0_2, %c0_3] : memref<14x2x2x7x128xbf16, #tpu.memory_space<vmem>>, vector<14x1x1x7x128xbf16>
    %1 = vector.shape_cast %0 : vector<14x1x1x7x128xbf16> to vector<14x7x128xbf16>
    %c0_4 = arith.constant 0 : index
    %c0_5 = arith.constant 0 : index
    %c1 = arith.constant 1 : index
    %c0_6 = arith.constant 0 : index
    %c0_7 = arith.constant 0 : index
    %2 = vector.load %arg1[%c0_4, %c0_5, %c1, %c0_6, %c0_7] : memref<14x2x2x7x128xbf16, #tpu.memory_space<vmem>>, vector<14x1x1x7x128xbf16>
    %3 = vector.shape_cast %2 : vector<14x1x1x7x128xbf16> to vector<14x7x128xbf16>
    %4 = arith.maximumf %1, %3 : vector<14x7x128xbf16>
    %c0_8 = arith.constant 0 : index
    %c1_9 = arith.constant 1 : index
    %c0_10 = arith.constant 0 : index
    %c0_11 = arith.constant 0 : index
    %c0_12 = arith.constant 0 : index
    %5 = vector.load %arg1[%c0_8, %c1_9, %c0_10, %c0_11, %c0_12] : memref<14x2x2x7x128xbf16, #tpu.memory_space<vmem>>, vector<14x1x1x7x128xbf16>
    %6 = vector.shape_cast %5 : vector<14x1x1x7x128xbf16> to vector<14x7x128xbf16>
    %c0_13 = arith.constant 0 : index
    %c1_14 = arith.constant 1 : index
    %c1_15 = arith.constant 1 : index
    %c0_16 = arith.constant 0 : index
    %c0_17 = arith.constant 0 : index
    %7 = vector.load %arg1[%c0_13, %c1_14, %c1_15, %c0_16, %c0_17] : memref<14x2x2x7x128xbf16, #tpu.memory_space<vmem>>, vector<14x1x1x7x128xbf16>
    %8 = vector.shape_cast %7 : vector<14x1x1x7x128xbf16> to vector<14x7x128xbf16>
    %9 = arith.maximumf %6, %8 : vector<14x7x128xbf16>
    %10 = arith.maximumf %4, %9 : vector<14x7x128xbf16>
    %c0_18 = arith.constant 0 : index
    %c0_19 = arith.constant 0 : index
    %c0_20 = arith.constant 0 : index
    %11 = vector.load %arg2[%c0_18, %c0_19, %c0_20] : memref<14x7x128xbf16, #tpu.memory_space<vmem>>, vector<14x7x128xbf16>
    tpu.vector_store %arg2[%c0_18, %c0_19, %c0_20], %10 {strides = array<i32>} : memref<14x7x128xbf16, #tpu.memory_space<vmem>>, vector<14x7x128xbf16>,
    return
  }
  func.func @transform_0(%arg0: i32) -> (i32, i32, i32, i32, i32) {
    %c0_i32 = arith.constant 0 : i32
    %c0_i32_0 = arith.constant 0 : i32
    %c0_i32_1 = arith.constant 0 : i32
    %c0_i32_2 = arith.constant 0 : i32
    %c0_i32_3 = arith.constant 0 : i32
    return %arg0, %c0_i32, %c0_i32_0, %c0_i32_1, %c0_i32_2 : i32, i32, i32, i32, i32
  }
  func.func @transform_1(%arg0: i32) -> (i32, i32, i32) {
    %c0_i32 = arith.constant 0 : i32
    %c0_i32_0 = arith.constant 0 : i32
    %c0_i32_1 = arith.constant 0 : i32
    return %arg0, %c0_i32, %c0_i32_0 : i32, i32, i32
  }
}

module attributes {stable_mosaic.version = 11 : i64} {
  func.func @_fc_fused_kernel(%arg0: i32, %arg1: memref<8x512xbf16, #tpu.memory_space<vmem>>, %arg2: memref<512x512xbf16, #tpu.memory_space<vmem>>, %arg3: memref<1x512xf32, #tpu.memory_space<vmem>>, %arg4: memref<512x128xbf16, #tpu.memory_space<vmem>>, %arg5: memref<1x128xf32, #tpu.memory_space<vmem>>, %arg6: memref<8x128xf32, #tpu.memory_space<vmem>>, %arg7: memref<8x512xf32, #tpu.memory_space<vmem>>) attributes {dimension_semantics = [#tpu.dimension_semantics<arbitrary>], iteration_bounds = array<i64: 7>, scalar_prefetch = 0 : i64, scratch_operands = 1 : i64, tpu.core_type = #tpu.core_type<tc>, window_params = [{transform_indices = @transform_0, window_bounds = array<i64: 8, 512>}, {transform_indices = @transform_1, window_bounds = array<i64: 512, 512>}, {pipeline_mode = #tpu.pipeline_mode<synchronous>, transform_indices = @transform_2, window_bounds = array<i64: 1, 512>}, {pipeline_mode = #tpu.pipeline_mode<synchronous>, transform_indices = @transform_3, window_bounds = array<i64: 512, 128>}, {pipeline_mode = #tpu.pipeline_mode<synchronous>, transform_indices = @transform_4, window_bounds = array<i64: 1, 128>}, {pipeline_mode = #tpu.pipeline_mode<synchronous>, transform_indices = @transform_5, window_bounds = array<i64: 8, 128>}]} {
    %c0_i32 = arith.constant 0 : i32
    %0 = arith.cmpi eq, %arg0, %c0_i32 : i32
    %1 = arith.extui %0 : i1 to i32
    %c0_i32_0 = arith.constant 0 : i32
    %2 = arith.cmpi ne, %1, %c0_i32_0 : i32
    scf.if %2 {
      %cst_9 = arith.constant 0.000000e+00 : f32
      %12 = vector.broadcast %cst_9 : f32 to vector<8x512xf32>
      %c0_10 = arith.constant 0 : index
      %c0_11 = arith.constant 0 : index
      %13 = vector.load %arg7[%c0_10, %c0_11] : memref<8x512xf32, #tpu.memory_space<vmem>>, vector<8x512xf32>
      tpu.vector_store %arg7[%c0_10, %c0_11], %12 {strides = array<i32>} : memref<8x512xf32, #tpu.memory_space<vmem>>, vector<8x512xf32>,
    } else {
    }
    %c0 = arith.constant 0 : index
    %c0_1 = arith.constant 0 : index
    %3 = vector.load %arg7[%c0, %c0_1] : memref<8x512xf32, #tpu.memory_space<vmem>>, vector<8x512xf32>
    %c0_2 = arith.constant 0 : index
    %c0_3 = arith.constant 0 : index
    %4 = vector.load %arg1[%c0_2, %c0_3] : memref<8x512xbf16, #tpu.memory_space<vmem>>, vector<8x512xbf16>
    %c0_4 = arith.constant 0 : index
    %c0_5 = arith.constant 0 : index
    %5 = vector.load %arg2[%c0_4, %c0_5] : memref<512x512xbf16, #tpu.memory_space<vmem>>, vector<512x512xbf16>
    %cst = arith.constant dense<0.000000e+00> : vector<8x512xf32>
    %6 = tpu.matmul %4, %5, %cst {dimension_numbers = #tpu.dot_dimension_numbers<[1], [0], [0], [1], [0, 0, 1, 1], [], []>} : vector<8x512xbf16>, vector<512x512xbf16>, vector<8x512xf32> -> vector<8x512xf32>
    %7 = arith.addf %3, %6 : vector<8x512xf32>
    %c0_6 = arith.constant 0 : index
    %c0_7 = arith.constant 0 : index
    %8 = vector.load %arg7[%c0_6, %c0_7] : memref<8x512xf32, #tpu.memory_space<vmem>>, vector<8x512xf32>
    tpu.vector_store %arg7[%c0_6, %c0_7], %7 {strides = array<i32>} : memref<8x512xf32, #tpu.memory_space<vmem>>, vector<8x512xf32>,
    %c6_i32 = arith.constant 6 : i32
    %9 = arith.cmpi eq, %arg0, %c6_i32 : i32
    %10 = arith.extui %9 : i1 to i32
    %c0_i32_8 = arith.constant 0 : i32
    %11 = arith.cmpi ne, %10, %c0_i32_8 : i32
    scf.if %11 {
      %c0_9 = arith.constant 0 : index
      %c0_10 = arith.constant 0 : index
      %12 = vector.load %arg7[%c0_9, %c0_10] : memref<8x512xf32, #tpu.memory_space<vmem>>, vector<8x512xf32>
      %c0_11 = arith.constant 0 : index
      %c0_12 = arith.constant 0 : index
      %13 = vector.load %arg3[%c0_11, %c0_12] : memref<1x512xf32, #tpu.memory_space<vmem>>, vector<1x512xf32>
      %14 = vector.broadcast %13 : vector<1x512xf32> to vector<8x512xf32>
      %15 = arith.addf %12, %14 : vector<8x512xf32>
      %cst_13 = arith.constant 0.000000e+00 : f32
      %16 = vector.broadcast %cst_13 : f32 to vector<8x512xf32>
      %17 = arith.maximumf %15, %16 : vector<8x512xf32>
      %18 = arith.truncf %17 : vector<8x512xf32> to vector<8x512xbf16>
      %c0_14 = arith.constant 0 : index
      %c0_15 = arith.constant 0 : index
      %19 = vector.load %arg4[%c0_14, %c0_15] : memref<512x128xbf16, #tpu.memory_space<vmem>>, vector<512x128xbf16>
      %cst_16 = arith.constant dense<0.000000e+00> : vector<8x128xf32>
      %20 = tpu.matmul %18, %19, %cst_16 {dimension_numbers = #tpu.dot_dimension_numbers<[1], [0], [0], [1], [0, 0, 1, 1], [], []>} : vector<8x512xbf16>, vector<512x128xbf16>, vector<8x128xf32> -> vector<8x128xf32>
      %c0_17 = arith.constant 0 : index
      %c0_18 = arith.constant 0 : index
      %21 = vector.load %arg5[%c0_17, %c0_18] : memref<1x128xf32, #tpu.memory_space<vmem>>, vector<1x128xf32>
      %22 = vector.broadcast %21 : vector<1x128xf32> to vector<8x128xf32>
      %23 = arith.addf %20, %22 : vector<8x128xf32>
      %c0_19 = arith.constant 0 : index
      %c0_20 = arith.constant 0 : index
      %24 = vector.load %arg6[%c0_19, %c0_20] : memref<8x128xf32, #tpu.memory_space<vmem>>, vector<8x128xf32>
      tpu.vector_store %arg6[%c0_19, %c0_20], %23 {strides = array<i32>} : memref<8x128xf32, #tpu.memory_space<vmem>>, vector<8x128xf32>,
    } else {
    }
    return
  }
  func.func @transform_0(%arg0: i32) -> (i32, i32) {
    %c0_i32 = arith.constant 0 : i32
    %c0_i32_0 = arith.constant 0 : i32
    return %c0_i32, %arg0 : i32, i32
  }
  func.func @transform_1(%arg0: i32) -> (i32, i32) {
    %c0_i32 = arith.constant 0 : i32
    %c0_i32_0 = arith.constant 0 : i32
    return %arg0, %c0_i32 : i32, i32
  }
  func.func @transform_2(%arg0: i32) -> (i32, i32) {
    %c0_i32 = arith.constant 0 : i32
    %c0_i32_0 = arith.constant 0 : i32
    %c0_i32_1 = arith.constant 0 : i32
    return %c0_i32, %c0_i32_0 : i32, i32
  }
  func.func @transform_3(%arg0: i32) -> (i32, i32) {
    %c0_i32 = arith.constant 0 : i32
    %c0_i32_0 = arith.constant 0 : i32
    %c0_i32_1 = arith.constant 0 : i32
    return %c0_i32, %c0_i32_0 : i32, i32
  }
  func.func @transform_4(%arg0: i32) -> (i32, i32) {
    %c0_i32 = arith.constant 0 : i32
    %c0_i32_0 = arith.constant 0 : i32
    %c0_i32_1 = arith.constant 0 : i32
    return %c0_i32, %c0_i32_0 : i32, i32
  }
  func.func @transform_5(%arg0: i32) -> (i32, i32) {
    %c0_i32 = arith.constant 0 : i32
    %c0_i32_0 = arith.constant 0 : i32
    %c0_i32_1 = arith.constant 0 : i32
    return %c0_i32, %c0_i32_0 : i32, i32
  }
}

</mosaic_0001>

<llo_original>
// kernel: cnn_fedavg_forward.5
$region0: #{cnn_fedavg_forward.5}
  #allocation0 [shape = 'u32[]', space=smem, size = 0x4, offset = 0x4, fixed_abs, tag = 'smem constant byte address 0x4 - core index']
  #allocation1 [shape = 'u32[144,128]{1,0:T(1,128)}', space=vmem, size = 0x12000, scoped, tag = 'internal scratch']
  #allocation2 [shape = 'f32[392,128]{1,0:T(8,128)}', space=vmem, size = 0x31000, scoped, tag = 'scratch operand']
  %s0 = inlined_call_operand.vmem [shape: bf16[1568,25], index: 0, kind: input, shape index: {}]
  %s1 = inlined_call_operand.vmem [shape: bf16[25,128], index: 1, kind: input, shape index: {}]
  %s2 = inlined_call_operand.vmem [shape: f32[1,128], index: 2, kind: input, shape index: {}]
  %s3 = inlined_call_operand.vmem [shape: bf16[1568,128], index: 3, kind: output, shape index: {}]
  %s4 = sld [smem:[#allocation0]]
  $region53: #{cnn_fedavg_forward.5} parent=0
    _
  %s6 = ssub.s32 1, %s4
  %s7 = scalar_select 0, %s6, %s4
  loop: start=0, step=1, limit=6
  $region2: #{cnn_fedavg_forward.5} parent=0 // loop_pre_header
    _
  $region3: #{cnn_fedavg_forward.5} parent=0 // loop_header
    %s9 = sphi 0, %s13
    %p10 = scmp.ge.s32.totalorder %s9, 6
    %s16 = sphi 0, %s35
    %s17 = sphi 0, %s31
    %s18 = sphi 0, %s27
    %s19 = sphi 0, %s16
    %s20 = sphi 0, %s17
    %s21 = sphi 0, %s18
    %s22 = sphi 0, %s19
    %s23 = sphi 0, %s20
    %s24 = sphi 0, %s21
    %s40 = sphi 0, %s42
    %s43 = sphi 0, %s40
    %s44 = sphi 0, %s43
    %s60 = sphi 0, %s44
    %s68 = sphi 0, %s70
    %s71 = sphi 0, %s68
    %s72 = sphi 0, %s71
    %s88 = sphi 0, %s72
    %s94 = sphi 0, %s96
    %s97 = sphi 0, %s94
    %s98 = sphi 0, %s97
    %s114 = sphi 0, %s98
    %s122 = sphi 0, %s124
    %s125 = sphi 0, %s122
    %s126 = sphi 0, %s125
    %s142 = sphi 0, %s126
  $region4: #{cnn_fedavg_forward.5} parent=0 // loop_header_branch
    %12 = sbr.rel (%p10) target = $region8
  $region5: #{cnn_fedavg_forward.5} parent=0 // loop_body
    %s14 = ssub.s32 %s9, 1
    %s15 = ssub.s32 %s9, 2
    %s25 = sadd.s32 1, %s18
    %p26 = scmp.ge.s32.totalorder %s25, 1
    %s27 = scalar_select %p26, 0, %s25
    %s28 = sadd.s32 1, %s17
    %s29 = scalar_select %p26, %s28, %s17
    %p30 = scmp.ge.s32.totalorder %s29, 1
    %s31 = scalar_select %p30, 0, %s29
    %s32 = sadd.s32 1, %s16
    %s33 = scalar_select %p30, %s32, %s16
    %p34 = scmp.ge.s32.totalorder %s33, 4
    %s35 = scalar_select %p34, 0, %s33
    %s36 = ssub.s32 %s16, %s35
    %s37 = ssub.s32 %s18, %s27
    %s38 = sor.u32 %s36, %s37
    %p39 = scmp.eq.s32.totalorder %s38, 0
    %s41 = sadd.s32 %s40, 1
    %s42 = scalar_select %p39, %s40, %s41
    %p45 = pneg %p39
    %p46 = scmp.eq.s32.totalorder %s9, 3
    %p47 = por %p45, %p46
    %p48 = scmp.ne.s32.totalorder %s40, %s43
    %p49 = scmp.eq.s32.totalorder %s9, 0
    %p50 = por %p48, %p49
    %p51 = scmp.ne.s32.totalorder %s40, %s43
    %p52 = scmp.eq.s32.totalorder %s14, 3
    %p53 = por %p51, %p52
    %p54 = scmp.ne.s32.totalorder %s43, %s44
    %p55 = scmp.eq.s32.totalorder %s14, 0
    %p56 = por %p54, %p55
    %p57 = scmp.ne.s32.totalorder %s43, %s44
    %p58 = scmp.eq.s32.totalorder %s15, 3
    %p59 = por %p57, %p58
    %p61 = scmp.ne.s32.totalorder %s44, %s60
    %p62 = scmp.eq.s32.totalorder %s15, 0
    %p63 = por %p61, %p62
    %s64 = ssub.s32 %s18, %s27
    %s65 = ssub.s32 %s17, %s31
    %s66 = sor.u32 %s64, %s65
    %p67 = scmp.eq.s32.totalorder %s66, 0
    %s69 = sadd.s32 %s68, 1
    %s70 = scalar_select %p67, %s68, %s69
    %p73 = pneg %p67
    %p74 = scmp.eq.s32.totalorder %s9, 3
    %p75 = por %p73, %p74
    %p76 = scmp.ne.s32.totalorder %s68, %s71
    %p77 = scmp.eq.s32.totalorder %s9, 0
    %p78 = por %p76, %p77
    %p79 = scmp.ne.s32.totalorder %s68, %s71
    %p80 = scmp.eq.s32.totalorder %s14, 3
    %p81 = por %p79, %p80
    %p82 = scmp.ne.s32.totalorder %s71, %s72
    %p83 = scmp.eq.s32.totalorder %s14, 0
    %p84 = por %p82, %p83
    %p85 = scmp.ne.s32.totalorder %s71, %s72
    %p86 = scmp.eq.s32.totalorder %s15, 3
    %p87 = por %p85, %p86
    %p89 = scmp.ne.s32.totalorder %s72, %s88
    %p90 = scmp.eq.s32.totalorder %s15, 0
    %p91 = por %p89, %p90
    %s92 = ssub.s32 %s17, %s31
    %p93 = scmp.eq.s32.totalorder %s92, 0
    %s95 = sadd.s32 %s94, 1
    %s96 = scalar_select %p93, %s94, %s95
    %p99 = pneg %p93
    %p100 = scmp.eq.s32.totalorder %s9, 3
    %p101 = por %p99, %p100
    %p102 = scmp.ne.s32.totalorder %s94, %s97
    %p103 = scmp.eq.s32.totalorder %s9, 0
    %p104 = por %p102, %p103
    %p105 = scmp.ne.s32.totalorder %s94, %s97
    %p106 = scmp.eq.s32.totalorder %s14, 3
    %p107 = por %p105, %p106
    %p108 = scmp.ne.s32.totalorder %s97, %s98
    %p109 = scmp.eq.s32.totalorder %s14, 0
    %p110 = por %p108, %p109
    %p111 = scmp.ne.s32.totalorder %s97, %s98
    %p112 = scmp.eq.s32.totalorder %s15, 3
    %p113 = por %p111, %p112
    %p115 = scmp.ne.s32.totalorder %s98, %s114
    %p116 = scmp.eq.s32.totalorder %s15, 0
    %p117 = por %p115, %p116
    %s118 = ssub.s32 %s16, %s35
    %s119 = ssub.s32 %s17, %s31
    %s120 = sor.u32 %s118, %s119
    %p121 = scmp.eq.s32.totalorder %s120, 0
    %s123 = sadd.s32 %s122, 1
    %s124 = scalar_select %p121, %s122, %s123
    %p127 = pneg %p121
    %p128 = scmp.eq.s32.totalorder %s9, 3
    %p129 = por %p127, %p128
    %p130 = scmp.ne.s32.totalorder %s122, %s125
    %p131 = scmp.eq.s32.totalorder %s9, 0
    %p132 = por %p130, %p131
    %p133 = scmp.ne.s32.totalorder %s122, %s125
    %p134 = scmp.eq.s32.totalorder %s14, 3
    %p135 = por %p133, %p134
    %p136 = scmp.ne.s32.totalorder %s125, %s126
    %p137 = scmp.eq.s32.totalorder %s14, 0
    %p138 = por %p136, %p137
    %p139 = scmp.ne.s32.totalorder %s125, %s126
    %p140 = scmp.eq.s32.totalorder %s15, 3
    %p141 = por %p139, %p140
    %p143 = scmp.ne.s32.totalorder %s126, %s142
    %p144 = scmp.eq.s32.totalorder %s15, 0
    %p145 = por %p143, %p144
    %p146 = scmp.le.s32.totalorder 1, %s9
    %p147 = scmp.lt.s32.totalorder %s9, 5
    %p148 = pnand %p146, %p147
    %p149 = pneg %p148
    // Predicated region
    $region9: #{cnn_fedavg_forward.5} parent=5 // pred_check
      _
    $region10: #{cnn_fedavg_forward.5} parent=5 // pred_check_branch
      %151 = sbr.rel (%p148) target = $region12
    $region11: #{cnn_fedavg_forward.5} parent=5 // pred_region
      %s152 = ssub.s32 %s9, 1
      // Predicated region
      $region13: #{cnn_fedavg_forward.5} parent=11 // pred_check
        %p153 = pneg %p84
      $region14: #{cnn_fedavg_forward.5} parent=11 // pred_check_branch
        %155 = sbr.rel (%p153) target = $region16
      $region15: #{cnn_fedavg_forward.5} parent=11 // pred_region
        %s156 = smul.u32 4, %s21
        %p157 = scmp.lt.s32.totalorder %s156, 3
        %s158 = scalar_select %p157, %s156, 3
        %p159 = scmp.lt.s32.totalorder %s20, 0
        %s160 = scalar_select %p159, %s20, 0
        %s161 = sadd.s32 %s160, %s158
        %s162 = smul.addr %s161, 4
        %s163 = scalar_lea.vmem %s1, %s162
        %s164 = smul.u32 4, %s21
      $region16: #{cnn_fedavg_forward.5} parent=11 // pred_fallthru
        _
      // Predicated region
      $region17: #{cnn_fedavg_forward.5} parent=11 // pred_check
        %p165 = pneg %p110
      $region18: #{cnn_fedavg_forward.5} parent=11 // pred_check_branch
        %167 = sbr.rel (%p165) target = $region20
      $region19: #{cnn_fedavg_forward.5} parent=11 // pred_region
        %p168 = scmp.lt.s32.totalorder %s20, 0
        %s169 = scalar_select %p168, %s20, 0
        %s170 = scalar_lea.vmem %s2, %s169
      $region20: #{cnn_fedavg_forward.5} parent=11 // pred_fallthru
        _
    $region12: #{cnn_fedavg_forward.5} parent=5 // pred_fallthru
      _
    %p171 = scmp.lt.s32.totalorder %s9, 4
    // Predicated region
    $region21: #{cnn_fedavg_forward.5} parent=5 // pred_check
      %p172 = pneg %p171
    $region22: #{cnn_fedavg_forward.5} parent=5 // pred_check_branch
      %174 = sbr.rel (%p172) target = $region24
    $region23: #{cnn_fedavg_forward.5} parent=5 // pred_region
      // Predicated region
      $region25: #{cnn_fedavg_forward.5} parent=23 // pred_check
        %p175 = pneg %p50
      $region26: #{cnn_fedavg_forward.5} parent=23 // pred_check_branch
        %177 = sbr.rel (%p175) target = $region28
      $region27: #{cnn_fedavg_forward.5} parent=23 // pred_region
        %s178 = smul.u32 49, %s16
        %p179 = scmp.lt.s32.totalorder %s178, 195
        %s180 = scalar_select %p179, %s178, 195
        %p181 = scmp.lt.s32.totalorder %s18, 0
        %s182 = scalar_select %p181, %s18, 0
        %s183 = sadd.s32 %s182, %s180
        %s184 = smul.addr %s183, 4
        %s185 = scalar_lea.vmem %s0, %s184
        %s186 = smul.u32 49, %s16
      $region28: #{cnn_fedavg_forward.5} parent=23 // pred_fallthru
        _
    $region24: #{cnn_fedavg_forward.5} parent=5 // pred_fallthru
      _
    %p187 = scmp.le.s32.totalorder 1, %s9
    %p188 = scmp.lt.s32.totalorder %s9, 5
    %p189 = pnand %p187, %p188
    %p190 = pneg %p189
    // Predicated region
    $region29: #{cnn_fedavg_forward.5} parent=5 // pred_check
      _
    $region30: #{cnn_fedavg_forward.5} parent=5 // pred_check_branch
      %192 = sbr.rel (%p189) target = $region32
    $region31: #{cnn_fedavg_forward.5} parent=5 // pred_region
      %s193 = ssub.s32 %s9, 1
      %s194 = smul.u32 49, %s19
      %p195 = scmp.lt.s32.totalorder %s194, 195
      %s196 = scalar_select %p195, %s194, 195
      %p197 = scmp.lt.s32.totalorder %s21, 0
      %s198 = scalar_select %p197, %s21, 0
      %s199 = sadd.s32 %s198, %s196
      %s200 = smul.addr %s199, 4
      %s201 = scalar_lea.vmem %s0, %s200
      %p202 = pneg %p56
      %p203 = pneg %p53
      %s204 = smul.u32 4, %s21
      %p205 = scmp.lt.s32.totalorder %s204, 3
      %s206 = scalar_select %p205, %s204, 3
      %p207 = scmp.lt.s32.totalorder %s20, 0
      %s208 = scalar_select %p207, %s20, 0
      %s209 = sadd.s32 %s208, %s206
      %s210 = smul.addr %s209, 4
      %s211 = scalar_lea.vmem %s1, %s210
      %p212 = pneg %p84
      %p213 = pneg %p81
      %p214 = scmp.lt.s32.totalorder %s20, 0
      %s215 = scalar_select %p214, %s20, 0
      %s216 = scalar_lea.vmem %s2, %s215
      %p217 = pneg %p110
      %p218 = pneg %p107
      %p219 = pneg %p138
      %p220 = pneg %p135
      %s221 = smul.u32 49, %s19
      %p222 = scmp.lt.s32.totalorder %s221, 195
      %s223 = scalar_select %p222, %s221, 195
      %p224 = scmp.lt.s32.totalorder %s20, 0
      %s225 = scalar_select %p224, %s20, 0
      %s226 = sadd.s32 %s225, %s223
      %s227 = smul.addr %s226, 4
      %s228 = scalar_lea.vmem %s3, %s227
      %s229 = smul.u32 49, %s19
      %p230 = scmp.lt.s32.totalorder %s229, 195
      %s231 = scalar_select %p230, %s229, 195
      %p232 = scmp.lt.s32.totalorder %s21, 0
      %s233 = scalar_select %p232, %s21, 0
      %s234 = sadd.s32 %s233, %s231
      %s235 = smul.addr %s234, 4
      %s236 = scalar_lea.vmem %s0, %s235
      %s237 = smul.u32 49, %s19
      %s238 = smul.u32 4, %s21
      %p239 = scmp.lt.s32.totalorder %s238, 3
      %s240 = scalar_select %p239, %s238, 3
      %p241 = scmp.lt.s32.totalorder %s20, 0
      %s242 = scalar_select %p241, %s20, 0
      %s243 = sadd.s32 %s242, %s240
      %s244 = smul.addr %s243, 4
      %s245 = scalar_lea.vmem %s1, %s244
      %s246 = smul.u32 4, %s21
      %p247 = scmp.lt.s32.totalorder %s20, 0
      %s248 = scalar_select %p247, %s20, 0
      %s249 = scalar_lea.vmem %s2, %s248
      %s250 = smul.u32 49, %s19
      %p251 = scmp.lt.s32.totalorder %s250, 195
      %s252 = scalar_select %p251, %s250, 195
      %p253 = scmp.lt.s32.totalorder %s20, 0
      %s254 = scalar_select %p253, %s20, 0
      %s255 = sadd.s32 %s254, %s252
      %s256 = smul.addr %s255, 4
      %s257 = scalar_lea.vmem %s3, %s256
      %s258 = smul.u32 49, %s19
      %p260 = scmp.eq.s32.totalorder %s21, 0
      // Predicated region
      $region33: #{cnn_fedavg_forward.5} parent=31 // pred_check
        %p261 = pneg %p260
      $region34: #{cnn_fedavg_forward.5} parent=31 // pred_check_branch
        %263 = sbr.rel (%p261) target = $region36
      $region35: #{cnn_fedavg_forward.5} parent=31 // pred_region
        %264 = vst [vmem:[#allocation2] sm:$0xff] 0.0
        %265 = vst [vmem:[#allocation2 + $0x8] sm:$0xff] 0.0
        %266 = vst [vmem:[#allocation2 + $0x10] sm:$0xff] 0.0
        %267 = vst [vmem:[#allocation2 + $0x18] sm:$0xff] 0.0
        %268 = vst [vmem:[#allocation2 + $0x20] sm:$0xff] 0.0
        %269 = vst [vmem:[#allocation2 + $0x28] sm:$0xff] 0.0
        %270 = vst [vmem:[#allocation2 + $0x30] sm:$0xff] 0.0
        %271 = vst [vmem:[#allocation2 + $0x38] sm:$0xff] 0.0
        %272 = vst [vmem:[#allocation2 + $0x40] sm:$0xff] 0.0
        %273 = vst [vmem:[#allocation2 + $0x48] sm:$0xff] 0.0
        %274 = vst [vmem:[#allocation2 + $0x50] sm:$0xff] 0.0
        %275 = vst [vmem:[#allocation2 + $0x58] sm:$0xff] 0.0
        %276 = vst [vmem:[#allocation2 + $0x60] sm:$0xff] 0.0
        %277 = vst [vmem:[#allocation2 + $0x68] sm:$0xff] 0.0
        %278 = vst [vmem:[#allocation2 + $0x70] sm:$0xff] 0.0
        %279 = vst [vmem:[#allocation2 + $0x78] sm:$0xff] 0.0
        %280 = vst [vmem:[#allocation2 + $0x80] sm:$0xff] 0.0
        %281 = vst [vmem:[#allocation2 + $0x88] sm:$0xff] 0.0
        %282 = vst [vmem:[#allocation2 + $0x90] sm:$0xff] 0.0
        %283 = vst [vmem:[#allocation2 + $0x98] sm:$0xff] 0.0
        %284 = vst [vmem:[#allocation2 + $0xa0] sm:$0xff] 0.0
        %285 = vst [vmem:[#allocation2 + $0xa8] sm:$0xff] 0.0
        %286 = vst [vmem:[#allocation2 + $0xb0] sm:$0xff] 0.0
        %287 = vst [vmem:[#allocation2 + $0xb8] sm:$0xff] 0.0
        %288 = vst [vmem:[#allocation2 + $0xc0] sm:$0xff] 0.0
        %289 = vst [vmem:[#allocation2 + $0xc8] sm:$0xff] 0.0
        %290 = vst [vmem:[#allocation2 + $0xd0] sm:$0xff] 0.0
        %291 = vst [vmem:[#allocation2 + $0xd8] sm:$0xff] 0.0
        %292 = vst [vmem:[#allocation2 + $0xe0] sm:$0xff] 0.0
        %293 = vst [vmem:[#allocation2 + $0xe8] sm:$0xff] 0.0
        %294 = vst [vmem:[#allocation2 + $0xf0] sm:$0xff] 0.0
        %295 = vst [vmem:[#allocation2 + $0xf8] sm:$0xff] 0.0
        %296 = vst [vmem:[#allocation2 + $0x100] sm:$0xff] 0.0
        %297 = vst [vmem:[#allocation2 + $0x108] sm:$0xff] 0.0
        %298 = vst [vmem:[#allocation2 + $0x110] sm:$0xff] 0.0
        %299 = vst [vmem:[#allocation2 + $0x118] sm:$0xff] 0.0
        %300 = vst [vmem:[#allocation2 + $0x120] sm:$0xff] 0.0
        %301 = vst [vmem:[#allocation2 + $0x128] sm:$0xff] 0.0
        %302 = vst [vmem:[#allocation2 + $0x130] sm:$0xff] 0.0
        %303 = vst [vmem:[#allocation2 + $0x138] sm:$0xff] 0.0
        %304 = vst [vmem:[#allocation2 + $0x140] sm:$0xff] 0.0
        %305 = vst [vmem:[#allocation2 + $0x148] sm:$0xff] 0.0
        %306 = vst [vmem:[#allocation2 + $0x150] sm:$0xff] 0.0
        %307 = vst [vmem:[#allocation2 + $0x158] sm:$0xff] 0.0
        %308 = vst [vmem:[#allocation2 + $0x160] sm:$0xff] 0.0
        %309 = vst [vmem:[#allocation2 + $0x168] sm:$0xff] 0.0
        %310 = vst [vmem:[#allocation2 + $0x170] sm:$0xff] 0.0
        %311 = vst [vmem:[#allocation2 + $0x178] sm:$0xff] 0.0
        %312 = vst [vmem:[#allocation2 + $0x180] sm:$0xff] 0.0
      $region36: #{cnn_fedavg_forward.5} parent=31 // pred_fallthru
        _
      %v313 = vld [vmem:[#allocation2] sm:$0xff]
      %v314 = vld [vmem:[#allocation2 + $0x8] sm:$0xff]
      %v315 = vld [vmem:[#allocation2 + $0x10] sm:$0xff]
      %v316 = vld [vmem:[#allocation2 + $0x18] sm:$0xff]
      %v317 = vld [vmem:[#allocation2 + $0x20] sm:$0xff]
      %v318 = vld [vmem:[#allocation2 + $0x28] sm:$0xff]
      %v319 = vld [vmem:[#allocation2 + $0x30] sm:$0xff]
      %v320 = vld [vmem:[#allocation2 + $0x38] sm:$0xff]
      %v321 = vld [vmem:[#allocation2 + $0x40] sm:$0xff]
      %v322 = vld [vmem:[#allocation2 + $0x48] sm:$0xff]
      %v323 = vld [vmem:[#allocation2 + $0x50] sm:$0xff]
      %v324 = vld [vmem:[#allocation2 + $0x58] sm:$0xff]
      %v325 = vld [vmem:[#allocation2 + $0x60] sm:$0xff]
      %v326 = vld [vmem:[#allocation2 + $0x68] sm:$0xff]
      %v327 = vld [vmem:[#allocation2 + $0x70] sm:$0xff]
      %v328 = vld [vmem:[#allocation2 + $0x78] sm:$0xff]
      %v329 = vld [vmem:[#allocation2 + $0x80] sm:$0xff]
      %v330 = vld [vmem:[#allocation2 + $0x88] sm:$0xff]
      %v331 = vld [vmem:[#allocation2 + $0x90] sm:$0xff]
      %v332 = vld [vmem:[#allocation2 + $0x98] sm:$0xff]
      %v333 = vld [vmem:[#allocation2 + $0xa0] sm:$0xff]
      %v334 = vld [vmem:[#allocation2 + $0xa8] sm:$0xff]
      %v335 = vld [vmem:[#allocation2 + $0xb0] sm:$0xff]
      %v336 = vld [vmem:[#allocation2 + $0xb8] sm:$0xff]
      %v337 = vld [vmem:[#allocation2 + $0xc0] sm:$0xff]
      %v338 = vld [vmem:[#allocation2 + $0xc8] sm:$0xff]
      %v339 = vld [vmem:[#allocation2 + $0xd0] sm:$0xff]
      %v340 = vld [vmem:[#allocation2 + $0xd8] sm:$0xff]
      %v341 = vld [vmem:[#allocation2 + $0xe0] sm:$0xff]
      %v342 = vld [vmem:[#allocation2 + $0xe8] sm:$0xff]
      %v343 = vld [vmem:[#allocation2 + $0xf0] sm:$0xff]
      %v344 = vld [vmem:[#allocation2 + $0xf8] sm:$0xff]
      %v345 = vld [vmem:[#allocation2 + $0x100] sm:$0xff]
      %v346 = vld [vmem:[#allocation2 + $0x108] sm:$0xff]
      %v347 = vld [vmem:[#allocation2 + $0x110] sm:$0xff]
      %v348 = vld [vmem:[#allocation2 + $0x118] sm:$0xff]
      %v349 = vld [vmem:[#allocation2 + $0x120] sm:$0xff]
      %v350 = vld [vmem:[#allocation2 + $0x128] sm:$0xff]
      %v351 = vld [vmem:[#allocation2 + $0x130] sm:$0xff]
      %v352 = vld [vmem:[#allocation2 + $0x138] sm:$0xff]
      %v353 = vld [vmem:[#allocation2 + $0x140] sm:$0xff]
      %v354 = vld [vmem:[#allocation2 + $0x148] sm:$0xff]
      %v355 = vld [vmem:[#allocation2 + $0x150] sm:$0xff]
      %v356 = vld [vmem:[#allocation2 + $0x158] sm:$0xff]
      %v357 = vld [vmem:[#allocation2 + $0x160] sm:$0xff]
      %v358 = vld [vmem:[#allocation2 + $0x168] sm:$0xff]
      %v359 = vld [vmem:[#allocation2 + $0x170] sm:$0xff]
      %v360 = vld [vmem:[#allocation2 + $0x178] sm:$0xff]
      %v361 = vld [vmem:[#allocation2 + $0x180] sm:$0xff]
      %v362 = vld [vmem:[%s236] sm:$0xf]
      %v363 = vld [vmem:[%s236 + $0x4] sm:$0xf]
      %v364 = vld [vmem:[%s236 + $0x8] sm:$0xf]
      %v365 = vld [vmem:[%s236 + $0xc] sm:$0xf]
      %v366 = vld [vmem:[%s236 + $0x10] sm:$0xf]
      %v367 = vld [vmem:[%s236 + $0x14] sm:$0xf]
      %v368 = vld [vmem:[%s236 + $0x18] sm:$0xf]
      %v369 = vld [vmem:[%s236 + $0x1c] sm:$0xf]
      %v370 = vld [vmem:[%s236 + $0x20] sm:$0xf]
      %v371 = vld [vmem:[%s236 + $0x24] sm:$0xf]
      %v372 = vld [vmem:[%s236 + $0x28] sm:$0xf]
      %v373 = vld [vmem:[%s236 + $0x2c] sm:$0xf]
      %v374 = vld [vmem:[%s236 + $0x30] sm:$0xf]
      %v375 = vld [vmem:[%s236 + $0x34] sm:$0xf]
      %v376 = vld [vmem:[%s236 + $0x38] sm:$0xf]
      %v377 = vld [vmem:[%s236 + $0x3c] sm:$0xf]
      %v378 = vld [vmem:[%s236 + $0x40] sm:$0xf]
      %v379 = vld [vmem:[%s236 + $0x44] sm:$0xf]
      %v380 = vld [vmem:[%s236 + $0x48] sm:$0xf]
      %v381 = vld [vmem:[%s236 + $0x4c] sm:$0xf]
      %v382 = vld [vmem:[%s236 + $0x50] sm:$0xf]
      %v383 = vld [vmem:[%s236 + $0x54] sm:$0xf]
      %v384 = vld [vmem:[%s236 + $0x58] sm:$0xf]
      %v385 = vld [vmem:[%s236 + $0x5c] sm:$0xf]
      %v386 = vld [vmem:[%s236 + $0x60] sm:$0xf]
      %v387 = vld [vmem:[%s236 + $0x64] sm:$0xf]
      %v388 = vld [vmem:[%s236 + $0x68] sm:$0xf]
      %v389 = vld [vmem:[%s236 + $0x6c] sm:$0xf]
      %v390 = vld [vmem:[%s236 + $0x70] sm:$0xf]
      %v391 = vld [vmem:[%s236 + $0x74] sm:$0xf]
      %v392 = vld [vmem:[%s236 + $0x78] sm:$0xf]
      %v393 = vld [vmem:[%s236 + $0x7c] sm:$0xf]
      %v394 = vld [vmem:[%s236 + $0x80] sm:$0xf]
      %v395 = vld [vmem:[%s236 + $0x84] sm:$0xf]
      %v396 = vld [vmem:[%s236 + $0x88] sm:$0xf]
      %v397 = vld [vmem:[%s236 + $0x8c] sm:$0xf]
      %v398 = vld [vmem:[%s236 + $0x90] sm:$0xf]
      %v399 = vld [vmem:[%s236 + $0x94] sm:$0xf]
      %v400 = vld [vmem:[%s236 + $0x98] sm:$0xf]
      %v401 = vld [vmem:[%s236 + $0x9c] sm:$0xf]
      %v402 = vld [vmem:[%s236 + $0xa0] sm:$0xf]
      %v403 = vld [vmem:[%s236 + $0xa4] sm:$0xf]
      %v404 = vld [vmem:[%s236 + $0xa8] sm:$0xf]
      %v405 = vld [vmem:[%s236 + $0xac] sm:$0xf]
      %v406 = vld [vmem:[%s236 + $0xb0] sm:$0xf]
      %v407 = vld [vmem:[%s236 + $0xb4] sm:$0xf]
      %v408 = vld [vmem:[%s236 + $0xb8] sm:$0xf]
      %v409 = vld [vmem:[%s236 + $0xbc] sm:$0xf]
      %v410 = vld [vmem:[%s236 + $0xc0] sm:$0xf]
      %v411 = vld [vmem:[%s245] sm:$0xf]
      %v412 = vld [vmem:[%s245 + $0x4] sm:$0xf]
      %v413 = vld [vmem:[%s245 + $0x8] sm:$0xf]
      %v414 = vld [vmem:[%s245 + $0xc] sm:$0x1]
      %v464 = vunpack.c.l.b16 %v362
      %v465 = vunpack.c.l.b16 %v363
      %v466 = vunpack.c.l.b16 %v364
      %v467 = vunpack.c.l.b16 %v365
      %v468 = vunpack.c.l.b16 %v366
      %v469 = vunpack.c.l.b16 %v367
      %v470 = vunpack.c.l.b16 %v368
      %v471 = vunpack.c.l.b16 %v369
      %v472 = vunpack.c.l.b16 %v370
      %v473 = vunpack.c.l.b16 %v371
      %v474 = vunpack.c.l.b16 %v372
      %v475 = vunpack.c.l.b16 %v373
      %v476 = vunpack.c.l.b16 %v374
      %v477 = vunpack.c.l.b16 %v375
      %v478 = vunpack.c.l.b16 %v376
      %v479 = vunpack.c.l.b16 %v377
      %v480 = vunpack.c.l.b16 %v378
      %v481 = vunpack.c.l.b16 %v379
      %v482 = vunpack.c.l.b16 %v380
      %v483 = vunpack.c.l.b16 %v381
      %v484 = vunpack.c.l.b16 %v382
      %v485 = vunpack.c.l.b16 %v383
      %v486 = vunpack.c.l.b16 %v384
      %v487 = vunpack.c.l.b16 %v385
      %v488 = vunpack.c.l.b16 %v386
      %v489 = vunpack.c.l.b16 %v387
      %v490 = vunpack.c.l.b16 %v388
      %v491 = vunpack.c.l.b16 %v389
      %v492 = vunpack.c.l.b16 %v390
      %v493 = vunpack.c.l.b16 %v391
      %v494 = vunpack.c.l.b16 %v392
      %v495 = vunpack.c.l.b16 %v393
      %v496 = vunpack.c.l.b16 %v394
      %v497 = vunpack.c.l.b16 %v395
      %v498 = vunpack.c.l.b16 %v396
      %v499 = vunpack.c.l.b16 %v397
      %v500 = vunpack.c.l.b16 %v398
      %v501 = vunpack.c.l.b16 %v399
      %v502 = vunpack.c.l.b16 %v400
      %v503 = vunpack.c.l.b16 %v401
      %v504 = vunpack.c.l.b16 %v402
      %v505 = vunpack.c.l.b16 %v403
      %v506 = vunpack.c.l.b16 %v404
      %v507 = vunpack.c.l.b16 %v405
      %v508 = vunpack.c.l.b16 %v406
      %v509 = vunpack.c.l.b16 %v407
      %v510 = vunpack.c.l.b16 %v408
      %v511 = vunpack.c.l.b16 %v409
      %v512 = vunpack.c.l.b16 %v410
      %v513 = vpack.c.b16 %v465, %v464
      %v514 = vpack.c.b16 %v467, %v466
      %v515 = vpack.c.b16 %v469, %v468
      %v516 = vpack.c.b16 %v471, %v470
      %v517 = vpack.c.b16 %v473, %v472
      %v518 = vpack.c.b16 %v475, %v474
      %v519 = vpack.c.b16 %v477, %v476
      %v520 = vpack.c.b16 %v479, %v478
      %v521 = vpack.c.b16 %v481, %v480
      %v522 = vpack.c.b16 %v483, %v482
      %v523 = vpack.c.b16 %v485, %v484
      %v524 = vpack.c.b16 %v487, %v486
      %v525 = vpack.c.b16 %v489, %v488
      %v526 = vpack.c.b16 %v491, %v490
      %v527 = vpack.c.b16 %v493, %v492
      %v528 = vpack.c.b16 %v495, %v494
      %v529 = vpack.c.b16 %v497, %v496
      %v530 = vpack.c.b16 %v499, %v498
      %v531 = vpack.c.b16 %v501, %v500
      %v532 = vpack.c.b16 %v503, %v502
      %v533 = vpack.c.b16 %v505, %v504
      %v534 = vpack.c.b16 %v507, %v506
      %v535 = vpack.c.b16 %v509, %v508
      %v536 = vpack.c.b16 %v511, %v510
      %v537 = vpack.c.b16 %v512, %v512
      %v542 = vunpack.c.l.b16 %v411
      %v543 = vunpack.c.l.b16 %v412
      %v544 = vunpack.c.l.b16 %v413
      %v545 = vunpack.c.l.b16 %v414
      %v546 = vpack.c.b16 %v543, %v542
      %v547 = vpack.c.b16 %v545, %v544
      %vm549 = vcmask 203776
      %v551 = vsel %vm549, %v513, 0
      %v554 = vsel %vm549, %v514, 0
      %v557 = vsel %vm549, %v515, 0
      %v560 = vsel %vm549, %v516, 0
      %v563 = vsel %vm549, %v517, 0
      %v566 = vsel %vm549, %v518, 0
      %v569 = vsel %vm549, %v519, 0
      %v572 = vsel %vm549, %v520, 0
      %v575 = vsel %vm549, %v521, 0
      %v578 = vsel %vm549, %v522, 0
      %v581 = vsel %vm549, %v523, 0
      %v584 = vsel %vm549, %v524, 0
      %v587 = vsel %vm549, %v525, 0
      %v590 = vsel %vm549, %v526, 0
      %v593 = vsel %vm549, %v527, 0
      %v596 = vsel %vm549, %v528, 0
      %v599 = vsel %vm549, %v529, 0
      %v602 = vsel %vm549, %v530, 0
      %v605 = vsel %vm549, %v531, 0
      %v608 = vsel %vm549, %v532, 0
      %v611 = vsel %vm549, %v533, 0
      %v614 = vsel %vm549, %v534, 0
      %v617 = vsel %vm549, %v535, 0
      %v620 = vsel %vm549, %v536, 0
      %v623 = vsel %vm549, %v537, 0
      %vm625 = vcmask 1043456
      %vm626 = vcmask 1044480
      %v627 = vsel %vm625, 4294967295, 65535
      %v628 = vsel %vm626, %v627, 0
      %v630 = vand.u32 %v547, %v628
      %632 = vmatprep.subr.bf16.mxu0 0
      %633 = vmatpush1.bf16.msra.mxu0 %v546
      %634 = vmatprep.subr.bf16.mxu0 0
      %635 = vmatpush1.bf16.msra.mxu0 %v630
      %636 = vmatprep.subr.bf16.mxu0 0
      %637 = vmatpush1.bf16.msra.mxu0 0
      %638 = vmatprep.subr.bf16.mxu0 0
      %639 = vmatpush1.bf16.msra.mxu0 0
      %640 = vmatprep.subr.bf16.mxu0 0
      %641 = vmatpush1.bf16.msra.mxu0 0
      %642 = vmatprep.subr.bf16.mxu0 0
      %643 = vmatpush1.bf16.msra.mxu0 0
      %644 = vmatprep.subr.bf16.mxu0 0
      %645 = vmatpush1.bf16.msra.mxu0 0
      %646 = vmatprep.subr.bf16.mxu0 0
      %647 = vmatpush1.bf16.msra.mxu0 0
      %648 = vmatprep.subr.bf16.mxu0 0
      %649 = vmatpush1.bf16.msra.mxu0 0
      %650 = vmatprep.subr.bf16.mxu0 0
      %651 = vmatpush1.bf16.msra.mxu0 0
      %652 = vmatprep.subr.bf16.mxu0 0
      %653 = vmatpush1.bf16.msra.mxu0 0
      %654 = vmatprep.subr.bf16.mxu0 0
      %655 = vmatpush1.bf16.msra.mxu0 0
      %656 = vmatprep.subr.bf16.mxu0 0
      %657 = vmatpush1.bf16.msra.mxu0 0
      %658 = vmatprep.subr.bf16.mxu0 0
      %659 = vmatpush1.bf16.msra.mxu0 0
      %660 = vmatprep.subr.bf16.mxu0 0
      %661 = vmatpush1.bf16.msra.mxu0 0
      %662 = vmatprep.subr.bf16.mxu0 0
      %663 = vmatpush1.bf16.msra.mxu0 0
      %664 = vmatprep.mubr.bf16.mxu0 0
      %665 = vmatmul.mubr.bf16.gmra.mrb[0].mxu0 %v551
      %v666 = vpop.f32.mrb[0].mxu0
      %v667 = vadd.f32 0.0, %v666
      %v668 = vpop.f32.mrb[0].mxu0
      %v669 = vpop.f32.mrb[0].mxu0
      %v670 = vadd.f32 0.0, %v669
      %v671 = vpop.f32.mrb[0].mxu0
      %672 = vmatprep.mubr.bf16.mxu0 0
      %673 = vmatmul.mubr.bf16.gmra.mrb[0].mxu0 %v554
      %v674 = vpop.f32.mrb[0].mxu0
      %v675 = vadd.f32 0.0, %v674
      %v676 = vpop.f32.mrb[0].mxu0
      %v677 = vpop.f32.mrb[0].mxu0
      %v678 = vadd.f32 0.0, %v677
      %v679 = vpop.f32.mrb[0].mxu0
      %680 = vmatprep.mubr.bf16.mxu0 0
      %681 = vmatmul.mubr.bf16.gmra.mrb[0].mxu0 %v557
      %v682 = vpop.f32.mrb[0].mxu0
      %v683 = vadd.f32 0.0, %v682
      %v684 = vpop.f32.mrb[0].mxu0
      %v685 = vpop.f32.mrb[0].mxu0
      %v686 = vadd.f32 0.0, %v685
      %v687 = vpop.f32.mrb[0].mxu0
      %688 = vmatprep.mubr.bf16.mxu0 0
      %689 = vmatmul.mubr.bf16.gmra.mrb[0].mxu0 %v560
      %v690 = vpop.f32.mrb[0].mxu0
      %v691 = vadd.f32 0.0, %v690
      %v692 = vpop.f32.mrb[0].mxu0
      %v693 = vpop.f32.mrb[0].mxu0
      %v694 = vadd.f32 0.0, %v693
      %v695 = vpop.f32.mrb[0].mxu0
      %696 = vmatprep.mubr.bf16.mxu0 0
      %697 = vmatmul.mubr.bf16.gmra.mrb[0].mxu0 %v563
      %v698 = vpop.f32.mrb[0].mxu0
      %v699 = vadd.f32 0.0, %v698
      %v700 = vpop.f32.mrb[0].mxu0
      %v701 = vpop.f32.mrb[0].mxu0
      %v702 = vadd.f32 0.0, %v701
      %v703 = vpop.f32.mrb[0].mxu0
      %704 = vmatprep.mubr.bf16.mxu0 0
      %705 = vmatmul.mubr.bf16.gmra.mrb[0].mxu0 %v566
      %v706 = vpop.f32.mrb[0].mxu0
      %v707 = vadd.f32 0.0, %v706
      %v708 = vpop.f32.mrb[0].mxu0
      %v709 = vpop.f32.mrb[0].mxu0
      %v710 = vadd.f32 0.0, %v709
      %v711 = vpop.f32.mrb[0].mxu0
      %712 = vmatprep.mubr.bf16.mxu0 0
      %713 = vmatmul.mubr.bf16.gmra.mrb[0].mxu0 %v569
      %v714 = vpop.f32.mrb[0].mxu0
      %v715 = vadd.f32 0.0, %v714
      %v716 = vpop.f32.mrb[0].mxu0
      %v717 = vpop.f32.mrb[0].mxu0
      %v718 = vadd.f32 0.0, %v717
      %v719 = vpop.f32.mrb[0].mxu0
      %720 = vmatprep.mubr.bf16.mxu0 0
      %721 = vmatmul.mubr.bf16.gmra.mrb[0].mxu0 %v572
      %v722 = vpop.f32.mrb[0].mxu0
      %v723 = vadd.f32 0.0, %v722
      %v724 = vpop.f32.mrb[0].mxu0
      %v725 = vpop.f32.mrb[0].mxu0
      %v726 = vadd.f32 0.0, %v725
      %v727 = vpop.f32.mrb[0].mxu0
      %728 = vmatprep.mubr.bf16.mxu0 0
      %729 = vmatmul.mubr.bf16.gmra.mrb[0].mxu0 %v575
      %v730 = vpop.f32.mrb[0].mxu0
      %v731 = vadd.f32 0.0, %v730
      %v732 = vpop.f32.mrb[0].mxu0
      %v733 = vpop.f32.mrb[0].mxu0
      %v734 = vadd.f32 0.0, %v733
      %v735 = vpop.f32.mrb[0].mxu0
      %736 = vmatprep.mubr.bf16.mxu0 0
      %737 = vmatmul.mubr.bf16.gmra.mrb[0].mxu0 %v578
      %v738 = vpop.f32.mrb[0].mxu0
      %v739 = vadd.f32 0.0, %v738
      %v740 = vpop.f32.mrb[0].mxu0
      %v741 = vpop.f32.mrb[0].mxu0
      %v742 = vadd.f32 0.0, %v741
      %v743 = vpop.f32.mrb[0].mxu0
      %744 = vmatprep.mubr.bf16.mxu0 0
      %745 = vmatmul.mubr.bf16.gmra.mrb[0].mxu0 %v581
      %v746 = vpop.f32.mrb[0].mxu0
      %v747 = vadd.f32 0.0, %v746
      %v748 = vpop.f32.mrb[0].mxu0
      %v749 = vpop.f32.mrb[0].mxu0
      %v750 = vadd.f32 0.0, %v749
      %v751 = vpop.f32.mrb[0].mxu0
      %752 = vmatprep.mubr.bf16.mxu0 0
      %753 = vmatmul.mubr.bf16.gmra.mrb[0].mxu0 %v584
      %v754 = vpop.f32.mrb[0].mxu0
      %v755 = vadd.f32 0.0, %v754
      %v756 = vpop.f32.mrb[0].mxu0
      %v757 = vpop.f32.mrb[0].mxu0
      %v758 = vadd.f32 0.0, %v757
      %v759 = vpop.f32.mrb[0].mxu0
      %760 = vmatprep.mubr.bf16.mxu0 0
      %761 = vmatmul.mubr.bf16.gmra.mrb[0].mxu0 %v587
      %v762 = vpop.f32.mrb[0].mxu0
      %v763 = vadd.f32 0.0, %v762
      %v764 = vpop.f32.mrb[0].mxu0
      %v765 = vpop.f32.mrb[0].mxu0
      %v766 = vadd.f32 0.0, %v765
      %v767 = vpop.f32.mrb[0].mxu0
      %768 = vmatprep.mubr.bf16.mxu0 0
      %769 = vmatmul.mubr.bf16.gmra.mrb[0].mxu0 %v590
      %v770 = vpop.f32.mrb[0].mxu0
      %v771 = vadd.f32 0.0, %v770
      %v772 = vpop.f32.mrb[0].mxu0
      %v773 = vpop.f32.mrb[0].mxu0
      %v774 = vadd.f32 0.0, %v773
      %v775 = vpop.f32.mrb[0].mxu0
      %776 = vmatprep.mubr.bf16.mxu0 0
      %777 = vmatmul.mubr.bf16.gmra.mrb[0].mxu0 %v593
      %v778 = vpop.f32.mrb[0].mxu0
      %v779 = vadd.f32 0.0, %v778
      %v780 = vpop.f32.mrb[0].mxu0
      %v781 = vpop.f32.mrb[0].mxu0
      %v782 = vadd.f32 0.0, %v781
      %v783 = vpop.f32.mrb[0].mxu0
      %784 = vmatprep.mubr.bf16.mxu0 0
      %785 = vmatmul.mubr.bf16.gmra.mrb[0].mxu0 %v596
      %v786 = vpop.f32.mrb[0].mxu0
      %v787 = vadd.f32 0.0, %v786
      %v788 = vpop.f32.mrb[0].mxu0
      %v789 = vpop.f32.mrb[0].mxu0
      %v790 = vadd.f32 0.0, %v789
      %v791 = vpop.f32.mrb[0].mxu0
      %792 = vmatprep.mubr.bf16.mxu0 0
      %793 = vmatmul.mubr.bf16.gmra.mrb[0].mxu0 %v599
      %v794 = vpop.f32.mrb[0].mxu0
      %v795 = vadd.f32 0.0, %v794
      %v796 = vpop.f32.mrb[0].mxu0
      %v797 = vpop.f32.mrb[0].mxu0
      %v798 = vadd.f32 0.0, %v797
      %v799 = vpop.f32.mrb[0].mxu0
      %800 = vmatprep.mubr.bf16.mxu0 0
      %801 = vmatmul.mubr.bf16.gmra.mrb[0].mxu0 %v602
      %v802 = vpop.f32.mrb[0].mxu0
      %v803 = vadd.f32 0.0, %v802
      %v804 = vpop.f32.mrb[0].mxu0
      %v805 = vpop.f32.mrb[0].mxu0
      %v806 = vadd.f32 0.0, %v805
      %v807 = vpop.f32.mrb[0].mxu0
      %808 = vmatprep.mubr.bf16.mxu0 0
      %809 = vmatmul.mubr.bf16.gmra.mrb[0].mxu0 %v605
      %v810 = vpop.f32.mrb[0].mxu0
      %v811 = vadd.f32 0.0, %v810
      %v812 = vpop.f32.mrb[0].mxu0
      %v813 = vpop.f32.mrb[0].mxu0
      %v814 = vadd.f32 0.0, %v813
      %v815 = vpop.f32.mrb[0].mxu0
      %816 = vmatprep.mubr.bf16.mxu0 0
      %817 = vmatmul.mubr.bf16.gmra.mrb[0].mxu0 %v608
      %v818 = vpop.f32.mrb[0].mxu0
      %v819 = vadd.f32 0.0, %v818
      %v820 = vpop.f32.mrb[0].mxu0
      %v821 = vpop.f32.mrb[0].mxu0
      %v822 = vadd.f32 0.0, %v821
      %v823 = vpop.f32.mrb[0].mxu0
      %824 = vmatprep.mubr.bf16.mxu0 0
      %825 = vmatmul.mubr.bf16.gmra.mrb[0].mxu0 %v611
      %v826 = vpop.f32.mrb[0].mxu0
      %v827 = vadd.f32 0.0, %v826
      %v828 = vpop.f32.mrb[0].mxu0
      %v829 = vpop.f32.mrb[0].mxu0
      %v830 = vadd.f32 0.0, %v829
      %v831 = vpop.f32.mrb[0].mxu0
      %832 = vmatprep.mubr.bf16.mxu0 0
      %833 = vmatmul.mubr.bf16.gmra.mrb[0].mxu0 %v614
      %v834 = vpop.f32.mrb[0].mxu0
      %v835 = vadd.f32 0.0, %v834
      %v836 = vpop.f32.mrb[0].mxu0
      %v837 = vpop.f32.mrb[0].mxu0
      %v838 = vadd.f32 0.0, %v837
      %v839 = vpop.f32.mrb[0].mxu0
      %840 = vmatprep.mubr.bf16.mxu0 0
      %841 = vmatmul.mubr.bf16.gmra.mrb[0].mxu0 %v617
      %v842 = vpop.f32.mrb[0].mxu0
      %v843 = vadd.f32 0.0, %v842
      %v844 = vpop.f32.mrb[0].mxu0
      %v845 = vpop.f32.mrb[0].mxu0
      %v846 = vadd.f32 0.0, %v845
      %v847 = vpop.f32.mrb[0].mxu0
      %848 = vmatprep.mubr.bf16.mxu0 0
      %849 = vmatmul.mubr.bf16.gmra.mrb[0].mxu0 %v620
      %v850 = vpop.f32.mrb[0].mxu0
      %v851 = vadd.f32 0.0, %v850
      %v852 = vpop.f32.mrb[0].mxu0
      %v853 = vpop.f32.mrb[0].mxu0
      %v854 = vadd.f32 0.0, %v853
      %v855 = vpop.f32.mrb[0].mxu0
      %856 = vmatprep.mubr.bf16.mxu0 0
      %857 = vmatmul.mubr.bf16.gmra.mrb[0].mxu0 %v623
      %v858 = vpop.f32.mrb[0].mxu0
      %v859 = vadd.f32 0.0, %v858
      %v860 = vpop.f32.mrb[0].mxu0
      %v861 = vpop.f32.mrb[0].mxu0
      %v862 = vpop.f32.mrb[0].mxu0
      %863 = vdwg.mxu0
      %v864 = vadd.f32 %v313, %v667
      %v865 = vadd.f32 %v314, %v670
      %v866 = vadd.f32 %v315, %v675
      %v867 = vadd.f32 %v316, %v678
      %v868 = vadd.f32 %v317, %v683
      %v869 = vadd.f32 %v318, %v686
      %v870 = vadd.f32 %v319, %v691
      %v871 = vadd.f32 %v320, %v694
      %v872 = vadd.f32 %v321, %v699
      %v873 = vadd.f32 %v322, %v702
      %v874 = vadd.f32 %v323, %v707
      %v875 = vadd.f32 %v324, %v710
      %v876 = vadd.f32 %v325, %v715
      %v877 = vadd.f32 %v326, %v718
      %v878 = vadd.f32 %v327, %v723
      %v879 = vadd.f32 %v328, %v726
      %v880 = vadd.f32 %v329, %v731
      %v881 = vadd.f32 %v330, %v734
      %v882 = vadd.f32 %v331, %v739
      %v883 = vadd.f32 %v332, %v742
      %v884 = vadd.f32 %v333, %v747
      %v885 = vadd.f32 %v334, %v750
      %v886 = vadd.f32 %v335, %v755
      %v887 = vadd.f32 %v336, %v758
      %v888 = vadd.f32 %v337, %v763
      %v889 = vadd.f32 %v338, %v766
      %v890 = vadd.f32 %v339, %v771
      %v891 = vadd.f32 %v340, %v774
      %v892 = vadd.f32 %v341, %v779
      %v893 = vadd.f32 %v342, %v782
      %v894 = vadd.f32 %v343, %v787
      %v895 = vadd.f32 %v344, %v790
      %v896 = vadd.f32 %v345, %v795
      %v897 = vadd.f32 %v346, %v798
      %v898 = vadd.f32 %v347, %v803
      %v899 = vadd.f32 %v348, %v806
      %v900 = vadd.f32 %v349, %v811
      %v901 = vadd.f32 %v350, %v814
      %v902 = vadd.f32 %v351, %v819
      %v903 = vadd.f32 %v352, %v822
      %v904 = vadd.f32 %v353, %v827
      %v905 = vadd.f32 %v354, %v830
      %v906 = vadd.f32 %v355, %v835
      %v907 = vadd.f32 %v356, %v838
      %v908 = vadd.f32 %v357, %v843
      %v909 = vadd.f32 %v358, %v846
      %v910 = vadd.f32 %v359, %v851
      %v911 = vadd.f32 %v360, %v854
      %v912 = vadd.f32 %v361, %v859
      %913 = vst [vmem:[#allocation2] sm:$0xff] %v864
      %914 = vst [vmem:[#allocation2 + $0x8] sm:$0xff] %v865
      %915 = vst [vmem:[#allocation2 + $0x10] sm:$0xff] %v866
      %916 = vst [vmem:[#allocation2 + $0x18] sm:$0xff] %v867
      %917 = vst [vmem:[#allocation2 + $0x20] sm:$0xff] %v868
      %918 = vst [vmem:[#allocation2 + $0x28] sm:$0xff] %v869
      %919 = vst [vmem:[#allocation2 + $0x30] sm:$0xff] %v870
      %920 = vst [vmem:[#allocation2 + $0x38] sm:$0xff] %v871
      %921 = vst [vmem:[#allocation2 + $0x40] sm:$0xff] %v872
      %922 = vst [vmem:[#allocation2 + $0x48] sm:$0xff] %v873
      %923 = vst [vmem:[#allocation2 + $0x50] sm:$0xff] %v874
      %924 = vst [vmem:[#allocation2 + $0x58] sm:$0xff] %v875
      %925 = vst [vmem:[#allocation2 + $0x60] sm:$0xff] %v876
      %926 = vst [vmem:[#allocation2 + $0x68] sm:$0xff] %v877
      %927 = vst [vmem:[#allocation2 + $0x70] sm:$0xff] %v878
      %928 = vst [vmem:[#allocation2 + $0x78] sm:$0xff] %v879
      %929 = vst [vmem:[#allocation2 + $0x80] sm:$0xff] %v880
      %930 = vst [vmem:[#allocation2 + $0x88] sm:$0xff] %v881
      %931 = vst [vmem:[#allocation2 + $0x90] sm:$0xff] %v882
      %932 = vst [vmem:[#allocation2 + $0x98] sm:$0xff] %v883
      %933 = vst [vmem:[#allocation2 + $0xa0] sm:$0xff] %v884
      %934 = vst [vmem:[#allocation2 + $0xa8] sm:$0xff] %v885
      %935 = vst [vmem:[#allocation2 + $0xb0] sm:$0xff] %v886
      %936 = vst [vmem:[#allocation2 + $0xb8] sm:$0xff] %v887
      %937 = vst [vmem:[#allocation2 + $0xc0] sm:$0xff] %v888
      %938 = vst [vmem:[#allocation2 + $0xc8] sm:$0xff] %v889
      %939 = vst [vmem:[#allocation2 + $0xd0] sm:$0xff] %v890
      %940 = vst [vmem:[#allocation2 + $0xd8] sm:$0xff] %v891
      %941 = vst [vmem:[#allocation2 + $0xe0] sm:$0xff] %v892
      %942 = vst [vmem:[#allocation2 + $0xe8] sm:$0xff] %v893
      %943 = vst [vmem:[#allocation2 + $0xf0] sm:$0xff] %v894
      %944 = vst [vmem:[#allocation2 + $0xf8] sm:$0xff] %v895
      %945 = vst [vmem:[#allocation2 + $0x100] sm:$0xff] %v896
      %946 = vst [vmem:[#allocation2 + $0x108] sm:$0xff] %v897
      %947 = vst [vmem:[#allocation2 + $0x110] sm:$0xff] %v898
      %948 = vst [vmem:[#allocation2 + $0x118] sm:$0xff] %v899
      %949 = vst [vmem:[#allocation2 + $0x120] sm:$0xff] %v900
      %950 = vst [vmem:[#allocation2 + $0x128] sm:$0xff] %v901
      %951 = vst [vmem:[#allocation2 + $0x130] sm:$0xff] %v902
      %952 = vst [vmem:[#allocation2 + $0x138] sm:$0xff] %v903
      %953 = vst [vmem:[#allocation2 + $0x140] sm:$0xff] %v904
      %954 = vst [vmem:[#allocation2 + $0x148] sm:$0xff] %v905
      %955 = vst [vmem:[#allocation2 + $0x150] sm:$0xff] %v906
      %956 = vst [vmem:[#allocation2 + $0x158] sm:$0xff] %v907
      %957 = vst [vmem:[#allocation2 + $0x160] sm:$0xff] %v908
      %958 = vst [vmem:[#allocation2 + $0x168] sm:$0xff] %v909
      %959 = vst [vmem:[#allocation2 + $0x170] sm:$0xff] %v910
      %960 = vst [vmem:[#allocation2 + $0x178] sm:$0xff] %v911
      %961 = vst [vmem:[#allocation2 + $0x180] sm:$0xff] %v912
      // Predicated region
      $region37: #{cnn_fedavg_forward.5} parent=31 // pred_check
        %p962 = pneg %p260
      $region38: #{cnn_fedavg_forward.5} parent=31 // pred_check_branch
        %964 = sbr.rel (%p962) target = $region40
      $region39: #{cnn_fedavg_forward.5} parent=31 // pred_region
        %v965 = vld [vmem:[#allocation2] sm:$0xff]
        %v966 = vld [vmem:[#allocation2 + $0x8] sm:$0xff]
        %v967 = vld [vmem:[#allocation2 + $0x10] sm:$0xff]
        %v968 = vld [vmem:[#allocation2 + $0x18] sm:$0xff]
        %v969 = vld [vmem:[#allocation2 + $0x20] sm:$0xff]
        %v970 = vld [vmem:[#allocation2 + $0x28] sm:$0xff]
        %v971 = vld [vmem:[#allocation2 + $0x30] sm:$0xff]
        %v972 = vld [vmem:[#allocation2 + $0x38] sm:$0xff]
        %v973 = vld [vmem:[#allocation2 + $0x40] sm:$0xff]
        %v974 = vld [vmem:[#allocation2 + $0x48] sm:$0xff]
        %v975 = vld [vmem:[#allocation2 + $0x50] sm:$0xff]
        %v976 = vld [vmem:[#allocation2 + $0x58] sm:$0xff]
        %v977 = vld [vmem:[#allocation2 + $0x60] sm:$0xff]
        %v978 = vld [vmem:[#allocation2 + $0x68] sm:$0xff]
        %v979 = vld [vmem:[#allocation2 + $0x70] sm:$0xff]
        %v980 = vld [vmem:[#allocation2 + $0x78] sm:$0xff]
        %v981 = vld [vmem:[#allocation2 + $0x80] sm:$0xff]
        %v982 = vld [vmem:[#allocation2 + $0x88] sm:$0xff]
        %v983 = vld [vmem:[#allocation2 + $0x90] sm:$0xff]
        %v984 = vld [vmem:[#allocation2 + $0x98] sm:$0xff]
        %v985 = vld [vmem:[#allocation2 + $0xa0] sm:$0xff]
        %v986 = vld [vmem:[#allocation2 + $0xa8] sm:$0xff]
        %v987 = vld [vmem:[#allocation2 + $0xb0] sm:$0xff]
        %v988 = vld [vmem:[#allocation2 + $0xb8] sm:$0xff]
        %v989 = vld [vmem:[#allocation2 + $0xc0] sm:$0xff]
        %v990 = vld [vmem:[#allocation2 + $0xc8] sm:$0xff]
        %v991 = vld [vmem:[#allocation2 + $0xd0] sm:$0xff]
        %v992 = vld [vmem:[#allocation2 + $0xd8] sm:$0xff]
        %v993 = vld [vmem:[#allocation2 + $0xe0] sm:$0xff]
        %v994 = vld [vmem:[#allocation2 + $0xe8] sm:$0xff]
        %v995 = vld [vmem:[#allocation2 + $0xf0] sm:$0xff]
        %v996 = vld [vmem:[#allocation2 + $0xf8] sm:$0xff]
        %v997 = vld [vmem:[#allocation2 + $0x100] sm:$0xff]
        %v998 = vld [vmem:[#allocation2 + $0x108] sm:$0xff]
        %v999 = vld [vmem:[#allocation2 + $0x110] sm:$0xff]
        %v1000 = vld [vmem:[#allocation2 + $0x118] sm:$0xff]
        %v1001 = vld [vmem:[#allocation2 + $0x120] sm:$0xff]
        %v1002 = vld [vmem:[#allocation2 + $0x128] sm:$0xff]
        %v1003 = vld [vmem:[#allocation2 + $0x130] sm:$0xff]
        %v1004 = vld [vmem:[#allocation2 + $0x138] sm:$0xff]
        %v1005 = vld [vmem:[#allocation2 + $0x140] sm:$0xff]
        %v1006 = vld [vmem:[#allocation2 + $0x148] sm:$0xff]
        %v1007 = vld [vmem:[#allocation2 + $0x150] sm:$0xff]
        %v1008 = vld [vmem:[#allocation2 + $0x158] sm:$0xff]
        %v1009 = vld [vmem:[#allocation2 + $0x160] sm:$0xff]
        %v1010 = vld [vmem:[#allocation2 + $0x168] sm:$0xff]
        %v1011 = vld [vmem:[#allocation2 + $0x170] sm:$0xff]
        %v1012 = vld [vmem:[#allocation2 + $0x178] sm:$0xff]
        %v1013 = vld [vmem:[#allocation2 + $0x180] sm:$0xff]
        %v1014 = vld [vmem:[%s249] sm:$0x1]
        %v1016 = vlaneseq
        %v1017 = vshrl.u32 %v1016, 7
        %v1018 = vsub.s32 0, %v1017
        %v1019 = vrot.slane %v1014, %v1018
        %v1021 = vadd.f32 %v965, %v1019
        %v1022 = vadd.f32 %v966, %v1019
        %v1023 = vadd.f32 %v967, %v1019
        %v1024 = vadd.f32 %v968, %v1019
        %v1025 = vadd.f32 %v969, %v1019
        %v1026 = vadd.f32 %v970, %v1019
        %v1027 = vadd.f32 %v971, %v1019
        %v1028 = vadd.f32 %v972, %v1019
        %v1029 = vadd.f32 %v973, %v1019
        %v1030 = vadd.f32 %v974, %v1019
        %v1031 = vadd.f32 %v975, %v1019
        %v1032 = vadd.f32 %v976, %v1019
        %v1033 = vadd.f32 %v977, %v1019
        %v1034 = vadd.f32 %v978, %v1019
        %v1035 = vadd.f32 %v979, %v1019
        %v1036 = vadd.f32 %v980, %v1019
        %v1037 = vadd.f32 %v981, %v1019
        %v1038 = vadd.f32 %v982, %v1019
        %v1039 = vadd.f32 %v983, %v1019
        %v1040 = vadd.f32 %v984, %v1019
        %v1041 = vadd.f32 %v985, %v1019
        %v1042 = vadd.f32 %v986, %v1019
        %v1043 = vadd.f32 %v987, %v1019
        %v1044 = vadd.f32 %v988, %v1019
        %v1045 = vadd.f32 %v989, %v1019
        %v1046 = vadd.f32 %v990, %v1019
        %v1047 = vadd.f32 %v991, %v1019
        %v1048 = vadd.f32 %v992, %v1019
        %v1049 = vadd.f32 %v993, %v1019
        %v1050 = vadd.f32 %v994, %v1019
        %v1051 = vadd.f32 %v995, %v1019
        %v1052 = vadd.f32 %v996, %v1019
        %v1053 = vadd.f32 %v997, %v1019
        %v1054 = vadd.f32 %v998, %v1019
        %v1055 = vadd.f32 %v999, %v1019
        %v1056 = vadd.f32 %v1000, %v1019
        %v1057 = vadd.f32 %v1001, %v1019
        %v1058 = vadd.f32 %v1002, %v1019
        %v1059 = vadd.f32 %v1003, %v1019
        %v1060 = vadd.f32 %v1004, %v1019
        %v1061 = vadd.f32 %v1005, %v1019
        %v1062 = vadd.f32 %v1006, %v1019
        %v1063 = vadd.f32 %v1007, %v1019
        %v1064 = vadd.f32 %v1008, %v1019
        %v1065 = vadd.f32 %v1009, %v1019
        %v1066 = vadd.f32 %v1010, %v1019
        %v1067 = vadd.f32 %v1011, %v1019
        %v1068 = vadd.f32 %v1012, %v1019
        %v1069 = vadd.f32 %v1013, %v1019
        %v1070 = vmax.f32 %v1021, 0.0
        %v1071 = vmax.f32 %v1022, 0.0
        %v1072 = vmax.f32 %v1023, 0.0
        %v1073 = vmax.f32 %v1024, 0.0
        %v1074 = vmax.f32 %v1025, 0.0
        %v1075 = vmax.f32 %v1026, 0.0
        %v1076 = vmax.f32 %v1027, 0.0
        %v1077 = vmax.f32 %v1028, 0.0
        %v1078 = vmax.f32 %v1029, 0.0
        %v1079 = vmax.f32 %v1030, 0.0
        %v1080 = vmax.f32 %v1031, 0.0
        %v1081 = vmax.f32 %v1032, 0.0
        %v1082 = vmax.f32 %v1033, 0.0
        %v1083 = vmax.f32 %v1034, 0.0
        %v1084 = vmax.f32 %v1035, 0.0
        %v1085 = vmax.f32 %v1036, 0.0
        %v1086 = vmax.f32 %v1037, 0.0
        %v1087 = vmax.f32 %v1038, 0.0
        %v1088 = vmax.f32 %v1039, 0.0
        %v1089 = vmax.f32 %v1040, 0.0
        %v1090 = vmax.f32 %v1041, 0.0
        %v1091 = vmax.f32 %v1042, 0.0
        %v1092 = vmax.f32 %v1043, 0.0
        %v1093 = vmax.f32 %v1044, 0.0
        %v1094 = vmax.f32 %v1045, 0.0
        %v1095 = vmax.f32 %v1046, 0.0
        %v1096 = vmax.f32 %v1047, 0.0
        %v1097 = vmax.f32 %v1048, 0.0
        %v1098 = vmax.f32 %v1049, 0.0
        %v1099 = vmax.f32 %v1050, 0.0
        %v1100 = vmax.f32 %v1051, 0.0
        %v1101 = vmax.f32 %v1052, 0.0
        %v1102 = vmax.f32 %v1053, 0.0
        %v1103 = vmax.f32 %v1054, 0.0
        %v1104 = vmax.f32 %v1055, 0.0
        %v1105 = vmax.f32 %v1056, 0.0
        %v1106 = vmax.f32 %v1057, 0.0
        %v1107 = vmax.f32 %v1058, 0.0
        %v1108 = vmax.f32 %v1059, 0.0
        %v1109 = vmax.f32 %v1060, 0.0
        %v1110 = vmax.f32 %v1061, 0.0
        %v1111 = vmax.f32 %v1062, 0.0
        %v1112 = vmax.f32 %v1063, 0.0
        %v1113 = vmax.f32 %v1064, 0.0
        %v1114 = vmax.f32 %v1065, 0.0
        %v1115 = vmax.f32 %v1066, 0.0
        %v1116 = vmax.f32 %v1067, 0.0
        %v1117 = vmax.f32 %v1068, 0.0
        %v1118 = vmax.f32 %v1069, 0.0
        %v1119 = vpack.c.bf16 %v1071, %v1070
        %v1120 = vpack.c.bf16 %v1073, %v1072
        %v1121 = vpack.c.bf16 %v1075, %v1074
        %v1122 = vpack.c.bf16 %v1077, %v1076
        %v1123 = vpack.c.bf16 %v1079, %v1078
        %v1124 = vpack.c.bf16 %v1081, %v1080
        %v1125 = vpack.c.bf16 %v1083, %v1082
        %v1126 = vpack.c.bf16 %v1085, %v1084
        %v1127 = vpack.c.bf16 %v1087, %v1086
        %v1128 = vpack.c.bf16 %v1089, %v1088
        %v1129 = vpack.c.bf16 %v1091, %v1090
        %v1130 = vpack.c.bf16 %v1093, %v1092
        %v1131 = vpack.c.bf16 %v1095, %v1094
        %v1132 = vpack.c.bf16 %v1097, %v1096
        %v1133 = vpack.c.bf16 %v1099, %v1098
        %v1134 = vpack.c.bf16 %v1101, %v1100
        %v1135 = vpack.c.bf16 %v1103, %v1102
        %v1136 = vpack.c.bf16 %v1105, %v1104
        %v1137 = vpack.c.bf16 %v1107, %v1106
        %v1138 = vpack.c.bf16 %v1109, %v1108
        %v1139 = vpack.c.bf16 %v1111, %v1110
        %v1140 = vpack.c.bf16 %v1113, %v1112
        %v1141 = vpack.c.bf16 %v1115, %v1114
        %v1142 = vpack.c.bf16 %v1117, %v1116
        %v1143 = vpack.c.bf16 %v1118, %v1118
        %v1169 = vunpack.c.l.b16 %v1119
        %v1170 = vunpack.c.h.b16 %v1119
        %v1171 = vunpack.c.l.b16 %v1120
        %v1172 = vunpack.c.h.b16 %v1120
        %v1173 = vunpack.c.l.b16 %v1121
        %v1174 = vunpack.c.h.b16 %v1121
        %v1175 = vunpack.c.l.b16 %v1122
        %v1176 = vunpack.c.h.b16 %v1122
        %v1177 = vunpack.c.l.b16 %v1123
        %v1178 = vunpack.c.h.b16 %v1123
        %v1179 = vunpack.c.l.b16 %v1124
        %v1180 = vunpack.c.h.b16 %v1124
        %v1181 = vunpack.c.l.b16 %v1125
        %v1182 = vunpack.c.h.b16 %v1125
        %v1183 = vunpack.c.l.b16 %v1126
        %v1184 = vunpack.c.h.b16 %v1126
        %v1185 = vunpack.c.l.b16 %v1127
        %v1186 = vunpack.c.h.b16 %v1127
        %v1187 = vunpack.c.l.b16 %v1128
        %v1188 = vunpack.c.h.b16 %v1128
        %v1189 = vunpack.c.l.b16 %v1129
        %v1190 = vunpack.c.h.b16 %v1129
        %v1191 = vunpack.c.l.b16 %v1130
        %v1192 = vunpack.c.h.b16 %v1130
        %v1193 = vunpack.c.l.b16 %v1131
        %v1194 = vunpack.c.h.b16 %v1131
        %v1195 = vunpack.c.l.b16 %v1132
        %v1196 = vunpack.c.h.b16 %v1132
        %v1197 = vunpack.c.l.b16 %v1133
        %v1198 = vunpack.c.h.b16 %v1133
        %v1199 = vunpack.c.l.b16 %v1134
        %v1200 = vunpack.c.h.b16 %v1134
        %v1201 = vunpack.c.l.b16 %v1135
        %v1202 = vunpack.c.h.b16 %v1135
        %v1203 = vunpack.c.l.b16 %v1136
        %v1204 = vunpack.c.h.b16 %v1136
        %v1205 = vunpack.c.l.b16 %v1137
        %v1206 = vunpack.c.h.b16 %v1137
        %v1207 = vunpack.c.l.b16 %v1138
        %v1208 = vunpack.c.h.b16 %v1138
        %v1209 = vunpack.c.l.b16 %v1139
        %v1210 = vunpack.c.h.b16 %v1139
        %v1211 = vunpack.c.l.b16 %v1140
        %v1212 = vunpack.c.h.b16 %v1140
        %v1213 = vunpack.c.l.b16 %v1141
        %v1214 = vunpack.c.h.b16 %v1141
        %v1215 = vunpack.c.l.b16 %v1142
        %v1216 = vunpack.c.h.b16 %v1142
        %v1217 = vunpack.c.l.b16 %v1143
        %v1218 = vpack.c.b16 %v1169, %v1169
        %v1219 = vpack.c.b16 %v1170, %v1170
        %v1220 = vpack.c.b16 %v1171, %v1171
        %v1221 = vpack.c.b16 %v1172, %v1172
        %v1222 = vpack.c.b16 %v1173, %v1173
        %v1223 = vpack.c.b16 %v1174, %v1174
        %v1224 = vpack.c.b16 %v1175, %v1175
        %v1225 = vpack.c.b16 %v1176, %v1176
        %v1226 = vpack.c.b16 %v1177, %v1177
        %v1227 = vpack.c.b16 %v1178, %v1178
        %v1228 = vpack.c.b16 %v1179, %v1179
        %v1229 = vpack.c.b16 %v1180, %v1180
        %v1230 = vpack.c.b16 %v1181, %v1181
        %v1231 = vpack.c.b16 %v1182, %v1182
        %v1232 = vpack.c.b16 %v1183, %v1183
        %v1233 = vpack.c.b16 %v1184, %v1184
        %v1234 = vpack.c.b16 %v1185, %v1185
        %v1235 = vpack.c.b16 %v1186, %v1186
        %v1236 = vpack.c.b16 %v1187, %v1187
        %v1237 = vpack.c.b16 %v1188, %v1188
        %v1238 = vpack.c.b16 %v1189, %v1189
        %v1239 = vpack.c.b16 %v1190, %v1190
        %v1240 = vpack.c.b16 %v1191, %v1191
        %v1241 = vpack.c.b16 %v1192, %v1192
        %v1242 = vpack.c.b16 %v1193, %v1193
        %v1243 = vpack.c.b16 %v1194, %v1194
        %v1244 = vpack.c.b16 %v1195, %v1195
        %v1245 = vpack.c.b16 %v1196, %v1196
        %v1246 = vpack.c.b16 %v1197, %v1197
        %v1247 = vpack.c.b16 %v1198, %v1198
        %v1248 = vpack.c.b16 %v1199, %v1199
        %v1249 = vpack.c.b16 %v1200, %v1200
        %v1250 = vpack.c.b16 %v1201, %v1201
        %v1251 = vpack.c.b16 %v1202, %v1202
        %v1252 = vpack.c.b16 %v1203, %v1203
        %v1253 = vpack.c.b16 %v1204, %v1204
        %v1254 = vpack.c.b16 %v1205, %v1205
        %v1255 = vpack.c.b16 %v1206, %v1206
        %v1256 = vpack.c.b16 %v1207, %v1207
        %v1257 = vpack.c.b16 %v1208, %v1208
        %v1258 = vpack.c.b16 %v1209, %v1209
        %v1259 = vpack.c.b16 %v1210, %v1210
        %v1260 = vpack.c.b16 %v1211, %v1211
        %v1261 = vpack.c.b16 %v1212, %v1212
        %v1262 = vpack.c.b16 %v1213, %v1213
        %v1263 = vpack.c.b16 %v1214, %v1214
        %v1264 = vpack.c.b16 %v1215, %v1215
        %v1265 = vpack.c.b16 %v1216, %v1216
        %v1266 = vpack.c.b16 %v1217, %v1217
        %1316 = vst [vmem:[%s257] sm:$0xf] %v1218
        %1317 = vst [vmem:[%s257 + $0x4] sm:$0xf] %v1219
        %1318 = vst [vmem:[%s257 + $0x8] sm:$0xf] %v1220
        %1319 = vst [vmem:[%s257 + $0xc] sm:$0xf] %v1221
        %1320 = vst [vmem:[%s257 + $0x10] sm:$0xf] %v1222
        %1321 = vst [vmem:[%s257 + $0x14] sm:$0xf] %v1223
        %1322 = vst [vmem:[%s257 + $0x18] sm:$0xf] %v1224
        %1323 = vst [vmem:[%s257 + $0x1c] sm:$0xf] %v1225
        %1324 = vst [vmem:[%s257 + $0x20] sm:$0xf] %v1226
        %1325 = vst [vmem:[%s257 + $0x24] sm:$0xf] %v1227
        %1326 = vst [vmem:[%s257 + $0x28] sm:$0xf] %v1228
        %1327 = vst [vmem:[%s257 + $0x2c] sm:$0xf] %v1229
        %1328 = vst [vmem:[%s257 + $0x30] sm:$0xf] %v1230
        %1329 = vst [vmem:[%s257 + $0x34] sm:$0xf] %v1231
        %1330 = vst [vmem:[%s257 + $0x38] sm:$0xf] %v1232
        %1331 = vst [vmem:[%s257 + $0x3c] sm:$0xf] %v1233
        %1332 = vst [vmem:[%s257 + $0x40] sm:$0xf] %v1234
        %1333 = vst [vmem:[%s257 + $0x44] sm:$0xf] %v1235
        %1334 = vst [vmem:[%s257 + $0x48] sm:$0xf] %v1236
        %1335 = vst [vmem:[%s257 + $0x4c] sm:$0xf] %v1237
        %1336 = vst [vmem:[%s257 + $0x50] sm:$0xf] %v1238
        %1337 = vst [vmem:[%s257 + $0x54] sm:$0xf] %v1239
        %1338 = vst [vmem:[%s257 + $0x58] sm:$0xf] %v1240
        %1339 = vst [vmem:[%s257 + $0x5c] sm:$0xf] %v1241
        %1340 = vst [vmem:[%s257 + $0x60] sm:$0xf] %v1242
        %1341 = vst [vmem:[%s257 + $0x64] sm:$0xf] %v1243
        %1342 = vst [vmem:[%s257 + $0x68] sm:$0xf] %v1244
        %1343 = vst [vmem:[%s257 + $0x6c] sm:$0xf] %v1245
        %1344 = vst [vmem:[%s257 + $0x70] sm:$0xf] %v1246
        %1345 = vst [vmem:[%s257 + $0x74] sm:$0xf] %v1247
        %1346 = vst [vmem:[%s257 + $0x78] sm:$0xf] %v1248
        %1347 = vst [vmem:[%s257 + $0x7c] sm:$0xf] %v1249
        %1348 = vst [vmem:[%s257 + $0x80] sm:$0xf] %v1250
        %1349 = vst [vmem:[%s257 + $0x84] sm:$0xf] %v1251
        %1350 = vst [vmem:[%s257 + $0x88] sm:$0xf] %v1252
        %1351 = vst [vmem:[%s257 + $0x8c] sm:$0xf] %v1253
        %1352 = vst [vmem:[%s257 + $0x90] sm:$0xf] %v1254
        %1353 = vst [vmem:[%s257 + $0x94] sm:$0xf] %v1255
        %1354 = vst [vmem:[%s257 + $0x98] sm:$0xf] %v1256
        %1355 = vst [vmem:[%s257 + $0x9c] sm:$0xf] %v1257
        %1356 = vst [vmem:[%s257 + $0xa0] sm:$0xf] %v1258
        %1357 = vst [vmem:[%s257 + $0xa4] sm:$0xf] %v1259
        %1358 = vst [vmem:[%s257 + $0xa8] sm:$0xf] %v1260
        %1359 = vst [vmem:[%s257 + $0xac] sm:$0xf] %v1261
        %1360 = vst [vmem:[%s257 + $0xb0] sm:$0xf] %v1262
        %1361 = vst [vmem:[%s257 + $0xb4] sm:$0xf] %v1263
        %1362 = vst [vmem:[%s257 + $0xb8] sm:$0xf] %v1264
        %1363 = vst [vmem:[%s257 + $0xbc] sm:$0xf] %v1265
        %1364 = vst [vmem:[%s257 + $0xc0] sm:$0xf] %v1266
      $region40: #{cnn_fedavg_forward.5} parent=31 // pred_fallthru
        _
      %s1365 = smul.u32 49, %s19
      %p1366 = scmp.lt.s32.totalorder %s1365, 195
      %s1367 = scalar_select %p1366, %s1365, 195
      %p1368 = scmp.lt.s32.totalorder %s20, 0
      %s1369 = scalar_select %p1368, %s20, 0
      %s1370 = sadd.s32 %s1369, %s1367
      %s1371 = smul.addr %s1370, 4
      %s1372 = scalar_lea.vmem %s3, %s1371
      // Predicated region
      $region41: #{cnn_fedavg_forward.5} parent=31 // pred_check
        %p1373 = pneg %p135
      $region42: #{cnn_fedavg_forward.5} parent=31 // pred_check_branch
        %1375 = sbr.rel (%p1373) target = $region44
      $region43: #{cnn_fedavg_forward.5} parent=31 // pred_region
        %s1376 = smul.u32 49, %s19
      $region44: #{cnn_fedavg_forward.5} parent=31 // pred_fallthru
        _
    $region32: #{cnn_fedavg_forward.5} parent=5 // pred_fallthru
      _
    %p1377 = scmp.le.s32.totalorder 2, %s9
    // Predicated region
    $region45: #{cnn_fedavg_forward.5} parent=5 // pred_check
      %p1378 = pneg %p1377
    $region46: #{cnn_fedavg_forward.5} parent=5 // pred_check_branch
      %1380 = sbr.rel (%p1378) target = $region48
    $region47: #{cnn_fedavg_forward.5} parent=5 // pred_region
      %s1381 = ssub.s32 %s9, 2
      // Predicated region
      $region49: #{cnn_fedavg_forward.5} parent=47 // pred_check
        %p1382 = pneg %p141
      $region50: #{cnn_fedavg_forward.5} parent=47 // pred_check_branch
        %1384 = sbr.rel (%p1382) target = $region52
      $region51: #{cnn_fedavg_forward.5} parent=47 // pred_region
        %s1385 = smul.u32 49, %s22
        %p1386 = scmp.lt.s32.totalorder %s1385, 195
        %s1387 = scalar_select %p1386, %s1385, 195
        %p1388 = scmp.lt.s32.totalorder %s23, 0
        %s1389 = scalar_select %p1388, %s23, 0
        %s1390 = sadd.s32 %s1389, %s1387
        %s1391 = smul.addr %s1390, 4
        %s1392 = scalar_lea.vmem %s3, %s1391
      $region52: #{cnn_fedavg_forward.5} parent=47 // pred_fallthru
        _
    $region48: #{cnn_fedavg_forward.5} parent=5 // pred_fallthru
      _
  $region6: #{cnn_fedavg_forward.5} parent=0 // loop_footer
    %s13 = sadd.s32 1, %s9
  $region7: #{cnn_fedavg_forward.5} parent=0 // loop_footer_branch
    %8 = sbr.rel target = $region3
  $region8: #{cnn_fedavg_forward.5} parent=0 // loop_exit
    _

// kernel: cnn_fedavg_forward.6
$region0: #{cnn_fedavg_forward.6}
  #allocation0 [shape = 'u32[]', space=smem, size = 0x4, offset = 0x4, fixed_abs, tag = 'smem constant byte address 0x4 - core index']
  #allocation1 [shape = 'u32[144,128]{1,0:T(1,128)}', space=vmem, size = 0x12000, scoped, tag = 'internal scratch']
  %s0 = inlined_call_operand.vmem [shape: bf16[28,2,2,14,128], index: 0, kind: input, shape index: {}]
  %s1 = inlined_call_operand.vmem [shape: bf16[28,14,128], index: 1, kind: output, shape index: {}]
  %s2 = sld [smem:[#allocation0]]
  $region14: #{cnn_fedavg_forward.6} parent=0
    _
  %s4 = ssub.s32 1, %s2
  %s5 = scalar_select 0, %s4, %s2
  // Predicated region
  $region2: #{cnn_fedavg_forward.6} parent=0 // pred_check
    _
  $region3: #{cnn_fedavg_forward.6} parent=0 // pred_check_branch
    %7 = sbr.rel (0) target = $region5
  $region4: #{cnn_fedavg_forward.6} parent=0 // pred_region
    _
  $region5: #{cnn_fedavg_forward.6} parent=0 // pred_fallthru
    _
  %v8 = vld [vmem:[%s0] sm:$0xf]
  %v9 = vld [vmem:[%s0 + $0x4] sm:$0x7]
  %v10 = vld [vmem:[%s0 + $0x20] sm:$0xf]
  %v11 = vld [vmem:[%s0 + $0x24] sm:$0x7]
  %v12 = vld [vmem:[%s0 + $0x40] sm:$0xf]
  %v13 = vld [vmem:[%s0 + $0x44] sm:$0x7]
  %v14 = vld [vmem:[%s0 + $0x60] sm:$0xf]
  %v15 = vld [vmem:[%s0 + $0x64] sm:$0x7]
  %v16 = vld [vmem:[%s0 + $0x80] sm:$0xf]
  %v17 = vld [vmem:[%s0 + $0x84] sm:$0x7]
  %v18 = vld [vmem:[%s0 + $0xa0] sm:$0xf]
  %v19 = vld [vmem:[%s0 + $0xa4] sm:$0x7]
  %v20 = vld [vmem:[%s0 + $0xc0] sm:$0xf]
  %v21 = vld [vmem:[%s0 + $0xc4] sm:$0x7]
  %v22 = vld [vmem:[%s0 + $0xe0] sm:$0xf]
  %v23 = vld [vmem:[%s0 + $0xe4] sm:$0x7]
  %v24 = vld [vmem:[%s0 + $0x100] sm:$0xf]
  %v25 = vld [vmem:[%s0 + $0x104] sm:$0x7]
  %v26 = vld [vmem:[%s0 + $0x120] sm:$0xf]
  %v27 = vld [vmem:[%s0 + $0x124] sm:$0x7]
  %v28 = vld [vmem:[%s0 + $0x140] sm:$0xf]
  %v29 = vld [vmem:[%s0 + $0x144] sm:$0x7]
  %v30 = vld [vmem:[%s0 + $0x160] sm:$0xf]
  %v31 = vld [vmem:[%s0 + $0x164] sm:$0x7]
  %v32 = vld [vmem:[%s0 + $0x180] sm:$0xf]
  %v33 = vld [vmem:[%s0 + $0x184] sm:$0x7]
  %v34 = vld [vmem:[%s0 + $0x1a0] sm:$0xf]
  %v35 = vld [vmem:[%s0 + $0x1a4] sm:$0x7]
  %v36 = vld [vmem:[%s0 + $0x1c0] sm:$0xf]
  %v37 = vld [vmem:[%s0 + $0x1c4] sm:$0x7]
  %v38 = vld [vmem:[%s0 + $0x1e0] sm:$0xf]
  %v39 = vld [vmem:[%s0 + $0x1e4] sm:$0x7]
  %v40 = vld [vmem:[%s0 + $0x200] sm:$0xf]
  %v41 = vld [vmem:[%s0 + $0x204] sm:$0x7]
  %v42 = vld [vmem:[%s0 + $0x220] sm:$0xf]
  %v43 = vld [vmem:[%s0 + $0x224] sm:$0x7]
  %v44 = vld [vmem:[%s0 + $0x240] sm:$0xf]
  %v45 = vld [vmem:[%s0 + $0x244] sm:$0x7]
  %v46 = vld [vmem:[%s0 + $0x260] sm:$0xf]
  %v47 = vld [vmem:[%s0 + $0x264] sm:$0x7]
  %v48 = vld [vmem:[%s0 + $0x280] sm:$0xf]
  %v49 = vld [vmem:[%s0 + $0x284] sm:$0x7]
  %v50 = vld [vmem:[%s0 + $0x2a0] sm:$0xf]
  %v51 = vld [vmem:[%s0 + $0x2a4] sm:$0x7]
  %v52 = vld [vmem:[%s0 + $0x2c0] sm:$0xf]
  %v53 = vld [vmem:[%s0 + $0x2c4] sm:$0x7]
  %v54 = vld [vmem:[%s0 + $0x2e0] sm:$0xf]
  %v55 = vld [vmem:[%s0 + $0x2e4] sm:$0x7]
  %v56 = vld [vmem:[%s0 + $0x300] sm:$0xf]
  %v57 = vld [vmem:[%s0 + $0x304] sm:$0x7]
  %v58 = vld [vmem:[%s0 + $0x320] sm:$0xf]
  %v59 = vld [vmem:[%s0 + $0x324] sm:$0x7]
  %v60 = vld [vmem:[%s0 + $0x340] sm:$0xf]
  %v61 = vld [vmem:[%s0 + $0x344] sm:$0x7]
  %v62 = vld [vmem:[%s0 + $0x360] sm:$0xf]
  %v63 = vld [vmem:[%s0 + $0x364] sm:$0x7]
  %s64 = scalar_lea.vmem %s0, 8
  %v65 = vld [vmem:[%s64] sm:$0xf]
  %v66 = vld [vmem:[%s64 + $0x4] sm:$0x7]
  %v67 = vld [vmem:[%s64 + $0x20] sm:$0xf]
  %v68 = vld [vmem:[%s64 + $0x24] sm:$0x7]
  %v69 = vld [vmem:[%s64 + $0x40] sm:$0xf]
  %v70 = vld [vmem:[%s64 + $0x44] sm:$0x7]
  %v71 = vld [vmem:[%s64 + $0x60] sm:$0xf]
  %v72 = vld [vmem:[%s64 + $0x64] sm:$0x7]
  %v73 = vld [vmem:[%s64 + $0x80] sm:$0xf]
  %v74 = vld [vmem:[%s64 + $0x84] sm:$0x7]
  %v75 = vld [vmem:[%s64 + $0xa0] sm:$0xf]
  %v76 = vld [vmem:[%s64 + $0xa4] sm:$0x7]
  %v77 = vld [vmem:[%s64 + $0xc0] sm:$0xf]
  %v78 = vld [vmem:[%s64 + $0xc4] sm:$0x7]
  %v79 = vld [vmem:[%s64 + $0xe0] sm:$0xf]
  %v80 = vld [vmem:[%s64 + $0xe4] sm:$0x7]
  %v81 = vld [vmem:[%s64 + $0x100] sm:$0xf]
  %v82 = vld [vmem:[%s64 + $0x104] sm:$0x7]
  %v83 = vld [vmem:[%s64 + $0x120] sm:$0xf]
  %v84 = vld [vmem:[%s64 + $0x124] sm:$0x7]
  %v85 = vld [vmem:[%s64 + $0x140] sm:$0xf]
  %v86 = vld [vmem:[%s64 + $0x144] sm:$0x7]
  %v87 = vld [vmem:[%s64 + $0x160] sm:$0xf]
  %v88 = vld [vmem:[%s64 + $0x164] sm:$0x7]
  %v89 = vld [vmem:[%s64 + $0x180] sm:$0xf]
  %v90 = vld [vmem:[%s64 + $0x184] sm:$0x7]
  %v91 = vld [vmem:[%s64 + $0x1a0] sm:$0xf]
  %v92 = vld [vmem:[%s64 + $0x1a4] sm:$0x7]
  %v93 = vld [vmem:[%s64 + $0x1c0] sm:$0xf]
  %v94 = vld [vmem:[%s64 + $0x1c4] sm:$0x7]
  %v95 = vld [vmem:[%s64 + $0x1e0] sm:$0xf]
  %v96 = vld [vmem:[%s64 + $0x1e4] sm:$0x7]
  %v97 = vld [vmem:[%s64 + $0x200] sm:$0xf]
  %v98 = vld [vmem:[%s64 + $0x204] sm:$0x7]
  %v99 = vld [vmem:[%s64 + $0x220] sm:$0xf]
  %v100 = vld [vmem:[%s64 + $0x224] sm:$0x7]
  %v101 = vld [vmem:[%s64 + $0x240] sm:$0xf]
  %v102 = vld [vmem:[%s64 + $0x244] sm:$0x7]
  %v103 = vld [vmem:[%s64 + $0x260] sm:$0xf]
  %v104 = vld [vmem:[%s64 + $0x264] sm:$0x7]
  %v105 = vld [vmem:[%s64 + $0x280] sm:$0xf]
  %v106 = vld [vmem:[%s64 + $0x284] sm:$0x7]
  %v107 = vld [vmem:[%s64 + $0x2a0] sm:$0xf]
  %v108 = vld [vmem:[%s64 + $0x2a4] sm:$0x7]
  %v109 = vld [vmem:[%s64 + $0x2c0] sm:$0xf]
  %v110 = vld [vmem:[%s64 + $0x2c4] sm:$0x7]
  %v111 = vld [vmem:[%s64 + $0x2e0] sm:$0xf]
  %v112 = vld [vmem:[%s64 + $0x2e4] sm:$0x7]
  %v113 = vld [vmem:[%s64 + $0x300] sm:$0xf]
  %v114 = vld [vmem:[%s64 + $0x304] sm:$0x7]
  %v115 = vld [vmem:[%s64 + $0x320] sm:$0xf]
  %v116 = vld [vmem:[%s64 + $0x324] sm:$0x7]
  %v117 = vld [vmem:[%s64 + $0x340] sm:$0xf]
  %v118 = vld [vmem:[%s64 + $0x344] sm:$0x7]
  %v119 = vld [vmem:[%s64 + $0x360] sm:$0xf]
  %v120 = vld [vmem:[%s64 + $0x364] sm:$0x7]
  %v121 = vmax.bf16 %v8, %v65
  %v122 = vmax.bf16 %v9, %v66
  %v123 = vmax.bf16 %v10, %v67
  %v124 = vmax.bf16 %v11, %v68
  %v125 = vmax.bf16 %v12, %v69
  %v126 = vmax.bf16 %v13, %v70
  %v127 = vmax.bf16 %v14, %v71
  %v128 = vmax.bf16 %v15, %v72
  %v129 = vmax.bf16 %v16, %v73
  %v130 = vmax.bf16 %v17, %v74
  %v131 = vmax.bf16 %v18, %v75
  %v132 = vmax.bf16 %v19, %v76
  %v133 = vmax.bf16 %v20, %v77
  %v134 = vmax.bf16 %v21, %v78
  %v135 = vmax.bf16 %v22, %v79
  %v136 = vmax.bf16 %v23, %v80
  %v137 = vmax.bf16 %v24, %v81
  %v138 = vmax.bf16 %v25, %v82
  %v139 = vmax.bf16 %v26, %v83
  %v140 = vmax.bf16 %v27, %v84
  %v141 = vmax.bf16 %v28, %v85
  %v142 = vmax.bf16 %v29, %v86
  %v143 = vmax.bf16 %v30, %v87
  %v144 = vmax.bf16 %v31, %v88
  %v145 = vmax.bf16 %v32, %v89
  %v146 = vmax.bf16 %v33, %v90
  %v147 = vmax.bf16 %v34, %v91
  %v148 = vmax.bf16 %v35, %v92
  %v149 = vmax.bf16 %v36, %v93
  %v150 = vmax.bf16 %v37, %v94
  %v151 = vmax.bf16 %v38, %v95
  %v152 = vmax.bf16 %v39, %v96
  %v153 = vmax.bf16 %v40, %v97
  %v154 = vmax.bf16 %v41, %v98
  %v155 = vmax.bf16 %v42, %v99
  %v156 = vmax.bf16 %v43, %v100
  %v157 = vmax.bf16 %v44, %v101
  %v158 = vmax.bf16 %v45, %v102
  %v159 = vmax.bf16 %v46, %v103
  %v160 = vmax.bf16 %v47, %v104
  %v161 = vmax.bf16 %v48, %v105
  %v162 = vmax.bf16 %v49, %v106
  %v163 = vmax.bf16 %v50, %v107
  %v164 = vmax.bf16 %v51, %v108
  %v165 = vmax.bf16 %v52, %v109
  %v166 = vmax.bf16 %v53, %v110
  %v167 = vmax.bf16 %v54, %v111
  %v168 = vmax.bf16 %v55, %v112
  %v169 = vmax.bf16 %v56, %v113
  %v170 = vmax.bf16 %v57, %v114
  %v171 = vmax.bf16 %v58, %v115
  %v172 = vmax.bf16 %v59, %v116
  %v173 = vmax.bf16 %v60, %v117
  %v174 = vmax.bf16 %v61, %v118
  %v175 = vmax.bf16 %v62, %v119
  %v176 = vmax.bf16 %v63, %v120
  %s177 = scalar_lea.vmem %s0, 16
  %v178 = vld [vmem:[%s177] sm:$0xf]
  %v179 = vld [vmem:[%s177 + $0x4] sm:$0x7]
  %v180 = vld [vmem:[%s177 + $0x20] sm:$0xf]
  %v181 = vld [vmem:[%s177 + $0x24] sm:$0x7]
  %v182 = vld [vmem:[%s177 + $0x40] sm:$0xf]
  %v183 = vld [vmem:[%s177 + $0x44] sm:$0x7]
  %v184 = vld [vmem:[%s177 + $0x60] sm:$0xf]
  %v185 = vld [vmem:[%s177 + $0x64] sm:$0x7]
  %v186 = vld [vmem:[%s177 + $0x80] sm:$0xf]
  %v187 = vld [vmem:[%s177 + $0x84] sm:$0x7]
  %v188 = vld [vmem:[%s177 + $0xa0] sm:$0xf]
  %v189 = vld [vmem:[%s177 + $0xa4] sm:$0x7]
  %v190 = vld [vmem:[%s177 + $0xc0] sm:$0xf]
  %v191 = vld [vmem:[%s177 + $0xc4] sm:$0x7]
  %v192 = vld [vmem:[%s177 + $0xe0] sm:$0xf]
  %v193 = vld [vmem:[%s177 + $0xe4] sm:$0x7]
  %v194 = vld [vmem:[%s177 + $0x100] sm:$0xf]
  %v195 = vld [vmem:[%s177 + $0x104] sm:$0x7]
  %v196 = vld [vmem:[%s177 + $0x120] sm:$0xf]
  %v197 = vld [vmem:[%s177 + $0x124] sm:$0x7]
  %v198 = vld [vmem:[%s177 + $0x140] sm:$0xf]
  %v199 = vld [vmem:[%s177 + $0x144] sm:$0x7]
  %v200 = vld [vmem:[%s177 + $0x160] sm:$0xf]
  %v201 = vld [vmem:[%s177 + $0x164] sm:$0x7]
  %v202 = vld [vmem:[%s177 + $0x180] sm:$0xf]
  %v203 = vld [vmem:[%s177 + $0x184] sm:$0x7]
  %v204 = vld [vmem:[%s177 + $0x1a0] sm:$0xf]
  %v205 = vld [vmem:[%s177 + $0x1a4] sm:$0x7]
  %v206 = vld [vmem:[%s177 + $0x1c0] sm:$0xf]
  %v207 = vld [vmem:[%s177 + $0x1c4] sm:$0x7]
  %v208 = vld [vmem:[%s177 + $0x1e0] sm:$0xf]
  %v209 = vld [vmem:[%s177 + $0x1e4] sm:$0x7]
  %v210 = vld [vmem:[%s177 + $0x200] sm:$0xf]
  %v211 = vld [vmem:[%s177 + $0x204] sm:$0x7]
  %v212 = vld [vmem:[%s177 + $0x220] sm:$0xf]
  %v213 = vld [vmem:[%s177 + $0x224] sm:$0x7]
  %v214 = vld [vmem:[%s177 + $0x240] sm:$0xf]
  %v215 = vld [vmem:[%s177 + $0x244] sm:$0x7]
  %v216 = vld [vmem:[%s177 + $0x260] sm:$0xf]
  %v217 = vld [vmem:[%s177 + $0x264] sm:$0x7]
  %v218 = vld [vmem:[%s177 + $0x280] sm:$0xf]
  %v219 = vld [vmem:[%s177 + $0x284] sm:$0x7]
  %v220 = vld [vmem:[%s177 + $0x2a0] sm:$0xf]
  %v221 = vld [vmem:[%s177 + $0x2a4] sm:$0x7]
  %v222 = vld [vmem:[%s177 + $0x2c0] sm:$0xf]
  %v223 = vld [vmem:[%s177 + $0x2c4] sm:$0x7]
  %v224 = vld [vmem:[%s177 + $0x2e0] sm:$0xf]
  %v225 = vld [vmem:[%s177 + $0x2e4] sm:$0x7]
  %v226 = vld [vmem:[%s177 + $0x300] sm:$0xf]
  %v227 = vld [vmem:[%s177 + $0x304] sm:$0x7]
  %v228 = vld [vmem:[%s177 + $0x320] sm:$0xf]
  %v229 = vld [vmem:[%s177 + $0x324] sm:$0x7]
  %v230 = vld [vmem:[%s177 + $0x340] sm:$0xf]
  %v231 = vld [vmem:[%s177 + $0x344] sm:$0x7]
  %v232 = vld [vmem:[%s177 + $0x360] sm:$0xf]
  %v233 = vld [vmem:[%s177 + $0x364] sm:$0x7]
  %s234 = scalar_lea.vmem %s0, 24
  %v235 = vld [vmem:[%s234] sm:$0xf]
  %v236 = vld [vmem:[%s234 + $0x4] sm:$0x7]
  %v237 = vld [vmem:[%s234 + $0x20] sm:$0xf]
  %v238 = vld [vmem:[%s234 + $0x24] sm:$0x7]
  %v239 = vld [vmem:[%s234 + $0x40] sm:$0xf]
  %v240 = vld [vmem:[%s234 + $0x44] sm:$0x7]
  %v241 = vld [vmem:[%s234 + $0x60] sm:$0xf]
  %v242 = vld [vmem:[%s234 + $0x64] sm:$0x7]
  %v243 = vld [vmem:[%s234 + $0x80] sm:$0xf]
  %v244 = vld [vmem:[%s234 + $0x84] sm:$0x7]
  %v245 = vld [vmem:[%s234 + $0xa0] sm:$0xf]
  %v246 = vld [vmem:[%s234 + $0xa4] sm:$0x7]
  %v247 = vld [vmem:[%s234 + $0xc0] sm:$0xf]
  %v248 = vld [vmem:[%s234 + $0xc4] sm:$0x7]
  %v249 = vld [vmem:[%s234 + $0xe0] sm:$0xf]
  %v250 = vld [vmem:[%s234 + $0xe4] sm:$0x7]
  %v251 = vld [vmem:[%s234 + $0x100] sm:$0xf]
  %v252 = vld [vmem:[%s234 + $0x104] sm:$0x7]
  %v253 = vld [vmem:[%s234 + $0x120] sm:$0xf]
  %v254 = vld [vmem:[%s234 + $0x124] sm:$0x7]
  %v255 = vld [vmem:[%s234 + $0x140] sm:$0xf]
  %v256 = vld [vmem:[%s234 + $0x144] sm:$0x7]
  %v257 = vld [vmem:[%s234 + $0x160] sm:$0xf]
  %v258 = vld [vmem:[%s234 + $0x164] sm:$0x7]
  %v259 = vld [vmem:[%s234 + $0x180] sm:$0xf]
  %v260 = vld [vmem:[%s234 + $0x184] sm:$0x7]
  %v261 = vld [vmem:[%s234 + $0x1a0] sm:$0xf]
  %v262 = vld [vmem:[%s234 + $0x1a4] sm:$0x7]
  %v263 = vld [vmem:[%s234 + $0x1c0] sm:$0xf]
  %v264 = vld [vmem:[%s234 + $0x1c4] sm:$0x7]
  %v265 = vld [vmem:[%s234 + $0x1e0] sm:$0xf]
  %v266 = vld [vmem:[%s234 + $0x1e4] sm:$0x7]
  %v267 = vld [vmem:[%s234 + $0x200] sm:$0xf]
  %v268 = vld [vmem:[%s234 + $0x204] sm:$0x7]
  %v269 = vld [vmem:[%s234 + $0x220] sm:$0xf]
  %v270 = vld [vmem:[%s234 + $0x224] sm:$0x7]
  %v271 = vld [vmem:[%s234 + $0x240] sm:$0xf]
  %v272 = vld [vmem:[%s234 + $0x244] sm:$0x7]
  %v273 = vld [vmem:[%s234 + $0x260] sm:$0xf]
  %v274 = vld [vmem:[%s234 + $0x264] sm:$0x7]
  %v275 = vld [vmem:[%s234 + $0x280] sm:$0xf]
  %v276 = vld [vmem:[%s234 + $0x284] sm:$0x7]
  %v277 = vld [vmem:[%s234 + $0x2a0] sm:$0xf]
  %v278 = vld [vmem:[%s234 + $0x2a4] sm:$0x7]
  %v279 = vld [vmem:[%s234 + $0x2c0] sm:$0xf]
  %v280 = vld [vmem:[%s234 + $0x2c4] sm:$0x7]
  %v281 = vld [vmem:[%s234 + $0x2e0] sm:$0xf]
  %v282 = vld [vmem:[%s234 + $0x2e4] sm:$0x7]
  %v283 = vld [vmem:[%s234 + $0x300] sm:$0xf]
  %v284 = vld [vmem:[%s234 + $0x304] sm:$0x7]
  %v285 = vld [vmem:[%s234 + $0x320] sm:$0xf]
  %v286 = vld [vmem:[%s234 + $0x324] sm:$0x7]
  %v287 = vld [vmem:[%s234 + $0x340] sm:$0xf]
  %v288 = vld [vmem:[%s234 + $0x344] sm:$0x7]
  %v289 = vld [vmem:[%s234 + $0x360] sm:$0xf]
  %v290 = vld [vmem:[%s234 + $0x364] sm:$0x7]
  %v291 = vmax.bf16 %v178, %v235
  %v292 = vmax.bf16 %v179, %v236
  %v293 = vmax.bf16 %v180, %v237
  %v294 = vmax.bf16 %v181, %v238
  %v295 = vmax.bf16 %v182, %v239
  %v296 = vmax.bf16 %v183, %v240
  %v297 = vmax.bf16 %v184, %v241
  %v298 = vmax.bf16 %v185, %v242
  %v299 = vmax.bf16 %v186, %v243
  %v300 = vmax.bf16 %v187, %v244
  %v301 = vmax.bf16 %v188, %v245
  %v302 = vmax.bf16 %v189, %v246
  %v303 = vmax.bf16 %v190, %v247
  %v304 = vmax.bf16 %v191, %v248
  %v305 = vmax.bf16 %v192, %v249
  %v306 = vmax.bf16 %v193, %v250
  %v307 = vmax.bf16 %v194, %v251
  %v308 = vmax.bf16 %v195, %v252
  %v309 = vmax.bf16 %v196, %v253
  %v310 = vmax.bf16 %v197, %v254
  %v311 = vmax.bf16 %v198, %v255
  %v312 = vmax.bf16 %v199, %v256
  %v313 = vmax.bf16 %v200, %v257
  %v314 = vmax.bf16 %v201, %v258
  %v315 = vmax.bf16 %v202, %v259
  %v316 = vmax.bf16 %v203, %v260
  %v317 = vmax.bf16 %v204, %v261
  %v318 = vmax.bf16 %v205, %v262
  %v319 = vmax.bf16 %v206, %v263
  %v320 = vmax.bf16 %v207, %v264
  %v321 = vmax.bf16 %v208, %v265
  %v322 = vmax.bf16 %v209, %v266
  %v323 = vmax.bf16 %v210, %v267
  %v324 = vmax.bf16 %v211, %v268
  %v325 = vmax.bf16 %v212, %v269
  %v326 = vmax.bf16 %v213, %v270
  %v327 = vmax.bf16 %v214, %v271
  %v328 = vmax.bf16 %v215, %v272
  %v329 = vmax.bf16 %v216, %v273
  %v330 = vmax.bf16 %v217, %v274
  %v331 = vmax.bf16 %v218, %v275
  %v332 = vmax.bf16 %v219, %v276
  %v333 = vmax.bf16 %v220, %v277
  %v334 = vmax.bf16 %v221, %v278
  %v335 = vmax.bf16 %v222, %v279
  %v336 = vmax.bf16 %v223, %v280
  %v337 = vmax.bf16 %v224, %v281
  %v338 = vmax.bf16 %v225, %v282
  %v339 = vmax.bf16 %v226, %v283
  %v340 = vmax.bf16 %v227, %v284
  %v341 = vmax.bf16 %v228, %v285
  %v342 = vmax.bf16 %v229, %v286
  %v343 = vmax.bf16 %v230, %v287
  %v344 = vmax.bf16 %v231, %v288
  %v345 = vmax.bf16 %v232, %v289
  %v346 = vmax.bf16 %v233, %v290
  %v347 = vmax.bf16 %v121, %v291
  %v348 = vmax.bf16 %v122, %v292
  %v349 = vmax.bf16 %v123, %v293
  %v350 = vmax.bf16 %v124, %v294
  %v351 = vmax.bf16 %v125, %v295
  %v352 = vmax.bf16 %v126, %v296
  %v353 = vmax.bf16 %v127, %v297
  %v354 = vmax.bf16 %v128, %v298
  %v355 = vmax.bf16 %v129, %v299
  %v356 = vmax.bf16 %v130, %v300
  %v357 = vmax.bf16 %v131, %v301
  %v358 = vmax.bf16 %v132, %v302
  %v359 = vmax.bf16 %v133, %v303
  %v360 = vmax.bf16 %v134, %v304
  %v361 = vmax.bf16 %v135, %v305
  %v362 = vmax.bf16 %v136, %v306
  %v363 = vmax.bf16 %v137, %v307
  %v364 = vmax.bf16 %v138, %v308
  %v365 = vmax.bf16 %v139, %v309
  %v366 = vmax.bf16 %v140, %v310
  %v367 = vmax.bf16 %v141, %v311
  %v368 = vmax.bf16 %v142, %v312
  %v369 = vmax.bf16 %v143, %v313
  %v370 = vmax.bf16 %v144, %v314
  %v371 = vmax.bf16 %v145, %v315
  %v372 = vmax.bf16 %v146, %v316
  %v373 = vmax.bf16 %v147, %v317
  %v374 = vmax.bf16 %v148, %v318
  %v375 = vmax.bf16 %v149, %v319
  %v376 = vmax.bf16 %v150, %v320
  %v377 = vmax.bf16 %v151, %v321
  %v378 = vmax.bf16 %v152, %v322
  %v379 = vmax.bf16 %v153, %v323
  %v380 = vmax.bf16 %v154, %v324
  %v381 = vmax.bf16 %v155, %v325
  %v382 = vmax.bf16 %v156, %v326
  %v383 = vmax.bf16 %v157, %v327
  %v384 = vmax.bf16 %v158, %v328
  %v385 = vmax.bf16 %v159, %v329
  %v386 = vmax.bf16 %v160, %v330
  %v387 = vmax.bf16 %v161, %v331
  %v388 = vmax.bf16 %v162, %v332
  %v389 = vmax.bf16 %v163, %v333
  %v390 = vmax.bf16 %v164, %v334
  %v391 = vmax.bf16 %v165, %v335
  %v392 = vmax.bf16 %v166, %v336
  %v393 = vmax.bf16 %v167, %v337
  %v394 = vmax.bf16 %v168, %v338
  %v395 = vmax.bf16 %v169, %v339
  %v396 = vmax.bf16 %v170, %v340
  %v397 = vmax.bf16 %v171, %v341
  %v398 = vmax.bf16 %v172, %v342
  %v399 = vmax.bf16 %v173, %v343
  %v400 = vmax.bf16 %v174, %v344
  %v401 = vmax.bf16 %v175, %v345
  %v402 = vmax.bf16 %v176, %v346
  %403 = vst [vmem:[%s1] sm:$0xf] %v347
  %404 = vst [vmem:[%s1 + $0x4] sm:$0x7] %v348
  %405 = vst [vmem:[%s1 + $0x8] sm:$0xf] %v349
  %406 = vst [vmem:[%s1 + $0xc] sm:$0x7] %v350
  %407 = vst [vmem:[%s1 + $0x10] sm:$0xf] %v351
  %408 = vst [vmem:[%s1 + $0x14] sm:$0x7] %v352
  %409 = vst [vmem:[%s1 + $0x18] sm:$0xf] %v353
  %410 = vst [vmem:[%s1 + $0x1c] sm:$0x7] %v354
  %411 = vst [vmem:[%s1 + $0x20] sm:$0xf] %v355
  %412 = vst [vmem:[%s1 + $0x24] sm:$0x7] %v356
  %413 = vst [vmem:[%s1 + $0x28] sm:$0xf] %v357
  %414 = vst [vmem:[%s1 + $0x2c] sm:$0x7] %v358
  %415 = vst [vmem:[%s1 + $0x30] sm:$0xf] %v359
  %416 = vst [vmem:[%s1 + $0x34] sm:$0x7] %v360
  %417 = vst [vmem:[%s1 + $0x38] sm:$0xf] %v361
  %418 = vst [vmem:[%s1 + $0x3c] sm:$0x7] %v362
  %419 = vst [vmem:[%s1 + $0x40] sm:$0xf] %v363
  %420 = vst [vmem:[%s1 + $0x44] sm:$0x7] %v364
  %421 = vst [vmem:[%s1 + $0x48] sm:$0xf] %v365
  %422 = vst [vmem:[%s1 + $0x4c] sm:$0x7] %v366
  %423 = vst [vmem:[%s1 + $0x50] sm:$0xf] %v367
  %424 = vst [vmem:[%s1 + $0x54] sm:$0x7] %v368
  %425 = vst [vmem:[%s1 + $0x58] sm:$0xf] %v369
  %426 = vst [vmem:[%s1 + $0x5c] sm:$0x7] %v370
  %427 = vst [vmem:[%s1 + $0x60] sm:$0xf] %v371
  %428 = vst [vmem:[%s1 + $0x64] sm:$0x7] %v372
  %429 = vst [vmem:[%s1 + $0x68] sm:$0xf] %v373
  %430 = vst [vmem:[%s1 + $0x6c] sm:$0x7] %v374
  %431 = vst [vmem:[%s1 + $0x70] sm:$0xf] %v375
  %432 = vst [vmem:[%s1 + $0x74] sm:$0x7] %v376
  %433 = vst [vmem:[%s1 + $0x78] sm:$0xf] %v377
  %434 = vst [vmem:[%s1 + $0x7c] sm:$0x7] %v378
  %435 = vst [vmem:[%s1 + $0x80] sm:$0xf] %v379
  %436 = vst [vmem:[%s1 + $0x84] sm:$0x7] %v380
  %437 = vst [vmem:[%s1 + $0x88] sm:$0xf] %v381
  %438 = vst [vmem:[%s1 + $0x8c] sm:$0x7] %v382
  %439 = vst [vmem:[%s1 + $0x90] sm:$0xf] %v383
  %440 = vst [vmem:[%s1 + $0x94] sm:$0x7] %v384
  %441 = vst [vmem:[%s1 + $0x98] sm:$0xf] %v385
  %442 = vst [vmem:[%s1 + $0x9c] sm:$0x7] %v386
  %443 = vst [vmem:[%s1 + $0xa0] sm:$0xf] %v387
  %444 = vst [vmem:[%s1 + $0xa4] sm:$0x7] %v388
  %445 = vst [vmem:[%s1 + $0xa8] sm:$0xf] %v389
  %446 = vst [vmem:[%s1 + $0xac] sm:$0x7] %v390
  %447 = vst [vmem:[%s1 + $0xb0] sm:$0xf] %v391
  %448 = vst [vmem:[%s1 + $0xb4] sm:$0x7] %v392
  %449 = vst [vmem:[%s1 + $0xb8] sm:$0xf] %v393
  %450 = vst [vmem:[%s1 + $0xbc] sm:$0x7] %v394
  %451 = vst [vmem:[%s1 + $0xc0] sm:$0xf] %v395
  %452 = vst [vmem:[%s1 + $0xc4] sm:$0x7] %v396
  %453 = vst [vmem:[%s1 + $0xc8] sm:$0xf] %v397
  %454 = vst [vmem:[%s1 + $0xcc] sm:$0x7] %v398
  %455 = vst [vmem:[%s1 + $0xd0] sm:$0xf] %v399
  %456 = vst [vmem:[%s1 + $0xd4] sm:$0x7] %v400
  %457 = vst [vmem:[%s1 + $0xd8] sm:$0xf] %v401
  %458 = vst [vmem:[%s1 + $0xdc] sm:$0x7] %v402
  // Predicated region
  $region6: #{cnn_fedavg_forward.6} parent=0 // pred_check
    _
  $region7: #{cnn_fedavg_forward.6} parent=0 // pred_check_branch
    %460 = sbr.rel (0) target = $region9
  $region8: #{cnn_fedavg_forward.6} parent=0 // pred_region
    _
  $region9: #{cnn_fedavg_forward.6} parent=0 // pred_fallthru
    _
  // Predicated region
  $region10: #{cnn_fedavg_forward.6} parent=0 // pred_check
    _
  $region11: #{cnn_fedavg_forward.6} parent=0 // pred_check_branch
    %462 = sbr.rel (0) target = $region13
  $region12: #{cnn_fedavg_forward.6} parent=0 // pred_region
    _
  $region13: #{cnn_fedavg_forward.6} parent=0 // pred_fallthru
    _

// kernel: cnn_fedavg_forward.8
$region0: #{cnn_fedavg_forward.8}
  #allocation0 [shape = 'u32[]', space=smem, size = 0x4, offset = 0x4, fixed_abs, tag = 'smem constant byte address 0x4 - core index']
  #allocation1 [shape = 'u32[144,128]{1,0:T(1,128)}', space=vmem, size = 0x12000, scoped, tag = 'internal scratch']
  %s0 = inlined_call_operand.vmem [shape: bf16[14,2,2,7,128], index: 0, kind: input, shape index: {}]
  %s1 = inlined_call_operand.vmem [shape: bf16[14,7,128], index: 1, kind: output, shape index: {}]
  %s2 = sld [smem:[#allocation0]]
  $region14: #{cnn_fedavg_forward.8} parent=0
    _
  %s4 = ssub.s32 1, %s2
  %s5 = scalar_select 0, %s4, %s2
  // Predicated region
  $region2: #{cnn_fedavg_forward.8} parent=0 // pred_check
    _
  $region3: #{cnn_fedavg_forward.8} parent=0 // pred_check_branch
    %7 = sbr.rel (0) target = $region5
  $region4: #{cnn_fedavg_forward.8} parent=0 // pred_region
    _
  $region5: #{cnn_fedavg_forward.8} parent=0 // pred_fallthru
    _
  %v8 = vld [vmem:[%s0] sm:$0xf]
  %v9 = vld [vmem:[%s0 + $0x10] sm:$0xf]
  %v10 = vld [vmem:[%s0 + $0x20] sm:$0xf]
  %v11 = vld [vmem:[%s0 + $0x30] sm:$0xf]
  %v12 = vld [vmem:[%s0 + $0x40] sm:$0xf]
  %v13 = vld [vmem:[%s0 + $0x50] sm:$0xf]
  %v14 = vld [vmem:[%s0 + $0x60] sm:$0xf]
  %v15 = vld [vmem:[%s0 + $0x70] sm:$0xf]
  %v16 = vld [vmem:[%s0 + $0x80] sm:$0xf]
  %v17 = vld [vmem:[%s0 + $0x90] sm:$0xf]
  %v18 = vld [vmem:[%s0 + $0xa0] sm:$0xf]
  %v19 = vld [vmem:[%s0 + $0xb0] sm:$0xf]
  %v20 = vld [vmem:[%s0 + $0xc0] sm:$0xf]
  %v21 = vld [vmem:[%s0 + $0xd0] sm:$0xf]
  %s22 = scalar_lea.vmem %s0, 4
  %v23 = vld [vmem:[%s22] sm:$0xf]
  %v24 = vld [vmem:[%s22 + $0x10] sm:$0xf]
  %v25 = vld [vmem:[%s22 + $0x20] sm:$0xf]
  %v26 = vld [vmem:[%s22 + $0x30] sm:$0xf]
  %v27 = vld [vmem:[%s22 + $0x40] sm:$0xf]
  %v28 = vld [vmem:[%s22 + $0x50] sm:$0xf]
  %v29 = vld [vmem:[%s22 + $0x60] sm:$0xf]
  %v30 = vld [vmem:[%s22 + $0x70] sm:$0xf]
  %v31 = vld [vmem:[%s22 + $0x80] sm:$0xf]
  %v32 = vld [vmem:[%s22 + $0x90] sm:$0xf]
  %v33 = vld [vmem:[%s22 + $0xa0] sm:$0xf]
  %v34 = vld [vmem:[%s22 + $0xb0] sm:$0xf]
  %v35 = vld [vmem:[%s22 + $0xc0] sm:$0xf]
  %v36 = vld [vmem:[%s22 + $0xd0] sm:$0xf]
  %v37 = vmax.bf16 %v8, %v23
  %v38 = vmax.bf16 %v9, %v24
  %v39 = vmax.bf16 %v10, %v25
  %v40 = vmax.bf16 %v11, %v26
  %v41 = vmax.bf16 %v12, %v27
  %v42 = vmax.bf16 %v13, %v28
  %v43 = vmax.bf16 %v14, %v29
  %v44 = vmax.bf16 %v15, %v30
  %v45 = vmax.bf16 %v16, %v31
  %v46 = vmax.bf16 %v17, %v32
  %v47 = vmax.bf16 %v18, %v33
  %v48 = vmax.bf16 %v19, %v34
  %v49 = vmax.bf16 %v20, %v35
  %v50 = vmax.bf16 %v21, %v36
  %s51 = scalar_lea.vmem %s0, 8
  %v52 = vld [vmem:[%s51] sm:$0xf]
  %v53 = vld [vmem:[%s51 + $0x10] sm:$0xf]
  %v54 = vld [vmem:[%s51 + $0x20] sm:$0xf]
  %v55 = vld [vmem:[%s51 + $0x30] sm:$0xf]
  %v56 = vld [vmem:[%s51 + $0x40] sm:$0xf]
  %v57 = vld [vmem:[%s51 + $0x50] sm:$0xf]
  %v58 = vld [vmem:[%s51 + $0x60] sm:$0xf]
  %v59 = vld [vmem:[%s51 + $0x70] sm:$0xf]
  %v60 = vld [vmem:[%s51 + $0x80] sm:$0xf]
  %v61 = vld [vmem:[%s51 + $0x90] sm:$0xf]
  %v62 = vld [vmem:[%s51 + $0xa0] sm:$0xf]
  %v63 = vld [vmem:[%s51 + $0xb0] sm:$0xf]
  %v64 = vld [vmem:[%s51 + $0xc0] sm:$0xf]
  %v65 = vld [vmem:[%s51 + $0xd0] sm:$0xf]
  %s66 = scalar_lea.vmem %s0, 12
  %v67 = vld [vmem:[%s66] sm:$0xf]
  %v68 = vld [vmem:[%s66 + $0x10] sm:$0xf]
  %v69 = vld [vmem:[%s66 + $0x20] sm:$0xf]
  %v70 = vld [vmem:[%s66 + $0x30] sm:$0xf]
  %v71 = vld [vmem:[%s66 + $0x40] sm:$0xf]
  %v72 = vld [vmem:[%s66 + $0x50] sm:$0xf]
  %v73 = vld [vmem:[%s66 + $0x60] sm:$0xf]
  %v74 = vld [vmem:[%s66 + $0x70] sm:$0xf]
  %v75 = vld [vmem:[%s66 + $0x80] sm:$0xf]
  %v76 = vld [vmem:[%s66 + $0x90] sm:$0xf]
  %v77 = vld [vmem:[%s66 + $0xa0] sm:$0xf]
  %v78 = vld [vmem:[%s66 + $0xb0] sm:$0xf]
  %v79 = vld [vmem:[%s66 + $0xc0] sm:$0xf]
  %v80 = vld [vmem:[%s66 + $0xd0] sm:$0xf]
  %v81 = vmax.bf16 %v52, %v67
  %v82 = vmax.bf16 %v53, %v68
  %v83 = vmax.bf16 %v54, %v69
  %v84 = vmax.bf16 %v55, %v70
  %v85 = vmax.bf16 %v56, %v71
  %v86 = vmax.bf16 %v57, %v72
  %v87 = vmax.bf16 %v58, %v73
  %v88 = vmax.bf16 %v59, %v74
  %v89 = vmax.bf16 %v60, %v75
  %v90 = vmax.bf16 %v61, %v76
  %v91 = vmax.bf16 %v62, %v77
  %v92 = vmax.bf16 %v63, %v78
  %v93 = vmax.bf16 %v64, %v79
  %v94 = vmax.bf16 %v65, %v80
  %v95 = vmax.bf16 %v37, %v81
  %v96 = vmax.bf16 %v38, %v82
  %v97 = vmax.bf16 %v39, %v83
  %v98 = vmax.bf16 %v40, %v84
  %v99 = vmax.bf16 %v41, %v85
  %v100 = vmax.bf16 %v42, %v86
  %v101 = vmax.bf16 %v43, %v87
  %v102 = vmax.bf16 %v44, %v88
  %v103 = vmax.bf16 %v45, %v89
  %v104 = vmax.bf16 %v46, %v90
  %v105 = vmax.bf16 %v47, %v91
  %v106 = vmax.bf16 %v48, %v92
  %v107 = vmax.bf16 %v49, %v93
  %v108 = vmax.bf16 %v50, %v94
  %vm109 = vcmask 1043456
  %vm110 = vsmask.f32 3328
  %vm111 = vmand %vm109, %vm110
  %v112 = vld [vmem:[%s1] sm:$0xf]
  %v113 = vsel %vm111, %v95, %v112
  %114 = vst [vmem:[%s1] sm:$0xf] %v113
  %v115 = vld [vmem:[%s1 + $0x4] sm:$0xf]
  %v116 = vsel %vm111, %v96, %v115
  %117 = vst [vmem:[%s1 + $0x4] sm:$0xf] %v116
  %v118 = vld [vmem:[%s1 + $0x8] sm:$0xf]
  %v119 = vsel %vm111, %v97, %v118
  %120 = vst [vmem:[%s1 + $0x8] sm:$0xf] %v119
  %v121 = vld [vmem:[%s1 + $0xc] sm:$0xf]
  %v122 = vsel %vm111, %v98, %v121
  %123 = vst [vmem:[%s1 + $0xc] sm:$0xf] %v122
  %v124 = vld [vmem:[%s1 + $0x10] sm:$0xf]
  %v125 = vsel %vm111, %v99, %v124
  %126 = vst [vmem:[%s1 + $0x10] sm:$0xf] %v125
  %v127 = vld [vmem:[%s1 + $0x14] sm:$0xf]
  %v128 = vsel %vm111, %v100, %v127
  %129 = vst [vmem:[%s1 + $0x14] sm:$0xf] %v128
  %v130 = vld [vmem:[%s1 + $0x18] sm:$0xf]
  %v131 = vsel %vm111, %v101, %v130
  %132 = vst [vmem:[%s1 + $0x18] sm:$0xf] %v131
  %v133 = vld [vmem:[%s1 + $0x1c] sm:$0xf]
  %v134 = vsel %vm111, %v102, %v133
  %135 = vst [vmem:[%s1 + $0x1c] sm:$0xf] %v134
  %v136 = vld [vmem:[%s1 + $0x20] sm:$0xf]
  %v137 = vsel %vm111, %v103, %v136
  %138 = vst [vmem:[%s1 + $0x20] sm:$0xf] %v137
  %v139 = vld [vmem:[%s1 + $0x24] sm:$0xf]
  %v140 = vsel %vm111, %v104, %v139
  %141 = vst [vmem:[%s1 + $0x24] sm:$0xf] %v140
  %v142 = vld [vmem:[%s1 + $0x28] sm:$0xf]
  %v143 = vsel %vm111, %v105, %v142
  %144 = vst [vmem:[%s1 + $0x28] sm:$0xf] %v143
  %v145 = vld [vmem:[%s1 + $0x2c] sm:$0xf]
  %v146 = vsel %vm111, %v106, %v145
  %147 = vst [vmem:[%s1 + $0x2c] sm:$0xf] %v146
  %v148 = vld [vmem:[%s1 + $0x30] sm:$0xf]
  %v149 = vsel %vm111, %v107, %v148
  %150 = vst [vmem:[%s1 + $0x30] sm:$0xf] %v149
  %v151 = vld [vmem:[%s1 + $0x34] sm:$0xf]
  %v152 = vsel %vm111, %v108, %v151
  %153 = vst [vmem:[%s1 + $0x34] sm:$0xf] %v152
  // Predicated region
  $region6: #{cnn_fedavg_forward.8} parent=0 // pred_check
    _
  $region7: #{cnn_fedavg_forward.8} parent=0 // pred_check_branch
    %155 = sbr.rel (0) target = $region9
  $region8: #{cnn_fedavg_forward.8} parent=0 // pred_region
    _
  $region9: #{cnn_fedavg_forward.8} parent=0 // pred_fallthru
    _
  // Predicated region
  $region10: #{cnn_fedavg_forward.8} parent=0 // pred_check
    _
  $region11: #{cnn_fedavg_forward.8} parent=0 // pred_check_branch
    %157 = sbr.rel (0) target = $region13
  $region12: #{cnn_fedavg_forward.8} parent=0 // pred_region
    _
  $region13: #{cnn_fedavg_forward.8} parent=0 // pred_fallthru
    _

// kernel: cnn_fedavg_forward.7
$region0: #{cnn_fedavg_forward.7}
  #allocation0 [shape = 'u32[]', space=smem, size = 0x4, offset = 0x4, fixed_abs, tag = 'smem constant byte address 0x4 - core index']
  #allocation1 [shape = 'u32[144,128]{1,0:T(1,128)}', space=vmem, size = 0x12000, scoped, tag = 'internal scratch']
  #allocation2 [shape = 'f32[392,128]{1,0:T(8,128)}', space=vmem, size = 0x31000, scoped, tag = 'scratch operand']
  %s0 = inlined_call_operand.vmem [shape: bf16[392,800], index: 0, kind: input, shape index: {}]
  %s1 = inlined_call_operand.vmem [shape: bf16[800,128], index: 1, kind: input, shape index: {}]
  %s2 = inlined_call_operand.vmem [shape: f32[1,128], index: 2, kind: input, shape index: {}]
  %s3 = inlined_call_operand.vmem [shape: bf16[392,128], index: 3, kind: output, shape index: {}]
  %s4 = sld [smem:[#allocation0]]
  $region30: #{cnn_fedavg_forward.7} parent=0
    _
  %s6 = ssub.s32 1, %s4
  %s7 = scalar_select 0, %s6, %s4
  // Predicated region
  $region2: #{cnn_fedavg_forward.7} parent=0 // pred_check
    _
  $region3: #{cnn_fedavg_forward.7} parent=0 // pred_check_branch
    %9 = sbr.rel (0) target = $region5
  $region4: #{cnn_fedavg_forward.7} parent=0 // pred_region
    _
  $region5: #{cnn_fedavg_forward.7} parent=0 // pred_fallthru
    _
  // Predicated region
  $region6: #{cnn_fedavg_forward.7} parent=0 // pred_check
    _
  $region7: #{cnn_fedavg_forward.7} parent=0 // pred_check_branch
    %11 = sbr.rel (0) target = $region9
  $region8: #{cnn_fedavg_forward.7} parent=0 // pred_region
    _
  $region9: #{cnn_fedavg_forward.7} parent=0 // pred_fallthru
    _
  // Predicated region
  $region10: #{cnn_fedavg_forward.7} parent=0 // pred_check
    _
  $region11: #{cnn_fedavg_forward.7} parent=0 // pred_check_branch
    %13 = sbr.rel (0) target = $region13
  $region12: #{cnn_fedavg_forward.7} parent=0 // pred_region
    _
  $region13: #{cnn_fedavg_forward.7} parent=0 // pred_fallthru
    _
  %p15 = scmp.eq.s32.totalorder 0, 0
  // Predicated region
  $region14: #{cnn_fedavg_forward.7} parent=0 // pred_check
    %p16 = pneg %p15
  $region15: #{cnn_fedavg_forward.7} parent=0 // pred_check_branch
    %18 = sbr.rel (%p16) target = $region17
  $region16: #{cnn_fedavg_forward.7} parent=0 // pred_region
    %19 = vst [vmem:[#allocation2] sm:$0xff] 0.0
    %20 = vst [vmem:[#allocation2 + $0x8] sm:$0xff] 0.0
    %21 = vst [vmem:[#allocation2 + $0x10] sm:$0xff] 0.0
    %22 = vst [vmem:[#allocation2 + $0x18] sm:$0xff] 0.0
    %23 = vst [vmem:[#allocation2 + $0x20] sm:$0xff] 0.0
    %24 = vst [vmem:[#allocation2 + $0x28] sm:$0xff] 0.0
    %25 = vst [vmem:[#allocation2 + $0x30] sm:$0xff] 0.0
    %26 = vst [vmem:[#allocation2 + $0x38] sm:$0xff] 0.0
    %27 = vst [vmem:[#allocation2 + $0x40] sm:$0xff] 0.0
    %28 = vst [vmem:[#allocation2 + $0x48] sm:$0xff] 0.0
    %29 = vst [vmem:[#allocation2 + $0x50] sm:$0xff] 0.0
    %30 = vst [vmem:[#allocation2 + $0x58] sm:$0xff] 0.0
    %31 = vst [vmem:[#allocation2 + $0x60] sm:$0xff] 0.0
    %32 = vst [vmem:[#allocation2 + $0x68] sm:$0xff] 0.0
    %33 = vst [vmem:[#allocation2 + $0x70] sm:$0xff] 0.0
    %34 = vst [vmem:[#allocation2 + $0x78] sm:$0xff] 0.0
    %35 = vst [vmem:[#allocation2 + $0x80] sm:$0xff] 0.0
    %36 = vst [vmem:[#allocation2 + $0x88] sm:$0xff] 0.0
    %37 = vst [vmem:[#allocation2 + $0x90] sm:$0xff] 0.0
    %38 = vst [vmem:[#allocation2 + $0x98] sm:$0xff] 0.0
    %39 = vst [vmem:[#allocation2 + $0xa0] sm:$0xff] 0.0
    %40 = vst [vmem:[#allocation2 + $0xa8] sm:$0xff] 0.0
    %41 = vst [vmem:[#allocation2 + $0xb0] sm:$0xff] 0.0
    %42 = vst [vmem:[#allocation2 + $0xb8] sm:$0xff] 0.0
    %43 = vst [vmem:[#allocation2 + $0xc0] sm:$0xff] 0.0
    %44 = vst [vmem:[#allocation2 + $0xc8] sm:$0xff] 0.0
    %45 = vst [vmem:[#allocation2 + $0xd0] sm:$0xff] 0.0
    %46 = vst [vmem:[#allocation2 + $0xd8] sm:$0xff] 0.0
    %47 = vst [vmem:[#allocation2 + $0xe0] sm:$0xff] 0.0
    %48 = vst [vmem:[#allocation2 + $0xe8] sm:$0xff] 0.0
    %49 = vst [vmem:[#allocation2 + $0xf0] sm:$0xff] 0.0
    %50 = vst [vmem:[#allocation2 + $0xf8] sm:$0xff] 0.0
    %51 = vst [vmem:[#allocation2 + $0x100] sm:$0xff] 0.0
    %52 = vst [vmem:[#allocation2 + $0x108] sm:$0xff] 0.0
    %53 = vst [vmem:[#allocation2 + $0x110] sm:$0xff] 0.0
    %54 = vst [vmem:[#allocation2 + $0x118] sm:$0xff] 0.0
    %55 = vst [vmem:[#allocation2 + $0x120] sm:$0xff] 0.0
    %56 = vst [vmem:[#allocation2 + $0x128] sm:$0xff] 0.0
    %57 = vst [vmem:[#allocation2 + $0x130] sm:$0xff] 0.0
    %58 = vst [vmem:[#allocation2 + $0x138] sm:$0xff] 0.0
    %59 = vst [vmem:[#allocation2 + $0x140] sm:$0xff] 0.0
    %60 = vst [vmem:[#allocation2 + $0x148] sm:$0xff] 0.0
    %61 = vst [vmem:[#allocation2 + $0x150] sm:$0xff] 0.0
    %62 = vst [vmem:[#allocation2 + $0x158] sm:$0xff] 0.0
    %63 = vst [vmem:[#allocation2 + $0x160] sm:$0xff] 0.0
    %64 = vst [vmem:[#allocation2 + $0x168] sm:$0xff] 0.0
    %65 = vst [vmem:[#allocation2 + $0x170] sm:$0xff] 0.0
    %66 = vst [vmem:[#allocation2 + $0x178] sm:$0xff] 0.0
    %67 = vst [vmem:[#allocation2 + $0x180] sm:$0xff] 0.0
  $region17: #{cnn_fedavg_forward.7} parent=0 // pred_fallthru
    _
  %v68 = vld [vmem:[#allocation2] sm:$0xff]
  %v69 = vld [vmem:[#allocation2 + $0x8] sm:$0xff]
  %v70 = vld [vmem:[#allocation2 + $0x10] sm:$0xff]
  %v71 = vld [vmem:[#allocation2 + $0x18] sm:$0xff]
  %v72 = vld [vmem:[#allocation2 + $0x20] sm:$0xff]
  %v73 = vld [vmem:[#allocation2 + $0x28] sm:$0xff]
  %v74 = vld [vmem:[#allocation2 + $0x30] sm:$0xff]
  %v75 = vld [vmem:[#allocation2 + $0x38] sm:$0xff]
  %v76 = vld [vmem:[#allocation2 + $0x40] sm:$0xff]
  %v77 = vld [vmem:[#allocation2 + $0x48] sm:$0xff]
  %v78 = vld [vmem:[#allocation2 + $0x50] sm:$0xff]
  %v79 = vld [vmem:[#allocation2 + $0x58] sm:$0xff]
  %v80 = vld [vmem:[#allocation2 + $0x60] sm:$0xff]
  %v81 = vld [vmem:[#allocation2 + $0x68] sm:$0xff]
  %v82 = vld [vmem:[#allocation2 + $0x70] sm:$0xff]
  %v83 = vld [vmem:[#allocation2 + $0x78] sm:$0xff]
  %v84 = vld [vmem:[#allocation2 + $0x80] sm:$0xff]
  %v85 = vld [vmem:[#allocation2 + $0x88] sm:$0xff]
  %v86 = vld [vmem:[#allocation2 + $0x90] sm:$0xff]
  %v87 = vld [vmem:[#allocation2 + $0x98] sm:$0xff]
  %v88 = vld [vmem:[#allocation2 + $0xa0] sm:$0xff]
  %v89 = vld [vmem:[#allocation2 + $0xa8] sm:$0xff]
  %v90 = vld [vmem:[#allocation2 + $0xb0] sm:$0xff]
  %v91 = vld [vmem:[#allocation2 + $0xb8] sm:$0xff]
  %v92 = vld [vmem:[#allocation2 + $0xc0] sm:$0xff]
  %v93 = vld [vmem:[#allocation2 + $0xc8] sm:$0xff]
  %v94 = vld [vmem:[#allocation2 + $0xd0] sm:$0xff]
  %v95 = vld [vmem:[#allocation2 + $0xd8] sm:$0xff]
  %v96 = vld [vmem:[#allocation2 + $0xe0] sm:$0xff]
  %v97 = vld [vmem:[#allocation2 + $0xe8] sm:$0xff]
  %v98 = vld [vmem:[#allocation2 + $0xf0] sm:$0xff]
  %v99 = vld [vmem:[#allocation2 + $0xf8] sm:$0xff]
  %v100 = vld [vmem:[#allocation2 + $0x100] sm:$0xff]
  %v101 = vld [vmem:[#allocation2 + $0x108] sm:$0xff]
  %v102 = vld [vmem:[#allocation2 + $0x110] sm:$0xff]
  %v103 = vld [vmem:[#allocation2 + $0x118] sm:$0xff]
  %v104 = vld [vmem:[#allocation2 + $0x120] sm:$0xff]
  %v105 = vld [vmem:[#allocation2 + $0x128] sm:$0xff]
  %v106 = vld [vmem:[#allocation2 + $0x130] sm:$0xff]
  %v107 = vld [vmem:[#allocation2 + $0x138] sm:$0xff]
  %v108 = vld [vmem:[#allocation2 + $0x140] sm:$0xff]
  %v109 = vld [vmem:[#allocation2 + $0x148] sm:$0xff]
  %v110 = vld [vmem:[#allocation2 + $0x150] sm:$0xff]
  %v111 = vld [vmem:[#allocation2 + $0x158] sm:$0xff]
  %v112 = vld [vmem:[#allocation2 + $0x160] sm:$0xff]
  %v113 = vld [vmem:[#allocation2 + $0x168] sm:$0xff]
  %v114 = vld [vmem:[#allocation2 + $0x170] sm:$0xff]
  %v115 = vld [vmem:[#allocation2 + $0x178] sm:$0xff]
  %v116 = vld [vmem:[#allocation2 + $0x180] sm:$0xff]
  %v117 = vld [vmem:[%s0] sm:$0xff]
  %v118 = vld [vmem:[%s0 + $0x8] sm:$0xff]
  %v119 = vld [vmem:[%s0 + $0x10] sm:$0xff]
  %v120 = vld [vmem:[%s0 + $0x18] sm:$0xf]
  %v121 = vld [vmem:[%s0 + $0x1c] sm:$0xff]
  %v122 = vld [vmem:[%s0 + $0x24] sm:$0xff]
  %v123 = vld [vmem:[%s0 + $0x2c] sm:$0xff]
  %v124 = vld [vmem:[%s0 + $0x34] sm:$0xf]
  %v125 = vld [vmem:[%s0 + $0x38] sm:$0xff]
  %v126 = vld [vmem:[%s0 + $0x40] sm:$0xff]
  %v127 = vld [vmem:[%s0 + $0x48] sm:$0xff]
  %v128 = vld [vmem:[%s0 + $0x50] sm:$0xf]
  %v129 = vld [vmem:[%s0 + $0x54] sm:$0xff]
  %v130 = vld [vmem:[%s0 + $0x5c] sm:$0xff]
  %v131 = vld [vmem:[%s0 + $0x64] sm:$0xff]
  %v132 = vld [vmem:[%s0 + $0x6c] sm:$0xf]
  %v133 = vld [vmem:[%s0 + $0x70] sm:$0xff]
  %v134 = vld [vmem:[%s0 + $0x78] sm:$0xff]
  %v135 = vld [vmem:[%s0 + $0x80] sm:$0xff]
  %v136 = vld [vmem:[%s0 + $0x88] sm:$0xf]
  %v137 = vld [vmem:[%s0 + $0x8c] sm:$0xff]
  %v138 = vld [vmem:[%s0 + $0x94] sm:$0xff]
  %v139 = vld [vmem:[%s0 + $0x9c] sm:$0xff]
  %v140 = vld [vmem:[%s0 + $0xa4] sm:$0xf]
  %v141 = vld [vmem:[%s0 + $0xa8] sm:$0xff]
  %v142 = vld [vmem:[%s0 + $0xb0] sm:$0xff]
  %v143 = vld [vmem:[%s0 + $0xb8] sm:$0xff]
  %v144 = vld [vmem:[%s0 + $0xc0] sm:$0xf]
  %v145 = vld [vmem:[%s0 + $0xc4] sm:$0xff]
  %v146 = vld [vmem:[%s0 + $0xcc] sm:$0xff]
  %v147 = vld [vmem:[%s0 + $0xd4] sm:$0xff]
  %v148 = vld [vmem:[%s0 + $0xdc] sm:$0xf]
  %v149 = vld [vmem:[%s0 + $0xe0] sm:$0xff]
  %v150 = vld [vmem:[%s0 + $0xe8] sm:$0xff]
  %v151 = vld [vmem:[%s0 + $0xf0] sm:$0xff]
  %v152 = vld [vmem:[%s0 + $0xf8] sm:$0xf]
  %v153 = vld [vmem:[%s0 + $0xfc] sm:$0xff]
  %v154 = vld [vmem:[%s0 + $0x104] sm:$0xff]
  %v155 = vld [vmem:[%s0 + $0x10c] sm:$0xff]
  %v156 = vld [vmem:[%s0 + $0x114] sm:$0xf]
  %v157 = vld [vmem:[%s0 + $0x118] sm:$0xff]
  %v158 = vld [vmem:[%s0 + $0x120] sm:$0xff]
  %v159 = vld [vmem:[%s0 + $0x128] sm:$0xff]
  %v160 = vld [vmem:[%s0 + $0x130] sm:$0xf]
  %v161 = vld [vmem:[%s0 + $0x134] sm:$0xff]
  %v162 = vld [vmem:[%s0 + $0x13c] sm:$0xff]
  %v163 = vld [vmem:[%s0 + $0x144] sm:$0xff]
  %v164 = vld [vmem:[%s0 + $0x14c] sm:$0xf]
  %v165 = vld [vmem:[%s0 + $0x150] sm:$0xff]
  %v166 = vld [vmem:[%s0 + $0x158] sm:$0xff]
  %v167 = vld [vmem:[%s0 + $0x160] sm:$0xff]
  %v168 = vld [vmem:[%s0 + $0x168] sm:$0xf]
  %v169 = vld [vmem:[%s0 + $0x16c] sm:$0xff]
  %v170 = vld [vmem:[%s0 + $0x174] sm:$0xff]
  %v171 = vld [vmem:[%s0 + $0x17c] sm:$0xff]
  %v172 = vld [vmem:[%s0 + $0x184] sm:$0xf]
  %v173 = vld [vmem:[%s0 + $0x188] sm:$0xff]
  %v174 = vld [vmem:[%s0 + $0x190] sm:$0xff]
  %v175 = vld [vmem:[%s0 + $0x198] sm:$0xff]
  %v176 = vld [vmem:[%s0 + $0x1a0] sm:$0xf]
  %v177 = vld [vmem:[%s0 + $0x1a4] sm:$0xff]
  %v178 = vld [vmem:[%s0 + $0x1ac] sm:$0xff]
  %v179 = vld [vmem:[%s0 + $0x1b4] sm:$0xff]
  %v180 = vld [vmem:[%s0 + $0x1bc] sm:$0xf]
  %v181 = vld [vmem:[%s0 + $0x1c0] sm:$0xff]
  %v182 = vld [vmem:[%s0 + $0x1c8] sm:$0xff]
  %v183 = vld [vmem:[%s0 + $0x1d0] sm:$0xff]
  %v184 = vld [vmem:[%s0 + $0x1d8] sm:$0xf]
  %v185 = vld [vmem:[%s0 + $0x1dc] sm:$0xff]
  %v186 = vld [vmem:[%s0 + $0x1e4] sm:$0xff]
  %v187 = vld [vmem:[%s0 + $0x1ec] sm:$0xff]
  %v188 = vld [vmem:[%s0 + $0x1f4] sm:$0xf]
  %v189 = vld [vmem:[%s0 + $0x1f8] sm:$0xff]
  %v190 = vld [vmem:[%s0 + $0x200] sm:$0xff]
  %v191 = vld [vmem:[%s0 + $0x208] sm:$0xff]
  %v192 = vld [vmem:[%s0 + $0x210] sm:$0xf]
  %v193 = vld [vmem:[%s0 + $0x214] sm:$0xff]
  %v194 = vld [vmem:[%s0 + $0x21c] sm:$0xff]
  %v195 = vld [vmem:[%s0 + $0x224] sm:$0xff]
  %v196 = vld [vmem:[%s0 + $0x22c] sm:$0xf]
  %v197 = vld [vmem:[%s0 + $0x230] sm:$0xff]
  %v198 = vld [vmem:[%s0 + $0x238] sm:$0xff]
  %v199 = vld [vmem:[%s0 + $0x240] sm:$0xff]
  %v200 = vld [vmem:[%s0 + $0x248] sm:$0xf]
  %v201 = vld [vmem:[%s0 + $0x24c] sm:$0xff]
  %v202 = vld [vmem:[%s0 + $0x254] sm:$0xff]
  %v203 = vld [vmem:[%s0 + $0x25c] sm:$0xff]
  %v204 = vld [vmem:[%s0 + $0x264] sm:$0xf]
  %v205 = vld [vmem:[%s0 + $0x268] sm:$0xff]
  %v206 = vld [vmem:[%s0 + $0x270] sm:$0xff]
  %v207 = vld [vmem:[%s0 + $0x278] sm:$0xff]
  %v208 = vld [vmem:[%s0 + $0x280] sm:$0xf]
  %v209 = vld [vmem:[%s0 + $0x284] sm:$0xff]
  %v210 = vld [vmem:[%s0 + $0x28c] sm:$0xff]
  %v211 = vld [vmem:[%s0 + $0x294] sm:$0xff]
  %v212 = vld [vmem:[%s0 + $0x29c] sm:$0xf]
  %v213 = vld [vmem:[%s0 + $0x2a0] sm:$0xff]
  %v214 = vld [vmem:[%s0 + $0x2a8] sm:$0xff]
  %v215 = vld [vmem:[%s0 + $0x2b0] sm:$0xff]
  %v216 = vld [vmem:[%s0 + $0x2b8] sm:$0xf]
  %v217 = vld [vmem:[%s0 + $0x2bc] sm:$0xff]
  %v218 = vld [vmem:[%s0 + $0x2c4] sm:$0xff]
  %v219 = vld [vmem:[%s0 + $0x2cc] sm:$0xff]
  %v220 = vld [vmem:[%s0 + $0x2d4] sm:$0xf]
  %v221 = vld [vmem:[%s0 + $0x2d8] sm:$0xff]
  %v222 = vld [vmem:[%s0 + $0x2e0] sm:$0xff]
  %v223 = vld [vmem:[%s0 + $0x2e8] sm:$0xff]
  %v224 = vld [vmem:[%s0 + $0x2f0] sm:$0xf]
  %v225 = vld [vmem:[%s0 + $0x2f4] sm:$0xff]
  %v226 = vld [vmem:[%s0 + $0x2fc] sm:$0xff]
  %v227 = vld [vmem:[%s0 + $0x304] sm:$0xff]
  %v228 = vld [vmem:[%s0 + $0x30c] sm:$0xf]
  %v229 = vld [vmem:[%s0 + $0x310] sm:$0xff]
  %v230 = vld [vmem:[%s0 + $0x318] sm:$0xff]
  %v231 = vld [vmem:[%s0 + $0x320] sm:$0xff]
  %v232 = vld [vmem:[%s0 + $0x328] sm:$0xf]
  %v233 = vld [vmem:[%s0 + $0x32c] sm:$0xff]
  %v234 = vld [vmem:[%s0 + $0x334] sm:$0xff]
  %v235 = vld [vmem:[%s0 + $0x33c] sm:$0xff]
  %v236 = vld [vmem:[%s0 + $0x344] sm:$0xf]
  %v237 = vld [vmem:[%s0 + $0x348] sm:$0xff]
  %v238 = vld [vmem:[%s0 + $0x350] sm:$0xff]
  %v239 = vld [vmem:[%s0 + $0x358] sm:$0xff]
  %v240 = vld [vmem:[%s0 + $0x360] sm:$0xf]
  %v241 = vld [vmem:[%s0 + $0x364] sm:$0xff]
  %v242 = vld [vmem:[%s0 + $0x36c] sm:$0xff]
  %v243 = vld [vmem:[%s0 + $0x374] sm:$0xff]
  %v244 = vld [vmem:[%s0 + $0x37c] sm:$0xf]
  %v245 = vld [vmem:[%s0 + $0x380] sm:$0xff]
  %v246 = vld [vmem:[%s0 + $0x388] sm:$0xff]
  %v247 = vld [vmem:[%s0 + $0x390] sm:$0xff]
  %v248 = vld [vmem:[%s0 + $0x398] sm:$0xf]
  %v249 = vld [vmem:[%s0 + $0x39c] sm:$0xff]
  %v250 = vld [vmem:[%s0 + $0x3a4] sm:$0xff]
  %v251 = vld [vmem:[%s0 + $0x3ac] sm:$0xff]
  %v252 = vld [vmem:[%s0 + $0x3b4] sm:$0xf]
  %v253 = vld [vmem:[%s0 + $0x3b8] sm:$0xff]
  %v254 = vld [vmem:[%s0 + $0x3c0] sm:$0xff]
  %v255 = vld [vmem:[%s0 + $0x3c8] sm:$0xff]
  %v256 = vld [vmem:[%s0 + $0x3d0] sm:$0xf]
  %v257 = vld [vmem:[%s0 + $0x3d4] sm:$0xff]
  %v258 = vld [vmem:[%s0 + $0x3dc] sm:$0xff]
  %v259 = vld [vmem:[%s0 + $0x3e4] sm:$0xff]
  %v260 = vld [vmem:[%s0 + $0x3ec] sm:$0xf]
  %v261 = vld [vmem:[%s0 + $0x3f0] sm:$0xff]
  %v262 = vld [vmem:[%s0 + $0x3f8] sm:$0xff]
  %v263 = vld [vmem:[%s0 + $0x400] sm:$0xff]
  %v264 = vld [vmem:[%s0 + $0x408] sm:$0xf]
  %v265 = vld [vmem:[%s0 + $0x40c] sm:$0xff]
  %v266 = vld [vmem:[%s0 + $0x414] sm:$0xff]
  %v267 = vld [vmem:[%s0 + $0x41c] sm:$0xff]
  %v268 = vld [vmem:[%s0 + $0x424] sm:$0xf]
  %v269 = vld [vmem:[%s0 + $0x428] sm:$0xff]
  %v270 = vld [vmem:[%s0 + $0x430] sm:$0xff]
  %v271 = vld [vmem:[%s0 + $0x438] sm:$0xff]
  %v272 = vld [vmem:[%s0 + $0x440] sm:$0xf]
  %v273 = vld [vmem:[%s0 + $0x444] sm:$0xff]
  %v274 = vld [vmem:[%s0 + $0x44c] sm:$0xff]
  %v275 = vld [vmem:[%s0 + $0x454] sm:$0xff]
  %v276 = vld [vmem:[%s0 + $0x45c] sm:$0xf]
  %v277 = vld [vmem:[%s0 + $0x460] sm:$0xff]
  %v278 = vld [vmem:[%s0 + $0x468] sm:$0xff]
  %v279 = vld [vmem:[%s0 + $0x470] sm:$0xff]
  %v280 = vld [vmem:[%s0 + $0x478] sm:$0xf]
  %v281 = vld [vmem:[%s0 + $0x47c] sm:$0xff]
  %v282 = vld [vmem:[%s0 + $0x484] sm:$0xff]
  %v283 = vld [vmem:[%s0 + $0x48c] sm:$0xff]
  %v284 = vld [vmem:[%s0 + $0x494] sm:$0xf]
  %v285 = vld [vmem:[%s0 + $0x498] sm:$0xff]
  %v286 = vld [vmem:[%s0 + $0x4a0] sm:$0xff]
  %v287 = vld [vmem:[%s0 + $0x4a8] sm:$0xff]
  %v288 = vld [vmem:[%s0 + $0x4b0] sm:$0xf]
  %v289 = vld [vmem:[%s0 + $0x4b4] sm:$0xff]
  %v290 = vld [vmem:[%s0 + $0x4bc] sm:$0xff]
  %v291 = vld [vmem:[%s0 + $0x4c4] sm:$0xff]
  %v292 = vld [vmem:[%s0 + $0x4cc] sm:$0xf]
  %v293 = vld [vmem:[%s0 + $0x4d0] sm:$0xff]
  %v294 = vld [vmem:[%s0 + $0x4d8] sm:$0xff]
  %v295 = vld [vmem:[%s0 + $0x4e0] sm:$0xff]
  %v296 = vld [vmem:[%s0 + $0x4e8] sm:$0xf]
  %v297 = vld [vmem:[%s0 + $0x4ec] sm:$0xff]
  %v298 = vld [vmem:[%s0 + $0x4f4] sm:$0xff]
  %v299 = vld [vmem:[%s0 + $0x4fc] sm:$0xff]
  %v300 = vld [vmem:[%s0 + $0x504] sm:$0xf]
  %v301 = vld [vmem:[%s0 + $0x508] sm:$0xff]
  %v302 = vld [vmem:[%s0 + $0x510] sm:$0xff]
  %v303 = vld [vmem:[%s0 + $0x518] sm:$0xff]
  %v304 = vld [vmem:[%s0 + $0x520] sm:$0xf]
  %v305 = vld [vmem:[%s0 + $0x524] sm:$0xff]
  %v306 = vld [vmem:[%s0 + $0x52c] sm:$0xff]
  %v307 = vld [vmem:[%s0 + $0x534] sm:$0xff]
  %v308 = vld [vmem:[%s0 + $0x53c] sm:$0xf]
  %v309 = vld [vmem:[%s0 + $0x540] sm:$0xff]
  %v310 = vld [vmem:[%s0 + $0x548] sm:$0xff]
  %v311 = vld [vmem:[%s0 + $0x550] sm:$0xff]
  %v312 = vld [vmem:[%s0 + $0x558] sm:$0xf]
  %v313 = vld [vmem:[%s1] sm:$0xf]
  %v314 = vld [vmem:[%s1 + $0x4] sm:$0xf]
  %v315 = vld [vmem:[%s1 + $0x8] sm:$0xf]
  %v316 = vld [vmem:[%s1 + $0xc] sm:$0xf]
  %v317 = vld [vmem:[%s1 + $0x10] sm:$0xf]
  %v318 = vld [vmem:[%s1 + $0x14] sm:$0xf]
  %v319 = vld [vmem:[%s1 + $0x18] sm:$0xf]
  %v320 = vld [vmem:[%s1 + $0x1c] sm:$0xf]
  %v321 = vld [vmem:[%s1 + $0x20] sm:$0xf]
  %v322 = vld [vmem:[%s1 + $0x24] sm:$0xf]
  %v323 = vld [vmem:[%s1 + $0x28] sm:$0xf]
  %v324 = vld [vmem:[%s1 + $0x2c] sm:$0xf]
  %v325 = vld [vmem:[%s1 + $0x30] sm:$0xf]
  %v326 = vld [vmem:[%s1 + $0x34] sm:$0xf]
  %v327 = vld [vmem:[%s1 + $0x38] sm:$0xf]
  %v328 = vld [vmem:[%s1 + $0x3c] sm:$0xf]
  %v329 = vld [vmem:[%s1 + $0x40] sm:$0xf]
  %v330 = vld [vmem:[%s1 + $0x44] sm:$0xf]
  %v331 = vld [vmem:[%s1 + $0x48] sm:$0xf]
  %v332 = vld [vmem:[%s1 + $0x4c] sm:$0xf]
  %v333 = vld [vmem:[%s1 + $0x50] sm:$0xf]
  %v334 = vld [vmem:[%s1 + $0x54] sm:$0xf]
  %v335 = vld [vmem:[%s1 + $0x58] sm:$0xf]
  %v336 = vld [vmem:[%s1 + $0x5c] sm:$0xf]
  %v337 = vld [vmem:[%s1 + $0x60] sm:$0xf]
  %v338 = vld [vmem:[%s1 + $0x64] sm:$0xf]
  %v339 = vld [vmem:[%s1 + $0x68] sm:$0xf]
  %v340 = vld [vmem:[%s1 + $0x6c] sm:$0xf]
  %v341 = vld [vmem:[%s1 + $0x70] sm:$0xf]
  %v342 = vld [vmem:[%s1 + $0x74] sm:$0xf]
  %v343 = vld [vmem:[%s1 + $0x78] sm:$0xf]
  %v344 = vld [vmem:[%s1 + $0x7c] sm:$0xf]
  %v345 = vld [vmem:[%s1 + $0x80] sm:$0xf]
  %v346 = vld [vmem:[%s1 + $0x84] sm:$0xf]
  %v347 = vld [vmem:[%s1 + $0x88] sm:$0xf]
  %v348 = vld [vmem:[%s1 + $0x8c] sm:$0xf]
  %v349 = vld [vmem:[%s1 + $0x90] sm:$0xf]
  %v350 = vld [vmem:[%s1 + $0x94] sm:$0xf]
  %v351 = vld [vmem:[%s1 + $0x98] sm:$0xf]
  %v352 = vld [vmem:[%s1 + $0x9c] sm:$0xf]
  %v353 = vld [vmem:[%s1 + $0xa0] sm:$0xf]
  %v354 = vld [vmem:[%s1 + $0xa4] sm:$0xf]
  %v355 = vld [vmem:[%s1 + $0xa8] sm:$0xf]
  %v356 = vld [vmem:[%s1 + $0xac] sm:$0xf]
  %v357 = vld [vmem:[%s1 + $0xb0] sm:$0xf]
  %v358 = vld [vmem:[%s1 + $0xb4] sm:$0xf]
  %v359 = vld [vmem:[%s1 + $0xb8] sm:$0xf]
  %v360 = vld [vmem:[%s1 + $0xbc] sm:$0xf]
  %v361 = vld [vmem:[%s1 + $0xc0] sm:$0xf]
  %v362 = vld [vmem:[%s1 + $0xc4] sm:$0xf]
  %v363 = vld [vmem:[%s1 + $0xc8] sm:$0xf]
  %v364 = vld [vmem:[%s1 + $0xcc] sm:$0xf]
  %v365 = vld [vmem:[%s1 + $0xd0] sm:$0xf]
  %v366 = vld [vmem:[%s1 + $0xd4] sm:$0xf]
  %v367 = vld [vmem:[%s1 + $0xd8] sm:$0xf]
  %v368 = vld [vmem:[%s1 + $0xdc] sm:$0xf]
  %v369 = vld [vmem:[%s1 + $0xe0] sm:$0xf]
  %v370 = vld [vmem:[%s1 + $0xe4] sm:$0xf]
  %v371 = vld [vmem:[%s1 + $0xe8] sm:$0xf]
  %v372 = vld [vmem:[%s1 + $0xec] sm:$0xf]
  %v373 = vld [vmem:[%s1 + $0xf0] sm:$0xf]
  %v374 = vld [vmem:[%s1 + $0xf4] sm:$0xf]
  %v375 = vld [vmem:[%s1 + $0xf8] sm:$0xf]
  %v376 = vld [vmem:[%s1 + $0xfc] sm:$0xf]
  %v377 = vld [vmem:[%s1 + $0x100] sm:$0xf]
  %v378 = vld [vmem:[%s1 + $0x104] sm:$0xf]
  %v379 = vld [vmem:[%s1 + $0x108] sm:$0xf]
  %v380 = vld [vmem:[%s1 + $0x10c] sm:$0xf]
  %v381 = vld [vmem:[%s1 + $0x110] sm:$0xf]
  %v382 = vld [vmem:[%s1 + $0x114] sm:$0xf]
  %v383 = vld [vmem:[%s1 + $0x118] sm:$0xf]
  %v384 = vld [vmem:[%s1 + $0x11c] sm:$0xf]
  %v385 = vld [vmem:[%s1 + $0x120] sm:$0xf]
  %v386 = vld [vmem:[%s1 + $0x124] sm:$0xf]
  %v387 = vld [vmem:[%s1 + $0x128] sm:$0xf]
  %v388 = vld [vmem:[%s1 + $0x12c] sm:$0xf]
  %v389 = vld [vmem:[%s1 + $0x130] sm:$0xf]
  %v390 = vld [vmem:[%s1 + $0x134] sm:$0xf]
  %v391 = vld [vmem:[%s1 + $0x138] sm:$0xf]
  %v392 = vld [vmem:[%s1 + $0x13c] sm:$0xf]
  %v393 = vld [vmem:[%s1 + $0x140] sm:$0xf]
  %v394 = vld [vmem:[%s1 + $0x144] sm:$0xf]
  %v395 = vld [vmem:[%s1 + $0x148] sm:$0xf]
  %v396 = vld [vmem:[%s1 + $0x14c] sm:$0xf]
  %v397 = vld [vmem:[%s1 + $0x150] sm:$0xf]
  %v398 = vld [vmem:[%s1 + $0x154] sm:$0xf]
  %v399 = vld [vmem:[%s1 + $0x158] sm:$0xf]
  %v400 = vld [vmem:[%s1 + $0x15c] sm:$0xf]
  %v401 = vld [vmem:[%s1 + $0x160] sm:$0xf]
  %v402 = vld [vmem:[%s1 + $0x164] sm:$0xf]
  %v403 = vld [vmem:[%s1 + $0x168] sm:$0xf]
  %v404 = vld [vmem:[%s1 + $0x16c] sm:$0xf]
  %v405 = vld [vmem:[%s1 + $0x170] sm:$0xf]
  %v406 = vld [vmem:[%s1 + $0x174] sm:$0xf]
  %v407 = vld [vmem:[%s1 + $0x178] sm:$0xf]
  %v408 = vld [vmem:[%s1 + $0x17c] sm:$0xf]
  %v409 = vld [vmem:[%s1 + $0x180] sm:$0xf]
  %v410 = vld [vmem:[%s1 + $0x184] sm:$0xf]
  %v411 = vld [vmem:[%s1 + $0x188] sm:$0xf]
  %v412 = vld [vmem:[%s1 + $0x18c] sm:$0xf]
  %v609 = vunpack.c.l.b16 %v117
  %v610 = vunpack.c.h.b16 %v117
  %v611 = vunpack.c.l.b16 %v118
  %v612 = vunpack.c.h.b16 %v118
  %v613 = vunpack.c.l.b16 %v119
  %v614 = vunpack.c.h.b16 %v119
  %v615 = vunpack.c.l.b16 %v120
  %v616 = vunpack.c.l.b16 %v121
  %v617 = vunpack.c.h.b16 %v121
  %v618 = vunpack.c.l.b16 %v122
  %v619 = vunpack.c.h.b16 %v122
  %v620 = vunpack.c.l.b16 %v123
  %v621 = vunpack.c.h.b16 %v123
  %v622 = vunpack.c.l.b16 %v124
  %v623 = vunpack.c.l.b16 %v125
  %v624 = vunpack.c.h.b16 %v125
  %v625 = vunpack.c.l.b16 %v126
  %v626 = vunpack.c.h.b16 %v126
  %v627 = vunpack.c.l.b16 %v127
  %v628 = vunpack.c.h.b16 %v127
  %v629 = vunpack.c.l.b16 %v128
  %v630 = vunpack.c.l.b16 %v129
  %v631 = vunpack.c.h.b16 %v129
  %v632 = vunpack.c.l.b16 %v130
  %v633 = vunpack.c.h.b16 %v130
  %v634 = vunpack.c.l.b16 %v131
  %v635 = vunpack.c.h.b16 %v131
  %v636 = vunpack.c.l.b16 %v132
  %v637 = vunpack.c.l.b16 %v133
  %v638 = vunpack.c.h.b16 %v133
  %v639 = vunpack.c.l.b16 %v134
  %v640 = vunpack.c.h.b16 %v134
  %v641 = vunpack.c.l.b16 %v135
  %v642 = vunpack.c.h.b16 %v135
  %v643 = vunpack.c.l.b16 %v136
  %v644 = vunpack.c.l.b16 %v137
  %v645 = vunpack.c.h.b16 %v137
  %v646 = vunpack.c.l.b16 %v138
  %v647 = vunpack.c.h.b16 %v138
  %v648 = vunpack.c.l.b16 %v139
  %v649 = vunpack.c.h.b16 %v139
  %v650 = vunpack.c.l.b16 %v140
  %v651 = vunpack.c.l.b16 %v141
  %v652 = vunpack.c.h.b16 %v141
  %v653 = vunpack.c.l.b16 %v142
  %v654 = vunpack.c.h.b16 %v142
  %v655 = vunpack.c.l.b16 %v143
  %v656 = vunpack.c.h.b16 %v143
  %v657 = vunpack.c.l.b16 %v144
  %v658 = vunpack.c.l.b16 %v145
  %v659 = vunpack.c.h.b16 %v145
  %v660 = vunpack.c.l.b16 %v146
  %v661 = vunpack.c.h.b16 %v146
  %v662 = vunpack.c.l.b16 %v147
  %v663 = vunpack.c.h.b16 %v147
  %v664 = vunpack.c.l.b16 %v148
  %v665 = vunpack.c.l.b16 %v149
  %v666 = vunpack.c.h.b16 %v149
  %v667 = vunpack.c.l.b16 %v150
  %v668 = vunpack.c.h.b16 %v150
  %v669 = vunpack.c.l.b16 %v151
  %v670 = vunpack.c.h.b16 %v151
  %v671 = vunpack.c.l.b16 %v152
  %v672 = vunpack.c.l.b16 %v153
  %v673 = vunpack.c.h.b16 %v153
  %v674 = vunpack.c.l.b16 %v154
  %v675 = vunpack.c.h.b16 %v154
  %v676 = vunpack.c.l.b16 %v155
  %v677 = vunpack.c.h.b16 %v155
  %v678 = vunpack.c.l.b16 %v156
  %v679 = vunpack.c.l.b16 %v157
  %v680 = vunpack.c.h.b16 %v157
  %v681 = vunpack.c.l.b16 %v158
  %v682 = vunpack.c.h.b16 %v158
  %v683 = vunpack.c.l.b16 %v159
  %v684 = vunpack.c.h.b16 %v159
  %v685 = vunpack.c.l.b16 %v160
  %v686 = vunpack.c.l.b16 %v161
  %v687 = vunpack.c.h.b16 %v161
  %v688 = vunpack.c.l.b16 %v162
  %v689 = vunpack.c.h.b16 %v162
  %v690 = vunpack.c.l.b16 %v163
  %v691 = vunpack.c.h.b16 %v163
  %v692 = vunpack.c.l.b16 %v164
  %v693 = vunpack.c.l.b16 %v165
  %v694 = vunpack.c.h.b16 %v165
  %v695 = vunpack.c.l.b16 %v166
  %v696 = vunpack.c.h.b16 %v166
  %v697 = vunpack.c.l.b16 %v167
  %v698 = vunpack.c.h.b16 %v167
  %v699 = vunpack.c.l.b16 %v168
  %v700 = vunpack.c.l.b16 %v169
  %v701 = vunpack.c.h.b16 %v169
  %v702 = vunpack.c.l.b16 %v170
  %v703 = vunpack.c.h.b16 %v170
  %v704 = vunpack.c.l.b16 %v171
  %v705 = vunpack.c.h.b16 %v171
  %v706 = vunpack.c.l.b16 %v172
  %v707 = vunpack.c.l.b16 %v173
  %v708 = vunpack.c.h.b16 %v173
  %v709 = vunpack.c.l.b16 %v174
  %v710 = vunpack.c.h.b16 %v174
  %v711 = vunpack.c.l.b16 %v175
  %v712 = vunpack.c.h.b16 %v175
  %v713 = vunpack.c.l.b16 %v176
  %v714 = vunpack.c.l.b16 %v177
  %v715 = vunpack.c.h.b16 %v177
  %v716 = vunpack.c.l.b16 %v178
  %v717 = vunpack.c.h.b16 %v178
  %v718 = vunpack.c.l.b16 %v179
  %v719 = vunpack.c.h.b16 %v179
  %v720 = vunpack.c.l.b16 %v180
  %v721 = vunpack.c.l.b16 %v181
  %v722 = vunpack.c.h.b16 %v181
  %v723 = vunpack.c.l.b16 %v182
  %v724 = vunpack.c.h.b16 %v182
  %v725 = vunpack.c.l.b16 %v183
  %v726 = vunpack.c.h.b16 %v183
  %v727 = vunpack.c.l.b16 %v184
  %v728 = vunpack.c.l.b16 %v185
  %v729 = vunpack.c.h.b16 %v185
  %v730 = vunpack.c.l.b16 %v186
  %v731 = vunpack.c.h.b16 %v186
  %v732 = vunpack.c.l.b16 %v187
  %v733 = vunpack.c.h.b16 %v187
  %v734 = vunpack.c.l.b16 %v188
  %v735 = vunpack.c.l.b16 %v189
  %v736 = vunpack.c.h.b16 %v189
  %v737 = vunpack.c.l.b16 %v190
  %v738 = vunpack.c.h.b16 %v190
  %v739 = vunpack.c.l.b16 %v191
  %v740 = vunpack.c.h.b16 %v191
  %v741 = vunpack.c.l.b16 %v192
  %v742 = vunpack.c.l.b16 %v193
  %v743 = vunpack.c.h.b16 %v193
  %v744 = vunpack.c.l.b16 %v194
  %v745 = vunpack.c.h.b16 %v194
  %v746 = vunpack.c.l.b16 %v195
  %v747 = vunpack.c.h.b16 %v195
  %v748 = vunpack.c.l.b16 %v196
  %v749 = vunpack.c.l.b16 %v197
  %v750 = vunpack.c.h.b16 %v197
  %v751 = vunpack.c.l.b16 %v198
  %v752 = vunpack.c.h.b16 %v198
  %v753 = vunpack.c.l.b16 %v199
  %v754 = vunpack.c.h.b16 %v199
  %v755 = vunpack.c.l.b16 %v200
  %v756 = vunpack.c.l.b16 %v201
  %v757 = vunpack.c.h.b16 %v201
  %v758 = vunpack.c.l.b16 %v202
  %v759 = vunpack.c.h.b16 %v202
  %v760 = vunpack.c.l.b16 %v203
  %v761 = vunpack.c.h.b16 %v203
  %v762 = vunpack.c.l.b16 %v204
  %v763 = vunpack.c.l.b16 %v205
  %v764 = vunpack.c.h.b16 %v205
  %v765 = vunpack.c.l.b16 %v206
  %v766 = vunpack.c.h.b16 %v206
  %v767 = vunpack.c.l.b16 %v207
  %v768 = vunpack.c.h.b16 %v207
  %v769 = vunpack.c.l.b16 %v208
  %v770 = vunpack.c.l.b16 %v209
  %v771 = vunpack.c.h.b16 %v209
  %v772 = vunpack.c.l.b16 %v210
  %v773 = vunpack.c.h.b16 %v210
  %v774 = vunpack.c.l.b16 %v211
  %v775 = vunpack.c.h.b16 %v211
  %v776 = vunpack.c.l.b16 %v212
  %v777 = vunpack.c.l.b16 %v213
  %v778 = vunpack.c.h.b16 %v213
  %v779 = vunpack.c.l.b16 %v214
  %v780 = vunpack.c.h.b16 %v214
  %v781 = vunpack.c.l.b16 %v215
  %v782 = vunpack.c.h.b16 %v215
  %v783 = vunpack.c.l.b16 %v216
  %v784 = vunpack.c.l.b16 %v217
  %v785 = vunpack.c.h.b16 %v217
  %v786 = vunpack.c.l.b16 %v218
  %v787 = vunpack.c.h.b16 %v218
  %v788 = vunpack.c.l.b16 %v219
  %v789 = vunpack.c.h.b16 %v219
  %v790 = vunpack.c.l.b16 %v220
  %v791 = vunpack.c.l.b16 %v221
  %v792 = vunpack.c.h.b16 %v221
  %v793 = vunpack.c.l.b16 %v222
  %v794 = vunpack.c.h.b16 %v222
  %v795 = vunpack.c.l.b16 %v223
  %v796 = vunpack.c.h.b16 %v223
  %v797 = vunpack.c.l.b16 %v224
  %v798 = vunpack.c.l.b16 %v225
  %v799 = vunpack.c.h.b16 %v225
  %v800 = vunpack.c.l.b16 %v226
  %v801 = vunpack.c.h.b16 %v226
  %v802 = vunpack.c.l.b16 %v227
  %v803 = vunpack.c.h.b16 %v227
  %v804 = vunpack.c.l.b16 %v228
  %v805 = vunpack.c.l.b16 %v229
  %v806 = vunpack.c.h.b16 %v229
  %v807 = vunpack.c.l.b16 %v230
  %v808 = vunpack.c.h.b16 %v230
  %v809 = vunpack.c.l.b16 %v231
  %v810 = vunpack.c.h.b16 %v231
  %v811 = vunpack.c.l.b16 %v232
  %v812 = vunpack.c.l.b16 %v233
  %v813 = vunpack.c.h.b16 %v233
  %v814 = vunpack.c.l.b16 %v234
  %v815 = vunpack.c.h.b16 %v234
  %v816 = vunpack.c.l.b16 %v235
  %v817 = vunpack.c.h.b16 %v235
  %v818 = vunpack.c.l.b16 %v236
  %v819 = vunpack.c.l.b16 %v237
  %v820 = vunpack.c.h.b16 %v237
  %v821 = vunpack.c.l.b16 %v238
  %v822 = vunpack.c.h.b16 %v238
  %v823 = vunpack.c.l.b16 %v239
  %v824 = vunpack.c.h.b16 %v239
  %v825 = vunpack.c.l.b16 %v240
  %v826 = vunpack.c.l.b16 %v241
  %v827 = vunpack.c.h.b16 %v241
  %v828 = vunpack.c.l.b16 %v242
  %v829 = vunpack.c.h.b16 %v242
  %v830 = vunpack.c.l.b16 %v243
  %v831 = vunpack.c.h.b16 %v243
  %v832 = vunpack.c.l.b16 %v244
  %v833 = vunpack.c.l.b16 %v245
  %v834 = vunpack.c.h.b16 %v245
  %v835 = vunpack.c.l.b16 %v246
  %v836 = vunpack.c.h.b16 %v246
  %v837 = vunpack.c.l.b16 %v247
  %v838 = vunpack.c.h.b16 %v247
  %v839 = vunpack.c.l.b16 %v248
  %v840 = vunpack.c.l.b16 %v249
  %v841 = vunpack.c.h.b16 %v249
  %v842 = vunpack.c.l.b16 %v250
  %v843 = vunpack.c.h.b16 %v250
  %v844 = vunpack.c.l.b16 %v251
  %v845 = vunpack.c.h.b16 %v251
  %v846 = vunpack.c.l.b16 %v252
  %v847 = vunpack.c.l.b16 %v253
  %v848 = vunpack.c.h.b16 %v253
  %v849 = vunpack.c.l.b16 %v254
  %v850 = vunpack.c.h.b16 %v254
  %v851 = vunpack.c.l.b16 %v255
  %v852 = vunpack.c.h.b16 %v255
  %v853 = vunpack.c.l.b16 %v256
  %v854 = vunpack.c.l.b16 %v257
  %v855 = vunpack.c.h.b16 %v257
  %v856 = vunpack.c.l.b16 %v258
  %v857 = vunpack.c.h.b16 %v258
  %v858 = vunpack.c.l.b16 %v259
  %v859 = vunpack.c.h.b16 %v259
  %v860 = vunpack.c.l.b16 %v260
  %v861 = vunpack.c.l.b16 %v261
  %v862 = vunpack.c.h.b16 %v261
  %v863 = vunpack.c.l.b16 %v262
  %v864 = vunpack.c.h.b16 %v262
  %v865 = vunpack.c.l.b16 %v263
  %v866 = vunpack.c.h.b16 %v263
  %v867 = vunpack.c.l.b16 %v264
  %v868 = vunpack.c.l.b16 %v265
  %v869 = vunpack.c.h.b16 %v265
  %v870 = vunpack.c.l.b16 %v266
  %v871 = vunpack.c.h.b16 %v266
  %v872 = vunpack.c.l.b16 %v267
  %v873 = vunpack.c.h.b16 %v267
  %v874 = vunpack.c.l.b16 %v268
  %v875 = vunpack.c.l.b16 %v269
  %v876 = vunpack.c.h.b16 %v269
  %v877 = vunpack.c.l.b16 %v270
  %v878 = vunpack.c.h.b16 %v270
  %v879 = vunpack.c.l.b16 %v271
  %v880 = vunpack.c.h.b16 %v271
  %v881 = vunpack.c.l.b16 %v272
  %v882 = vunpack.c.l.b16 %v273
  %v883 = vunpack.c.h.b16 %v273
  %v884 = vunpack.c.l.b16 %v274
  %v885 = vunpack.c.h.b16 %v274
  %v886 = vunpack.c.l.b16 %v275
  %v887 = vunpack.c.h.b16 %v275
  %v888 = vunpack.c.l.b16 %v276
  %v889 = vunpack.c.l.b16 %v277
  %v890 = vunpack.c.h.b16 %v277
  %v891 = vunpack.c.l.b16 %v278
  %v892 = vunpack.c.h.b16 %v278
  %v893 = vunpack.c.l.b16 %v279
  %v894 = vunpack.c.h.b16 %v279
  %v895 = vunpack.c.l.b16 %v280
  %v896 = vunpack.c.l.b16 %v281
  %v897 = vunpack.c.h.b16 %v281
  %v898 = vunpack.c.l.b16 %v282
  %v899 = vunpack.c.h.b16 %v282
  %v900 = vunpack.c.l.b16 %v283
  %v901 = vunpack.c.h.b16 %v283
  %v902 = vunpack.c.l.b16 %v284
  %v903 = vunpack.c.l.b16 %v285
  %v904 = vunpack.c.h.b16 %v285
  %v905 = vunpack.c.l.b16 %v286
  %v906 = vunpack.c.h.b16 %v286
  %v907 = vunpack.c.l.b16 %v287
  %v908 = vunpack.c.h.b16 %v287
  %v909 = vunpack.c.l.b16 %v288
  %v910 = vunpack.c.l.b16 %v289
  %v911 = vunpack.c.h.b16 %v289
  %v912 = vunpack.c.l.b16 %v290
  %v913 = vunpack.c.h.b16 %v290
  %v914 = vunpack.c.l.b16 %v291
  %v915 = vunpack.c.h.b16 %v291
  %v916 = vunpack.c.l.b16 %v292
  %v917 = vunpack.c.l.b16 %v293
  %v918 = vunpack.c.h.b16 %v293
  %v919 = vunpack.c.l.b16 %v294
  %v920 = vunpack.c.h.b16 %v294
  %v921 = vunpack.c.l.b16 %v295
  %v922 = vunpack.c.h.b16 %v295
  %v923 = vunpack.c.l.b16 %v296
  %v924 = vunpack.c.l.b16 %v297
  %v925 = vunpack.c.h.b16 %v297
  %v926 = vunpack.c.l.b16 %v298
  %v927 = vunpack.c.h.b16 %v298
  %v928 = vunpack.c.l.b16 %v299
  %v929 = vunpack.c.h.b16 %v299
  %v930 = vunpack.c.l.b16 %v300
  %v931 = vunpack.c.l.b16 %v301
  %v932 = vunpack.c.h.b16 %v301
  %v933 = vunpack.c.l.b16 %v302
  %v934 = vunpack.c.h.b16 %v302
  %v935 = vunpack.c.l.b16 %v303
  %v936 = vunpack.c.h.b16 %v303
  %v937 = vunpack.c.l.b16 %v304
  %v938 = vunpack.c.l.b16 %v305
  %v939 = vunpack.c.h.b16 %v305
  %v940 = vunpack.c.l.b16 %v306
  %v941 = vunpack.c.h.b16 %v306
  %v942 = vunpack.c.l.b16 %v307
  %v943 = vunpack.c.h.b16 %v307
  %v944 = vunpack.c.l.b16 %v308
  %v945 = vunpack.c.l.b16 %v309
  %v946 = vunpack.c.h.b16 %v309
  %v947 = vunpack.c.l.b16 %v310
  %v948 = vunpack.c.h.b16 %v310
  %v949 = vunpack.c.l.b16 %v311
  %v950 = vunpack.c.h.b16 %v311
  %v951 = vunpack.c.l.b16 %v312
  %v952 = vpack.c.b16 %v616, %v609
  %v953 = vpack.c.b16 %v617, %v610
  %v954 = vpack.c.b16 %v618, %v611
  %v955 = vpack.c.b16 %v619, %v612
  %v956 = vpack.c.b16 %v620, %v613
  %v957 = vpack.c.b16 %v621, %v614
  %v958 = vpack.c.b16 %v622, %v615
  %v959 = vpack.c.b16 %v630, %v623
  %v960 = vpack.c.b16 %v631, %v624
  %v961 = vpack.c.b16 %v632, %v625
  %v962 = vpack.c.b16 %v633, %v626
  %v963 = vpack.c.b16 %v634, %v627
  %v964 = vpack.c.b16 %v635, %v628
  %v965 = vpack.c.b16 %v636, %v629
  %v966 = vpack.c.b16 %v644, %v637
  %v967 = vpack.c.b16 %v645, %v638
  %v968 = vpack.c.b16 %v646, %v639
  %v969 = vpack.c.b16 %v647, %v640
  %v970 = vpack.c.b16 %v648, %v641
  %v971 = vpack.c.b16 %v649, %v642
  %v972 = vpack.c.b16 %v650, %v643
  %v973 = vpack.c.b16 %v658, %v651
  %v974 = vpack.c.b16 %v659, %v652
  %v975 = vpack.c.b16 %v660, %v653
  %v976 = vpack.c.b16 %v661, %v654
  %v977 = vpack.c.b16 %v662, %v655
  %v978 = vpack.c.b16 %v663, %v656
  %v979 = vpack.c.b16 %v664, %v657
  %v980 = vpack.c.b16 %v672, %v665
  %v981 = vpack.c.b16 %v673, %v666
  %v982 = vpack.c.b16 %v674, %v667
  %v983 = vpack.c.b16 %v675, %v668
  %v984 = vpack.c.b16 %v676, %v669
  %v985 = vpack.c.b16 %v677, %v670
  %v986 = vpack.c.b16 %v678, %v671
  %v987 = vpack.c.b16 %v686, %v679
  %v988 = vpack.c.b16 %v687, %v680
  %v989 = vpack.c.b16 %v688, %v681
  %v990 = vpack.c.b16 %v689, %v682
  %v991 = vpack.c.b16 %v690, %v683
  %v992 = vpack.c.b16 %v691, %v684
  %v993 = vpack.c.b16 %v692, %v685
  %v994 = vpack.c.b16 %v700, %v693
  %v995 = vpack.c.b16 %v701, %v694
  %v996 = vpack.c.b16 %v702, %v695
  %v997 = vpack.c.b16 %v703, %v696
  %v998 = vpack.c.b16 %v704, %v697
  %v999 = vpack.c.b16 %v705, %v698
  %v1000 = vpack.c.b16 %v706, %v699
  %v1001 = vpack.c.b16 %v714, %v707
  %v1002 = vpack.c.b16 %v715, %v708
  %v1003 = vpack.c.b16 %v716, %v709
  %v1004 = vpack.c.b16 %v717, %v710
  %v1005 = vpack.c.b16 %v718, %v711
  %v1006 = vpack.c.b16 %v719, %v712
  %v1007 = vpack.c.b16 %v720, %v713
  %v1008 = vpack.c.b16 %v728, %v721
  %v1009 = vpack.c.b16 %v729, %v722
  %v1010 = vpack.c.b16 %v730, %v723
  %v1011 = vpack.c.b16 %v731, %v724
  %v1012 = vpack.c.b16 %v732, %v725
  %v1013 = vpack.c.b16 %v733, %v726
  %v1014 = vpack.c.b16 %v734, %v727
  %v1015 = vpack.c.b16 %v742, %v735
  %v1016 = vpack.c.b16 %v743, %v736
  %v1017 = vpack.c.b16 %v744, %v737
  %v1018 = vpack.c.b16 %v745, %v738
  %v1019 = vpack.c.b16 %v746, %v739
  %v1020 = vpack.c.b16 %v747, %v740
  %v1021 = vpack.c.b16 %v748, %v741
  %v1022 = vpack.c.b16 %v756, %v749
  %v1023 = vpack.c.b16 %v757, %v750
  %v1024 = vpack.c.b16 %v758, %v751
  %v1025 = vpack.c.b16 %v759, %v752
  %v1026 = vpack.c.b16 %v760, %v753
  %v1027 = vpack.c.b16 %v761, %v754
  %v1028 = vpack.c.b16 %v762, %v755
  %v1029 = vpack.c.b16 %v770, %v763
  %v1030 = vpack.c.b16 %v771, %v764
  %v1031 = vpack.c.b16 %v772, %v765
  %v1032 = vpack.c.b16 %v773, %v766
  %v1033 = vpack.c.b16 %v774, %v767
  %v1034 = vpack.c.b16 %v775, %v768
  %v1035 = vpack.c.b16 %v776, %v769
  %v1036 = vpack.c.b16 %v784, %v777
  %v1037 = vpack.c.b16 %v785, %v778
  %v1038 = vpack.c.b16 %v786, %v779
  %v1039 = vpack.c.b16 %v787, %v780
  %v1040 = vpack.c.b16 %v788, %v781
  %v1041 = vpack.c.b16 %v789, %v782
  %v1042 = vpack.c.b16 %v790, %v783
  %v1043 = vpack.c.b16 %v798, %v791
  %v1044 = vpack.c.b16 %v799, %v792
  %v1045 = vpack.c.b16 %v800, %v793
  %v1046 = vpack.c.b16 %v801, %v794
  %v1047 = vpack.c.b16 %v802, %v795
  %v1048 = vpack.c.b16 %v803, %v796
  %v1049 = vpack.c.b16 %v804, %v797
  %v1050 = vpack.c.b16 %v812, %v805
  %v1051 = vpack.c.b16 %v813, %v806
  %v1052 = vpack.c.b16 %v814, %v807
  %v1053 = vpack.c.b16 %v815, %v808
  %v1054 = vpack.c.b16 %v816, %v809
  %v1055 = vpack.c.b16 %v817, %v810
  %v1056 = vpack.c.b16 %v818, %v811
  %v1057 = vpack.c.b16 %v826, %v819
  %v1058 = vpack.c.b16 %v827, %v820
  %v1059 = vpack.c.b16 %v828, %v821
  %v1060 = vpack.c.b16 %v829, %v822
  %v1061 = vpack.c.b16 %v830, %v823
  %v1062 = vpack.c.b16 %v831, %v824
  %v1063 = vpack.c.b16 %v832, %v825
  %v1064 = vpack.c.b16 %v840, %v833
  %v1065 = vpack.c.b16 %v841, %v834
  %v1066 = vpack.c.b16 %v842, %v835
  %v1067 = vpack.c.b16 %v843, %v836
  %v1068 = vpack.c.b16 %v844, %v837
  %v1069 = vpack.c.b16 %v845, %v838
  %v1070 = vpack.c.b16 %v846, %v839
  %v1071 = vpack.c.b16 %v854, %v847
  %v1072 = vpack.c.b16 %v855, %v848
  %v1073 = vpack.c.b16 %v856, %v849
  %v1074 = vpack.c.b16 %v857, %v850
  %v1075 = vpack.c.b16 %v858, %v851
  %v1076 = vpack.c.b16 %v859, %v852
  %v1077 = vpack.c.b16 %v860, %v853
  %v1078 = vpack.c.b16 %v868, %v861
  %v1079 = vpack.c.b16 %v869, %v862
  %v1080 = vpack.c.b16 %v870, %v863
  %v1081 = vpack.c.b16 %v871, %v864
  %v1082 = vpack.c.b16 %v872, %v865
  %v1083 = vpack.c.b16 %v873, %v866
  %v1084 = vpack.c.b16 %v874, %v867
  %v1085 = vpack.c.b16 %v882, %v875
  %v1086 = vpack.c.b16 %v883, %v876
  %v1087 = vpack.c.b16 %v884, %v877
  %v1088 = vpack.c.b16 %v885, %v878
  %v1089 = vpack.c.b16 %v886, %v879
  %v1090 = vpack.c.b16 %v887, %v880
  %v1091 = vpack.c.b16 %v888, %v881
  %v1092 = vpack.c.b16 %v896, %v889
  %v1093 = vpack.c.b16 %v897, %v890
  %v1094 = vpack.c.b16 %v898, %v891
  %v1095 = vpack.c.b16 %v899, %v892
  %v1096 = vpack.c.b16 %v900, %v893
  %v1097 = vpack.c.b16 %v901, %v894
  %v1098 = vpack.c.b16 %v902, %v895
  %v1099 = vpack.c.b16 %v910, %v903
  %v1100 = vpack.c.b16 %v911, %v904
  %v1101 = vpack.c.b16 %v912, %v905
  %v1102 = vpack.c.b16 %v913, %v906
  %v1103 = vpack.c.b16 %v914, %v907
  %v1104 = vpack.c.b16 %v915, %v908
  %v1105 = vpack.c.b16 %v916, %v909
  %v1106 = vpack.c.b16 %v924, %v917
  %v1107 = vpack.c.b16 %v925, %v918
  %v1108 = vpack.c.b16 %v926, %v919
  %v1109 = vpack.c.b16 %v927, %v920
  %v1110 = vpack.c.b16 %v928, %v921
  %v1111 = vpack.c.b16 %v929, %v922
  %v1112 = vpack.c.b16 %v930, %v923
  %v1113 = vpack.c.b16 %v938, %v931
  %v1114 = vpack.c.b16 %v939, %v932
  %v1115 = vpack.c.b16 %v940, %v933
  %v1116 = vpack.c.b16 %v941, %v934
  %v1117 = vpack.c.b16 %v942, %v935
  %v1118 = vpack.c.b16 %v943, %v936
  %v1119 = vpack.c.b16 %v944, %v937
  %v1120 = vpack.c.b16 %v945, %v945
  %v1121 = vpack.c.b16 %v946, %v946
  %v1122 = vpack.c.b16 %v947, %v947
  %v1123 = vpack.c.b16 %v948, %v948
  %v1124 = vpack.c.b16 %v949, %v949
  %v1125 = vpack.c.b16 %v950, %v950
  %v1126 = vpack.c.b16 %v951, %v951
  %v1377 = vunpack.c.l.b16 %v313
  %v1378 = vunpack.c.l.b16 %v314
  %v1379 = vunpack.c.l.b16 %v315
  %v1380 = vunpack.c.l.b16 %v316
  %v1381 = vunpack.c.l.b16 %v317
  %v1382 = vunpack.c.l.b16 %v318
  %v1383 = vunpack.c.l.b16 %v319
  %v1384 = vunpack.c.l.b16 %v320
  %v1385 = vunpack.c.l.b16 %v321
  %v1386 = vunpack.c.l.b16 %v322
  %v1387 = vunpack.c.l.b16 %v323
  %v1388 = vunpack.c.l.b16 %v324
  %v1389 = vunpack.c.l.b16 %v325
  %v1390 = vunpack.c.l.b16 %v326
  %v1391 = vunpack.c.l.b16 %v327
  %v1392 = vunpack.c.l.b16 %v328
  %v1393 = vunpack.c.l.b16 %v329
  %v1394 = vunpack.c.l.b16 %v330
  %v1395 = vunpack.c.l.b16 %v331
  %v1396 = vunpack.c.l.b16 %v332
  %v1397 = vunpack.c.l.b16 %v333
  %v1398 = vunpack.c.l.b16 %v334
  %v1399 = vunpack.c.l.b16 %v335
  %v1400 = vunpack.c.l.b16 %v336
  %v1401 = vunpack.c.l.b16 %v337
  %v1402 = vunpack.c.l.b16 %v338
  %v1403 = vunpack.c.l.b16 %v339
  %v1404 = vunpack.c.l.b16 %v340
  %v1405 = vunpack.c.l.b16 %v341
  %v1406 = vunpack.c.l.b16 %v342
  %v1407 = vunpack.c.l.b16 %v343
  %v1408 = vunpack.c.l.b16 %v344
  %v1409 = vunpack.c.l.b16 %v345
  %v1410 = vunpack.c.l.b16 %v346
  %v1411 = vunpack.c.l.b16 %v347
  %v1412 = vunpack.c.l.b16 %v348
  %v1413 = vunpack.c.l.b16 %v349
  %v1414 = vunpack.c.l.b16 %v350
  %v1415 = vunpack.c.l.b16 %v351
  %v1416 = vunpack.c.l.b16 %v352
  %v1417 = vunpack.c.l.b16 %v353
  %v1418 = vunpack.c.l.b16 %v354
  %v1419 = vunpack.c.l.b16 %v355
  %v1420 = vunpack.c.l.b16 %v356
  %v1421 = vunpack.c.l.b16 %v357
  %v1422 = vunpack.c.l.b16 %v358
  %v1423 = vunpack.c.l.b16 %v359
  %v1424 = vunpack.c.l.b16 %v360
  %v1425 = vunpack.c.l.b16 %v361
  %v1426 = vunpack.c.l.b16 %v362
  %v1427 = vunpack.c.l.b16 %v363
  %v1428 = vunpack.c.l.b16 %v364
  %v1429 = vunpack.c.l.b16 %v365
  %v1430 = vunpack.c.l.b16 %v366
  %v1431 = vunpack.c.l.b16 %v367
  %v1432 = vunpack.c.l.b16 %v368
  %v1433 = vunpack.c.l.b16 %v369
  %v1434 = vunpack.c.l.b16 %v370
  %v1435 = vunpack.c.l.b16 %v371
  %v1436 = vunpack.c.l.b16 %v372
  %v1437 = vunpack.c.l.b16 %v373
  %v1438 = vunpack.c.l.b16 %v374
  %v1439 = vunpack.c.l.b16 %v375
  %v1440 = vunpack.c.l.b16 %v376
  %v1441 = vunpack.c.l.b16 %v377
  %v1442 = vunpack.c.l.b16 %v378
  %v1443 = vunpack.c.l.b16 %v379
  %v1444 = vunpack.c.l.b16 %v380
  %v1445 = vunpack.c.l.b16 %v381
  %v1446 = vunpack.c.l.b16 %v382
  %v1447 = vunpack.c.l.b16 %v383
  %v1448 = vunpack.c.l.b16 %v384
  %v1449 = vunpack.c.l.b16 %v385
  %v1450 = vunpack.c.l.b16 %v386
  %v1451 = vunpack.c.l.b16 %v387
  %v1452 = vunpack.c.l.b16 %v388
  %v1453 = vunpack.c.l.b16 %v389
  %v1454 = vunpack.c.l.b16 %v390
  %v1455 = vunpack.c.l.b16 %v391
  %v1456 = vunpack.c.l.b16 %v392
  %v1457 = vunpack.c.l.b16 %v393
  %v1458 = vunpack.c.l.b16 %v394
  %v1459 = vunpack.c.l.b16 %v395
  %v1460 = vunpack.c.l.b16 %v396
  %v1461 = vunpack.c.l.b16 %v397
  %v1462 = vunpack.c.l.b16 %v398
  %v1463 = vunpack.c.l.b16 %v399
  %v1464 = vunpack.c.l.b16 %v400
  %v1465 = vunpack.c.l.b16 %v401
  %v1466 = vunpack.c.l.b16 %v402
  %v1467 = vunpack.c.l.b16 %v403
  %v1468 = vunpack.c.l.b16 %v404
  %v1469 = vunpack.c.l.b16 %v405
  %v1470 = vunpack.c.l.b16 %v406
  %v1471 = vunpack.c.l.b16 %v407
  %v1472 = vunpack.c.l.b16 %v408
  %v1473 = vunpack.c.l.b16 %v409
  %v1474 = vunpack.c.l.b16 %v410
  %v1475 = vunpack.c.l.b16 %v411
  %v1476 = vunpack.c.l.b16 %v412
  %v1477 = vpack.c.b16 %v1378, %v1377
  %v1478 = vpack.c.b16 %v1380, %v1379
  %v1479 = vpack.c.b16 %v1382, %v1381
  %v1480 = vpack.c.b16 %v1384, %v1383
  %v1481 = vpack.c.b16 %v1386, %v1385
  %v1482 = vpack.c.b16 %v1388, %v1387
  %v1483 = vpack.c.b16 %v1390, %v1389
  %v1484 = vpack.c.b16 %v1392, %v1391
  %v1485 = vpack.c.b16 %v1394, %v1393
  %v1486 = vpack.c.b16 %v1396, %v1395
  %v1487 = vpack.c.b16 %v1398, %v1397
  %v1488 = vpack.c.b16 %v1400, %v1399
  %v1489 = vpack.c.b16 %v1402, %v1401
  %v1490 = vpack.c.b16 %v1404, %v1403
  %v1491 = vpack.c.b16 %v1406, %v1405
  %v1492 = vpack.c.b16 %v1408, %v1407
  %v1493 = vpack.c.b16 %v1410, %v1409
  %v1494 = vpack.c.b16 %v1412, %v1411
  %v1495 = vpack.c.b16 %v1414, %v1413
  %v1496 = vpack.c.b16 %v1416, %v1415
  %v1497 = vpack.c.b16 %v1418, %v1417
  %v1498 = vpack.c.b16 %v1420, %v1419
  %v1499 = vpack.c.b16 %v1422, %v1421
  %v1500 = vpack.c.b16 %v1424, %v1423
  %v1501 = vpack.c.b16 %v1426, %v1425
  %v1502 = vpack.c.b16 %v1428, %v1427
  %v1503 = vpack.c.b16 %v1430, %v1429
  %v1504 = vpack.c.b16 %v1432, %v1431
  %v1505 = vpack.c.b16 %v1434, %v1433
  %v1506 = vpack.c.b16 %v1436, %v1435
  %v1507 = vpack.c.b16 %v1438, %v1437
  %v1508 = vpack.c.b16 %v1440, %v1439
  %v1509 = vpack.c.b16 %v1442, %v1441
  %v1510 = vpack.c.b16 %v1444, %v1443
  %v1511 = vpack.c.b16 %v1446, %v1445
  %v1512 = vpack.c.b16 %v1448, %v1447
  %v1513 = vpack.c.b16 %v1450, %v1449
  %v1514 = vpack.c.b16 %v1452, %v1451
  %v1515 = vpack.c.b16 %v1454, %v1453
  %v1516 = vpack.c.b16 %v1456, %v1455
  %v1517 = vpack.c.b16 %v1458, %v1457
  %v1518 = vpack.c.b16 %v1460, %v1459
  %v1519 = vpack.c.b16 %v1462, %v1461
  %v1520 = vpack.c.b16 %v1464, %v1463
  %v1521 = vpack.c.b16 %v1466, %v1465
  %v1522 = vpack.c.b16 %v1468, %v1467
  %v1523 = vpack.c.b16 %v1470, %v1469
  %v1524 = vpack.c.b16 %v1472, %v1471
  %v1525 = vpack.c.b16 %v1474, %v1473
  %v1526 = vpack.c.b16 %v1476, %v1475
  %vm1577 = vcmask 261120
  %v1579 = vsel %vm1577, %v958, 0
  %v1582 = vsel %vm1577, %v965, 0
  %v1585 = vsel %vm1577, %v972, 0
  %v1588 = vsel %vm1577, %v979, 0
  %v1591 = vsel %vm1577, %v986, 0
  %v1594 = vsel %vm1577, %v993, 0
  %v1597 = vsel %vm1577, %v1000, 0
  %v1600 = vsel %vm1577, %v1007, 0
  %v1603 = vsel %vm1577, %v1014, 0
  %v1606 = vsel %vm1577, %v1021, 0
  %v1609 = vsel %vm1577, %v1028, 0
  %v1612 = vsel %vm1577, %v1035, 0
  %v1615 = vsel %vm1577, %v1042, 0
  %v1618 = vsel %vm1577, %v1049, 0
  %v1621 = vsel %vm1577, %v1056, 0
  %v1624 = vsel %vm1577, %v1063, 0
  %v1627 = vsel %vm1577, %v1070, 0
  %v1630 = vsel %vm1577, %v1077, 0
  %v1633 = vsel %vm1577, %v1084, 0
  %v1636 = vsel %vm1577, %v1091, 0
  %v1639 = vsel %vm1577, %v1098, 0
  %v1642 = vsel %vm1577, %v1105, 0
  %v1645 = vsel %vm1577, %v1112, 0
  %v1648 = vsel %vm1577, %v1119, 0
  %v1651 = vsel %vm1577, %v1126, 0
  %1653 = vmatprep.subr.bf16.mxu0 0
  %1654 = vmatpush1.bf16.msra.mxu0 %v1477
  %1655 = vmatprep.subr.bf16.mxu0 0
  %1656 = vmatpush1.bf16.msra.mxu0 %v1478
  %1657 = vmatprep.subr.bf16.mxu0 0
  %1658 = vmatpush1.bf16.msra.mxu0 %v1479
  %1659 = vmatprep.subr.bf16.mxu0 0
  %1660 = vmatpush1.bf16.msra.mxu0 %v1480
  %1661 = vmatprep.subr.bf16.mxu0 0
  %1662 = vmatpush1.bf16.msra.mxu0 %v1481
  %1663 = vmatprep.subr.bf16.mxu0 0
  %1664 = vmatpush1.bf16.msra.mxu0 %v1482
  %1665 = vmatprep.subr.bf16.mxu0 0
  %1666 = vmatpush1.bf16.msra.mxu0 %v1483
  %1667 = vmatprep.subr.bf16.mxu0 0
  %1668 = vmatpush1.bf16.msra.mxu0 %v1484
  %1669 = vmatprep.subr.bf16.mxu0 0
  %1670 = vmatpush1.bf16.msra.mxu0 %v1485
  %1671 = vmatprep.subr.bf16.mxu0 0
  %1672 = vmatpush1.bf16.msra.mxu0 %v1486
  %1673 = vmatprep.subr.bf16.mxu0 0
  %1674 = vmatpush1.bf16.msra.mxu0 %v1487
  %1675 = vmatprep.subr.bf16.mxu0 0
  %1676 = vmatpush1.bf16.msra.mxu0 %v1488
  %1677 = vmatprep.subr.bf16.mxu0 0
  %1678 = vmatpush1.bf16.msra.mxu0 %v1489
  %1679 = vmatprep.subr.bf16.mxu0 0
  %1680 = vmatpush1.bf16.msra.mxu0 %v1490
  %1681 = vmatprep.subr.bf16.mxu0 0
  %1682 = vmatpush1.bf16.msra.mxu0 %v1491
  %1683 = vmatprep.subr.bf16.mxu0 0
  %1684 = vmatpush1.bf16.msra.mxu0 %v1492
  %1685 = vmatprep.mubr.bf16.mxu0 %v953
  %1686 = vmatmul.mubr.bf16.gmra.mrb[0].mxu0 %v952
  %v1687 = vpop.f32.mrb[0].mxu0
  %v1688 = vadd.f32 0.0, %v1687
  %v1689 = vpop.f32.mrb[0].mxu0
  %v1690 = vpop.f32.mrb[0].mxu0
  %v1691 = vadd.f32 0.0, %v1690
  %v1692 = vpop.f32.mrb[0].mxu0
  %1693 = vmatprep.mubr.bf16.mxu0 %v960
  %1694 = vmatmul.mubr.bf16.gmra.mrb[0].mxu0 %v959
  %v1695 = vpop.f32.mrb[0].mxu0
  %v1696 = vadd.f32 0.0, %v1695
  %v1697 = vpop.f32.mrb[0].mxu0
  %v1698 = vpop.f32.mrb[0].mxu0
  %v1699 = vadd.f32 0.0, %v1698
  %v1700 = vpop.f32.mrb[0].mxu0
  %1701 = vmatprep.mubr.bf16.mxu0 %v967
  %1702 = vmatmul.mubr.bf16.gmra.mrb[0].mxu0 %v966
  %v1703 = vpop.f32.mrb[0].mxu0
  %v1704 = vadd.f32 0.0, %v1703
  %v1705 = vpop.f32.mrb[0].mxu0
  %v1706 = vpop.f32.mrb[0].mxu0
  %v1707 = vadd.f32 0.0, %v1706
  %v1708 = vpop.f32.mrb[0].mxu0
  %1709 = vmatprep.mubr.bf16.mxu0 %v974
  %1710 = vmatmul.mubr.bf16.gmra.mrb[0].mxu0 %v973
  %v1711 = vpop.f32.mrb[0].mxu0
  %v1712 = vadd.f32 0.0, %v1711
  %v1713 = vpop.f32.mrb[0].mxu0
  %v1714 = vpop.f32.mrb[0].mxu0
  %v1715 = vadd.f32 0.0, %v1714
  %v1716 = vpop.f32.mrb[0].mxu0
  %1717 = vmatprep.mubr.bf16.mxu0 %v981
  %1718 = vmatmul.mubr.bf16.gmra.mrb[0].mxu0 %v980
  %v1719 = vpop.f32.mrb[0].mxu0
  %v1720 = vadd.f32 0.0, %v1719
  %v1721 = vpop.f32.mrb[0].mxu0
  %v1722 = vpop.f32.mrb[0].mxu0
  %v1723 = vadd.f32 0.0, %v1722
  %v1724 = vpop.f32.mrb[0].mxu0
  %1725 = vmatprep.mubr.bf16.mxu0 %v988
  %1726 = vmatmul.mubr.bf16.gmra.mrb[0].mxu0 %v987
  %v1727 = vpop.f32.mrb[0].mxu0
  %v1728 = vadd.f32 0.0, %v1727
  %v1729 = vpop.f32.mrb[0].mxu0
  %v1730 = vpop.f32.mrb[0].mxu0
  %v1731 = vadd.f32 0.0, %v1730
  %v1732 = vpop.f32.mrb[0].mxu0
  %1733 = vmatprep.mubr.bf16.mxu0 %v995
  %1734 = vmatmul.mubr.bf16.gmra.mrb[0].mxu0 %v994
  %v1735 = vpop.f32.mrb[0].mxu0
  %v1736 = vadd.f32 0.0, %v1735
  %v1737 = vpop.f32.mrb[0].mxu0
  %v1738 = vpop.f32.mrb[0].mxu0
  %v1739 = vadd.f32 0.0, %v1738
  %v1740 = vpop.f32.mrb[0].mxu0
  %1741 = vmatprep.mubr.bf16.mxu0 %v1002
  %1742 = vmatmul.mubr.bf16.gmra.mrb[0].mxu0 %v1001
  %v1743 = vpop.f32.mrb[0].mxu0
  %v1744 = vadd.f32 0.0, %v1743
  %v1745 = vpop.f32.mrb[0].mxu0
  %v1746 = vpop.f32.mrb[0].mxu0
  %v1747 = vadd.f32 0.0, %v1746
  %v1748 = vpop.f32.mrb[0].mxu0
  %1749 = vmatprep.mubr.bf16.mxu0 %v1009
  %1750 = vmatmul.mubr.bf16.gmra.mrb[0].mxu0 %v1008
  %v1751 = vpop.f32.mrb[0].mxu0
  %v1752 = vadd.f32 0.0, %v1751
  %v1753 = vpop.f32.mrb[0].mxu0
  %v1754 = vpop.f32.mrb[0].mxu0
  %v1755 = vadd.f32 0.0, %v1754
  %v1756 = vpop.f32.mrb[0].mxu0
  %1757 = vmatprep.mubr.bf16.mxu0 %v1016
  %1758 = vmatmul.mubr.bf16.gmra.mrb[0].mxu0 %v1015
  %v1759 = vpop.f32.mrb[0].mxu0
  %v1760 = vadd.f32 0.0, %v1759
  %v1761 = vpop.f32.mrb[0].mxu0
  %v1762 = vpop.f32.mrb[0].mxu0
  %v1763 = vadd.f32 0.0, %v1762
  %v1764 = vpop.f32.mrb[0].mxu0
  %1765 = vmatprep.mubr.bf16.mxu0 %v1023
  %1766 = vmatmul.mubr.bf16.gmra.mrb[0].mxu0 %v1022
  %v1767 = vpop.f32.mrb[0].mxu0
  %v1768 = vadd.f32 0.0, %v1767
  %v1769 = vpop.f32.mrb[0].mxu0
  %v1770 = vpop.f32.mrb[0].mxu0
  %v1771 = vadd.f32 0.0, %v1770
  %v1772 = vpop.f32.mrb[0].mxu0
  %1773 = vmatprep.mubr.bf16.mxu0 %v1030
  %1774 = vmatmul.mubr.bf16.gmra.mrb[0].mxu0 %v1029
  %v1775 = vpop.f32.mrb[0].mxu0
  %v1776 = vadd.f32 0.0, %v1775
  %v1777 = vpop.f32.mrb[0].mxu0
  %v1778 = vpop.f32.mrb[0].mxu0
  %v1779 = vadd.f32 0.0, %v1778
  %v1780 = vpop.f32.mrb[0].mxu0
  %1781 = vmatprep.mubr.bf16.mxu0 %v1037
  %1782 = vmatmul.mubr.bf16.gmra.mrb[0].mxu0 %v1036
  %v1783 = vpop.f32.mrb[0].mxu0
  %v1784 = vadd.f32 0.0, %v1783
  %v1785 = vpop.f32.mrb[0].mxu0
  %v1786 = vpop.f32.mrb[0].mxu0
  %v1787 = vadd.f32 0.0, %v1786
  %v1788 = vpop.f32.mrb[0].mxu0
  %1789 = vmatprep.mubr.bf16.mxu0 %v1044
  %1790 = vmatmul.mubr.bf16.gmra.mrb[0].mxu0 %v1043
  %v1791 = vpop.f32.mrb[0].mxu0
  %v1792 = vadd.f32 0.0, %v1791
  %v1793 = vpop.f32.mrb[0].mxu0
  %v1794 = vpop.f32.mrb[0].mxu0
  %v1795 = vadd.f32 0.0, %v1794
  %v1796 = vpop.f32.mrb[0].mxu0
  %1797 = vmatprep.mubr.bf16.mxu0 %v1051
  %1798 = vmatmul.mubr.bf16.gmra.mrb[0].mxu0 %v1050
  %v1799 = vpop.f32.mrb[0].mxu0
  %v1800 = vadd.f32 0.0, %v1799
  %v1801 = vpop.f32.mrb[0].mxu0
  %v1802 = vpop.f32.mrb[0].mxu0
  %v1803 = vadd.f32 0.0, %v1802
  %v1804 = vpop.f32.mrb[0].mxu0
  %1805 = vmatprep.mubr.bf16.mxu0 %v1058
  %1806 = vmatmul.mubr.bf16.gmra.mrb[0].mxu0 %v1057
  %v1807 = vpop.f32.mrb[0].mxu0
  %v1808 = vadd.f32 0.0, %v1807
  %v1809 = vpop.f32.mrb[0].mxu0
  %v1810 = vpop.f32.mrb[0].mxu0
  %v1811 = vadd.f32 0.0, %v1810
  %v1812 = vpop.f32.mrb[0].mxu0
  %1813 = vmatprep.mubr.bf16.mxu0 %v1065
  %1814 = vmatmul.mubr.bf16.gmra.mrb[0].mxu0 %v1064
  %v1815 = vpop.f32.mrb[0].mxu0
  %v1816 = vadd.f32 0.0, %v1815
  %v1817 = vpop.f32.mrb[0].mxu0
  %v1818 = vpop.f32.mrb[0].mxu0
  %v1819 = vadd.f32 0.0, %v1818
  %v1820 = vpop.f32.mrb[0].mxu0
  %1821 = vmatprep.mubr.bf16.mxu0 %v1072
  %1822 = vmatmul.mubr.bf16.gmra.mrb[0].mxu0 %v1071
  %v1823 = vpop.f32.mrb[0].mxu0
  %v1824 = vadd.f32 0.0, %v1823
  %v1825 = vpop.f32.mrb[0].mxu0
  %v1826 = vpop.f32.mrb[0].mxu0
  %v1827 = vadd.f32 0.0, %v1826
  %v1828 = vpop.f32.mrb[0].mxu0
  %1829 = vmatprep.mubr.bf16.mxu0 %v1079
  %1830 = vmatmul.mubr.bf16.gmra.mrb[0].mxu0 %v1078
  %v1831 = vpop.f32.mrb[0].mxu0
  %v1832 = vadd.f32 0.0, %v1831
  %v1833 = vpop.f32.mrb[0].mxu0
  %v1834 = vpop.f32.mrb[0].mxu0
  %v1835 = vadd.f32 0.0, %v1834
  %v1836 = vpop.f32.mrb[0].mxu0
  %1837 = vmatprep.mubr.bf16.mxu0 %v1086
  %1838 = vmatmul.mubr.bf16.gmra.mrb[0].mxu0 %v1085
  %v1839 = vpop.f32.mrb[0].mxu0
  %v1840 = vadd.f32 0.0, %v1839
  %v1841 = vpop.f32.mrb[0].mxu0
  %v1842 = vpop.f32.mrb[0].mxu0
  %v1843 = vadd.f32 0.0, %v1842
  %v1844 = vpop.f32.mrb[0].mxu0
  %1845 = vmatprep.mubr.bf16.mxu0 %v1093
  %1846 = vmatmul.mubr.bf16.gmra.mrb[0].mxu0 %v1092
  %v1847 = vpop.f32.mrb[0].mxu0
  %v1848 = vadd.f32 0.0, %v1847
  %v1849 = vpop.f32.mrb[0].mxu0
  %v1850 = vpop.f32.mrb[0].mxu0
  %v1851 = vadd.f32 0.0, %v1850
  %v1852 = vpop.f32.mrb[0].mxu0
  %1853 = vmatprep.mubr.bf16.mxu0 %v1100
  %1854 = vmatmul.mubr.bf16.gmra.mrb[0].mxu0 %v1099
  %v1855 = vpop.f32.mrb[0].mxu0
  %v1856 = vadd.f32 0.0, %v1855
  %v1857 = vpop.f32.mrb[0].mxu0
  %v1858 = vpop.f32.mrb[0].mxu0
  %v1859 = vadd.f32 0.0, %v1858
  %v1860 = vpop.f32.mrb[0].mxu0
  %1861 = vmatprep.mubr.bf16.mxu0 %v1107
  %1862 = vmatmul.mubr.bf16.gmra.mrb[0].mxu0 %v1106
  %v1863 = vpop.f32.mrb[0].mxu0
  %v1864 = vadd.f32 0.0, %v1863
  %v1865 = vpop.f32.mrb[0].mxu0
  %v1866 = vpop.f32.mrb[0].mxu0
  %v1867 = vadd.f32 0.0, %v1866
  %v1868 = vpop.f32.mrb[0].mxu0
  %1869 = vmatprep.mubr.bf16.mxu0 %v1114
  %1870 = vmatmul.mubr.bf16.gmra.mrb[0].mxu0 %v1113
  %v1871 = vpop.f32.mrb[0].mxu0
  %v1872 = vadd.f32 0.0, %v1871
  %v1873 = vpop.f32.mrb[0].mxu0
  %v1874 = vpop.f32.mrb[0].mxu0
  %v1875 = vadd.f32 0.0, %v1874
  %v1876 = vpop.f32.mrb[0].mxu0
  %1877 = vmatprep.mubr.bf16.mxu0 %v1121
  %1878 = vmatmul.mubr.bf16.gmra.mrb[0].mxu0 %v1120
  %v1879 = vpop.f32.mrb[0].mxu0
  %v1880 = vadd.f32 0.0, %v1879
  %v1881 = vpop.f32.mrb[0].mxu0
  %v1882 = vpop.f32.mrb[0].mxu0
  %v1883 = vpop.f32.mrb[0].mxu0
  %1884 = vdwg.mxu0
  %1885 = vmatprep.subr.bf16.mxu0 0
  %1886 = vmatpush1.bf16.msra.mxu0 %v1493
  %1887 = vmatprep.subr.bf16.mxu0 0
  %1888 = vmatpush1.bf16.msra.mxu0 %v1494
  %1889 = vmatprep.subr.bf16.mxu0 0
  %1890 = vmatpush1.bf16.msra.mxu0 %v1495
  %1891 = vmatprep.subr.bf16.mxu0 0
  %1892 = vmatpush1.bf16.msra.mxu0 %v1496
  %1893 = vmatprep.subr.bf16.mxu0 0
  %1894 = vmatpush1.bf16.msra.mxu0 %v1497
  %1895 = vmatprep.subr.bf16.mxu0 0
  %1896 = vmatpush1.bf16.msra.mxu0 %v1498
  %1897 = vmatprep.subr.bf16.mxu0 0
  %1898 = vmatpush1.bf16.msra.mxu0 %v1499
  %1899 = vmatprep.subr.bf16.mxu0 0
  %1900 = vmatpush1.bf16.msra.mxu0 %v1500
  %1901 = vmatprep.subr.bf16.mxu0 0
  %1902 = vmatpush1.bf16.msra.mxu0 %v1501
  %1903 = vmatprep.subr.bf16.mxu0 0
  %1904 = vmatpush1.bf16.msra.mxu0 %v1502
  %1905 = vmatprep.subr.bf16.mxu0 0
  %1906 = vmatpush1.bf16.msra.mxu0 %v1503
  %1907 = vmatprep.subr.bf16.mxu0 0
  %1908 = vmatpush1.bf16.msra.mxu0 %v1504
  %1909 = vmatprep.subr.bf16.mxu0 0
  %1910 = vmatpush1.bf16.msra.mxu0 %v1505
  %1911 = vmatprep.subr.bf16.mxu0 0
  %1912 = vmatpush1.bf16.msra.mxu0 %v1506
  %1913 = vmatprep.subr.bf16.mxu0 0
  %1914 = vmatpush1.bf16.msra.mxu0 %v1507
  %1915 = vmatprep.subr.bf16.mxu0 0
  %1916 = vmatpush1.bf16.msra.mxu0 %v1508
  %1917 = vmatprep.mubr.bf16.mxu0 %v955
  %1918 = vmatmul.mubr.bf16.gmra.mrb[0].mxu0 %v954
  %v1919 = vpop.f32.mrb[0].mxu0
  %v1920 = vadd.f32 %v1688, %v1919
  %v1921 = vpop.f32.mrb[0].mxu0
  %v1922 = vpop.f32.mrb[0].mxu0
  %v1923 = vadd.f32 %v1691, %v1922
  %v1924 = vpop.f32.mrb[0].mxu0
  %1925 = vmatprep.mubr.bf16.mxu0 %v962
  %1926 = vmatmul.mubr.bf16.gmra.mrb[0].mxu0 %v961
  %v1927 = vpop.f32.mrb[0].mxu0
  %v1928 = vadd.f32 %v1696, %v1927
  %v1929 = vpop.f32.mrb[0].mxu0
  %v1930 = vpop.f32.mrb[0].mxu0
  %v1931 = vadd.f32 %v1699, %v1930
  %v1932 = vpop.f32.mrb[0].mxu0
  %1933 = vmatprep.mubr.bf16.mxu0 %v969
  %1934 = vmatmul.mubr.bf16.gmra.mrb[0].mxu0 %v968
  %v1935 = vpop.f32.mrb[0].mxu0
  %v1936 = vadd.f32 %v1704, %v1935
  %v1937 = vpop.f32.mrb[0].mxu0
  %v1938 = vpop.f32.mrb[0].mxu0
  %v1939 = vadd.f32 %v1707, %v1938
  %v1940 = vpop.f32.mrb[0].mxu0
  %1941 = vmatprep.mubr.bf16.mxu0 %v976
  %1942 = vmatmul.mubr.bf16.gmra.mrb[0].mxu0 %v975
  %v1943 = vpop.f32.mrb[0].mxu0
  %v1944 = vadd.f32 %v1712, %v1943
  %v1945 = vpop.f32.mrb[0].mxu0
  %v1946 = vpop.f32.mrb[0].mxu0
  %v1947 = vadd.f32 %v1715, %v1946
  %v1948 = vpop.f32.mrb[0].mxu0
  %1949 = vmatprep.mubr.bf16.mxu0 %v983
  %1950 = vmatmul.mubr.bf16.gmra.mrb[0].mxu0 %v982
  %v1951 = vpop.f32.mrb[0].mxu0
  %v1952 = vadd.f32 %v1720, %v1951
  %v1953 = vpop.f32.mrb[0].mxu0
  %v1954 = vpop.f32.mrb[0].mxu0
  %v1955 = vadd.f32 %v1723, %v1954
  %v1956 = vpop.f32.mrb[0].mxu0
  %1957 = vmatprep.mubr.bf16.mxu0 %v990
  %1958 = vmatmul.mubr.bf16.gmra.mrb[0].mxu0 %v989
  %v1959 = vpop.f32.mrb[0].mxu0
  %v1960 = vadd.f32 %v1728, %v1959
  %v1961 = vpop.f32.mrb[0].mxu0
  %v1962 = vpop.f32.mrb[0].mxu0
  %v1963 = vadd.f32 %v1731, %v1962
  %v1964 = vpop.f32.mrb[0].mxu0
  %1965 = vmatprep.mubr.bf16.mxu0 %v997
  %1966 = vmatmul.mubr.bf16.gmra.mrb[0].mxu0 %v996
  %v1967 = vpop.f32.mrb[0].mxu0
  %v1968 = vadd.f32 %v1736, %v1967
  %v1969 = vpop.f32.mrb[0].mxu0
  %v1970 = vpop.f32.mrb[0].mxu0
  %v1971 = vadd.f32 %v1739, %v1970
  %v1972 = vpop.f32.mrb[0].mxu0
  %1973 = vmatprep.mubr.bf16.mxu0 %v1004
  %1974 = vmatmul.mubr.bf16.gmra.mrb[0].mxu0 %v1003
  %v1975 = vpop.f32.mrb[0].mxu0
  %v1976 = vadd.f32 %v1744, %v1975
  %v1977 = vpop.f32.mrb[0].mxu0
  %v1978 = vpop.f32.mrb[0].mxu0
  %v1979 = vadd.f32 %v1747, %v1978
  %v1980 = vpop.f32.mrb[0].mxu0
  %1981 = vmatprep.mubr.bf16.mxu0 %v1011
  %1982 = vmatmul.mubr.bf16.gmra.mrb[0].mxu0 %v1010
  %v1983 = vpop.f32.mrb[0].mxu0
  %v1984 = vadd.f32 %v1752, %v1983
  %v1985 = vpop.f32.mrb[0].mxu0
  %v1986 = vpop.f32.mrb[0].mxu0
  %v1987 = vadd.f32 %v1755, %v1986
  %v1988 = vpop.f32.mrb[0].mxu0
  %1989 = vmatprep.mubr.bf16.mxu0 %v1018
  %1990 = vmatmul.mubr.bf16.gmra.mrb[0].mxu0 %v1017
  %v1991 = vpop.f32.mrb[0].mxu0
  %v1992 = vadd.f32 %v1760, %v1991
  %v1993 = vpop.f32.mrb[0].mxu0
  %v1994 = vpop.f32.mrb[0].mxu0
  %v1995 = vadd.f32 %v1763, %v1994
  %v1996 = vpop.f32.mrb[0].mxu0
  %1997 = vmatprep.mubr.bf16.mxu0 %v1025
  %1998 = vmatmul.mubr.bf16.gmra.mrb[0].mxu0 %v1024
  %v1999 = vpop.f32.mrb[0].mxu0
  %v2000 = vadd.f32 %v1768, %v1999
  %v2001 = vpop.f32.mrb[0].mxu0
  %v2002 = vpop.f32.mrb[0].mxu0
  %v2003 = vadd.f32 %v1771, %v2002
  %v2004 = vpop.f32.mrb[0].mxu0
  %2005 = vmatprep.mubr.bf16.mxu0 %v1032
  %2006 = vmatmul.mubr.bf16.gmra.mrb[0].mxu0 %v1031
  %v2007 = vpop.f32.mrb[0].mxu0
  %v2008 = vadd.f32 %v1776, %v2007
  %v2009 = vpop.f32.mrb[0].mxu0
  %v2010 = vpop.f32.mrb[0].mxu0
  %v2011 = vadd.f32 %v1779, %v2010
  %v2012 = vpop.f32.mrb[0].mxu0
  %2013 = vmatprep.mubr.bf16.mxu0 %v1039
  %2014 = vmatmul.mubr.bf16.gmra.mrb[0].mxu0 %v1038
  %v2015 = vpop.f32.mrb[0].mxu0
  %v2016 = vadd.f32 %v1784, %v2015
  %v2017 = vpop.f32.mrb[0].mxu0
  %v2018 = vpop.f32.mrb[0].mxu0
  %v2019 = vadd.f32 %v1787, %v2018
  %v2020 = vpop.f32.mrb[0].mxu0
  %2021 = vmatprep.mubr.bf16.mxu0 %v1046
  %2022 = vmatmul.mubr.bf16.gmra.mrb[0].mxu0 %v1045
  %v2023 = vpop.f32.mrb[0].mxu0
  %v2024 = vadd.f32 %v1792, %v2023
  %v2025 = vpop.f32.mrb[0].mxu0
  %v2026 = vpop.f32.mrb[0].mxu0
  %v2027 = vadd.f32 %v1795, %v2026
  %v2028 = vpop.f32.mrb[0].mxu0
  %2029 = vmatprep.mubr.bf16.mxu0 %v1053
  %2030 = vmatmul.mubr.bf16.gmra.mrb[0].mxu0 %v1052
  %v2031 = vpop.f32.mrb[0].mxu0
  %v2032 = vadd.f32 %v1800, %v2031
  %v2033 = vpop.f32.mrb[0].mxu0
  %v2034 = vpop.f32.mrb[0].mxu0
  %v2035 = vadd.f32 %v1803, %v2034
  %v2036 = vpop.f32.mrb[0].mxu0
  %2037 = vmatprep.mubr.bf16.mxu0 %v1060
  %2038 = vmatmul.mubr.bf16.gmra.mrb[0].mxu0 %v1059
  %v2039 = vpop.f32.mrb[0].mxu0
  %v2040 = vadd.f32 %v1808, %v2039
  %v2041 = vpop.f32.mrb[0].mxu0
  %v2042 = vpop.f32.mrb[0].mxu0
  %v2043 = vadd.f32 %v1811, %v2042
  %v2044 = vpop.f32.mrb[0].mxu0
  %2045 = vmatprep.mubr.bf16.mxu0 %v1067
  %2046 = vmatmul.mubr.bf16.gmra.mrb[0].mxu0 %v1066
  %v2047 = vpop.f32.mrb[0].mxu0
  %v2048 = vadd.f32 %v1816, %v2047
  %v2049 = vpop.f32.mrb[0].mxu0
  %v2050 = vpop.f32.mrb[0].mxu0
  %v2051 = vadd.f32 %v1819, %v2050
  %v2052 = vpop.f32.mrb[0].mxu0
  %2053 = vmatprep.mubr.bf16.mxu0 %v1074
  %2054 = vmatmul.mubr.bf16.gmra.mrb[0].mxu0 %v1073
  %v2055 = vpop.f32.mrb[0].mxu0
  %v2056 = vadd.f32 %v1824, %v2055
  %v2057 = vpop.f32.mrb[0].mxu0
  %v2058 = vpop.f32.mrb[0].mxu0
  %v2059 = vadd.f32 %v1827, %v2058
  %v2060 = vpop.f32.mrb[0].mxu0
  %2061 = vmatprep.mubr.bf16.mxu0 %v1081
  %2062 = vmatmul.mubr.bf16.gmra.mrb[0].mxu0 %v1080
  %v2063 = vpop.f32.mrb[0].mxu0
  %v2064 = vadd.f32 %v1832, %v2063
  %v2065 = vpop.f32.mrb[0].mxu0
  %v2066 = vpop.f32.mrb[0].mxu0
  %v2067 = vadd.f32 %v1835, %v2066
  %v2068 = vpop.f32.mrb[0].mxu0
  %2069 = vmatprep.mubr.bf16.mxu0 %v1088
  %2070 = vmatmul.mubr.bf16.gmra.mrb[0].mxu0 %v1087
  %v2071 = vpop.f32.mrb[0].mxu0
  %v2072 = vadd.f32 %v1840, %v2071
  %v2073 = vpop.f32.mrb[0].mxu0
  %v2074 = vpop.f32.mrb[0].mxu0
  %v2075 = vadd.f32 %v1843, %v2074
  %v2076 = vpop.f32.mrb[0].mxu0
  %2077 = vmatprep.mubr.bf16.mxu0 %v1095
  %2078 = vmatmul.mubr.bf16.gmra.mrb[0].mxu0 %v1094
  %v2079 = vpop.f32.mrb[0].mxu0
  %v2080 = vadd.f32 %v1848, %v2079
  %v2081 = vpop.f32.mrb[0].mxu0
  %v2082 = vpop.f32.mrb[0].mxu0
  %v2083 = vadd.f32 %v1851, %v2082
  %v2084 = vpop.f32.mrb[0].mxu0
  %2085 = vmatprep.mubr.bf16.mxu0 %v1102
  %2086 = vmatmul.mubr.bf16.gmra.mrb[0].mxu0 %v1101
  %v2087 = vpop.f32.mrb[0].mxu0
  %v2088 = vadd.f32 %v1856, %v2087
  %v2089 = vpop.f32.mrb[0].mxu0
  %v2090 = vpop.f32.mrb[0].mxu0
  %v2091 = vadd.f32 %v1859, %v2090
  %v2092 = vpop.f32.mrb[0].mxu0
  %2093 = vmatprep.mubr.bf16.mxu0 %v1109
  %2094 = vmatmul.mubr.bf16.gmra.mrb[0].mxu0 %v1108
  %v2095 = vpop.f32.mrb[0].mxu0
  %v2096 = vadd.f32 %v1864, %v2095
  %v2097 = vpop.f32.mrb[0].mxu0
  %v2098 = vpop.f32.mrb[0].mxu0
  %v2099 = vadd.f32 %v1867, %v2098
  %v2100 = vpop.f32.mrb[0].mxu0
  %2101 = vmatprep.mubr.bf16.mxu0 %v1116
  %2102 = vmatmul.mubr.bf16.gmra.mrb[0].mxu0 %v1115
  %v2103 = vpop.f32.mrb[0].mxu0
  %v2104 = vadd.f32 %v1872, %v2103
  %v2105 = vpop.f32.mrb[0].mxu0
  %v2106 = vpop.f32.mrb[0].mxu0
  %v2107 = vadd.f32 %v1875, %v2106
  %v2108 = vpop.f32.mrb[0].mxu0
  %2109 = vmatprep.mubr.bf16.mxu0 %v1123
  %2110 = vmatmul.mubr.bf16.gmra.mrb[0].mxu0 %v1122
  %v2111 = vpop.f32.mrb[0].mxu0
  %v2112 = vadd.f32 %v1880, %v2111
  %v2113 = vpop.f32.mrb[0].mxu0
  %v2114 = vpop.f32.mrb[0].mxu0
  %v2115 = vpop.f32.mrb[0].mxu0
  %2116 = vdwg.mxu0
  %2117 = vmatprep.subr.bf16.mxu0 0
  %2118 = vmatpush1.bf16.msra.mxu0 %v1509
  %2119 = vmatprep.subr.bf16.mxu0 0
  %2120 = vmatpush1.bf16.msra.mxu0 %v1510
  %2121 = vmatprep.subr.bf16.mxu0 0
  %2122 = vmatpush1.bf16.msra.mxu0 %v1511
  %2123 = vmatprep.subr.bf16.mxu0 0
  %2124 = vmatpush1.bf16.msra.mxu0 %v1512
  %2125 = vmatprep.subr.bf16.mxu0 0
  %2126 = vmatpush1.bf16.msra.mxu0 %v1513
  %2127 = vmatprep.subr.bf16.mxu0 0
  %2128 = vmatpush1.bf16.msra.mxu0 %v1514
  %2129 = vmatprep.subr.bf16.mxu0 0
  %2130 = vmatpush1.bf16.msra.mxu0 %v1515
  %2131 = vmatprep.subr.bf16.mxu0 0
  %2132 = vmatpush1.bf16.msra.mxu0 %v1516
  %2133 = vmatprep.subr.bf16.mxu0 0
  %2134 = vmatpush1.bf16.msra.mxu0 %v1517
  %2135 = vmatprep.subr.bf16.mxu0 0
  %2136 = vmatpush1.bf16.msra.mxu0 %v1518
  %2137 = vmatprep.subr.bf16.mxu0 0
  %2138 = vmatpush1.bf16.msra.mxu0 %v1519
  %2139 = vmatprep.subr.bf16.mxu0 0
  %2140 = vmatpush1.bf16.msra.mxu0 %v1520
  %2141 = vmatprep.subr.bf16.mxu0 0
  %2142 = vmatpush1.bf16.msra.mxu0 %v1521
  %2143 = vmatprep.subr.bf16.mxu0 0
  %2144 = vmatpush1.bf16.msra.mxu0 %v1522
  %2145 = vmatprep.subr.bf16.mxu0 0
  %2146 = vmatpush1.bf16.msra.mxu0 %v1523
  %2147 = vmatprep.subr.bf16.mxu0 0
  %2148 = vmatpush1.bf16.msra.mxu0 %v1524
  %2149 = vmatprep.mubr.bf16.mxu0 %v957
  %2150 = vmatmul.mubr.bf16.gmra.mrb[0].mxu0 %v956
  %v2151 = vpop.f32.mrb[0].mxu0
  %v2152 = vadd.f32 %v1920, %v2151
  %v2153 = vpop.f32.mrb[0].mxu0
  %v2154 = vpop.f32.mrb[0].mxu0
  %v2155 = vadd.f32 %v1923, %v2154
  %v2156 = vpop.f32.mrb[0].mxu0
  %2157 = vmatprep.mubr.bf16.mxu0 %v964
  %2158 = vmatmul.mubr.bf16.gmra.mrb[0].mxu0 %v963
  %v2159 = vpop.f32.mrb[0].mxu0
  %v2160 = vadd.f32 %v1928, %v2159
  %v2161 = vpop.f32.mrb[0].mxu0
  %v2162 = vpop.f32.mrb[0].mxu0
  %v2163 = vadd.f32 %v1931, %v2162
  %v2164 = vpop.f32.mrb[0].mxu0
  %2165 = vmatprep.mubr.bf16.mxu0 %v971
  %2166 = vmatmul.mubr.bf16.gmra.mrb[0].mxu0 %v970
  %v2167 = vpop.f32.mrb[0].mxu0
  %v2168 = vadd.f32 %v1936, %v2167
  %v2169 = vpop.f32.mrb[0].mxu0
  %v2170 = vpop.f32.mrb[0].mxu0
  %v2171 = vadd.f32 %v1939, %v2170
  %v2172 = vpop.f32.mrb[0].mxu0
  %2173 = vmatprep.mubr.bf16.mxu0 %v978
  %2174 = vmatmul.mubr.bf16.gmra.mrb[0].mxu0 %v977
  %v2175 = vpop.f32.mrb[0].mxu0
  %v2176 = vadd.f32 %v1944, %v2175
  %v2177 = vpop.f32.mrb[0].mxu0
  %v2178 = vpop.f32.mrb[0].mxu0
  %v2179 = vadd.f32 %v1947, %v2178
  %v2180 = vpop.f32.mrb[0].mxu0
  %2181 = vmatprep.mubr.bf16.mxu0 %v985
  %2182 = vmatmul.mubr.bf16.gmra.mrb[0].mxu0 %v984
  %v2183 = vpop.f32.mrb[0].mxu0
  %v2184 = vadd.f32 %v1952, %v2183
  %v2185 = vpop.f32.mrb[0].mxu0
  %v2186 = vpop.f32.mrb[0].mxu0
  %v2187 = vadd.f32 %v1955, %v2186
  %v2188 = vpop.f32.mrb[0].mxu0
  %2189 = vmatprep.mubr.bf16.mxu0 %v992
  %2190 = vmatmul.mubr.bf16.gmra.mrb[0].mxu0 %v991
  %v2191 = vpop.f32.mrb[0].mxu0
  %v2192 = vadd.f32 %v1960, %v2191
  %v2193 = vpop.f32.mrb[0].mxu0
  %v2194 = vpop.f32.mrb[0].mxu0
  %v2195 = vadd.f32 %v1963, %v2194
  %v2196 = vpop.f32.mrb[0].mxu0
  %2197 = vmatprep.mubr.bf16.mxu0 %v999
  %2198 = vmatmul.mubr.bf16.gmra.mrb[0].mxu0 %v998
  %v2199 = vpop.f32.mrb[0].mxu0
  %v2200 = vadd.f32 %v1968, %v2199
  %v2201 = vpop.f32.mrb[0].mxu0
  %v2202 = vpop.f32.mrb[0].mxu0
  %v2203 = vadd.f32 %v1971, %v2202
  %v2204 = vpop.f32.mrb[0].mxu0
  %2205 = vmatprep.mubr.bf16.mxu0 %v1006
  %2206 = vmatmul.mubr.bf16.gmra.mrb[0].mxu0 %v1005
  %v2207 = vpop.f32.mrb[0].mxu0
  %v2208 = vadd.f32 %v1976, %v2207
  %v2209 = vpop.f32.mrb[0].mxu0
  %v2210 = vpop.f32.mrb[0].mxu0
  %v2211 = vadd.f32 %v1979, %v2210
  %v2212 = vpop.f32.mrb[0].mxu0
  %2213 = vmatprep.mubr.bf16.mxu0 %v1013
  %2214 = vmatmul.mubr.bf16.gmra.mrb[0].mxu0 %v1012
  %v2215 = vpop.f32.mrb[0].mxu0
  %v2216 = vadd.f32 %v1984, %v2215
  %v2217 = vpop.f32.mrb[0].mxu0
  %v2218 = vpop.f32.mrb[0].mxu0
  %v2219 = vadd.f32 %v1987, %v2218
  %v2220 = vpop.f32.mrb[0].mxu0
  %2221 = vmatprep.mubr.bf16.mxu0 %v1020
  %2222 = vmatmul.mubr.bf16.gmra.mrb[0].mxu0 %v1019
  %v2223 = vpop.f32.mrb[0].mxu0
  %v2224 = vadd.f32 %v1992, %v2223
  %v2225 = vpop.f32.mrb[0].mxu0
  %v2226 = vpop.f32.mrb[0].mxu0
  %v2227 = vadd.f32 %v1995, %v2226
  %v2228 = vpop.f32.mrb[0].mxu0
  %2229 = vmatprep.mubr.bf16.mxu0 %v1027
  %2230 = vmatmul.mubr.bf16.gmra.mrb[0].mxu0 %v1026
  %v2231 = vpop.f32.mrb[0].mxu0
  %v2232 = vadd.f32 %v2000, %v2231
  %v2233 = vpop.f32.mrb[0].mxu0
  %v2234 = vpop.f32.mrb[0].mxu0
  %v2235 = vadd.f32 %v2003, %v2234
  %v2236 = vpop.f32.mrb[0].mxu0
  %2237 = vmatprep.mubr.bf16.mxu0 %v1034
  %2238 = vmatmul.mubr.bf16.gmra.mrb[0].mxu0 %v1033
  %v2239 = vpop.f32.mrb[0].mxu0
  %v2240 = vadd.f32 %v2008, %v2239
  %v2241 = vpop.f32.mrb[0].mxu0
  %v2242 = vpop.f32.mrb[0].mxu0
  %v2243 = vadd.f32 %v2011, %v2242
  %v2244 = vpop.f32.mrb[0].mxu0
  %2245 = vmatprep.mubr.bf16.mxu0 %v1041
  %2246 = vmatmul.mubr.bf16.gmra.mrb[0].mxu0 %v1040
  %v2247 = vpop.f32.mrb[0].mxu0
  %v2248 = vadd.f32 %v2016, %v2247
  %v2249 = vpop.f32.mrb[0].mxu0
  %v2250 = vpop.f32.mrb[0].mxu0
  %v2251 = vadd.f32 %v2019, %v2250
  %v2252 = vpop.f32.mrb[0].mxu0
  %2253 = vmatprep.mubr.bf16.mxu0 %v1048
  %2254 = vmatmul.mubr.bf16.gmra.mrb[0].mxu0 %v1047
  %v2255 = vpop.f32.mrb[0].mxu0
  %v2256 = vadd.f32 %v2024, %v2255
  %v2257 = vpop.f32.mrb[0].mxu0
  %v2258 = vpop.f32.mrb[0].mxu0
  %v2259 = vadd.f32 %v2027, %v2258
  %v2260 = vpop.f32.mrb[0].mxu0
  %2261 = vmatprep.mubr.bf16.mxu0 %v1055
  %2262 = vmatmul.mubr.bf16.gmra.mrb[0].mxu0 %v1054
  %v2263 = vpop.f32.mrb[0].mxu0
  %v2264 = vadd.f32 %v2032, %v2263
  %v2265 = vpop.f32.mrb[0].mxu0
  %v2266 = vpop.f32.mrb[0].mxu0
  %v2267 = vadd.f32 %v2035, %v2266
  %v2268 = vpop.f32.mrb[0].mxu0
  %2269 = vmatprep.mubr.bf16.mxu0 %v1062
  %2270 = vmatmul.mubr.bf16.gmra.mrb[0].mxu0 %v1061
  %v2271 = vpop.f32.mrb[0].mxu0
  %v2272 = vadd.f32 %v2040, %v2271
  %v2273 = vpop.f32.mrb[0].mxu0
  %v2274 = vpop.f32.mrb[0].mxu0
  %v2275 = vadd.f32 %v2043, %v2274
  %v2276 = vpop.f32.mrb[0].mxu0
  %2277 = vmatprep.mubr.bf16.mxu0 %v1069
  %2278 = vmatmul.mubr.bf16.gmra.mrb[0].mxu0 %v1068
  %v2279 = vpop.f32.mrb[0].mxu0
  %v2280 = vadd.f32 %v2048, %v2279
  %v2281 = vpop.f32.mrb[0].mxu0
  %v2282 = vpop.f32.mrb[0].mxu0
  %v2283 = vadd.f32 %v2051, %v2282
  %v2284 = vpop.f32.mrb[0].mxu0
  %2285 = vmatprep.mubr.bf16.mxu0 %v1076
  %2286 = vmatmul.mubr.bf16.gmra.mrb[0].mxu0 %v1075
  %v2287 = vpop.f32.mrb[0].mxu0
  %v2288 = vadd.f32 %v2056, %v2287
  %v2289 = vpop.f32.mrb[0].mxu0
  %v2290 = vpop.f32.mrb[0].mxu0
  %v2291 = vadd.f32 %v2059, %v2290
  %v2292 = vpop.f32.mrb[0].mxu0
  %2293 = vmatprep.mubr.bf16.mxu0 %v1083
  %2294 = vmatmul.mubr.bf16.gmra.mrb[0].mxu0 %v1082
  %v2295 = vpop.f32.mrb[0].mxu0
  %v2296 = vadd.f32 %v2064, %v2295
  %v2297 = vpop.f32.mrb[0].mxu0
  %v2298 = vpop.f32.mrb[0].mxu0
  %v2299 = vadd.f32 %v2067, %v2298
  %v2300 = vpop.f32.mrb[0].mxu0
  %2301 = vmatprep.mubr.bf16.mxu0 %v1090
  %2302 = vmatmul.mubr.bf16.gmra.mrb[0].mxu0 %v1089
  %v2303 = vpop.f32.mrb[0].mxu0
  %v2304 = vadd.f32 %v2072, %v2303
  %v2305 = vpop.f32.mrb[0].mxu0
  %v2306 = vpop.f32.mrb[0].mxu0
  %v2307 = vadd.f32 %v2075, %v2306
  %v2308 = vpop.f32.mrb[0].mxu0
  %2309 = vmatprep.mubr.bf16.mxu0 %v1097
  %2310 = vmatmul.mubr.bf16.gmra.mrb[0].mxu0 %v1096
  %v2311 = vpop.f32.mrb[0].mxu0
  %v2312 = vadd.f32 %v2080, %v2311
  %v2313 = vpop.f32.mrb[0].mxu0
  %v2314 = vpop.f32.mrb[0].mxu0
  %v2315 = vadd.f32 %v2083, %v2314
  %v2316 = vpop.f32.mrb[0].mxu0
  %2317 = vmatprep.mubr.bf16.mxu0 %v1104
  %2318 = vmatmul.mubr.bf16.gmra.mrb[0].mxu0 %v1103
  %v2319 = vpop.f32.mrb[0].mxu0
  %v2320 = vadd.f32 %v2088, %v2319
  %v2321 = vpop.f32.mrb[0].mxu0
  %v2322 = vpop.f32.mrb[0].mxu0
  %v2323 = vadd.f32 %v2091, %v2322
  %v2324 = vpop.f32.mrb[0].mxu0
  %2325 = vmatprep.mubr.bf16.mxu0 %v1111
  %2326 = vmatmul.mubr.bf16.gmra.mrb[0].mxu0 %v1110
  %v2327 = vpop.f32.mrb[0].mxu0
  %v2328 = vadd.f32 %v2096, %v2327
  %v2329 = vpop.f32.mrb[0].mxu0
  %v2330 = vpop.f32.mrb[0].mxu0
  %v2331 = vadd.f32 %v2099, %v2330
  %v2332 = vpop.f32.mrb[0].mxu0
  %2333 = vmatprep.mubr.bf16.mxu0 %v1118
  %2334 = vmatmul.mubr.bf16.gmra.mrb[0].mxu0 %v1117
  %v2335 = vpop.f32.mrb[0].mxu0
  %v2336 = vadd.f32 %v2104, %v2335
  %v2337 = vpop.f32.mrb[0].mxu0
  %v2338 = vpop.f32.mrb[0].mxu0
  %v2339 = vadd.f32 %v2107, %v2338
  %v2340 = vpop.f32.mrb[0].mxu0
  %2341 = vmatprep.mubr.bf16.mxu0 %v1125
  %2342 = vmatmul.mubr.bf16.gmra.mrb[0].mxu0 %v1124
  %v2343 = vpop.f32.mrb[0].mxu0
  %v2344 = vadd.f32 %v2112, %v2343
  %v2345 = vpop.f32.mrb[0].mxu0
  %v2346 = vpop.f32.mrb[0].mxu0
  %v2347 = vpop.f32.mrb[0].mxu0
  %2348 = vdwg.mxu0
  %2349 = vmatprep.subr.bf16.mxu0 0
  %2350 = vmatpush1.bf16.msra.mxu0 %v1525
  %2351 = vmatprep.subr.bf16.mxu0 0
  %2352 = vmatpush1.bf16.msra.mxu0 %v1526
  %2353 = vmatprep.subr.bf16.mxu0 0
  %2354 = vmatpush1.bf16.msra.mxu0 0
  %2355 = vmatprep.subr.bf16.mxu0 0
  %2356 = vmatpush1.bf16.msra.mxu0 0
  %2357 = vmatprep.subr.bf16.mxu0 0
  %2358 = vmatpush1.bf16.msra.mxu0 0
  %2359 = vmatprep.subr.bf16.mxu0 0
  %2360 = vmatpush1.bf16.msra.mxu0 0
  %2361 = vmatprep.subr.bf16.mxu0 0
  %2362 = vmatpush1.bf16.msra.mxu0 0
  %2363 = vmatprep.subr.bf16.mxu0 0
  %2364 = vmatpush1.bf16.msra.mxu0 0
  %2365 = vmatprep.subr.bf16.mxu0 0
  %2366 = vmatpush1.bf16.msra.mxu0 0
  %2367 = vmatprep.subr.bf16.mxu0 0
  %2368 = vmatpush1.bf16.msra.mxu0 0
  %2369 = vmatprep.subr.bf16.mxu0 0
  %2370 = vmatpush1.bf16.msra.mxu0 0
  %2371 = vmatprep.subr.bf16.mxu0 0
  %2372 = vmatpush1.bf16.msra.mxu0 0
  %2373 = vmatprep.subr.bf16.mxu0 0
  %2374 = vmatpush1.bf16.msra.mxu0 0
  %2375 = vmatprep.subr.bf16.mxu0 0
  %2376 = vmatpush1.bf16.msra.mxu0 0
  %2377 = vmatprep.subr.bf16.mxu0 0
  %2378 = vmatpush1.bf16.msra.mxu0 0
  %2379 = vmatprep.subr.bf16.mxu0 0
  %2380 = vmatpush1.bf16.msra.mxu0 0
  %2381 = vmatprep.mubr.bf16.mxu0 0
  %2382 = vmatmul.mubr.bf16.gmra.mrb[0].mxu0 %v1579
  %v2383 = vpop.f32.mrb[0].mxu0
  %v2384 = vadd.f32 %v2152, %v2383
  %v2385 = vpop.f32.mrb[0].mxu0
  %v2386 = vpop.f32.mrb[0].mxu0
  %v2387 = vadd.f32 %v2155, %v2386
  %v2388 = vpop.f32.mrb[0].mxu0
  %2389 = vmatprep.mubr.bf16.mxu0 0
  %2390 = vmatmul.mubr.bf16.gmra.mrb[0].mxu0 %v1582
  %v2391 = vpop.f32.mrb[0].mxu0
  %v2392 = vadd.f32 %v2160, %v2391
  %v2393 = vpop.f32.mrb[0].mxu0
  %v2394 = vpop.f32.mrb[0].mxu0
  %v2395 = vadd.f32 %v2163, %v2394
  %v2396 = vpop.f32.mrb[0].mxu0
  %2397 = vmatprep.mubr.bf16.mxu0 0
  %2398 = vmatmul.mubr.bf16.gmra.mrb[0].mxu0 %v1585
  %v2399 = vpop.f32.mrb[0].mxu0
  %v2400 = vadd.f32 %v2168, %v2399
  %v2401 = vpop.f32.mrb[0].mxu0
  %v2402 = vpop.f32.mrb[0].mxu0
  %v2403 = vadd.f32 %v2171, %v2402
  %v2404 = vpop.f32.mrb[0].mxu0
  %2405 = vmatprep.mubr.bf16.mxu0 0
  %2406 = vmatmul.mubr.bf16.gmra.mrb[0].mxu0 %v1588
  %v2407 = vpop.f32.mrb[0].mxu0
  %v2408 = vadd.f32 %v2176, %v2407
  %v2409 = vpop.f32.mrb[0].mxu0
  %v2410 = vpop.f32.mrb[0].mxu0
  %v2411 = vadd.f32 %v2179, %v2410
  %v2412 = vpop.f32.mrb[0].mxu0
  %2413 = vmatprep.mubr.bf16.mxu0 0
  %2414 = vmatmul.mubr.bf16.gmra.mrb[0].mxu0 %v1591
  %v2415 = vpop.f32.mrb[0].mxu0
  %v2416 = vadd.f32 %v2184, %v2415
  %v2417 = vpop.f32.mrb[0].mxu0
  %v2418 = vpop.f32.mrb[0].mxu0
  %v2419 = vadd.f32 %v2187, %v2418
  %v2420 = vpop.f32.mrb[0].mxu0
  %2421 = vmatprep.mubr.bf16.mxu0 0
  %2422 = vmatmul.mubr.bf16.gmra.mrb[0].mxu0 %v1594
  %v2423 = vpop.f32.mrb[0].mxu0
  %v2424 = vadd.f32 %v2192, %v2423
  %v2425 = vpop.f32.mrb[0].mxu0
  %v2426 = vpop.f32.mrb[0].mxu0
  %v2427 = vadd.f32 %v2195, %v2426
  %v2428 = vpop.f32.mrb[0].mxu0
  %2429 = vmatprep.mubr.bf16.mxu0 0
  %2430 = vmatmul.mubr.bf16.gmra.mrb[0].mxu0 %v1597
  %v2431 = vpop.f32.mrb[0].mxu0
  %v2432 = vadd.f32 %v2200, %v2431
  %v2433 = vpop.f32.mrb[0].mxu0
  %v2434 = vpop.f32.mrb[0].mxu0
  %v2435 = vadd.f32 %v2203, %v2434
  %v2436 = vpop.f32.mrb[0].mxu0
  %2437 = vmatprep.mubr.bf16.mxu0 0
  %2438 = vmatmul.mubr.bf16.gmra.mrb[0].mxu0 %v1600
  %v2439 = vpop.f32.mrb[0].mxu0
  %v2440 = vadd.f32 %v2208, %v2439
  %v2441 = vpop.f32.mrb[0].mxu0
  %v2442 = vpop.f32.mrb[0].mxu0
  %v2443 = vadd.f32 %v2211, %v2442
  %v2444 = vpop.f32.mrb[0].mxu0
  %2445 = vmatprep.mubr.bf16.mxu0 0
  %2446 = vmatmul.mubr.bf16.gmra.mrb[0].mxu0 %v1603
  %v2447 = vpop.f32.mrb[0].mxu0
  %v2448 = vadd.f32 %v2216, %v2447
  %v2449 = vpop.f32.mrb[0].mxu0
  %v2450 = vpop.f32.mrb[0].mxu0
  %v2451 = vadd.f32 %v2219, %v2450
  %v2452 = vpop.f32.mrb[0].mxu0
  %2453 = vmatprep.mubr.bf16.mxu0 0
  %2454 = vmatmul.mubr.bf16.gmra.mrb[0].mxu0 %v1606
  %v2455 = vpop.f32.mrb[0].mxu0
  %v2456 = vadd.f32 %v2224, %v2455
  %v2457 = vpop.f32.mrb[0].mxu0
  %v2458 = vpop.f32.mrb[0].mxu0
  %v2459 = vadd.f32 %v2227, %v2458
  %v2460 = vpop.f32.mrb[0].mxu0
  %2461 = vmatprep.mubr.bf16.mxu0 0
  %2462 = vmatmul.mubr.bf16.gmra.mrb[0].mxu0 %v1609
  %v2463 = vpop.f32.mrb[0].mxu0
  %v2464 = vadd.f32 %v2232, %v2463
  %v2465 = vpop.f32.mrb[0].mxu0
  %v2466 = vpop.f32.mrb[0].mxu0
  %v2467 = vadd.f32 %v2235, %v2466
  %v2468 = vpop.f32.mrb[0].mxu0
  %2469 = vmatprep.mubr.bf16.mxu0 0
  %2470 = vmatmul.mubr.bf16.gmra.mrb[0].mxu0 %v1612
  %v2471 = vpop.f32.mrb[0].mxu0
  %v2472 = vadd.f32 %v2240, %v2471
  %v2473 = vpop.f32.mrb[0].mxu0
  %v2474 = vpop.f32.mrb[0].mxu0
  %v2475 = vadd.f32 %v2243, %v2474
  %v2476 = vpop.f32.mrb[0].mxu0
  %2477 = vmatprep.mubr.bf16.mxu0 0
  %2478 = vmatmul.mubr.bf16.gmra.mrb[0].mxu0 %v1615
  %v2479 = vpop.f32.mrb[0].mxu0
  %v2480 = vadd.f32 %v2248, %v2479
  %v2481 = vpop.f32.mrb[0].mxu0
  %v2482 = vpop.f32.mrb[0].mxu0
  %v2483 = vadd.f32 %v2251, %v2482
  %v2484 = vpop.f32.mrb[0].mxu0
  %2485 = vmatprep.mubr.bf16.mxu0 0
  %2486 = vmatmul.mubr.bf16.gmra.mrb[0].mxu0 %v1618
  %v2487 = vpop.f32.mrb[0].mxu0
  %v2488 = vadd.f32 %v2256, %v2487
  %v2489 = vpop.f32.mrb[0].mxu0
  %v2490 = vpop.f32.mrb[0].mxu0
  %v2491 = vadd.f32 %v2259, %v2490
  %v2492 = vpop.f32.mrb[0].mxu0
  %2493 = vmatprep.mubr.bf16.mxu0 0
  %2494 = vmatmul.mubr.bf16.gmra.mrb[0].mxu0 %v1621
  %v2495 = vpop.f32.mrb[0].mxu0
  %v2496 = vadd.f32 %v2264, %v2495
  %v2497 = vpop.f32.mrb[0].mxu0
  %v2498 = vpop.f32.mrb[0].mxu0
  %v2499 = vadd.f32 %v2267, %v2498
  %v2500 = vpop.f32.mrb[0].mxu0
  %2501 = vmatprep.mubr.bf16.mxu0 0
  %2502 = vmatmul.mubr.bf16.gmra.mrb[0].mxu0 %v1624
  %v2503 = vpop.f32.mrb[0].mxu0
  %v2504 = vadd.f32 %v2272, %v2503
  %v2505 = vpop.f32.mrb[0].mxu0
  %v2506 = vpop.f32.mrb[0].mxu0
  %v2507 = vadd.f32 %v2275, %v2506
  %v2508 = vpop.f32.mrb[0].mxu0
  %2509 = vmatprep.mubr.bf16.mxu0 0
  %2510 = vmatmul.mubr.bf16.gmra.mrb[0].mxu0 %v1627
  %v2511 = vpop.f32.mrb[0].mxu0
  %v2512 = vadd.f32 %v2280, %v2511
  %v2513 = vpop.f32.mrb[0].mxu0
  %v2514 = vpop.f32.mrb[0].mxu0
  %v2515 = vadd.f32 %v2283, %v2514
  %v2516 = vpop.f32.mrb[0].mxu0
  %2517 = vmatprep.mubr.bf16.mxu0 0
  %2518 = vmatmul.mubr.bf16.gmra.mrb[0].mxu0 %v1630
  %v2519 = vpop.f32.mrb[0].mxu0
  %v2520 = vadd.f32 %v2288, %v2519
  %v2521 = vpop.f32.mrb[0].mxu0
  %v2522 = vpop.f32.mrb[0].mxu0
  %v2523 = vadd.f32 %v2291, %v2522
  %v2524 = vpop.f32.mrb[0].mxu0
  %2525 = vmatprep.mubr.bf16.mxu0 0
  %2526 = vmatmul.mubr.bf16.gmra.mrb[0].mxu0 %v1633
  %v2527 = vpop.f32.mrb[0].mxu0
  %v2528 = vadd.f32 %v2296, %v2527
  %v2529 = vpop.f32.mrb[0].mxu0
  %v2530 = vpop.f32.mrb[0].mxu0
  %v2531 = vadd.f32 %v2299, %v2530
  %v2532 = vpop.f32.mrb[0].mxu0
  %2533 = vmatprep.mubr.bf16.mxu0 0
  %2534 = vmatmul.mubr.bf16.gmra.mrb[0].mxu0 %v1636
  %v2535 = vpop.f32.mrb[0].mxu0
  %v2536 = vadd.f32 %v2304, %v2535
  %v2537 = vpop.f32.mrb[0].mxu0
  %v2538 = vpop.f32.mrb[0].mxu0
  %v2539 = vadd.f32 %v2307, %v2538
  %v2540 = vpop.f32.mrb[0].mxu0
  %2541 = vmatprep.mubr.bf16.mxu0 0
  %2542 = vmatmul.mubr.bf16.gmra.mrb[0].mxu0 %v1639
  %v2543 = vpop.f32.mrb[0].mxu0
  %v2544 = vadd.f32 %v2312, %v2543
  %v2545 = vpop.f32.mrb[0].mxu0
  %v2546 = vpop.f32.mrb[0].mxu0
  %v2547 = vadd.f32 %v2315, %v2546
  %v2548 = vpop.f32.mrb[0].mxu0
  %2549 = vmatprep.mubr.bf16.mxu0 0
  %2550 = vmatmul.mubr.bf16.gmra.mrb[0].mxu0 %v1642
  %v2551 = vpop.f32.mrb[0].mxu0
  %v2552 = vadd.f32 %v2320, %v2551
  %v2553 = vpop.f32.mrb[0].mxu0
  %v2554 = vpop.f32.mrb[0].mxu0
  %v2555 = vadd.f32 %v2323, %v2554
  %v2556 = vpop.f32.mrb[0].mxu0
  %2557 = vmatprep.mubr.bf16.mxu0 0
  %2558 = vmatmul.mubr.bf16.gmra.mrb[0].mxu0 %v1645
  %v2559 = vpop.f32.mrb[0].mxu0
  %v2560 = vadd.f32 %v2328, %v2559
  %v2561 = vpop.f32.mrb[0].mxu0
  %v2562 = vpop.f32.mrb[0].mxu0
  %v2563 = vadd.f32 %v2331, %v2562
  %v2564 = vpop.f32.mrb[0].mxu0
  %2565 = vmatprep.mubr.bf16.mxu0 0
  %2566 = vmatmul.mubr.bf16.gmra.mrb[0].mxu0 %v1648
  %v2567 = vpop.f32.mrb[0].mxu0
  %v2568 = vadd.f32 %v2336, %v2567
  %v2569 = vpop.f32.mrb[0].mxu0
  %v2570 = vpop.f32.mrb[0].mxu0
  %v2571 = vadd.f32 %v2339, %v2570
  %v2572 = vpop.f32.mrb[0].mxu0
  %2573 = vmatprep.mubr.bf16.mxu0 0
  %2574 = vmatmul.mubr.bf16.gmra.mrb[0].mxu0 %v1651
  %v2575 = vpop.f32.mrb[0].mxu0
  %v2576 = vadd.f32 %v2344, %v2575
  %v2577 = vpop.f32.mrb[0].mxu0
  %v2578 = vpop.f32.mrb[0].mxu0
  %v2579 = vpop.f32.mrb[0].mxu0
  %2580 = vdwg.mxu0
  %v2581 = vadd.f32 %v68, %v2384
  %v2582 = vadd.f32 %v69, %v2387
  %v2583 = vadd.f32 %v70, %v2392
  %v2584 = vadd.f32 %v71, %v2395
  %v2585 = vadd.f32 %v72, %v2400
  %v2586 = vadd.f32 %v73, %v2403
  %v2587 = vadd.f32 %v74, %v2408
  %v2588 = vadd.f32 %v75, %v2411
  %v2589 = vadd.f32 %v76, %v2416
  %v2590 = vadd.f32 %v77, %v2419
  %v2591 = vadd.f32 %v78, %v2424
  %v2592 = vadd.f32 %v79, %v2427
  %v2593 = vadd.f32 %v80, %v2432
  %v2594 = vadd.f32 %v81, %v2435
  %v2595 = vadd.f32 %v82, %v2440
  %v2596 = vadd.f32 %v83, %v2443
  %v2597 = vadd.f32 %v84, %v2448
  %v2598 = vadd.f32 %v85, %v2451
  %v2599 = vadd.f32 %v86, %v2456
  %v2600 = vadd.f32 %v87, %v2459
  %v2601 = vadd.f32 %v88, %v2464
  %v2602 = vadd.f32 %v89, %v2467
  %v2603 = vadd.f32 %v90, %v2472
  %v2604 = vadd.f32 %v91, %v2475
  %v2605 = vadd.f32 %v92, %v2480
  %v2606 = vadd.f32 %v93, %v2483
  %v2607 = vadd.f32 %v94, %v2488
  %v2608 = vadd.f32 %v95, %v2491
  %v2609 = vadd.f32 %v96, %v2496
  %v2610 = vadd.f32 %v97, %v2499
  %v2611 = vadd.f32 %v98, %v2504
  %v2612 = vadd.f32 %v99, %v2507
  %v2613 = vadd.f32 %v100, %v2512
  %v2614 = vadd.f32 %v101, %v2515
  %v2615 = vadd.f32 %v102, %v2520
  %v2616 = vadd.f32 %v103, %v2523
  %v2617 = vadd.f32 %v104, %v2528
  %v2618 = vadd.f32 %v105, %v2531
  %v2619 = vadd.f32 %v106, %v2536
  %v2620 = vadd.f32 %v107, %v2539
  %v2621 = vadd.f32 %v108, %v2544
  %v2622 = vadd.f32 %v109, %v2547
  %v2623 = vadd.f32 %v110, %v2552
  %v2624 = vadd.f32 %v111, %v2555
  %v2625 = vadd.f32 %v112, %v2560
  %v2626 = vadd.f32 %v113, %v2563
  %v2627 = vadd.f32 %v114, %v2568
  %v2628 = vadd.f32 %v115, %v2571
  %v2629 = vadd.f32 %v116, %v2576
  %2630 = vst [vmem:[#allocation2] sm:$0xff] %v2581
  %2631 = vst [vmem:[#allocation2 + $0x8] sm:$0xff] %v2582
  %2632 = vst [vmem:[#allocation2 + $0x10] sm:$0xff] %v2583
  %2633 = vst [vmem:[#allocation2 + $0x18] sm:$0xff] %v2584
  %2634 = vst [vmem:[#allocation2 + $0x20] sm:$0xff] %v2585
  %2635 = vst [vmem:[#allocation2 + $0x28] sm:$0xff] %v2586
  %2636 = vst [vmem:[#allocation2 + $0x30] sm:$0xff] %v2587
  %2637 = vst [vmem:[#allocation2 + $0x38] sm:$0xff] %v2588
  %2638 = vst [vmem:[#allocation2 + $0x40] sm:$0xff] %v2589
  %2639 = vst [vmem:[#allocation2 + $0x48] sm:$0xff] %v2590
  %2640 = vst [vmem:[#allocation2 + $0x50] sm:$0xff] %v2591
  %2641 = vst [vmem:[#allocation2 + $0x58] sm:$0xff] %v2592
  %2642 = vst [vmem:[#allocation2 + $0x60] sm:$0xff] %v2593
  %2643 = vst [vmem:[#allocation2 + $0x68] sm:$0xff] %v2594
  %2644 = vst [vmem:[#allocation2 + $0x70] sm:$0xff] %v2595
  %2645 = vst [vmem:[#allocation2 + $0x78] sm:$0xff] %v2596
  %2646 = vst [vmem:[#allocation2 + $0x80] sm:$0xff] %v2597
  %2647 = vst [vmem:[#allocation2 + $0x88] sm:$0xff] %v2598
  %2648 = vst [vmem:[#allocation2 + $0x90] sm:$0xff] %v2599
  %2649 = vst [vmem:[#allocation2 + $0x98] sm:$0xff] %v2600
  %2650 = vst [vmem:[#allocation2 + $0xa0] sm:$0xff] %v2601
  %2651 = vst [vmem:[#allocation2 + $0xa8] sm:$0xff] %v2602
  %2652 = vst [vmem:[#allocation2 + $0xb0] sm:$0xff] %v2603
  %2653 = vst [vmem:[#allocation2 + $0xb8] sm:$0xff] %v2604
  %2654 = vst [vmem:[#allocation2 + $0xc0] sm:$0xff] %v2605
  %2655 = vst [vmem:[#allocation2 + $0xc8] sm:$0xff] %v2606
  %2656 = vst [vmem:[#allocation2 + $0xd0] sm:$0xff] %v2607
  %2657 = vst [vmem:[#allocation2 + $0xd8] sm:$0xff] %v2608
  %2658 = vst [vmem:[#allocation2 + $0xe0] sm:$0xff] %v2609
  %2659 = vst [vmem:[#allocation2 + $0xe8] sm:$0xff] %v2610
  %2660 = vst [vmem:[#allocation2 + $0xf0] sm:$0xff] %v2611
  %2661 = vst [vmem:[#allocation2 + $0xf8] sm:$0xff] %v2612
  %2662 = vst [vmem:[#allocation2 + $0x100] sm:$0xff] %v2613
  %2663 = vst [vmem:[#allocation2 + $0x108] sm:$0xff] %v2614
  %2664 = vst [vmem:[#allocation2 + $0x110] sm:$0xff] %v2615
  %2665 = vst [vmem:[#allocation2 + $0x118] sm:$0xff] %v2616
  %2666 = vst [vmem:[#allocation2 + $0x120] sm:$0xff] %v2617
  %2667 = vst [vmem:[#allocation2 + $0x128] sm:$0xff] %v2618
  %2668 = vst [vmem:[#allocation2 + $0x130] sm:$0xff] %v2619
  %2669 = vst [vmem:[#allocation2 + $0x138] sm:$0xff] %v2620
  %2670 = vst [vmem:[#allocation2 + $0x140] sm:$0xff] %v2621
  %2671 = vst [vmem:[#allocation2 + $0x148] sm:$0xff] %v2622
  %2672 = vst [vmem:[#allocation2 + $0x150] sm:$0xff] %v2623
  %2673 = vst [vmem:[#allocation2 + $0x158] sm:$0xff] %v2624
  %2674 = vst [vmem:[#allocation2 + $0x160] sm:$0xff] %v2625
  %2675 = vst [vmem:[#allocation2 + $0x168] sm:$0xff] %v2626
  %2676 = vst [vmem:[#allocation2 + $0x170] sm:$0xff] %v2627
  %2677 = vst [vmem:[#allocation2 + $0x178] sm:$0xff] %v2628
  %2678 = vst [vmem:[#allocation2 + $0x180] sm:$0xff] %v2629
  // Predicated region
  $region18: #{cnn_fedavg_forward.7} parent=0 // pred_check
    %p2679 = pneg %p15
  $region19: #{cnn_fedavg_forward.7} parent=0 // pred_check_branch
    %2681 = sbr.rel (%p2679) target = $region21
  $region20: #{cnn_fedavg_forward.7} parent=0 // pred_region
    %v2682 = vld [vmem:[#allocation2] sm:$0xff]
    %v2683 = vld [vmem:[#allocation2 + $0x8] sm:$0xff]
    %v2684 = vld [vmem:[#allocation2 + $0x10] sm:$0xff]
    %v2685 = vld [vmem:[#allocation2 + $0x18] sm:$0xff]
    %v2686 = vld [vmem:[#allocation2 + $0x20] sm:$0xff]
    %v2687 = vld [vmem:[#allocation2 + $0x28] sm:$0xff]
    %v2688 = vld [vmem:[#allocation2 + $0x30] sm:$0xff]
    %v2689 = vld [vmem:[#allocation2 + $0x38] sm:$0xff]
    %v2690 = vld [vmem:[#allocation2 + $0x40] sm:$0xff]
    %v2691 = vld [vmem:[#allocation2 + $0x48] sm:$0xff]
    %v2692 = vld [vmem:[#allocation2 + $0x50] sm:$0xff]
    %v2693 = vld [vmem:[#allocation2 + $0x58] sm:$0xff]
    %v2694 = vld [vmem:[#allocation2 + $0x60] sm:$0xff]
    %v2695 = vld [vmem:[#allocation2 + $0x68] sm:$0xff]
    %v2696 = vld [vmem:[#allocation2 + $0x70] sm:$0xff]
    %v2697 = vld [vmem:[#allocation2 + $0x78] sm:$0xff]
    %v2698 = vld [vmem:[#allocation2 + $0x80] sm:$0xff]
    %v2699 = vld [vmem:[#allocation2 + $0x88] sm:$0xff]
    %v2700 = vld [vmem:[#allocation2 + $0x90] sm:$0xff]
    %v2701 = vld [vmem:[#allocation2 + $0x98] sm:$0xff]
    %v2702 = vld [vmem:[#allocation2 + $0xa0] sm:$0xff]
    %v2703 = vld [vmem:[#allocation2 + $0xa8] sm:$0xff]
    %v2704 = vld [vmem:[#allocation2 + $0xb0] sm:$0xff]
    %v2705 = vld [vmem:[#allocation2 + $0xb8] sm:$0xff]
    %v2706 = vld [vmem:[#allocation2 + $0xc0] sm:$0xff]
    %v2707 = vld [vmem:[#allocation2 + $0xc8] sm:$0xff]
    %v2708 = vld [vmem:[#allocation2 + $0xd0] sm:$0xff]
    %v2709 = vld [vmem:[#allocation2 + $0xd8] sm:$0xff]
    %v2710 = vld [vmem:[#allocation2 + $0xe0] sm:$0xff]
    %v2711 = vld [vmem:[#allocation2 + $0xe8] sm:$0xff]
    %v2712 = vld [vmem:[#allocation2 + $0xf0] sm:$0xff]
    %v2713 = vld [vmem:[#allocation2 + $0xf8] sm:$0xff]
    %v2714 = vld [vmem:[#allocation2 + $0x100] sm:$0xff]
    %v2715 = vld [vmem:[#allocation2 + $0x108] sm:$0xff]
    %v2716 = vld [vmem:[#allocation2 + $0x110] sm:$0xff]
    %v2717 = vld [vmem:[#allocation2 + $0x118] sm:$0xff]
    %v2718 = vld [vmem:[#allocation2 + $0x120] sm:$0xff]
    %v2719 = vld [vmem:[#allocation2 + $0x128] sm:$0xff]
    %v2720 = vld [vmem:[#allocation2 + $0x130] sm:$0xff]
    %v2721 = vld [vmem:[#allocation2 + $0x138] sm:$0xff]
    %v2722 = vld [vmem:[#allocation2 + $0x140] sm:$0xff]
    %v2723 = vld [vmem:[#allocation2 + $0x148] sm:$0xff]
    %v2724 = vld [vmem:[#allocation2 + $0x150] sm:$0xff]
    %v2725 = vld [vmem:[#allocation2 + $0x158] sm:$0xff]
    %v2726 = vld [vmem:[#allocation2 + $0x160] sm:$0xff]
    %v2727 = vld [vmem:[#allocation2 + $0x168] sm:$0xff]
    %v2728 = vld [vmem:[#allocation2 + $0x170] sm:$0xff]
    %v2729 = vld [vmem:[#allocation2 + $0x178] sm:$0xff]
    %v2730 = vld [vmem:[#allocation2 + $0x180] sm:$0xff]
    %v2731 = vld [vmem:[%s2] sm:$0x1]
    %v2733 = vlaneseq
    %v2734 = vshrl.u32 %v2733, 7
    %v2735 = vsub.s32 0, %v2734
    %v2736 = vrot.slane %v2731, %v2735
    %v2738 = vadd.f32 %v2682, %v2736
    %v2739 = vadd.f32 %v2683, %v2736
    %v2740 = vadd.f32 %v2684, %v2736
    %v2741 = vadd.f32 %v2685, %v2736
    %v2742 = vadd.f32 %v2686, %v2736
    %v2743 = vadd.f32 %v2687, %v2736
    %v2744 = vadd.f32 %v2688, %v2736
    %v2745 = vadd.f32 %v2689, %v2736
    %v2746 = vadd.f32 %v2690, %v2736
    %v2747 = vadd.f32 %v2691, %v2736
    %v2748 = vadd.f32 %v2692, %v2736
    %v2749 = vadd.f32 %v2693, %v2736
    %v2750 = vadd.f32 %v2694, %v2736
    %v2751 = vadd.f32 %v2695, %v2736
    %v2752 = vadd.f32 %v2696, %v2736
    %v2753 = vadd.f32 %v2697, %v2736
    %v2754 = vadd.f32 %v2698, %v2736
    %v2755 = vadd.f32 %v2699, %v2736
    %v2756 = vadd.f32 %v2700, %v2736
    %v2757 = vadd.f32 %v2701, %v2736
    %v2758 = vadd.f32 %v2702, %v2736
    %v2759 = vadd.f32 %v2703, %v2736
    %v2760 = vadd.f32 %v2704, %v2736
    %v2761 = vadd.f32 %v2705, %v2736
    %v2762 = vadd.f32 %v2706, %v2736
    %v2763 = vadd.f32 %v2707, %v2736
    %v2764 = vadd.f32 %v2708, %v2736
    %v2765 = vadd.f32 %v2709, %v2736
    %v2766 = vadd.f32 %v2710, %v2736
    %v2767 = vadd.f32 %v2711, %v2736
    %v2768 = vadd.f32 %v2712, %v2736
    %v2769 = vadd.f32 %v2713, %v2736
    %v2770 = vadd.f32 %v2714, %v2736
    %v2771 = vadd.f32 %v2715, %v2736
    %v2772 = vadd.f32 %v2716, %v2736
    %v2773 = vadd.f32 %v2717, %v2736
    %v2774 = vadd.f32 %v2718, %v2736
    %v2775 = vadd.f32 %v2719, %v2736
    %v2776 = vadd.f32 %v2720, %v2736
    %v2777 = vadd.f32 %v2721, %v2736
    %v2778 = vadd.f32 %v2722, %v2736
    %v2779 = vadd.f32 %v2723, %v2736
    %v2780 = vadd.f32 %v2724, %v2736
    %v2781 = vadd.f32 %v2725, %v2736
    %v2782 = vadd.f32 %v2726, %v2736
    %v2783 = vadd.f32 %v2727, %v2736
    %v2784 = vadd.f32 %v2728, %v2736
    %v2785 = vadd.f32 %v2729, %v2736
    %v2786 = vadd.f32 %v2730, %v2736
    %v2787 = vmax.f32 %v2738, 0.0
    %v2788 = vmax.f32 %v2739, 0.0
    %v2789 = vmax.f32 %v2740, 0.0
    %v2790 = vmax.f32 %v2741, 0.0
    %v2791 = vmax.f32 %v2742, 0.0
    %v2792 = vmax.f32 %v2743, 0.0
    %v2793 = vmax.f32 %v2744, 0.0
    %v2794 = vmax.f32 %v2745, 0.0
    %v2795 = vmax.f32 %v2746, 0.0
    %v2796 = vmax.f32 %v2747, 0.0
    %v2797 = vmax.f32 %v2748, 0.0
    %v2798 = vmax.f32 %v2749, 0.0
    %v2799 = vmax.f32 %v2750, 0.0
    %v2800 = vmax.f32 %v2751, 0.0
    %v2801 = vmax.f32 %v2752, 0.0
    %v2802 = vmax.f32 %v2753, 0.0
    %v2803 = vmax.f32 %v2754, 0.0
    %v2804 = vmax.f32 %v2755, 0.0
    %v2805 = vmax.f32 %v2756, 0.0
    %v2806 = vmax.f32 %v2757, 0.0
    %v2807 = vmax.f32 %v2758, 0.0
    %v2808 = vmax.f32 %v2759, 0.0
    %v2809 = vmax.f32 %v2760, 0.0
    %v2810 = vmax.f32 %v2761, 0.0
    %v2811 = vmax.f32 %v2762, 0.0
    %v2812 = vmax.f32 %v2763, 0.0
    %v2813 = vmax.f32 %v2764, 0.0
    %v2814 = vmax.f32 %v2765, 0.0
    %v2815 = vmax.f32 %v2766, 0.0
    %v2816 = vmax.f32 %v2767, 0.0
    %v2817 = vmax.f32 %v2768, 0.0
    %v2818 = vmax.f32 %v2769, 0.0
    %v2819 = vmax.f32 %v2770, 0.0
    %v2820 = vmax.f32 %v2771, 0.0
    %v2821 = vmax.f32 %v2772, 0.0
    %v2822 = vmax.f32 %v2773, 0.0
    %v2823 = vmax.f32 %v2774, 0.0
    %v2824 = vmax.f32 %v2775, 0.0
    %v2825 = vmax.f32 %v2776, 0.0
    %v2826 = vmax.f32 %v2777, 0.0
    %v2827 = vmax.f32 %v2778, 0.0
    %v2828 = vmax.f32 %v2779, 0.0
    %v2829 = vmax.f32 %v2780, 0.0
    %v2830 = vmax.f32 %v2781, 0.0
    %v2831 = vmax.f32 %v2782, 0.0
    %v2832 = vmax.f32 %v2783, 0.0
    %v2833 = vmax.f32 %v2784, 0.0
    %v2834 = vmax.f32 %v2785, 0.0
    %v2835 = vmax.f32 %v2786, 0.0
    %v2836 = vpack.c.bf16 %v2788, %v2787
    %v2837 = vpack.c.bf16 %v2790, %v2789
    %v2838 = vpack.c.bf16 %v2792, %v2791
    %v2839 = vpack.c.bf16 %v2794, %v2793
    %v2840 = vpack.c.bf16 %v2796, %v2795
    %v2841 = vpack.c.bf16 %v2798, %v2797
    %v2842 = vpack.c.bf16 %v2800, %v2799
    %v2843 = vpack.c.bf16 %v2802, %v2801
    %v2844 = vpack.c.bf16 %v2804, %v2803
    %v2845 = vpack.c.bf16 %v2806, %v2805
    %v2846 = vpack.c.bf16 %v2808, %v2807
    %v2847 = vpack.c.bf16 %v2810, %v2809
    %v2848 = vpack.c.bf16 %v2812, %v2811
    %v2849 = vpack.c.bf16 %v2814, %v2813
    %v2850 = vpack.c.bf16 %v2816, %v2815
    %v2851 = vpack.c.bf16 %v2818, %v2817
    %v2852 = vpack.c.bf16 %v2820, %v2819
    %v2853 = vpack.c.bf16 %v2822, %v2821
    %v2854 = vpack.c.bf16 %v2824, %v2823
    %v2855 = vpack.c.bf16 %v2826, %v2825
    %v2856 = vpack.c.bf16 %v2828, %v2827
    %v2857 = vpack.c.bf16 %v2830, %v2829
    %v2858 = vpack.c.bf16 %v2832, %v2831
    %v2859 = vpack.c.bf16 %v2834, %v2833
    %v2860 = vpack.c.bf16 %v2835, %v2835
    %v2886 = vunpack.c.l.b16 %v2836
    %v2887 = vunpack.c.h.b16 %v2836
    %v2888 = vunpack.c.l.b16 %v2837
    %v2889 = vunpack.c.h.b16 %v2837
    %v2890 = vunpack.c.l.b16 %v2838
    %v2891 = vunpack.c.h.b16 %v2838
    %v2892 = vunpack.c.l.b16 %v2839
    %v2893 = vunpack.c.h.b16 %v2839
    %v2894 = vunpack.c.l.b16 %v2840
    %v2895 = vunpack.c.h.b16 %v2840
    %v2896 = vunpack.c.l.b16 %v2841
    %v2897 = vunpack.c.h.b16 %v2841
    %v2898 = vunpack.c.l.b16 %v2842
    %v2899 = vunpack.c.h.b16 %v2842
    %v2900 = vunpack.c.l.b16 %v2843
    %v2901 = vunpack.c.h.b16 %v2843
    %v2902 = vunpack.c.l.b16 %v2844
    %v2903 = vunpack.c.h.b16 %v2844
    %v2904 = vunpack.c.l.b16 %v2845
    %v2905 = vunpack.c.h.b16 %v2845
    %v2906 = vunpack.c.l.b16 %v2846
    %v2907 = vunpack.c.h.b16 %v2846
    %v2908 = vunpack.c.l.b16 %v2847
    %v2909 = vunpack.c.h.b16 %v2847
    %v2910 = vunpack.c.l.b16 %v2848
    %v2911 = vunpack.c.h.b16 %v2848
    %v2912 = vunpack.c.l.b16 %v2849
    %v2913 = vunpack.c.h.b16 %v2849
    %v2914 = vunpack.c.l.b16 %v2850
    %v2915 = vunpack.c.h.b16 %v2850
    %v2916 = vunpack.c.l.b16 %v2851
    %v2917 = vunpack.c.h.b16 %v2851
    %v2918 = vunpack.c.l.b16 %v2852
    %v2919 = vunpack.c.h.b16 %v2852
    %v2920 = vunpack.c.l.b16 %v2853
    %v2921 = vunpack.c.h.b16 %v2853
    %v2922 = vunpack.c.l.b16 %v2854
    %v2923 = vunpack.c.h.b16 %v2854
    %v2924 = vunpack.c.l.b16 %v2855
    %v2925 = vunpack.c.h.b16 %v2855
    %v2926 = vunpack.c.l.b16 %v2856
    %v2927 = vunpack.c.h.b16 %v2856
    %v2928 = vunpack.c.l.b16 %v2857
    %v2929 = vunpack.c.h.b16 %v2857
    %v2930 = vunpack.c.l.b16 %v2858
    %v2931 = vunpack.c.h.b16 %v2858
    %v2932 = vunpack.c.l.b16 %v2859
    %v2933 = vunpack.c.h.b16 %v2859
    %v2934 = vunpack.c.l.b16 %v2860
    %v2935 = vpack.c.b16 %v2886, %v2886
    %v2936 = vpack.c.b16 %v2887, %v2887
    %v2937 = vpack.c.b16 %v2888, %v2888
    %v2938 = vpack.c.b16 %v2889, %v2889
    %v2939 = vpack.c.b16 %v2890, %v2890
    %v2940 = vpack.c.b16 %v2891, %v2891
    %v2941 = vpack.c.b16 %v2892, %v2892
    %v2942 = vpack.c.b16 %v2893, %v2893
    %v2943 = vpack.c.b16 %v2894, %v2894
    %v2944 = vpack.c.b16 %v2895, %v2895
    %v2945 = vpack.c.b16 %v2896, %v2896
    %v2946 = vpack.c.b16 %v2897, %v2897
    %v2947 = vpack.c.b16 %v2898, %v2898
    %v2948 = vpack.c.b16 %v2899, %v2899
    %v2949 = vpack.c.b16 %v2900, %v2900
    %v2950 = vpack.c.b16 %v2901, %v2901
    %v2951 = vpack.c.b16 %v2902, %v2902
    %v2952 = vpack.c.b16 %v2903, %v2903
    %v2953 = vpack.c.b16 %v2904, %v2904
    %v2954 = vpack.c.b16 %v2905, %v2905
    %v2955 = vpack.c.b16 %v2906, %v2906
    %v2956 = vpack.c.b16 %v2907, %v2907
    %v2957 = vpack.c.b16 %v2908, %v2908
    %v2958 = vpack.c.b16 %v2909, %v2909
    %v2959 = vpack.c.b16 %v2910, %v2910
    %v2960 = vpack.c.b16 %v2911, %v2911
    %v2961 = vpack.c.b16 %v2912, %v2912
    %v2962 = vpack.c.b16 %v2913, %v2913
    %v2963 = vpack.c.b16 %v2914, %v2914
    %v2964 = vpack.c.b16 %v2915, %v2915
    %v2965 = vpack.c.b16 %v2916, %v2916
    %v2966 = vpack.c.b16 %v2917, %v2917
    %v2967 = vpack.c.b16 %v2918, %v2918
    %v2968 = vpack.c.b16 %v2919, %v2919
    %v2969 = vpack.c.b16 %v2920, %v2920
    %v2970 = vpack.c.b16 %v2921, %v2921
    %v2971 = vpack.c.b16 %v2922, %v2922
    %v2972 = vpack.c.b16 %v2923, %v2923
    %v2973 = vpack.c.b16 %v2924, %v2924
    %v2974 = vpack.c.b16 %v2925, %v2925
    %v2975 = vpack.c.b16 %v2926, %v2926
    %v2976 = vpack.c.b16 %v2927, %v2927
    %v2977 = vpack.c.b16 %v2928, %v2928
    %v2978 = vpack.c.b16 %v2929, %v2929
    %v2979 = vpack.c.b16 %v2930, %v2930
    %v2980 = vpack.c.b16 %v2931, %v2931
    %v2981 = vpack.c.b16 %v2932, %v2932
    %v2982 = vpack.c.b16 %v2933, %v2933
    %v2983 = vpack.c.b16 %v2934, %v2934
    %3033 = vst [vmem:[%s3] sm:$0xf] %v2935
    %3034 = vst [vmem:[%s3 + $0x4] sm:$0xf] %v2936
    %3035 = vst [vmem:[%s3 + $0x8] sm:$0xf] %v2937
    %3036 = vst [vmem:[%s3 + $0xc] sm:$0xf] %v2938
    %3037 = vst [vmem:[%s3 + $0x10] sm:$0xf] %v2939
    %3038 = vst [vmem:[%s3 + $0x14] sm:$0xf] %v2940
    %3039 = vst [vmem:[%s3 + $0x18] sm:$0xf] %v2941
    %3040 = vst [vmem:[%s3 + $0x1c] sm:$0xf] %v2942
    %3041 = vst [vmem:[%s3 + $0x20] sm:$0xf] %v2943
    %3042 = vst [vmem:[%s3 + $0x24] sm:$0xf] %v2944
    %3043 = vst [vmem:[%s3 + $0x28] sm:$0xf] %v2945
    %3044 = vst [vmem:[%s3 + $0x2c] sm:$0xf] %v2946
    %3045 = vst [vmem:[%s3 + $0x30] sm:$0xf] %v2947
    %3046 = vst [vmem:[%s3 + $0x34] sm:$0xf] %v2948
    %3047 = vst [vmem:[%s3 + $0x38] sm:$0xf] %v2949
    %3048 = vst [vmem:[%s3 + $0x3c] sm:$0xf] %v2950
    %3049 = vst [vmem:[%s3 + $0x40] sm:$0xf] %v2951
    %3050 = vst [vmem:[%s3 + $0x44] sm:$0xf] %v2952
    %3051 = vst [vmem:[%s3 + $0x48] sm:$0xf] %v2953
    %3052 = vst [vmem:[%s3 + $0x4c] sm:$0xf] %v2954
    %3053 = vst [vmem:[%s3 + $0x50] sm:$0xf] %v2955
    %3054 = vst [vmem:[%s3 + $0x54] sm:$0xf] %v2956
    %3055 = vst [vmem:[%s3 + $0x58] sm:$0xf] %v2957
    %3056 = vst [vmem:[%s3 + $0x5c] sm:$0xf] %v2958
    %3057 = vst [vmem:[%s3 + $0x60] sm:$0xf] %v2959
    %3058 = vst [vmem:[%s3 + $0x64] sm:$0xf] %v2960
    %3059 = vst [vmem:[%s3 + $0x68] sm:$0xf] %v2961
    %3060 = vst [vmem:[%s3 + $0x6c] sm:$0xf] %v2962
    %3061 = vst [vmem:[%s3 + $0x70] sm:$0xf] %v2963
    %3062 = vst [vmem:[%s3 + $0x74] sm:$0xf] %v2964
    %3063 = vst [vmem:[%s3 + $0x78] sm:$0xf] %v2965
    %3064 = vst [vmem:[%s3 + $0x7c] sm:$0xf] %v2966
    %3065 = vst [vmem:[%s3 + $0x80] sm:$0xf] %v2967
    %3066 = vst [vmem:[%s3 + $0x84] sm:$0xf] %v2968
    %3067 = vst [vmem:[%s3 + $0x88] sm:$0xf] %v2969
    %3068 = vst [vmem:[%s3 + $0x8c] sm:$0xf] %v2970
    %3069 = vst [vmem:[%s3 + $0x90] sm:$0xf] %v2971
    %3070 = vst [vmem:[%s3 + $0x94] sm:$0xf] %v2972
    %3071 = vst [vmem:[%s3 + $0x98] sm:$0xf] %v2973
    %3072 = vst [vmem:[%s3 + $0x9c] sm:$0xf] %v2974
    %3073 = vst [vmem:[%s3 + $0xa0] sm:$0xf] %v2975
    %3074 = vst [vmem:[%s3 + $0xa4] sm:$0xf] %v2976
    %3075 = vst [vmem:[%s3 + $0xa8] sm:$0xf] %v2977
    %3076 = vst [vmem:[%s3 + $0xac] sm:$0xf] %v2978
    %3077 = vst [vmem:[%s3 + $0xb0] sm:$0xf] %v2979
    %3078 = vst [vmem:[%s3 + $0xb4] sm:$0xf] %v2980
    %3079 = vst [vmem:[%s3 + $0xb8] sm:$0xf] %v2981
    %3080 = vst [vmem:[%s3 + $0xbc] sm:$0xf] %v2982
    %3081 = vst [vmem:[%s3 + $0xc0] sm:$0xf] %v2983
  $region21: #{cnn_fedavg_forward.7} parent=0 // pred_fallthru
    _
  // Predicated region
  $region22: #{cnn_fedavg_forward.7} parent=0 // pred_check
    _
  $region23: #{cnn_fedavg_forward.7} parent=0 // pred_check_branch
    %3083 = sbr.rel (0) target = $region25
  $region24: #{cnn_fedavg_forward.7} parent=0 // pred_region
    _
  $region25: #{cnn_fedavg_forward.7} parent=0 // pred_fallthru
    _
  // Predicated region
  $region26: #{cnn_fedavg_forward.7} parent=0 // pred_check
    _
  $region27: #{cnn_fedavg_forward.7} parent=0 // pred_check_branch
    %3085 = sbr.rel (0) target = $region29
  $region28: #{cnn_fedavg_forward.7} parent=0 // pred_region
    _
  $region29: #{cnn_fedavg_forward.7} parent=0 // pred_fallthru
    _

// kernel: cnn_fedavg_forward.9
$region0: #{cnn_fedavg_forward.9}
  #allocation0 [shape = 'u32[]', space=smem, size = 0x4, offset = 0x4, fixed_abs, tag = 'smem constant byte address 0x4 - core index']
  #allocation1 [shape = 'u32[144,128]{1,0:T(1,128)}', space=vmem, size = 0x12000, scoped, tag = 'internal scratch']
  #allocation2 [shape = 'f32[8,512]{1,0:T(8,128)}', space=vmem, size = 0x4000, scoped, tag = 'scratch operand']
  %s0 = inlined_call_operand.vmem [shape: bf16[8,3584], index: 0, kind: input, shape index: {}]
  %s1 = inlined_call_operand.vmem [shape: bf16[3584,512], index: 1, kind: input, shape index: {}]
  %s2 = inlined_call_operand.vmem [shape: f32[1,512], index: 2, kind: input, shape index: {}]
  %s3 = inlined_call_operand.vmem [shape: bf16[512,128], index: 3, kind: input, shape index: {}]
  %s4 = inlined_call_operand.vmem [shape: f32[1,128], index: 4, kind: input, shape index: {}]
  %s5 = inlined_call_operand.vmem [shape: f32[8,128], index: 5, kind: output, shape index: {}]
  %s6 = sld [smem:[#allocation0]]
  $region61: #{cnn_fedavg_forward.9} parent=0
    _
  %s8 = ssub.s32 1, %s6
  %s9 = scalar_select 0, %s8, %s6
  loop: start=0, step=1, limit=9
  $region2: #{cnn_fedavg_forward.9} parent=0 // loop_pre_header
    _
  $region3: #{cnn_fedavg_forward.9} parent=0 // loop_header
    %s11 = sphi 0, %s15
    %p12 = scmp.ge.s32.totalorder %s11, 9
    %s21 = sphi 0, %s23
    %s24 = sphi 0, %s21
    %s25 = sphi 0, %s24
    %s41 = sphi 0, %s25
    %s47 = sphi 0, %s49
    %s50 = sphi 0, %s47
    %s51 = sphi 0, %s50
    %s67 = sphi 0, %s51
    %s71 = sphi 0, %s71
    %s73 = sphi 0, %s71
    %s74 = sphi 0, %s73
    %s88 = sphi 0, %s74
    %s92 = sphi 0, %s92
    %s94 = sphi 0, %s92
    %s95 = sphi 0, %s94
    %s109 = sphi 0, %s95
    %s113 = sphi 0, %s113
    %s115 = sphi 0, %s113
    %s116 = sphi 0, %s115
    %s130 = sphi 0, %s116
    %s134 = sphi 0, %s134
    %s136 = sphi 0, %s134
    %s137 = sphi 0, %s136
    %s151 = sphi 0, %s137
  $region4: #{cnn_fedavg_forward.9} parent=0 // loop_header_branch
    %14 = sbr.rel (%p12) target = $region8
  $region5: #{cnn_fedavg_forward.9} parent=0 // loop_body
    %s16 = ssub.s32 %s11, 1
    %s17 = ssub.s32 %s11, 2
    %s18 = sadd.s32 %s11, 1
    %s19 = ssub.s32 %s11, %s18
    %p20 = scmp.eq.s32.totalorder %s19, 0
    %s22 = sadd.s32 %s21, 1
    %s23 = scalar_select %p20, %s21, %s22
    %p26 = pneg %p20
    %p27 = scmp.eq.s32.totalorder %s11, 6
    %p28 = por %p26, %p27
    %p29 = scmp.ne.s32.totalorder %s21, %s24
    %p30 = scmp.eq.s32.totalorder %s11, 0
    %p31 = por %p29, %p30
    %p32 = scmp.ne.s32.totalorder %s21, %s24
    %p33 = scmp.eq.s32.totalorder %s16, 6
    %p34 = por %p32, %p33
    %p35 = scmp.ne.s32.totalorder %s24, %s25
    %p36 = scmp.eq.s32.totalorder %s16, 0
    %p37 = por %p35, %p36
    %p38 = scmp.ne.s32.totalorder %s24, %s25
    %p39 = scmp.eq.s32.totalorder %s17, 6
    %p40 = por %p38, %p39
    %p42 = scmp.ne.s32.totalorder %s25, %s41
    %p43 = scmp.eq.s32.totalorder %s17, 0
    %p44 = por %p42, %p43
    %s45 = ssub.s32 %s11, %s18
    %p46 = scmp.eq.s32.totalorder %s45, 0
    %s48 = sadd.s32 %s47, 1
    %s49 = scalar_select %p46, %s47, %s48
    %p52 = pneg %p46
    %p53 = scmp.eq.s32.totalorder %s11, 6
    %p54 = por %p52, %p53
    %p55 = scmp.ne.s32.totalorder %s47, %s50
    %p56 = scmp.eq.s32.totalorder %s11, 0
    %p57 = por %p55, %p56
    %p58 = scmp.ne.s32.totalorder %s47, %s50
    %p59 = scmp.eq.s32.totalorder %s16, 6
    %p60 = por %p58, %p59
    %p61 = scmp.ne.s32.totalorder %s50, %s51
    %p62 = scmp.eq.s32.totalorder %s16, 0
    %p63 = por %p61, %p62
    %p64 = scmp.ne.s32.totalorder %s50, %s51
    %p65 = scmp.eq.s32.totalorder %s17, 6
    %p66 = por %p64, %p65
    %p68 = scmp.ne.s32.totalorder %s51, %s67
    %p69 = scmp.eq.s32.totalorder %s17, 0
    %p70 = por %p68, %p69
    %s72 = sadd.s32 %s71, 1
    %p75 = scmp.eq.s32.totalorder %s11, 6
    %p76 = scmp.ne.s32.totalorder %s71, %s73
    %p77 = scmp.eq.s32.totalorder %s11, 0
    %p78 = por %p76, %p77
    %p79 = scmp.ne.s32.totalorder %s71, %s73
    %p80 = scmp.eq.s32.totalorder %s16, 6
    %p81 = por %p79, %p80
    %p82 = scmp.ne.s32.totalorder %s73, %s74
    %p83 = scmp.eq.s32.totalorder %s16, 0
    %p84 = por %p82, %p83
    %p85 = scmp.ne.s32.totalorder %s73, %s74
    %p86 = scmp.eq.s32.totalorder %s17, 6
    %p87 = por %p85, %p86
    %p89 = scmp.ne.s32.totalorder %s74, %s88
    %p90 = scmp.eq.s32.totalorder %s17, 0
    %p91 = por %p89, %p90
    %s93 = sadd.s32 %s92, 1
    %p96 = scmp.eq.s32.totalorder %s11, 6
    %p97 = scmp.ne.s32.totalorder %s92, %s94
    %p98 = scmp.eq.s32.totalorder %s11, 0
    %p99 = por %p97, %p98
    %p100 = scmp.ne.s32.totalorder %s92, %s94
    %p101 = scmp.eq.s32.totalorder %s16, 6
    %p102 = por %p100, %p101
    %p103 = scmp.ne.s32.totalorder %s94, %s95
    %p104 = scmp.eq.s32.totalorder %s16, 0
    %p105 = por %p103, %p104
    %p106 = scmp.ne.s32.totalorder %s94, %s95
    %p107 = scmp.eq.s32.totalorder %s17, 6
    %p108 = por %p106, %p107
    %p110 = scmp.ne.s32.totalorder %s95, %s109
    %p111 = scmp.eq.s32.totalorder %s17, 0
    %p112 = por %p110, %p111
    %s114 = sadd.s32 %s113, 1
    %p117 = scmp.eq.s32.totalorder %s11, 6
    %p118 = scmp.ne.s32.totalorder %s113, %s115
    %p119 = scmp.eq.s32.totalorder %s11, 0
    %p120 = por %p118, %p119
    %p121 = scmp.ne.s32.totalorder %s113, %s115
    %p122 = scmp.eq.s32.totalorder %s16, 6
    %p123 = por %p121, %p122
    %p124 = scmp.ne.s32.totalorder %s115, %s116
    %p125 = scmp.eq.s32.totalorder %s16, 0
    %p126 = por %p124, %p125
    %p127 = scmp.ne.s32.totalorder %s115, %s116
    %p128 = scmp.eq.s32.totalorder %s17, 6
    %p129 = por %p127, %p128
    %p131 = scmp.ne.s32.totalorder %s116, %s130
    %p132 = scmp.eq.s32.totalorder %s17, 0
    %p133 = por %p131, %p132
    %s135 = sadd.s32 %s134, 1
    %p138 = scmp.eq.s32.totalorder %s11, 6
    %p139 = scmp.ne.s32.totalorder %s134, %s136
    %p140 = scmp.eq.s32.totalorder %s11, 0
    %p141 = por %p139, %p140
    %p142 = scmp.ne.s32.totalorder %s134, %s136
    %p143 = scmp.eq.s32.totalorder %s16, 6
    %p144 = por %p142, %p143
    %p145 = scmp.ne.s32.totalorder %s136, %s137
    %p146 = scmp.eq.s32.totalorder %s16, 0
    %p147 = por %p145, %p146
    %p148 = scmp.ne.s32.totalorder %s136, %s137
    %p149 = scmp.eq.s32.totalorder %s17, 6
    %p150 = por %p148, %p149
    %p152 = scmp.ne.s32.totalorder %s137, %s151
    %p153 = scmp.eq.s32.totalorder %s17, 0
    %p154 = por %p152, %p153
    %p155 = scmp.le.s32.totalorder 1, %s11
    %p156 = scmp.lt.s32.totalorder %s11, 8
    %p157 = pnand %p155, %p156
    %p158 = pneg %p157
    // Predicated region
    $region9: #{cnn_fedavg_forward.9} parent=5 // pred_check
      _
    $region10: #{cnn_fedavg_forward.9} parent=5 // pred_check_branch
      %160 = sbr.rel (%p157) target = $region12
    $region11: #{cnn_fedavg_forward.9} parent=5 // pred_region
      %s161 = ssub.s32 %s11, 1
      // Predicated region
      $region13: #{cnn_fedavg_forward.9} parent=11 // pred_check
        %p162 = pneg %p84
      $region14: #{cnn_fedavg_forward.9} parent=11 // pred_check_branch
        %164 = sbr.rel (%p162) target = $region16
      $region15: #{cnn_fedavg_forward.9} parent=11 // pred_region
        _
      $region16: #{cnn_fedavg_forward.9} parent=11 // pred_fallthru
        _
      // Predicated region
      $region17: #{cnn_fedavg_forward.9} parent=11 // pred_check
        %p165 = pneg %p105
      $region18: #{cnn_fedavg_forward.9} parent=11 // pred_check_branch
        %167 = sbr.rel (%p165) target = $region20
      $region19: #{cnn_fedavg_forward.9} parent=11 // pred_region
        _
      $region20: #{cnn_fedavg_forward.9} parent=11 // pred_fallthru
        _
      // Predicated region
      $region21: #{cnn_fedavg_forward.9} parent=11 // pred_check
        %p168 = pneg %p126
      $region22: #{cnn_fedavg_forward.9} parent=11 // pred_check_branch
        %170 = sbr.rel (%p168) target = $region24
      $region23: #{cnn_fedavg_forward.9} parent=11 // pred_region
        _
      $region24: #{cnn_fedavg_forward.9} parent=11 // pred_fallthru
        _
    $region12: #{cnn_fedavg_forward.9} parent=5 // pred_fallthru
      _
    %p171 = scmp.lt.s32.totalorder %s11, 7
    // Predicated region
    $region25: #{cnn_fedavg_forward.9} parent=5 // pred_check
      %p172 = pneg %p171
    $region26: #{cnn_fedavg_forward.9} parent=5 // pred_check_branch
      %174 = sbr.rel (%p172) target = $region28
    $region27: #{cnn_fedavg_forward.9} parent=5 // pred_region
      // Predicated region
      $region29: #{cnn_fedavg_forward.9} parent=27 // pred_check
        %p175 = pneg %p31
      $region30: #{cnn_fedavg_forward.9} parent=27 // pred_check_branch
        %177 = sbr.rel (%p175) target = $region32
      $region31: #{cnn_fedavg_forward.9} parent=27 // pred_region
        %s178 = smul.u32 4, %s11
        %p179 = scmp.lt.s32.totalorder %s178, 27
        %s180 = scalar_select %p179, %s178, 27
        %s181 = smul.addr %s180, 4
        %s182 = scalar_lea.vmem %s0, %s181
        %s183 = smul.u32 4, %s11
      $region32: #{cnn_fedavg_forward.9} parent=27 // pred_fallthru
        _
      // Predicated region
      $region33: #{cnn_fedavg_forward.9} parent=27 // pred_check
        %p184 = pneg %p57
      $region34: #{cnn_fedavg_forward.9} parent=27 // pred_check_branch
        %186 = sbr.rel (%p184) target = $region36
      $region35: #{cnn_fedavg_forward.9} parent=27 // pred_region
        %s187 = smul.u32 64, %s11
        %p188 = scmp.lt.s32.totalorder %s187, 447
        %s189 = scalar_select %p188, %s187, 447
        %s190 = smul.addr %s189, 4
        %s191 = smul.addr %s190, 4
        %s192 = scalar_lea.vmem %s1, %s191
        %s193 = smul.u32 64, %s11
      $region36: #{cnn_fedavg_forward.9} parent=27 // pred_fallthru
        _
    $region28: #{cnn_fedavg_forward.9} parent=5 // pred_fallthru
      _
    %p194 = scmp.le.s32.totalorder 1, %s11
    %p195 = scmp.lt.s32.totalorder %s11, 8
    %p196 = pnand %p194, %p195
    %p197 = pneg %p196
    // Predicated region
    $region37: #{cnn_fedavg_forward.9} parent=5 // pred_check
      _
    $region38: #{cnn_fedavg_forward.9} parent=5 // pred_check_branch
      %199 = sbr.rel (%p196) target = $region40
    $region39: #{cnn_fedavg_forward.9} parent=5 // pred_region
      %s200 = ssub.s32 %s11, 1
      %s201 = smul.u32 4, %s16
      %p202 = scmp.lt.s32.totalorder %s201, 27
      %s203 = scalar_select %p202, %s201, 27
      %s204 = smul.addr %s203, 4
      %s205 = scalar_lea.vmem %s0, %s204
      %p206 = pneg %p37
      %p207 = pneg %p34
      %s208 = smul.u32 64, %s16
      %p209 = scmp.lt.s32.totalorder %s208, 447
      %s210 = scalar_select %p209, %s208, 447
      %s211 = smul.addr %s210, 4
      %s212 = smul.addr %s211, 4
      %s213 = scalar_lea.vmem %s1, %s212
      %p214 = pneg %p63
      %p215 = pneg %p60
      %p216 = pneg %p84
      %p217 = pneg %p81
      %p218 = pneg %p105
      %p219 = pneg %p102
      %p220 = pneg %p126
      %p221 = pneg %p123
      %p222 = pneg %p147
      %p223 = pneg %p144
      %s224 = smul.u32 4, %s16
      %p225 = scmp.lt.s32.totalorder %s224, 27
      %s226 = scalar_select %p225, %s224, 27
      %s227 = smul.addr %s226, 4
      %s228 = scalar_lea.vmem %s0, %s227
      %s229 = smul.u32 4, %s16
      %s230 = smul.u32 64, %s16
      %p231 = scmp.lt.s32.totalorder %s230, 447
      %s232 = scalar_select %p231, %s230, 447
      %s233 = smul.addr %s232, 4
      %s234 = smul.addr %s233, 4
      %s235 = scalar_lea.vmem %s1, %s234
      %s236 = smul.u32 64, %s16
      %p238 = scmp.eq.s32.totalorder %s16, 0
      // Predicated region
      $region41: #{cnn_fedavg_forward.9} parent=39 // pred_check
        %p239 = pneg %p238
      $region42: #{cnn_fedavg_forward.9} parent=39 // pred_check_branch
        %241 = sbr.rel (%p239) target = $region44
      $region43: #{cnn_fedavg_forward.9} parent=39 // pred_region
        %242 = vst [vmem:[#allocation2] sm:$0xff] 0.0
        %243 = vst [vmem:[#allocation2 + $0x8] sm:$0xff] 0.0
        %244 = vst [vmem:[#allocation2 + $0x10] sm:$0xff] 0.0
        %245 = vst [vmem:[#allocation2 + $0x18] sm:$0xff] 0.0
      $region44: #{cnn_fedavg_forward.9} parent=39 // pred_fallthru
        _
      %v246 = vld [vmem:[#allocation2] sm:$0xff]
      %v247 = vld [vmem:[#allocation2 + $0x8] sm:$0xff]
      %v248 = vld [vmem:[#allocation2 + $0x10] sm:$0xff]
      %v249 = vld [vmem:[#allocation2 + $0x18] sm:$0xff]
      %v250 = vld [vmem:[%s228] sm:$0xff]
      %v251 = vld [vmem:[%s228 + $0x8] sm:$0xff]
      %v252 = vld [vmem:[%s235] sm:$0xff]
      %v253 = vld [vmem:[%s235 + $0x8] sm:$0xff]
      %v254 = vld [vmem:[%s235 + $0x10] sm:$0xff]
      %v255 = vld [vmem:[%s235 + $0x18] sm:$0xff]
      %v256 = vld [vmem:[%s235 + $0x20] sm:$0xff]
      %v257 = vld [vmem:[%s235 + $0x28] sm:$0xff]
      %v258 = vld [vmem:[%s235 + $0x30] sm:$0xff]
      %v259 = vld [vmem:[%s235 + $0x38] sm:$0xff]
      %v260 = vld [vmem:[%s235 + $0x40] sm:$0xff]
      %v261 = vld [vmem:[%s235 + $0x48] sm:$0xff]
      %v262 = vld [vmem:[%s235 + $0x50] sm:$0xff]
      %v263 = vld [vmem:[%s235 + $0x58] sm:$0xff]
      %v264 = vld [vmem:[%s235 + $0x60] sm:$0xff]
      %v265 = vld [vmem:[%s235 + $0x68] sm:$0xff]
      %v266 = vld [vmem:[%s235 + $0x70] sm:$0xff]
      %v267 = vld [vmem:[%s235 + $0x78] sm:$0xff]
      %v268 = vld [vmem:[%s235 + $0x80] sm:$0xff]
      %v269 = vld [vmem:[%s235 + $0x88] sm:$0xff]
      %v270 = vld [vmem:[%s235 + $0x90] sm:$0xff]
      %v271 = vld [vmem:[%s235 + $0x98] sm:$0xff]
      %v272 = vld [vmem:[%s235 + $0xa0] sm:$0xff]
      %v273 = vld [vmem:[%s235 + $0xa8] sm:$0xff]
      %v274 = vld [vmem:[%s235 + $0xb0] sm:$0xff]
      %v275 = vld [vmem:[%s235 + $0xb8] sm:$0xff]
      %v276 = vld [vmem:[%s235 + $0xc0] sm:$0xff]
      %v277 = vld [vmem:[%s235 + $0xc8] sm:$0xff]
      %v278 = vld [vmem:[%s235 + $0xd0] sm:$0xff]
      %v279 = vld [vmem:[%s235 + $0xd8] sm:$0xff]
      %v280 = vld [vmem:[%s235 + $0xe0] sm:$0xff]
      %v281 = vld [vmem:[%s235 + $0xe8] sm:$0xff]
      %v282 = vld [vmem:[%s235 + $0xf0] sm:$0xff]
      %v283 = vld [vmem:[%s235 + $0xf8] sm:$0xff]
      %v284 = vld [vmem:[%s235 + $0x100] sm:$0xff]
      %v285 = vld [vmem:[%s235 + $0x108] sm:$0xff]
      %v286 = vld [vmem:[%s235 + $0x110] sm:$0xff]
      %v287 = vld [vmem:[%s235 + $0x118] sm:$0xff]
      %v288 = vld [vmem:[%s235 + $0x120] sm:$0xff]
      %v289 = vld [vmem:[%s235 + $0x128] sm:$0xff]
      %v290 = vld [vmem:[%s235 + $0x130] sm:$0xff]
      %v291 = vld [vmem:[%s235 + $0x138] sm:$0xff]
      %v292 = vld [vmem:[%s235 + $0x140] sm:$0xff]
      %v293 = vld [vmem:[%s235 + $0x148] sm:$0xff]
      %v294 = vld [vmem:[%s235 + $0x150] sm:$0xff]
      %v295 = vld [vmem:[%s235 + $0x158] sm:$0xff]
      %v296 = vld [vmem:[%s235 + $0x160] sm:$0xff]
      %v297 = vld [vmem:[%s235 + $0x168] sm:$0xff]
      %v298 = vld [vmem:[%s235 + $0x170] sm:$0xff]
      %v299 = vld [vmem:[%s235 + $0x178] sm:$0xff]
      %v300 = vld [vmem:[%s235 + $0x180] sm:$0xff]
      %v301 = vld [vmem:[%s235 + $0x188] sm:$0xff]
      %v302 = vld [vmem:[%s235 + $0x190] sm:$0xff]
      %v303 = vld [vmem:[%s235 + $0x198] sm:$0xff]
      %v304 = vld [vmem:[%s235 + $0x1a0] sm:$0xff]
      %v305 = vld [vmem:[%s235 + $0x1a8] sm:$0xff]
      %v306 = vld [vmem:[%s235 + $0x1b0] sm:$0xff]
      %v307 = vld [vmem:[%s235 + $0x1b8] sm:$0xff]
      %v308 = vld [vmem:[%s235 + $0x1c0] sm:$0xff]
      %v309 = vld [vmem:[%s235 + $0x1c8] sm:$0xff]
      %v310 = vld [vmem:[%s235 + $0x1d0] sm:$0xff]
      %v311 = vld [vmem:[%s235 + $0x1d8] sm:$0xff]
      %v312 = vld [vmem:[%s235 + $0x1e0] sm:$0xff]
      %v313 = vld [vmem:[%s235 + $0x1e8] sm:$0xff]
      %v314 = vld [vmem:[%s235 + $0x1f0] sm:$0xff]
      %v315 = vld [vmem:[%s235 + $0x1f8] sm:$0xff]
      %v316 = vld [vmem:[%s235 + $0x200] sm:$0xff]
      %v317 = vld [vmem:[%s235 + $0x208] sm:$0xff]
      %v318 = vld [vmem:[%s235 + $0x210] sm:$0xff]
      %v319 = vld [vmem:[%s235 + $0x218] sm:$0xff]
      %v320 = vld [vmem:[%s235 + $0x220] sm:$0xff]
      %v321 = vld [vmem:[%s235 + $0x228] sm:$0xff]
      %v322 = vld [vmem:[%s235 + $0x230] sm:$0xff]
      %v323 = vld [vmem:[%s235 + $0x238] sm:$0xff]
      %v324 = vld [vmem:[%s235 + $0x240] sm:$0xff]
      %v325 = vld [vmem:[%s235 + $0x248] sm:$0xff]
      %v326 = vld [vmem:[%s235 + $0x250] sm:$0xff]
      %v327 = vld [vmem:[%s235 + $0x258] sm:$0xff]
      %v328 = vld [vmem:[%s235 + $0x260] sm:$0xff]
      %v329 = vld [vmem:[%s235 + $0x268] sm:$0xff]
      %v330 = vld [vmem:[%s235 + $0x270] sm:$0xff]
      %v331 = vld [vmem:[%s235 + $0x278] sm:$0xff]
      %v332 = vld [vmem:[%s235 + $0x280] sm:$0xff]
      %v333 = vld [vmem:[%s235 + $0x288] sm:$0xff]
      %v334 = vld [vmem:[%s235 + $0x290] sm:$0xff]
      %v335 = vld [vmem:[%s235 + $0x298] sm:$0xff]
      %v336 = vld [vmem:[%s235 + $0x2a0] sm:$0xff]
      %v337 = vld [vmem:[%s235 + $0x2a8] sm:$0xff]
      %v338 = vld [vmem:[%s235 + $0x2b0] sm:$0xff]
      %v339 = vld [vmem:[%s235 + $0x2b8] sm:$0xff]
      %v340 = vld [vmem:[%s235 + $0x2c0] sm:$0xff]
      %v341 = vld [vmem:[%s235 + $0x2c8] sm:$0xff]
      %v342 = vld [vmem:[%s235 + $0x2d0] sm:$0xff]
      %v343 = vld [vmem:[%s235 + $0x2d8] sm:$0xff]
      %v344 = vld [vmem:[%s235 + $0x2e0] sm:$0xff]
      %v345 = vld [vmem:[%s235 + $0x2e8] sm:$0xff]
      %v346 = vld [vmem:[%s235 + $0x2f0] sm:$0xff]
      %v347 = vld [vmem:[%s235 + $0x2f8] sm:$0xff]
      %v348 = vld [vmem:[%s235 + $0x300] sm:$0xff]
      %v349 = vld [vmem:[%s235 + $0x308] sm:$0xff]
      %v350 = vld [vmem:[%s235 + $0x310] sm:$0xff]
      %v351 = vld [vmem:[%s235 + $0x318] sm:$0xff]
      %v352 = vld [vmem:[%s235 + $0x320] sm:$0xff]
      %v353 = vld [vmem:[%s235 + $0x328] sm:$0xff]
      %v354 = vld [vmem:[%s235 + $0x330] sm:$0xff]
      %v355 = vld [vmem:[%s235 + $0x338] sm:$0xff]
      %v356 = vld [vmem:[%s235 + $0x340] sm:$0xff]
      %v357 = vld [vmem:[%s235 + $0x348] sm:$0xff]
      %v358 = vld [vmem:[%s235 + $0x350] sm:$0xff]
      %v359 = vld [vmem:[%s235 + $0x358] sm:$0xff]
      %v360 = vld [vmem:[%s235 + $0x360] sm:$0xff]
      %v361 = vld [vmem:[%s235 + $0x368] sm:$0xff]
      %v362 = vld [vmem:[%s235 + $0x370] sm:$0xff]
      %v363 = vld [vmem:[%s235 + $0x378] sm:$0xff]
      %v364 = vld [vmem:[%s235 + $0x380] sm:$0xff]
      %v365 = vld [vmem:[%s235 + $0x388] sm:$0xff]
      %v366 = vld [vmem:[%s235 + $0x390] sm:$0xff]
      %v367 = vld [vmem:[%s235 + $0x398] sm:$0xff]
      %v368 = vld [vmem:[%s235 + $0x3a0] sm:$0xff]
      %v369 = vld [vmem:[%s235 + $0x3a8] sm:$0xff]
      %v370 = vld [vmem:[%s235 + $0x3b0] sm:$0xff]
      %v371 = vld [vmem:[%s235 + $0x3b8] sm:$0xff]
      %v372 = vld [vmem:[%s235 + $0x3c0] sm:$0xff]
      %v373 = vld [vmem:[%s235 + $0x3c8] sm:$0xff]
      %v374 = vld [vmem:[%s235 + $0x3d0] sm:$0xff]
      %v375 = vld [vmem:[%s235 + $0x3d8] sm:$0xff]
      %v376 = vld [vmem:[%s235 + $0x3e0] sm:$0xff]
      %v377 = vld [vmem:[%s235 + $0x3e8] sm:$0xff]
      %v378 = vld [vmem:[%s235 + $0x3f0] sm:$0xff]
      %v379 = vld [vmem:[%s235 + $0x3f8] sm:$0xff]
      %v382 = vunpack.c.l.b16 %v250
      %v383 = vunpack.c.h.b16 %v250
      %v384 = vunpack.c.l.b16 %v251
      %v385 = vunpack.c.h.b16 %v251
      %v386 = vpack.c.b16 %v382, %v382
      %v387 = vpack.c.b16 %v383, %v383
      %v388 = vpack.c.b16 %v384, %v384
      %v389 = vpack.c.b16 %v385, %v385
      %v522 = vunpack.c.l.b16 %v252
      %v523 = vunpack.c.h.b16 %v252
      %v524 = vunpack.c.l.b16 %v253
      %v525 = vunpack.c.h.b16 %v253
      %v526 = vunpack.c.l.b16 %v254
      %v527 = vunpack.c.h.b16 %v254
      %v528 = vunpack.c.l.b16 %v255
      %v529 = vunpack.c.h.b16 %v255
      %v530 = vunpack.c.l.b16 %v256
      %v531 = vunpack.c.h.b16 %v256
      %v532 = vunpack.c.l.b16 %v257
      %v533 = vunpack.c.h.b16 %v257
      %v534 = vunpack.c.l.b16 %v258
      %v535 = vunpack.c.h.b16 %v258
      %v536 = vunpack.c.l.b16 %v259
      %v537 = vunpack.c.h.b16 %v259
      %v538 = vunpack.c.l.b16 %v260
      %v539 = vunpack.c.h.b16 %v260
      %v540 = vunpack.c.l.b16 %v261
      %v541 = vunpack.c.h.b16 %v261
      %v542 = vunpack.c.l.b16 %v262
      %v543 = vunpack.c.h.b16 %v262
      %v544 = vunpack.c.l.b16 %v263
      %v545 = vunpack.c.h.b16 %v263
      %v546 = vunpack.c.l.b16 %v264
      %v547 = vunpack.c.h.b16 %v264
      %v548 = vunpack.c.l.b16 %v265
      %v549 = vunpack.c.h.b16 %v265
      %v550 = vunpack.c.l.b16 %v266
      %v551 = vunpack.c.h.b16 %v266
      %v552 = vunpack.c.l.b16 %v267
      %v553 = vunpack.c.h.b16 %v267
      %v554 = vunpack.c.l.b16 %v268
      %v555 = vunpack.c.h.b16 %v268
      %v556 = vunpack.c.l.b16 %v269
      %v557 = vunpack.c.h.b16 %v269
      %v558 = vunpack.c.l.b16 %v270
      %v559 = vunpack.c.h.b16 %v270
      %v560 = vunpack.c.l.b16 %v271
      %v561 = vunpack.c.h.b16 %v271
      %v562 = vunpack.c.l.b16 %v272
      %v563 = vunpack.c.h.b16 %v272
      %v564 = vunpack.c.l.b16 %v273
      %v565 = vunpack.c.h.b16 %v273
      %v566 = vunpack.c.l.b16 %v274
      %v567 = vunpack.c.h.b16 %v274
      %v568 = vunpack.c.l.b16 %v275
      %v569 = vunpack.c.h.b16 %v275
      %v570 = vunpack.c.l.b16 %v276
      %v571 = vunpack.c.h.b16 %v276
      %v572 = vunpack.c.l.b16 %v277
      %v573 = vunpack.c.h.b16 %v277
      %v574 = vunpack.c.l.b16 %v278
      %v575 = vunpack.c.h.b16 %v278
      %v576 = vunpack.c.l.b16 %v279
      %v577 = vunpack.c.h.b16 %v279
      %v578 = vunpack.c.l.b16 %v280
      %v579 = vunpack.c.h.b16 %v280
      %v580 = vunpack.c.l.b16 %v281
      %v581 = vunpack.c.h.b16 %v281
      %v582 = vunpack.c.l.b16 %v282
      %v583 = vunpack.c.h.b16 %v282
      %v584 = vunpack.c.l.b16 %v283
      %v585 = vunpack.c.h.b16 %v283
      %v586 = vunpack.c.l.b16 %v284
      %v587 = vunpack.c.h.b16 %v284
      %v588 = vunpack.c.l.b16 %v285
      %v589 = vunpack.c.h.b16 %v285
      %v590 = vunpack.c.l.b16 %v286
      %v591 = vunpack.c.h.b16 %v286
      %v592 = vunpack.c.l.b16 %v287
      %v593 = vunpack.c.h.b16 %v287
      %v594 = vunpack.c.l.b16 %v288
      %v595 = vunpack.c.h.b16 %v288
      %v596 = vunpack.c.l.b16 %v289
      %v597 = vunpack.c.h.b16 %v289
      %v598 = vunpack.c.l.b16 %v290
      %v599 = vunpack.c.h.b16 %v290
      %v600 = vunpack.c.l.b16 %v291
      %v601 = vunpack.c.h.b16 %v291
      %v602 = vunpack.c.l.b16 %v292
      %v603 = vunpack.c.h.b16 %v292
      %v604 = vunpack.c.l.b16 %v293
      %v605 = vunpack.c.h.b16 %v293
      %v606 = vunpack.c.l.b16 %v294
      %v607 = vunpack.c.h.b16 %v294
      %v608 = vunpack.c.l.b16 %v295
      %v609 = vunpack.c.h.b16 %v295
      %v610 = vunpack.c.l.b16 %v296
      %v611 = vunpack.c.h.b16 %v296
      %v612 = vunpack.c.l.b16 %v297
      %v613 = vunpack.c.h.b16 %v297
      %v614 = vunpack.c.l.b16 %v298
      %v615 = vunpack.c.h.b16 %v298
      %v616 = vunpack.c.l.b16 %v299
      %v617 = vunpack.c.h.b16 %v299
      %v618 = vunpack.c.l.b16 %v300
      %v619 = vunpack.c.h.b16 %v300
      %v620 = vunpack.c.l.b16 %v301
      %v621 = vunpack.c.h.b16 %v301
      %v622 = vunpack.c.l.b16 %v302
      %v623 = vunpack.c.h.b16 %v302
      %v624 = vunpack.c.l.b16 %v303
      %v625 = vunpack.c.h.b16 %v303
      %v626 = vunpack.c.l.b16 %v304
      %v627 = vunpack.c.h.b16 %v304
      %v628 = vunpack.c.l.b16 %v305
      %v629 = vunpack.c.h.b16 %v305
      %v630 = vunpack.c.l.b16 %v306
      %v631 = vunpack.c.h.b16 %v306
      %v632 = vunpack.c.l.b16 %v307
      %v633 = vunpack.c.h.b16 %v307
      %v634 = vunpack.c.l.b16 %v308
      %v635 = vunpack.c.h.b16 %v308
      %v636 = vunpack.c.l.b16 %v309
      %v637 = vunpack.c.h.b16 %v309
      %v638 = vunpack.c.l.b16 %v310
      %v639 = vunpack.c.h.b16 %v310
      %v640 = vunpack.c.l.b16 %v311
      %v641 = vunpack.c.h.b16 %v311
      %v642 = vunpack.c.l.b16 %v312
      %v643 = vunpack.c.h.b16 %v312
      %v644 = vunpack.c.l.b16 %v313
      %v645 = vunpack.c.h.b16 %v313
      %v646 = vunpack.c.l.b16 %v314
      %v647 = vunpack.c.h.b16 %v314
      %v648 = vunpack.c.l.b16 %v315
      %v649 = vunpack.c.h.b16 %v315
      %v650 = vunpack.c.l.b16 %v316
      %v651 = vunpack.c.h.b16 %v316
      %v652 = vunpack.c.l.b16 %v317
      %v653 = vunpack.c.h.b16 %v317
      %v654 = vunpack.c.l.b16 %v318
      %v655 = vunpack.c.h.b16 %v318
      %v656 = vunpack.c.l.b16 %v319
      %v657 = vunpack.c.h.b16 %v319
      %v658 = vunpack.c.l.b16 %v320
      %v659 = vunpack.c.h.b16 %v320
      %v660 = vunpack.c.l.b16 %v321
      %v661 = vunpack.c.h.b16 %v321
      %v662 = vunpack.c.l.b16 %v322
      %v663 = vunpack.c.h.b16 %v322
      %v664 = vunpack.c.l.b16 %v323
      %v665 = vunpack.c.h.b16 %v323
      %v666 = vunpack.c.l.b16 %v324
      %v667 = vunpack.c.h.b16 %v324
      %v668 = vunpack.c.l.b16 %v325
      %v669 = vunpack.c.h.b16 %v325
      %v670 = vunpack.c.l.b16 %v326
      %v671 = vunpack.c.h.b16 %v326
      %v672 = vunpack.c.l.b16 %v327
      %v673 = vunpack.c.h.b16 %v327
      %v674 = vunpack.c.l.b16 %v328
      %v675 = vunpack.c.h.b16 %v328
      %v676 = vunpack.c.l.b16 %v329
      %v677 = vunpack.c.h.b16 %v329
      %v678 = vunpack.c.l.b16 %v330
      %v679 = vunpack.c.h.b16 %v330
      %v680 = vunpack.c.l.b16 %v331
      %v681 = vunpack.c.h.b16 %v331
      %v682 = vunpack.c.l.b16 %v332
      %v683 = vunpack.c.h.b16 %v332
      %v684 = vunpack.c.l.b16 %v333
      %v685 = vunpack.c.h.b16 %v333
      %v686 = vunpack.c.l.b16 %v334
      %v687 = vunpack.c.h.b16 %v334
      %v688 = vunpack.c.l.b16 %v335
      %v689 = vunpack.c.h.b16 %v335
      %v690 = vunpack.c.l.b16 %v336
      %v691 = vunpack.c.h.b16 %v336
      %v692 = vunpack.c.l.b16 %v337
      %v693 = vunpack.c.h.b16 %v337
      %v694 = vunpack.c.l.b16 %v338
      %v695 = vunpack.c.h.b16 %v338
      %v696 = vunpack.c.l.b16 %v339
      %v697 = vunpack.c.h.b16 %v339
      %v698 = vunpack.c.l.b16 %v340
      %v699 = vunpack.c.h.b16 %v340
      %v700 = vunpack.c.l.b16 %v341
      %v701 = vunpack.c.h.b16 %v341
      %v702 = vunpack.c.l.b16 %v342
      %v703 = vunpack.c.h.b16 %v342
      %v704 = vunpack.c.l.b16 %v343
      %v705 = vunpack.c.h.b16 %v343
      %v706 = vunpack.c.l.b16 %v344
      %v707 = vunpack.c.h.b16 %v344
      %v708 = vunpack.c.l.b16 %v345
      %v709 = vunpack.c.h.b16 %v345
      %v710 = vunpack.c.l.b16 %v346
      %v711 = vunpack.c.h.b16 %v346
      %v712 = vunpack.c.l.b16 %v347
      %v713 = vunpack.c.h.b16 %v347
      %v714 = vunpack.c.l.b16 %v348
      %v715 = vunpack.c.h.b16 %v348
      %v716 = vunpack.c.l.b16 %v349
      %v717 = vunpack.c.h.b16 %v349
      %v718 = vunpack.c.l.b16 %v350
      %v719 = vunpack.c.h.b16 %v350
      %v720 = vunpack.c.l.b16 %v351
      %v721 = vunpack.c.h.b16 %v351
      %v722 = vunpack.c.l.b16 %v352
      %v723 = vunpack.c.h.b16 %v352
      %v724 = vunpack.c.l.b16 %v353
      %v725 = vunpack.c.h.b16 %v353
      %v726 = vunpack.c.l.b16 %v354
      %v727 = vunpack.c.h.b16 %v354
      %v728 = vunpack.c.l.b16 %v355
      %v729 = vunpack.c.h.b16 %v355
      %v730 = vunpack.c.l.b16 %v356
      %v731 = vunpack.c.h.b16 %v356
      %v732 = vunpack.c.l.b16 %v357
      %v733 = vunpack.c.h.b16 %v357
      %v734 = vunpack.c.l.b16 %v358
      %v735 = vunpack.c.h.b16 %v358
      %v736 = vunpack.c.l.b16 %v359
      %v737 = vunpack.c.h.b16 %v359
      %v738 = vunpack.c.l.b16 %v360
      %v739 = vunpack.c.h.b16 %v360
      %v740 = vunpack.c.l.b16 %v361
      %v741 = vunpack.c.h.b16 %v361
      %v742 = vunpack.c.l.b16 %v362
      %v743 = vunpack.c.h.b16 %v362
      %v744 = vunpack.c.l.b16 %v363
      %v745 = vunpack.c.h.b16 %v363
      %v746 = vunpack.c.l.b16 %v364
      %v747 = vunpack.c.h.b16 %v364
      %v748 = vunpack.c.l.b16 %v365
      %v749 = vunpack.c.h.b16 %v365
      %v750 = vunpack.c.l.b16 %v366
      %v751 = vunpack.c.h.b16 %v366
      %v752 = vunpack.c.l.b16 %v367
      %v753 = vunpack.c.h.b16 %v367
      %v754 = vunpack.c.l.b16 %v368
      %v755 = vunpack.c.h.b16 %v368
      %v756 = vunpack.c.l.b16 %v369
      %v757 = vunpack.c.h.b16 %v369
      %v758 = vunpack.c.l.b16 %v370
      %v759 = vunpack.c.h.b16 %v370
      %v760 = vunpack.c.l.b16 %v371
      %v761 = vunpack.c.h.b16 %v371
      %v762 = vunpack.c.l.b16 %v372
      %v763 = vunpack.c.h.b16 %v372
      %v764 = vunpack.c.l.b16 %v373
      %v765 = vunpack.c.h.b16 %v373
      %v766 = vunpack.c.l.b16 %v374
      %v767 = vunpack.c.h.b16 %v374
      %v768 = vunpack.c.l.b16 %v375
      %v769 = vunpack.c.h.b16 %v375
      %v770 = vunpack.c.l.b16 %v376
      %v771 = vunpack.c.h.b16 %v376
      %v772 = vunpack.c.l.b16 %v377
      %v773 = vunpack.c.h.b16 %v377
      %v774 = vunpack.c.l.b16 %v378
      %v775 = vunpack.c.h.b16 %v378
      %v776 = vunpack.c.l.b16 %v379
      %v777 = vunpack.c.h.b16 %v379
      %v778 = vpack.c.b16 %v526, %v522
      %v779 = vpack.c.b16 %v527, %v523
      %v780 = vpack.c.b16 %v528, %v524
      %v781 = vpack.c.b16 %v529, %v525
      %v782 = vpack.c.b16 %v534, %v530
      %v783 = vpack.c.b16 %v535, %v531
      %v784 = vpack.c.b16 %v536, %v532
      %v785 = vpack.c.b16 %v537, %v533
      %v786 = vpack.c.b16 %v542, %v538
      %v787 = vpack.c.b16 %v543, %v539
      %v788 = vpack.c.b16 %v544, %v540
      %v789 = vpack.c.b16 %v545, %v541
      %v790 = vpack.c.b16 %v550, %v546
      %v791 = vpack.c.b16 %v551, %v547
      %v792 = vpack.c.b16 %v552, %v548
      %v793 = vpack.c.b16 %v553, %v549
      %v794 = vpack.c.b16 %v558, %v554
      %v795 = vpack.c.b16 %v559, %v555
      %v796 = vpack.c.b16 %v560, %v556
      %v797 = vpack.c.b16 %v561, %v557
      %v798 = vpack.c.b16 %v566, %v562
      %v799 = vpack.c.b16 %v567, %v563
      %v800 = vpack.c.b16 %v568, %v564
      %v801 = vpack.c.b16 %v569, %v565
      %v802 = vpack.c.b16 %v574, %v570
      %v803 = vpack.c.b16 %v575, %v571
      %v804 = vpack.c.b16 %v576, %v572
      %v805 = vpack.c.b16 %v577, %v573
      %v806 = vpack.c.b16 %v582, %v578
      %v807 = vpack.c.b16 %v583, %v579
      %v808 = vpack.c.b16 %v584, %v580
      %v809 = vpack.c.b16 %v585, %v581
      %v810 = vpack.c.b16 %v590, %v586
      %v811 = vpack.c.b16 %v591, %v587
      %v812 = vpack.c.b16 %v592, %v588
      %v813 = vpack.c.b16 %v593, %v589
      %v814 = vpack.c.b16 %v598, %v594
      %v815 = vpack.c.b16 %v599, %v595
      %v816 = vpack.c.b16 %v600, %v596
      %v817 = vpack.c.b16 %v601, %v597
      %v818 = vpack.c.b16 %v606, %v602
      %v819 = vpack.c.b16 %v607, %v603
      %v820 = vpack.c.b16 %v608, %v604
      %v821 = vpack.c.b16 %v609, %v605
      %v822 = vpack.c.b16 %v614, %v610
      %v823 = vpack.c.b16 %v615, %v611
      %v824 = vpack.c.b16 %v616, %v612
      %v825 = vpack.c.b16 %v617, %v613
      %v826 = vpack.c.b16 %v622, %v618
      %v827 = vpack.c.b16 %v623, %v619
      %v828 = vpack.c.b16 %v624, %v620
      %v829 = vpack.c.b16 %v625, %v621
      %v830 = vpack.c.b16 %v630, %v626
      %v831 = vpack.c.b16 %v631, %v627
      %v832 = vpack.c.b16 %v632, %v628
      %v833 = vpack.c.b16 %v633, %v629
      %v834 = vpack.c.b16 %v638, %v634
      %v835 = vpack.c.b16 %v639, %v635
      %v836 = vpack.c.b16 %v640, %v636
      %v837 = vpack.c.b16 %v641, %v637
      %v838 = vpack.c.b16 %v646, %v642
      %v839 = vpack.c.b16 %v647, %v643
      %v840 = vpack.c.b16 %v648, %v644
      %v841 = vpack.c.b16 %v649, %v645
      %v842 = vpack.c.b16 %v654, %v650
      %v843 = vpack.c.b16 %v655, %v651
      %v844 = vpack.c.b16 %v656, %v652
      %v845 = vpack.c.b16 %v657, %v653
      %v846 = vpack.c.b16 %v662, %v658
      %v847 = vpack.c.b16 %v663, %v659
      %v848 = vpack.c.b16 %v664, %v660
      %v849 = vpack.c.b16 %v665, %v661
      %v850 = vpack.c.b16 %v670, %v666
      %v851 = vpack.c.b16 %v671, %v667
      %v852 = vpack.c.b16 %v672, %v668
      %v853 = vpack.c.b16 %v673, %v669
      %v854 = vpack.c.b16 %v678, %v674
      %v855 = vpack.c.b16 %v679, %v675
      %v856 = vpack.c.b16 %v680, %v676
      %v857 = vpack.c.b16 %v681, %v677
      %v858 = vpack.c.b16 %v686, %v682
      %v859 = vpack.c.b16 %v687, %v683
      %v860 = vpack.c.b16 %v688, %v684
      %v861 = vpack.c.b16 %v689, %v685
      %v862 = vpack.c.b16 %v694, %v690
      %v863 = vpack.c.b16 %v695, %v691
      %v864 = vpack.c.b16 %v696, %v692
      %v865 = vpack.c.b16 %v697, %v693
      %v866 = vpack.c.b16 %v702, %v698
      %v867 = vpack.c.b16 %v703, %v699
      %v868 = vpack.c.b16 %v704, %v700
      %v869 = vpack.c.b16 %v705, %v701
      %v870 = vpack.c.b16 %v710, %v706
      %v871 = vpack.c.b16 %v711, %v707
      %v872 = vpack.c.b16 %v712, %v708
      %v873 = vpack.c.b16 %v713, %v709
      %v874 = vpack.c.b16 %v718, %v714
      %v875 = vpack.c.b16 %v719, %v715
      %v876 = vpack.c.b16 %v720, %v716
      %v877 = vpack.c.b16 %v721, %v717
      %v878 = vpack.c.b16 %v726, %v722
      %v879 = vpack.c.b16 %v727, %v723
      %v880 = vpack.c.b16 %v728, %v724
      %v881 = vpack.c.b16 %v729, %v725
      %v882 = vpack.c.b16 %v734, %v730
      %v883 = vpack.c.b16 %v735, %v731
      %v884 = vpack.c.b16 %v736, %v732
      %v885 = vpack.c.b16 %v737, %v733
      %v886 = vpack.c.b16 %v742, %v738
      %v887 = vpack.c.b16 %v743, %v739
      %v888 = vpack.c.b16 %v744, %v740
      %v889 = vpack.c.b16 %v745, %v741
      %v890 = vpack.c.b16 %v750, %v746
      %v891 = vpack.c.b16 %v751, %v747
      %v892 = vpack.c.b16 %v752, %v748
      %v893 = vpack.c.b16 %v753, %v749
      %v894 = vpack.c.b16 %v758, %v754
      %v895 = vpack.c.b16 %v759, %v755
      %v896 = vpack.c.b16 %v760, %v756
      %v897 = vpack.c.b16 %v761, %v757
      %v898 = vpack.c.b16 %v766, %v762
      %v899 = vpack.c.b16 %v767, %v763
      %v900 = vpack.c.b16 %v768, %v764
      %v901 = vpack.c.b16 %v769, %v765
      %v902 = vpack.c.b16 %v774, %v770
      %v903 = vpack.c.b16 %v775, %v771
      %v904 = vpack.c.b16 %v776, %v772
      %v905 = vpack.c.b16 %v777, %v773
      %1034 = vmatprep.subr.bf16.mxu0 %v779
      %1035 = vmatpush1.bf16.msra.mxu0 %v778
      %1036 = vmatprep.subr.bf16.mxu0 %v783
      %1037 = vmatpush1.bf16.msra.mxu0 %v782
      %1038 = vmatprep.subr.bf16.mxu0 %v787
      %1039 = vmatpush1.bf16.msra.mxu0 %v786
      %1040 = vmatprep.subr.bf16.mxu0 %v791
      %1041 = vmatpush1.bf16.msra.mxu0 %v790
      %1042 = vmatprep.subr.bf16.mxu0 %v795
      %1043 = vmatpush1.bf16.msra.mxu0 %v794
      %1044 = vmatprep.subr.bf16.mxu0 %v799
      %1045 = vmatpush1.bf16.msra.mxu0 %v798
      %1046 = vmatprep.subr.bf16.mxu0 %v803
      %1047 = vmatpush1.bf16.msra.mxu0 %v802
      %1048 = vmatprep.subr.bf16.mxu0 %v807
      %1049 = vmatpush1.bf16.msra.mxu0 %v806
      %1050 = vmatprep.subr.bf16.mxu0 %v811
      %1051 = vmatpush1.bf16.msra.mxu0 %v810
      %1052 = vmatprep.subr.bf16.mxu0 %v815
      %1053 = vmatpush1.bf16.msra.mxu0 %v814
      %1054 = vmatprep.subr.bf16.mxu0 %v819
      %1055 = vmatpush1.bf16.msra.mxu0 %v818
      %1056 = vmatprep.subr.bf16.mxu0 %v823
      %1057 = vmatpush1.bf16.msra.mxu0 %v822
      %1058 = vmatprep.subr.bf16.mxu0 %v827
      %1059 = vmatpush1.bf16.msra.mxu0 %v826
      %1060 = vmatprep.subr.bf16.mxu0 %v831
      %1061 = vmatpush1.bf16.msra.mxu0 %v830
      %1062 = vmatprep.subr.bf16.mxu0 %v835
      %1063 = vmatpush1.bf16.msra.mxu0 %v834
      %1064 = vmatprep.subr.bf16.mxu0 %v839
      %1065 = vmatpush1.bf16.msra.mxu0 %v838
      %1066 = vmatprep.mubr.bf16.mxu0 %v387
      %1067 = vmatmul.mubr.bf16.gmra.mrb[0].mxu0 %v386
      %v1068 = vpop.f32.mrb[0].mxu0
      %v1069 = vadd.f32 0.0, %v1068
      %v1070 = vpop.f32.mrb[0].mxu0
      %v1071 = vadd.f32 0.0, %v1070
      %v1072 = vpop.f32.mrb[0].mxu0
      %v1073 = vpop.f32.mrb[0].mxu0
      %1074 = vdwg.mxu0
      %1075 = vmatprep.subr.bf16.mxu0 %v843
      %1076 = vmatpush1.bf16.msra.mxu0 %v842
      %1077 = vmatprep.subr.bf16.mxu0 %v847
      %1078 = vmatpush1.bf16.msra.mxu0 %v846
      %1079 = vmatprep.subr.bf16.mxu0 %v851
      %1080 = vmatpush1.bf16.msra.mxu0 %v850
      %1081 = vmatprep.subr.bf16.mxu0 %v855
      %1082 = vmatpush1.bf16.msra.mxu0 %v854
      %1083 = vmatprep.subr.bf16.mxu0 %v859
      %1084 = vmatpush1.bf16.msra.mxu0 %v858
      %1085 = vmatprep.subr.bf16.mxu0 %v863
      %1086 = vmatpush1.bf16.msra.mxu0 %v862
      %1087 = vmatprep.subr.bf16.mxu0 %v867
      %1088 = vmatpush1.bf16.msra.mxu0 %v866
      %1089 = vmatprep.subr.bf16.mxu0 %v871
      %1090 = vmatpush1.bf16.msra.mxu0 %v870
      %1091 = vmatprep.subr.bf16.mxu0 %v875
      %1092 = vmatpush1.bf16.msra.mxu0 %v874
      %1093 = vmatprep.subr.bf16.mxu0 %v879
      %1094 = vmatpush1.bf16.msra.mxu0 %v878
      %1095 = vmatprep.subr.bf16.mxu0 %v883
      %1096 = vmatpush1.bf16.msra.mxu0 %v882
      %1097 = vmatprep.subr.bf16.mxu0 %v887
      %1098 = vmatpush1.bf16.msra.mxu0 %v886
      %1099 = vmatprep.subr.bf16.mxu0 %v891
      %1100 = vmatpush1.bf16.msra.mxu0 %v890
      %1101 = vmatprep.subr.bf16.mxu0 %v895
      %1102 = vmatpush1.bf16.msra.mxu0 %v894
      %1103 = vmatprep.subr.bf16.mxu0 %v899
      %1104 = vmatpush1.bf16.msra.mxu0 %v898
      %1105 = vmatprep.subr.bf16.mxu0 %v903
      %1106 = vmatpush1.bf16.msra.mxu0 %v902
      %1107 = vmatprep.mubr.bf16.mxu0 %v389
      %1108 = vmatmul.mubr.bf16.gmra.mrb[0].mxu0 %v388
      %v1109 = vpop.f32.mrb[0].mxu0
      %v1110 = vadd.f32 %v1069, %v1109
      %v1111 = vpop.f32.mrb[0].mxu0
      %v1112 = vadd.f32 %v1071, %v1111
      %v1113 = vpop.f32.mrb[0].mxu0
      %v1114 = vpop.f32.mrb[0].mxu0
      %1115 = vdwg.mxu0
      %1116 = vmatprep.subr.bf16.mxu0 %v781
      %1117 = vmatpush1.bf16.msra.mxu0 %v780
      %1118 = vmatprep.subr.bf16.mxu0 %v785
      %1119 = vmatpush1.bf16.msra.mxu0 %v784
      %1120 = vmatprep.subr.bf16.mxu0 %v789
      %1121 = vmatpush1.bf16.msra.mxu0 %v788
      %1122 = vmatprep.subr.bf16.mxu0 %v793
      %1123 = vmatpush1.bf16.msra.mxu0 %v792
      %1124 = vmatprep.subr.bf16.mxu0 %v797
      %1125 = vmatpush1.bf16.msra.mxu0 %v796
      %1126 = vmatprep.subr.bf16.mxu0 %v801
      %1127 = vmatpush1.bf16.msra.mxu0 %v800
      %1128 = vmatprep.subr.bf16.mxu0 %v805
      %1129 = vmatpush1.bf16.msra.mxu0 %v804
      %1130 = vmatprep.subr.bf16.mxu0 %v809
      %1131 = vmatpush1.bf16.msra.mxu0 %v808
      %1132 = vmatprep.subr.bf16.mxu0 %v813
      %1133 = vmatpush1.bf16.msra.mxu0 %v812
      %1134 = vmatprep.subr.bf16.mxu0 %v817
      %1135 = vmatpush1.bf16.msra.mxu0 %v816
      %1136 = vmatprep.subr.bf16.mxu0 %v821
      %1137 = vmatpush1.bf16.msra.mxu0 %v820
      %1138 = vmatprep.subr.bf16.mxu0 %v825
      %1139 = vmatpush1.bf16.msra.mxu0 %v824
      %1140 = vmatprep.subr.bf16.mxu0 %v829
      %1141 = vmatpush1.bf16.msra.mxu0 %v828
      %1142 = vmatprep.subr.bf16.mxu0 %v833
      %1143 = vmatpush1.bf16.msra.mxu0 %v832
      %1144 = vmatprep.subr.bf16.mxu0 %v837
      %1145 = vmatpush1.bf16.msra.mxu0 %v836
      %1146 = vmatprep.subr.bf16.mxu0 %v841
      %1147 = vmatpush1.bf16.msra.mxu0 %v840
      %1148 = vmatprep.mubr.bf16.mxu0 %v387
      %1149 = vmatmul.mubr.bf16.gmra.mrb[0].mxu0 %v386
      %v1150 = vpop.f32.mrb[0].mxu0
      %v1151 = vadd.f32 0.0, %v1150
      %v1152 = vpop.f32.mrb[0].mxu0
      %v1153 = vadd.f32 0.0, %v1152
      %v1154 = vpop.f32.mrb[0].mxu0
      %v1155 = vpop.f32.mrb[0].mxu0
      %1156 = vdwg.mxu0
      %1157 = vmatprep.subr.bf16.mxu0 %v845
      %1158 = vmatpush1.bf16.msra.mxu0 %v844
      %1159 = vmatprep.subr.bf16.mxu0 %v849
      %1160 = vmatpush1.bf16.msra.mxu0 %v848
      %1161 = vmatprep.subr.bf16.mxu0 %v853
      %1162 = vmatpush1.bf16.msra.mxu0 %v852
      %1163 = vmatprep.subr.bf16.mxu0 %v857
      %1164 = vmatpush1.bf16.msra.mxu0 %v856
      %1165 = vmatprep.subr.bf16.mxu0 %v861
      %1166 = vmatpush1.bf16.msra.mxu0 %v860
      %1167 = vmatprep.subr.bf16.mxu0 %v865
      %1168 = vmatpush1.bf16.msra.mxu0 %v864
      %1169 = vmatprep.subr.bf16.mxu0 %v869
      %1170 = vmatpush1.bf16.msra.mxu0 %v868
      %1171 = vmatprep.subr.bf16.mxu0 %v873
      %1172 = vmatpush1.bf16.msra.mxu0 %v872
      %1173 = vmatprep.subr.bf16.mxu0 %v877
      %1174 = vmatpush1.bf16.msra.mxu0 %v876
      %1175 = vmatprep.subr.bf16.mxu0 %v881
      %1176 = vmatpush1.bf16.msra.mxu0 %v880
      %1177 = vmatprep.subr.bf16.mxu0 %v885
      %1178 = vmatpush1.bf16.msra.mxu0 %v884
      %1179 = vmatprep.subr.bf16.mxu0 %v889
      %1180 = vmatpush1.bf16.msra.mxu0 %v888
      %1181 = vmatprep.subr.bf16.mxu0 %v893
      %1182 = vmatpush1.bf16.msra.mxu0 %v892
      %1183 = vmatprep.subr.bf16.mxu0 %v897
      %1184 = vmatpush1.bf16.msra.mxu0 %v896
      %1185 = vmatprep.subr.bf16.mxu0 %v901
      %1186 = vmatpush1.bf16.msra.mxu0 %v900
      %1187 = vmatprep.subr.bf16.mxu0 %v905
      %1188 = vmatpush1.bf16.msra.mxu0 %v904
      %1189 = vmatprep.mubr.bf16.mxu0 %v389
      %1190 = vmatmul.mubr.bf16.gmra.mrb[0].mxu0 %v388
      %v1191 = vpop.f32.mrb[0].mxu0
      %v1192 = vadd.f32 %v1151, %v1191
      %v1193 = vpop.f32.mrb[0].mxu0
      %v1194 = vadd.f32 %v1153, %v1193
      %v1195 = vpop.f32.mrb[0].mxu0
      %v1196 = vpop.f32.mrb[0].mxu0
      %1197 = vdwg.mxu0
      %v1198 = vadd.f32 %v246, %v1110
      %v1199 = vadd.f32 %v247, %v1112
      %v1200 = vadd.f32 %v248, %v1192
      %v1201 = vadd.f32 %v249, %v1194
      %1202 = vst [vmem:[#allocation2] sm:$0xff] %v1198
      %1203 = vst [vmem:[#allocation2 + $0x8] sm:$0xff] %v1199
      %1204 = vst [vmem:[#allocation2 + $0x10] sm:$0xff] %v1200
      %1205 = vst [vmem:[#allocation2 + $0x18] sm:$0xff] %v1201
      %p1206 = scmp.eq.s32.totalorder %s16, 6
      // Predicated region
      $region45: #{cnn_fedavg_forward.9} parent=39 // pred_check
        %p1207 = pneg %p1206
      $region46: #{cnn_fedavg_forward.9} parent=39 // pred_check_branch
        %1209 = sbr.rel (%p1207) target = $region48
      $region47: #{cnn_fedavg_forward.9} parent=39 // pred_region
        %v1210 = vld [vmem:[#allocation2] sm:$0xff]
        %v1211 = vld [vmem:[#allocation2 + $0x8] sm:$0xff]
        %v1212 = vld [vmem:[#allocation2 + $0x10] sm:$0xff]
        %v1213 = vld [vmem:[#allocation2 + $0x18] sm:$0xff]
        %v1214 = vld [vmem:[%s2] sm:$0xf]
        %v1216 = vlaneseq
        %v1217 = vshrl.u32 %v1216, 7
        %v1218 = vsub.s32 0, %v1217
        %v1219 = vrot.slane %v1214, %v1218
        %v1220 = vlaneseq
        %v1221 = vshrl.u32 %v1220, 7
        %v1222 = vsub.s32 1, %v1221
        %v1223 = vrot.slane %v1214, %v1222
        %v1224 = vlaneseq
        %v1225 = vshrl.u32 %v1224, 7
        %v1226 = vsub.s32 2, %v1225
        %v1227 = vrot.slane %v1214, %v1226
        %v1228 = vlaneseq
        %v1229 = vshrl.u32 %v1228, 7
        %v1230 = vsub.s32 3, %v1229
        %v1231 = vrot.slane %v1214, %v1230
        %v1236 = vadd.f32 %v1210, %v1219
        %v1237 = vadd.f32 %v1211, %v1223
        %v1238 = vadd.f32 %v1212, %v1227
        %v1239 = vadd.f32 %v1213, %v1231
        %v1240 = vmax.f32 %v1236, 0.0
        %v1241 = vmax.f32 %v1237, 0.0
        %v1242 = vmax.f32 %v1238, 0.0
        %v1243 = vmax.f32 %v1239, 0.0
        %v1244 = vpack.c.bf16 %v1240, %v1240
        %v1245 = vpack.c.bf16 %v1241, %v1241
        %v1246 = vpack.c.bf16 %v1242, %v1242
        %v1247 = vpack.c.bf16 %v1243, %v1243
        %v1248 = vld [vmem:[%s3] sm:$0xf]
        %v1249 = vld [vmem:[%s3 + $0x4] sm:$0xf]
        %v1250 = vld [vmem:[%s3 + $0x8] sm:$0xf]
        %v1251 = vld [vmem:[%s3 + $0xc] sm:$0xf]
        %v1252 = vld [vmem:[%s3 + $0x10] sm:$0xf]
        %v1253 = vld [vmem:[%s3 + $0x14] sm:$0xf]
        %v1254 = vld [vmem:[%s3 + $0x18] sm:$0xf]
        %v1255 = vld [vmem:[%s3 + $0x1c] sm:$0xf]
        %v1256 = vld [vmem:[%s3 + $0x20] sm:$0xf]
        %v1257 = vld [vmem:[%s3 + $0x24] sm:$0xf]
        %v1258 = vld [vmem:[%s3 + $0x28] sm:$0xf]
        %v1259 = vld [vmem:[%s3 + $0x2c] sm:$0xf]
        %v1260 = vld [vmem:[%s3 + $0x30] sm:$0xf]
        %v1261 = vld [vmem:[%s3 + $0x34] sm:$0xf]
        %v1262 = vld [vmem:[%s3 + $0x38] sm:$0xf]
        %v1263 = vld [vmem:[%s3 + $0x3c] sm:$0xf]
        %v1264 = vld [vmem:[%s3 + $0x40] sm:$0xf]
        %v1265 = vld [vmem:[%s3 + $0x44] sm:$0xf]
        %v1266 = vld [vmem:[%s3 + $0x48] sm:$0xf]
        %v1267 = vld [vmem:[%s3 + $0x4c] sm:$0xf]
        %v1268 = vld [vmem:[%s3 + $0x50] sm:$0xf]
        %v1269 = vld [vmem:[%s3 + $0x54] sm:$0xf]
        %v1270 = vld [vmem:[%s3 + $0x58] sm:$0xf]
        %v1271 = vld [vmem:[%s3 + $0x5c] sm:$0xf]
        %v1272 = vld [vmem:[%s3 + $0x60] sm:$0xf]
        %v1273 = vld [vmem:[%s3 + $0x64] sm:$0xf]
        %v1274 = vld [vmem:[%s3 + $0x68] sm:$0xf]
        %v1275 = vld [vmem:[%s3 + $0x6c] sm:$0xf]
        %v1276 = vld [vmem:[%s3 + $0x70] sm:$0xf]
        %v1277 = vld [vmem:[%s3 + $0x74] sm:$0xf]
        %v1278 = vld [vmem:[%s3 + $0x78] sm:$0xf]
        %v1279 = vld [vmem:[%s3 + $0x7c] sm:$0xf]
        %v1280 = vld [vmem:[%s3 + $0x80] sm:$0xf]
        %v1281 = vld [vmem:[%s3 + $0x84] sm:$0xf]
        %v1282 = vld [vmem:[%s3 + $0x88] sm:$0xf]
        %v1283 = vld [vmem:[%s3 + $0x8c] sm:$0xf]
        %v1284 = vld [vmem:[%s3 + $0x90] sm:$0xf]
        %v1285 = vld [vmem:[%s3 + $0x94] sm:$0xf]
        %v1286 = vld [vmem:[%s3 + $0x98] sm:$0xf]
        %v1287 = vld [vmem:[%s3 + $0x9c] sm:$0xf]
        %v1288 = vld [vmem:[%s3 + $0xa0] sm:$0xf]
        %v1289 = vld [vmem:[%s3 + $0xa4] sm:$0xf]
        %v1290 = vld [vmem:[%s3 + $0xa8] sm:$0xf]
        %v1291 = vld [vmem:[%s3 + $0xac] sm:$0xf]
        %v1292 = vld [vmem:[%s3 + $0xb0] sm:$0xf]
        %v1293 = vld [vmem:[%s3 + $0xb4] sm:$0xf]
        %v1294 = vld [vmem:[%s3 + $0xb8] sm:$0xf]
        %v1295 = vld [vmem:[%s3 + $0xbc] sm:$0xf]
        %v1296 = vld [vmem:[%s3 + $0xc0] sm:$0xf]
        %v1297 = vld [vmem:[%s3 + $0xc4] sm:$0xf]
        %v1298 = vld [vmem:[%s3 + $0xc8] sm:$0xf]
        %v1299 = vld [vmem:[%s3 + $0xcc] sm:$0xf]
        %v1300 = vld [vmem:[%s3 + $0xd0] sm:$0xf]
        %v1301 = vld [vmem:[%s3 + $0xd4] sm:$0xf]
        %v1302 = vld [vmem:[%s3 + $0xd8] sm:$0xf]
        %v1303 = vld [vmem:[%s3 + $0xdc] sm:$0xf]
        %v1304 = vld [vmem:[%s3 + $0xe0] sm:$0xf]
        %v1305 = vld [vmem:[%s3 + $0xe4] sm:$0xf]
        %v1306 = vld [vmem:[%s3 + $0xe8] sm:$0xf]
        %v1307 = vld [vmem:[%s3 + $0xec] sm:$0xf]
        %v1308 = vld [vmem:[%s3 + $0xf0] sm:$0xf]
        %v1309 = vld [vmem:[%s3 + $0xf4] sm:$0xf]
        %v1310 = vld [vmem:[%s3 + $0xf8] sm:$0xf]
        %v1311 = vld [vmem:[%s3 + $0xfc] sm:$0xf]
        %v1312 = vld [vmem:[%s4] sm:$0x1]
        %v1314 = vlaneseq
        %v1315 = vshrl.u32 %v1314, 7
        %v1316 = vsub.s32 0, %v1315
        %v1317 = vrot.slane %v1312, %v1316
        %v1383 = vunpack.c.l.b16 %v1248
        %v1384 = vunpack.c.l.b16 %v1249
        %v1385 = vunpack.c.l.b16 %v1250
        %v1386 = vunpack.c.l.b16 %v1251
        %v1387 = vunpack.c.l.b16 %v1252
        %v1388 = vunpack.c.l.b16 %v1253
        %v1389 = vunpack.c.l.b16 %v1254
        %v1390 = vunpack.c.l.b16 %v1255
        %v1391 = vunpack.c.l.b16 %v1256
        %v1392 = vunpack.c.l.b16 %v1257
        %v1393 = vunpack.c.l.b16 %v1258
        %v1394 = vunpack.c.l.b16 %v1259
        %v1395 = vunpack.c.l.b16 %v1260
        %v1396 = vunpack.c.l.b16 %v1261
        %v1397 = vunpack.c.l.b16 %v1262
        %v1398 = vunpack.c.l.b16 %v1263
        %v1399 = vunpack.c.l.b16 %v1264
        %v1400 = vunpack.c.l.b16 %v1265
        %v1401 = vunpack.c.l.b16 %v1266
        %v1402 = vunpack.c.l.b16 %v1267
        %v1403 = vunpack.c.l.b16 %v1268
        %v1404 = vunpack.c.l.b16 %v1269
        %v1405 = vunpack.c.l.b16 %v1270
        %v1406 = vunpack.c.l.b16 %v1271
        %v1407 = vunpack.c.l.b16 %v1272
        %v1408 = vunpack.c.l.b16 %v1273
        %v1409 = vunpack.c.l.b16 %v1274
        %v1410 = vunpack.c.l.b16 %v1275
        %v1411 = vunpack.c.l.b16 %v1276
        %v1412 = vunpack.c.l.b16 %v1277
        %v1413 = vunpack.c.l.b16 %v1278
        %v1414 = vunpack.c.l.b16 %v1279
        %v1415 = vunpack.c.l.b16 %v1280
        %v1416 = vunpack.c.l.b16 %v1281
        %v1417 = vunpack.c.l.b16 %v1282
        %v1418 = vunpack.c.l.b16 %v1283
        %v1419 = vunpack.c.l.b16 %v1284
        %v1420 = vunpack.c.l.b16 %v1285
        %v1421 = vunpack.c.l.b16 %v1286
        %v1422 = vunpack.c.l.b16 %v1287
        %v1423 = vunpack.c.l.b16 %v1288
        %v1424 = vunpack.c.l.b16 %v1289
        %v1425 = vunpack.c.l.b16 %v1290
        %v1426 = vunpack.c.l.b16 %v1291
        %v1427 = vunpack.c.l.b16 %v1292
        %v1428 = vunpack.c.l.b16 %v1293
        %v1429 = vunpack.c.l.b16 %v1294
        %v1430 = vunpack.c.l.b16 %v1295
        %v1431 = vunpack.c.l.b16 %v1296
        %v1432 = vunpack.c.l.b16 %v1297
        %v1433 = vunpack.c.l.b16 %v1298
        %v1434 = vunpack.c.l.b16 %v1299
        %v1435 = vunpack.c.l.b16 %v1300
        %v1436 = vunpack.c.l.b16 %v1301
        %v1437 = vunpack.c.l.b16 %v1302
        %v1438 = vunpack.c.l.b16 %v1303
        %v1439 = vunpack.c.l.b16 %v1304
        %v1440 = vunpack.c.l.b16 %v1305
        %v1441 = vunpack.c.l.b16 %v1306
        %v1442 = vunpack.c.l.b16 %v1307
        %v1443 = vunpack.c.l.b16 %v1308
        %v1444 = vunpack.c.l.b16 %v1309
        %v1445 = vunpack.c.l.b16 %v1310
        %v1446 = vunpack.c.l.b16 %v1311
        %v1447 = vpack.c.b16 %v1384, %v1383
        %v1448 = vpack.c.b16 %v1386, %v1385
        %v1449 = vpack.c.b16 %v1388, %v1387
        %v1450 = vpack.c.b16 %v1390, %v1389
        %v1451 = vpack.c.b16 %v1392, %v1391
        %v1452 = vpack.c.b16 %v1394, %v1393
        %v1453 = vpack.c.b16 %v1396, %v1395
        %v1454 = vpack.c.b16 %v1398, %v1397
        %v1455 = vpack.c.b16 %v1400, %v1399
        %v1456 = vpack.c.b16 %v1402, %v1401
        %v1457 = vpack.c.b16 %v1404, %v1403
        %v1458 = vpack.c.b16 %v1406, %v1405
        %v1459 = vpack.c.b16 %v1408, %v1407
        %v1460 = vpack.c.b16 %v1410, %v1409
        %v1461 = vpack.c.b16 %v1412, %v1411
        %v1462 = vpack.c.b16 %v1414, %v1413
        %v1463 = vpack.c.b16 %v1416, %v1415
        %v1464 = vpack.c.b16 %v1418, %v1417
        %v1465 = vpack.c.b16 %v1420, %v1419
        %v1466 = vpack.c.b16 %v1422, %v1421
        %v1467 = vpack.c.b16 %v1424, %v1423
        %v1468 = vpack.c.b16 %v1426, %v1425
        %v1469 = vpack.c.b16 %v1428, %v1427
        %v1470 = vpack.c.b16 %v1430, %v1429
        %v1471 = vpack.c.b16 %v1432, %v1431
        %v1472 = vpack.c.b16 %v1434, %v1433
        %v1473 = vpack.c.b16 %v1436, %v1435
        %v1474 = vpack.c.b16 %v1438, %v1437
        %v1475 = vpack.c.b16 %v1440, %v1439
        %v1476 = vpack.c.b16 %v1442, %v1441
        %v1477 = vpack.c.b16 %v1444, %v1443
        %v1478 = vpack.c.b16 %v1446, %v1445
        %1511 = vmatprep.subr.bf16.mxu0 0
        %1512 = vmatpush1.bf16.msra.mxu0 %v1447
        %1513 = vmatprep.subr.bf16.mxu0 0
        %1514 = vmatpush1.bf16.msra.mxu0 %v1448
        %1515 = vmatprep.subr.bf16.mxu0 0
        %1516 = vmatpush1.bf16.msra.mxu0 %v1449
        %1517 = vmatprep.subr.bf16.mxu0 0
        %1518 = vmatpush1.bf16.msra.mxu0 %v1450
        %1519 = vmatprep.subr.bf16.mxu0 0
        %1520 = vmatpush1.bf16.msra.mxu0 %v1451
        %1521 = vmatprep.subr.bf16.mxu0 0
        %1522 = vmatpush1.bf16.msra.mxu0 %v1452
        %1523 = vmatprep.subr.bf16.mxu0 0
        %1524 = vmatpush1.bf16.msra.mxu0 %v1453
        %1525 = vmatprep.subr.bf16.mxu0 0
        %1526 = vmatpush1.bf16.msra.mxu0 %v1454
        %1527 = vmatprep.subr.bf16.mxu0 0
        %1528 = vmatpush1.bf16.msra.mxu0 %v1455
        %1529 = vmatprep.subr.bf16.mxu0 0
        %1530 = vmatpush1.bf16.msra.mxu0 %v1456
        %1531 = vmatprep.subr.bf16.mxu0 0
        %1532 = vmatpush1.bf16.msra.mxu0 %v1457
        %1533 = vmatprep.subr.bf16.mxu0 0
        %1534 = vmatpush1.bf16.msra.mxu0 %v1458
        %1535 = vmatprep.subr.bf16.mxu0 0
        %1536 = vmatpush1.bf16.msra.mxu0 %v1459
        %1537 = vmatprep.subr.bf16.mxu0 0
        %1538 = vmatpush1.bf16.msra.mxu0 %v1460
        %1539 = vmatprep.subr.bf16.mxu0 0
        %1540 = vmatpush1.bf16.msra.mxu0 %v1461
        %1541 = vmatprep.subr.bf16.mxu0 0
        %1542 = vmatpush1.bf16.msra.mxu0 %v1462
        %1543 = vmatprep.mubr.bf16.mxu0 %v1245
        %1544 = vmatmul.mubr.bf16.gmra.mrb[0].mxu0 %v1244
        %v1545 = vpop.f32.mrb[0].mxu0
        %v1546 = vadd.f32 %v1317, %v1545
        %v1547 = vpop.f32.mrb[0].mxu0
        %v1548 = vpop.f32.mrb[0].mxu0
        %v1549 = vpop.f32.mrb[0].mxu0
        %1550 = vdwg.mxu0
        %1551 = vmatprep.subr.bf16.mxu0 0
        %1552 = vmatpush1.bf16.msra.mxu0 %v1463
        %1553 = vmatprep.subr.bf16.mxu0 0
        %1554 = vmatpush1.bf16.msra.mxu0 %v1464
        %1555 = vmatprep.subr.bf16.mxu0 0
        %1556 = vmatpush1.bf16.msra.mxu0 %v1465
        %1557 = vmatprep.subr.bf16.mxu0 0
        %1558 = vmatpush1.bf16.msra.mxu0 %v1466
        %1559 = vmatprep.subr.bf16.mxu0 0
        %1560 = vmatpush1.bf16.msra.mxu0 %v1467
        %1561 = vmatprep.subr.bf16.mxu0 0
        %1562 = vmatpush1.bf16.msra.mxu0 %v1468
        %1563 = vmatprep.subr.bf16.mxu0 0
        %1564 = vmatpush1.bf16.msra.mxu0 %v1469
        %1565 = vmatprep.subr.bf16.mxu0 0
        %1566 = vmatpush1.bf16.msra.mxu0 %v1470
        %1567 = vmatprep.subr.bf16.mxu0 0
        %1568 = vmatpush1.bf16.msra.mxu0 %v1471
        %1569 = vmatprep.subr.bf16.mxu0 0
        %1570 = vmatpush1.bf16.msra.mxu0 %v1472
        %1571 = vmatprep.subr.bf16.mxu0 0
        %1572 = vmatpush1.bf16.msra.mxu0 %v1473
        %1573 = vmatprep.subr.bf16.mxu0 0
        %1574 = vmatpush1.bf16.msra.mxu0 %v1474
        %1575 = vmatprep.subr.bf16.mxu0 0
        %1576 = vmatpush1.bf16.msra.mxu0 %v1475
        %1577 = vmatprep.subr.bf16.mxu0 0
        %1578 = vmatpush1.bf16.msra.mxu0 %v1476
        %1579 = vmatprep.subr.bf16.mxu0 0
        %1580 = vmatpush1.bf16.msra.mxu0 %v1477
        %1581 = vmatprep.subr.bf16.mxu0 0
        %1582 = vmatpush1.bf16.msra.mxu0 %v1478
        %1583 = vmatprep.mubr.bf16.mxu0 %v1247
        %1584 = vmatmul.mubr.bf16.gmra.mrb[0].mxu0 %v1246
        %v1585 = vpop.f32.mrb[0].mxu0
        %v1586 = vadd.f32 %v1546, %v1585
        %v1587 = vpop.f32.mrb[0].mxu0
        %v1588 = vpop.f32.mrb[0].mxu0
        %v1589 = vpop.f32.mrb[0].mxu0
        %1590 = vdwg.mxu0
        %1591 = vst [vmem:[%s5] sm:$0xff] %v1586
      $region48: #{cnn_fedavg_forward.9} parent=39 // pred_fallthru
        _
      // Predicated region
      $region49: #{cnn_fedavg_forward.9} parent=39 // pred_check
        %p1592 = pneg %p144
      $region50: #{cnn_fedavg_forward.9} parent=39 // pred_check_branch
        %1594 = sbr.rel (%p1592) target = $region52
      $region51: #{cnn_fedavg_forward.9} parent=39 // pred_region
        _
      $region52: #{cnn_fedavg_forward.9} parent=39 // pred_fallthru
        _
      // Predicated region
      $region53: #{cnn_fedavg_forward.9} parent=39 // pred_check
        %p1595 = pneg %p144
      $region54: #{cnn_fedavg_forward.9} parent=39 // pred_check_branch
        %1597 = sbr.rel (%p1595) target = $region56
      $region55: #{cnn_fedavg_forward.9} parent=39 // pred_region
        _
      $region56: #{cnn_fedavg_forward.9} parent=39 // pred_fallthru
        _
    $region40: #{cnn_fedavg_forward.9} parent=5 // pred_fallthru
      _
    %p1598 = scmp.le.s32.totalorder 2, %s11
    // Predicated region
    $region57: #{cnn_fedavg_forward.9} parent=5 // pred_check
      %p1599 = pneg %p1598
    $region58: #{cnn_fedavg_forward.9} parent=5 // pred_check_branch
      %1601 = sbr.rel (%p1599) target = $region60
    $region59: #{cnn_fedavg_forward.9} parent=5 // pred_region
      %s1602 = ssub.s32 %s11, 2
    $region60: #{cnn_fedavg_forward.9} parent=5 // pred_fallthru
      _
  $region6: #{cnn_fedavg_forward.9} parent=0 // loop_footer
    %s15 = sadd.s32 1, %s11
  $region7: #{cnn_fedavg_forward.9} parent=0 // loop_footer_branch
    %10 = sbr.rel target = $region3
  $region8: #{cnn_fedavg_forward.9} parent=0 // loop_exit
    _

</llo_original>
